<compile_context>
chip_gen: v7x
topology: tpu7x:2x2x1
jax: 0.10.0
libtpu: 0.0.40
codegen_flags: <defaults>
</compile_context>

<pallas_src>
import jax
import jax.numpy as jnp
from jax.experimental import pallas as pl
from jax.experimental.pallas import tpu as pltpu


def _round_up(x, m):
    return ((x + m - 1) // m) * m


# ----------------------------- Pallas kernel -----------------------------

def lstm_eta_kernel(x_ref, whh_ref, wih_ref, b_ref, wt_ref, out_ref):
    """One grid step == one batch tile (batch-in-lanes), full time recurrence inside.

    x_ref   : (T, H, tb)  bf16 raw route embeddings, time-major, batch in lanes
    whh_ref : (4H, H)     f32 fused hidden->gate weights, pre-transposed, g cols pre-scaled x2
    wih_ref : (4H, H)     f32 fused input->gate weights, pre-transposed, g cols pre-scaled x2
    b_ref   : (4H, 1)     f32 combined gate bias (b_ih + b_hh), g entries pre-scaled x2
    wt_ref  : (H, 1)      f32 time_mapping weight
    out_ref : (1, tb)     f32 sum over time of h_t . wt   (T * bt is added by the wrapper)
    """
    T, H, tb = x_ref.shape
    G = whh_ref.shape[0]                                   # 4H

    whh_t = whh_ref[...]                                   # resident for the whole recurrence
    wih_t = wih_ref[...]
    wt = wt_ref[...]
    # Hoisted broadcast (JAX does not CSE broadcast_in_dim inside loops).
    bias = jnp.broadcast_to(b_ref[...], (G, tb))

    def step(t, carry):
        h, c, h_sum = carry
        x_t = x_ref[t].astype(jnp.float32)                                    # (H, tb)
        # Input projection has no dependence on the carry -> off the serial critical path.
        xz = jnp.dot(wih_t, x_t, preferred_element_type=jnp.float32)          # (4H, tb)
        gates = xz + bias + jnp.dot(whh_t, h, preferred_element_type=jnp.float32)
        # Single EUP pass over all 4H gate rows; g rows carry 2*z, so tanh(z) == 2*sigmoid(2z)-1
        # is a cheap VPU fixup on a free sublane slice.
        s = jax.nn.sigmoid(gates)
        i_g = s[0:H, :]
        f_g = s[H:2 * H, :]
        g_g = 2.0 * s[2 * H:3 * H, :] - 1.0
        o_g = s[3 * H:4 * H, :]
        c_new = f_g * c + i_g * g_g
        h_new = o_g * jnp.tanh(c_new)
        return h_new, c_new, h_sum + h_new

    zeros = jnp.zeros((H, tb), jnp.float32)
    _, _, h_sum = jax.lax.fori_loop(0, T, step, (zeros, zeros, zeros), unroll=True)

    # time_mapping commutes with the time sum:  sum_t (h_t . wt + bt) == h_sum . wt + T*bt
    out_ref[...] = jnp.sum(h_sum * wt, axis=0, keepdims=True)                 # lane-dense (1, tb)


def lstm_eta_pred_sum(x_thb, whh_t, wih_t, b_col, wt, tb):
    """x_thb: (T, H, B_pad) bf16 embeddings -> (1, B_pad) f32 summed-over-time h.wt."""
    T, H, B_pad = x_thb.shape
    G = whh_t.shape[0]
    assert B_pad % tb == 0
    grid = (B_pad // tb,)

    # Per-tile VMEM: x block = T*H*tb*2 B (bf16), double-buffered (~128 KiB at T=8, H=64).
    # TODO(synk): for very long routes add a T-chunk ("arbitrary") grid axis carrying h/c/h_sum
    # in VMEM scratch so the block stays well under v7x's 64 MiB VMEM.
    return pl.pallas_call(
        lstm_eta_kernel,
        out_shape=jax.ShapeDtypeStruct((1, B_pad), jnp.float32),
        grid_spec=pltpu.PrefetchScalarGridSpec(
            num_scalar_prefetch=0,
            grid=grid,
            in_specs=[
                pl.BlockSpec((T, H, tb), lambda b: (0, 0, b)),   # bf16 embeddings, batch-tiled
                pl.BlockSpec((G, H), lambda b: (0, 0)),          # W_hh^T (resident)
                pl.BlockSpec((G, H), lambda b: (0, 0)),          # W_ih^T (resident)
                pl.BlockSpec((G, 1), lambda b: (0, 0)),          # combined gate bias
                pl.BlockSpec((H, 1), lambda b: (0, 0)),          # time_mapping weight
            ],
            out_specs=pl.BlockSpec((1, tb), lambda b: (0, b)),   # lane-dense output row
        ),
        compiler_params=pltpu.CompilerParams(
            dimension_semantics=("parallel",)),                  # batch tiles independent (v7x)
    )(x_thb, whh_t, wih_t, b_col, wt)


# ------------------------------ model glue ------------------------------

def init_params(key, hidden_size=64, vocab_size=60000):
    # Canonical (PyTorch-equivalent) parameters.  Fused (H, 4H) weights applied as x @ W,
    # gate order i, f, g, o; b = b_ih + b_hh.  Real PyTorch checkpoints store weight_ih /
    # weight_hh as (4H, H) applied as x @ W^T, so transpose and sum the biases when loading.
    ks = jax.random.split(key, 6)
    H = hidden_size
    scale = 1.0 / jnp.sqrt(jnp.float32(H))
    return {
        "emb": jax.random.normal(ks[0], (vocab_size, H), jnp.float32),
        "wih": jax.random.uniform(ks[1], (H, 4 * H), jnp.float32, -scale, scale),
        "whh": jax.random.uniform(ks[2], (H, 4 * H), jnp.float32, -scale, scale),
        "b":   jax.random.uniform(ks[3], (4 * H,), jnp.float32, -scale, scale),   # b_ih + b_hh
        "wt":  jax.random.uniform(ks[4], (H, 1), jnp.float32, -scale, scale),
        "bt":  jax.random.uniform(ks[5], (1,), jnp.float32, -scale, scale),
    }


def route_lstm_time_pred(params, route_input, travel_time):
    """Forward pass matching RouteLSTMTimePred.forward.

    route_input : (B, T) int32 route ids
    travel_time : (B,)   float32
    returns (mape_loss_mean, mae_loss_mean) as float32 scalars
    """
    H = params["wt"].shape[0]
    B, T = route_input.shape

    # Embedding lookup (gather) stays in plain JAX; streamed to the kernel in bf16.
    # TODO(synk): for the tiny-B regime the gather itself could be DMA'd in-kernel via
    # scalar-prefetched route ids (PrefetchScalarGridSpec + memory_space=pl.ANY table).
    embeds = jnp.take(params["emb"], route_input, axis=0).astype(jnp.bfloat16)     # (B, T, H)

    # Kernel layout: time-major, batch in lanes (layout plumbing, not compute hoisting).
    tb = 128                                         # lane width; >=2 grid tiles once B > 128
    B_pad = _round_up(max(B, 1), tb)
    x_thb = jnp.transpose(embeds, (1, 2, 0))         # (T, H, B)
    x_thb = jnp.pad(x_thb, ((0, 0), (0, 0), (0, B_pad - B)))

    # Fold the x2 of tanh(z) = 2*sigmoid(2z) - 1 into the g-gate columns of BOTH weight
    # matrices and the bias, and pre-transpose for the batch-in-lanes (4H, H) @ (H, tb) dot.
    gscale = jnp.ones((4 * H,), jnp.float32).at[2 * H:3 * H].set(2.0)
    whh_t = (params["whh"] * gscale[None, :]).T.astype(jnp.float32)                 # (4H, H)
    wih_t = (params["wih"] * gscale[None, :]).T.astype(jnp.float32)                 # (4H, H)
    b_col = (params["b"] * gscale)[:, None].astype(jnp.float32)                     # (4H, 1)

    pred_sum = lstm_eta_pred_sum(x_thb, whh_t, wih_t, b_col, params["wt"], tb)[0, :B]
    pred_sum = pred_sum + jnp.float32(T) * params["bt"][0]                           # (B,)

    mape_loss = jnp.abs(pred_sum - travel_time) / (travel_time + 1e-9)
    mae_loss = jnp.abs(pred_sum - travel_time)
    return mape_loss.mean(), mae_loss.mean()


# Pure-JAX reference (sanity check of the Pallas kernel).
def _reference(params, route_input, travel_time):
    H = params["wt"].shape[0]
    # Use the same bf16-rounded embeddings the kernel streams -> apples-to-apples numerics.
    embeds = jnp.take(params["emb"], route_input, axis=0).astype(jnp.bfloat16).astype(jnp.float32)
    B, T, _ = embeds.shape

    def step(carry, x_t):
        h, c = carry
        gates = x_t @ params["wih"] + h @ params["whh"] + params["b"]
        i_g = jax.nn.sigmoid(gates[:, 0:H])
        f_g = jax.nn.sigmoid(gates[:, H:2 * H])
        g_g = jnp.tanh(gates[:, 2 * H:3 * H])
        o_g = jax.nn.sigmoid(gates[:, 3 * H:4 * H])
        c_new = f_g * c + i_g * g_g
        h_new = o_g * jnp.tanh(c_new)
        return (h_new, c_new), h_new

    h0 = jnp.zeros((B, H), jnp.float32)
    c0 = jnp.zeros((B, H), jnp.float32)
    _, outs = jax.lax.scan(step, (h0, c0), jnp.transpose(embeds, (1, 0, 2)))   # (T, B, H)
    preds = (outs @ params["wt"])[..., 0] + params["bt"][0]                    # (T, B)
    pred_sum = preds.sum(0)                                                    # (B,)
    mape = jnp.abs(pred_sum - travel_time) / (travel_time + 1e-9)
    mae = jnp.abs(pred_sum - travel_time)
    return mape.mean(), mae.mean()


if __name__ == "__main__":
    B, T, H, VOCAB = 4, 8, 64, 60000

    key = jax.random.PRNGKey(0)
    kp, kr, kt = jax.random.split(key, 3)

    params = init_params(kp, hidden_size=H, vocab_size=VOCAB)
    route_input = jax.random.randint(kr, (B, T), 0, VOCAB, dtype=jnp.int32)
    travel_time = jax.random.uniform(kt, (B,), jnp.float32, 10.0, 100.0)

    mape, mae = route_lstm_time_pred(params, route_input, travel_time)
    jax.block_until_ready((mape, mae))

    # sanity check against a pure-JAX reference
    mape_ref, mae_ref = _reference(params, route_input, travel_time)
    assert jnp.allclose(mape, mape_ref, rtol=1e-3, atol=1e-3), (mape, mape_ref)
    assert jnp.allclose(mae, mae_ref, rtol=1e-3, atol=1e-3), (mae, mae_ref)

    print("KERNEL_OK")
</pallas_src>

<mosaic_0001>
module attributes {stable_mosaic.version = 11 : i64} {
  func.func @lstm_eta_kernel(%arg0: i32, %arg1: memref<8x64x128xbf16, #tpu.memory_space<vmem>>, %arg2: memref<256x64xf32, #tpu.memory_space<vmem>>, %arg3: memref<256x64xf32, #tpu.memory_space<vmem>>, %arg4: memref<256x1xf32, #tpu.memory_space<vmem>>, %arg5: memref<64x1xf32, #tpu.memory_space<vmem>>, %arg6: memref<1x128xf32, #tpu.memory_space<vmem>>) attributes {dimension_semantics = [#tpu.dimension_semantics<parallel>], iteration_bounds = array<i64: 1>, scalar_prefetch = 0 : i64, scratch_operands = 0 : i64, tpu.core_type = #tpu.core_type<tc>, window_params = [{transform_indices = @transform_0, window_bounds = array<i64: 8, 64, 128>}, {pipeline_mode = #tpu.pipeline_mode<synchronous>, transform_indices = @transform_1, window_bounds = array<i64: 256, 64>}, {pipeline_mode = #tpu.pipeline_mode<synchronous>, transform_indices = @transform_2, window_bounds = array<i64: 256, 64>}, {pipeline_mode = #tpu.pipeline_mode<synchronous>, transform_indices = @transform_3, window_bounds = array<i64: 256, 1>}, {pipeline_mode = #tpu.pipeline_mode<synchronous>, transform_indices = @transform_4, window_bounds = array<i64: 64, 1>}, {transform_indices = @transform_5, window_bounds = array<i64: 1, 128>}]} {
    %c0 = arith.constant 0 : index
    %c0_0 = arith.constant 0 : index
    %0 = vector.load %arg2[%c0, %c0_0] : memref<256x64xf32, #tpu.memory_space<vmem>>, vector<256x64xf32>
    %c0_1 = arith.constant 0 : index
    %c0_2 = arith.constant 0 : index
    %1 = vector.load %arg3[%c0_1, %c0_2] : memref<256x64xf32, #tpu.memory_space<vmem>>, vector<256x64xf32>
    %c0_3 = arith.constant 0 : index
    %c0_4 = arith.constant 0 : index
    %2 = vector.load %arg5[%c0_3, %c0_4] : memref<64x1xf32, #tpu.memory_space<vmem>>, vector<64x1xf32>
    %c0_5 = arith.constant 0 : index
    %c0_6 = arith.constant 0 : index
    %3 = vector.load %arg4[%c0_5, %c0_6] : memref<256x1xf32, #tpu.memory_space<vmem>>, vector<256x1xf32>
    %4 = vector.shape_cast %3 : vector<256x1xf32> to vector<256x1xf32>
    %5 = vector.broadcast %4 : vector<256x1xf32> to vector<256x128xf32>
    %cst = arith.constant 0.000000e+00 : f32
    %6 = vector.broadcast %cst : f32 to vector<64x128xf32>
    %c0_i32 = arith.constant 0 : i32
    %7 = arith.index_cast %c0_i32 : i32 to index
    %c0_7 = arith.constant 0 : index
    %c0_8 = arith.constant 0 : index
    %8 = vector.load %arg1[%7, %c0_7, %c0_8] : memref<8x64x128xbf16, #tpu.memory_space<vmem>>, vector<1x64x128xbf16>
    %9 = vector.shape_cast %8 : vector<1x64x128xbf16> to vector<64x128xbf16>
    %10 = arith.extf %9 : vector<64x128xbf16> to vector<64x128xf32>
    %cst_9 = arith.constant dense<0.000000e+00> : vector<256x128xf32>
    %11 = tpu.matmul %1, %10, %cst_9 {dimension_numbers = #tpu.dot_dimension_numbers<[1], [0], [0], [1], [0, 0, 1, 1], [], []>} : vector<256x64xf32>, vector<64x128xf32>, vector<256x128xf32> -> vector<256x128xf32>
    %12 = arith.addf %11, %5 : vector<256x128xf32>
    %cst_10 = arith.constant dense<0.000000e+00> : vector<256x128xf32>
    %13 = tpu.matmul %0, %6, %cst_10 {dimension_numbers = #tpu.dot_dimension_numbers<[1], [0], [0], [1], [0, 0, 1, 1], [], []>} : vector<256x64xf32>, vector<64x128xf32>, vector<256x128xf32> -> vector<256x128xf32>
    %14 = arith.addf %12, %13 : vector<256x128xf32>
    %15 = arith.negf %14 : vector<256x128xf32>
    %16 = math.exp %15 : vector<256x128xf32>
    %cst_11 = arith.constant 1.000000e+00 : f32
    %17 = vector.broadcast %cst_11 : f32 to vector<256x128xf32>
    %18 = arith.addf %17, %16 : vector<256x128xf32>
    %19 = arith.divf %17, %18 : vector<256x128xf32>
    %20 = vector.extract_strided_slice %19 {offsets = [0, 0], sizes = [64, 128], strides = [1, 1]} : vector<256x128xf32> to vector<64x128xf32>
    %21 = vector.extract_strided_slice %19 {offsets = [64, 0], sizes = [64, 128], strides = [1, 1]} : vector<256x128xf32> to vector<64x128xf32>
    %22 = vector.extract_strided_slice %19 {offsets = [128, 0], sizes = [64, 128], strides = [1, 1]} : vector<256x128xf32> to vector<64x128xf32>
    %cst_12 = arith.constant 2.000000e+00 : f32
    %23 = vector.broadcast %cst_12 : f32 to vector<64x128xf32>
    %24 = arith.mulf %23, %22 : vector<64x128xf32>
    %cst_13 = arith.constant 1.000000e+00 : f32
    %25 = vector.broadcast %cst_13 : f32 to vector<64x128xf32>
    %26 = arith.subf %24, %25 : vector<64x128xf32>
    %27 = vector.extract_strided_slice %19 {offsets = [192, 0], sizes = [64, 128], strides = [1, 1]} : vector<256x128xf32> to vector<64x128xf32>
    %28 = arith.mulf %21, %6 : vector<64x128xf32>
    %29 = arith.mulf %20, %26 : vector<64x128xf32>
    %30 = arith.addf %28, %29 : vector<64x128xf32>
    %31 = math.tanh %30 : vector<64x128xf32>
    %32 = arith.mulf %27, %31 : vector<64x128xf32>
    %33 = arith.addf %6, %32 : vector<64x128xf32>
    %c1_i32 = arith.constant 1 : i32
    %34 = arith.index_cast %c1_i32 : i32 to index
    %c0_14 = arith.constant 0 : index
    %c0_15 = arith.constant 0 : index
    %35 = vector.load %arg1[%34, %c0_14, %c0_15] : memref<8x64x128xbf16, #tpu.memory_space<vmem>>, vector<1x64x128xbf16>
    %36 = vector.shape_cast %35 : vector<1x64x128xbf16> to vector<64x128xbf16>
    %37 = arith.extf %36 : vector<64x128xbf16> to vector<64x128xf32>
    %cst_16 = arith.constant dense<0.000000e+00> : vector<256x128xf32>
    %38 = tpu.matmul %1, %37, %cst_16 {dimension_numbers = #tpu.dot_dimension_numbers<[1], [0], [0], [1], [0, 0, 1, 1], [], []>} : vector<256x64xf32>, vector<64x128xf32>, vector<256x128xf32> -> vector<256x128xf32>
    %39 = arith.addf %38, %5 : vector<256x128xf32>
    %cst_17 = arith.constant dense<0.000000e+00> : vector<256x128xf32>
    %40 = tpu.matmul %0, %32, %cst_17 {dimension_numbers = #tpu.dot_dimension_numbers<[1], [0], [0], [1], [0, 0, 1, 1], [], []>} : vector<256x64xf32>, vector<64x128xf32>, vector<256x128xf32> -> vector<256x128xf32>
    %41 = arith.addf %39, %40 : vector<256x128xf32>
    %42 = arith.negf %41 : vector<256x128xf32>
    %43 = math.exp %42 : vector<256x128xf32>
    %cst_18 = arith.constant 1.000000e+00 : f32
    %44 = vector.broadcast %cst_18 : f32 to vector<256x128xf32>
    %45 = arith.addf %44, %43 : vector<256x128xf32>
    %46 = arith.divf %44, %45 : vector<256x128xf32>
    %47 = vector.extract_strided_slice %46 {offsets = [0, 0], sizes = [64, 128], strides = [1, 1]} : vector<256x128xf32> to vector<64x128xf32>
    %48 = vector.extract_strided_slice %46 {offsets = [64, 0], sizes = [64, 128], strides = [1, 1]} : vector<256x128xf32> to vector<64x128xf32>
    %49 = vector.extract_strided_slice %46 {offsets = [128, 0], sizes = [64, 128], strides = [1, 1]} : vector<256x128xf32> to vector<64x128xf32>
    %cst_19 = arith.constant 2.000000e+00 : f32
    %50 = vector.broadcast %cst_19 : f32 to vector<64x128xf32>
    %51 = arith.mulf %50, %49 : vector<64x128xf32>
    %cst_20 = arith.constant 1.000000e+00 : f32
    %52 = vector.broadcast %cst_20 : f32 to vector<64x128xf32>
    %53 = arith.subf %51, %52 : vector<64x128xf32>
    %54 = vector.extract_strided_slice %46 {offsets = [192, 0], sizes = [64, 128], strides = [1, 1]} : vector<256x128xf32> to vector<64x128xf32>
    %55 = arith.mulf %48, %30 : vector<64x128xf32>
    %56 = arith.mulf %47, %53 : vector<64x128xf32>
    %57 = arith.addf %55, %56 : vector<64x128xf32>
    %58 = math.tanh %57 : vector<64x128xf32>
    %59 = arith.mulf %54, %58 : vector<64x128xf32>
    %60 = arith.addf %33, %59 : vector<64x128xf32>
    %c2_i32 = arith.constant 2 : i32
    %61 = arith.index_cast %c2_i32 : i32 to index
    %c0_21 = arith.constant 0 : index
    %c0_22 = arith.constant 0 : index
    %62 = vector.load %arg1[%61, %c0_21, %c0_22] : memref<8x64x128xbf16, #tpu.memory_space<vmem>>, vector<1x64x128xbf16>
    %63 = vector.shape_cast %62 : vector<1x64x128xbf16> to vector<64x128xbf16>
    %64 = arith.extf %63 : vector<64x128xbf16> to vector<64x128xf32>
    %cst_23 = arith.constant dense<0.000000e+00> : vector<256x128xf32>
    %65 = tpu.matmul %1, %64, %cst_23 {dimension_numbers = #tpu.dot_dimension_numbers<[1], [0], [0], [1], [0, 0, 1, 1], [], []>} : vector<256x64xf32>, vector<64x128xf32>, vector<256x128xf32> -> vector<256x128xf32>
    %66 = arith.addf %65, %5 : vector<256x128xf32>
    %cst_24 = arith.constant dense<0.000000e+00> : vector<256x128xf32>
    %67 = tpu.matmul %0, %59, %cst_24 {dimension_numbers = #tpu.dot_dimension_numbers<[1], [0], [0], [1], [0, 0, 1, 1], [], []>} : vector<256x64xf32>, vector<64x128xf32>, vector<256x128xf32> -> vector<256x128xf32>
    %68 = arith.addf %66, %67 : vector<256x128xf32>
    %69 = arith.negf %68 : vector<256x128xf32>
    %70 = math.exp %69 : vector<256x128xf32>
    %cst_25 = arith.constant 1.000000e+00 : f32
    %71 = vector.broadcast %cst_25 : f32 to vector<256x128xf32>
    %72 = arith.addf %71, %70 : vector<256x128xf32>
    %73 = arith.divf %71, %72 : vector<256x128xf32>
    %74 = vector.extract_strided_slice %73 {offsets = [0, 0], sizes = [64, 128], strides = [1, 1]} : vector<256x128xf32> to vector<64x128xf32>
    %75 = vector.extract_strided_slice %73 {offsets = [64, 0], sizes = [64, 128], strides = [1, 1]} : vector<256x128xf32> to vector<64x128xf32>
    %76 = vector.extract_strided_slice %73 {offsets = [128, 0], sizes = [64, 128], strides = [1, 1]} : vector<256x128xf32> to vector<64x128xf32>
    %cst_26 = arith.constant 2.000000e+00 : f32
    %77 = vector.broadcast %cst_26 : f32 to vector<64x128xf32>
    %78 = arith.mulf %77, %76 : vector<64x128xf32>
    %cst_27 = arith.constant 1.000000e+00 : f32
    %79 = vector.broadcast %cst_27 : f32 to vector<64x128xf32>
    %80 = arith.subf %78, %79 : vector<64x128xf32>
    %81 = vector.extract_strided_slice %73 {offsets = [192, 0], sizes = [64, 128], strides = [1, 1]} : vector<256x128xf32> to vector<64x128xf32>
    %82 = arith.mulf %75, %57 : vector<64x128xf32>
    %83 = arith.mulf %74, %80 : vector<64x128xf32>
    %84 = arith.addf %82, %83 : vector<64x128xf32>
    %85 = math.tanh %84 : vector<64x128xf32>
    %86 = arith.mulf %81, %85 : vector<64x128xf32>
    %87 = arith.addf %60, %86 : vector<64x128xf32>
    %c3_i32 = arith.constant 3 : i32
    %88 = arith.index_cast %c3_i32 : i32 to index
    %c0_28 = arith.constant 0 : index
    %c0_29 = arith.constant 0 : index
    %89 = vector.load %arg1[%88, %c0_28, %c0_29] : memref<8x64x128xbf16, #tpu.memory_space<vmem>>, vector<1x64x128xbf16>
    %90 = vector.shape_cast %89 : vector<1x64x128xbf16> to vector<64x128xbf16>
    %91 = arith.extf %90 : vector<64x128xbf16> to vector<64x128xf32>
    %cst_30 = arith.constant dense<0.000000e+00> : vector<256x128xf32>
    %92 = tpu.matmul %1, %91, %cst_30 {dimension_numbers = #tpu.dot_dimension_numbers<[1], [0], [0], [1], [0, 0, 1, 1], [], []>} : vector<256x64xf32>, vector<64x128xf32>, vector<256x128xf32> -> vector<256x128xf32>
    %93 = arith.addf %92, %5 : vector<256x128xf32>
    %cst_31 = arith.constant dense<0.000000e+00> : vector<256x128xf32>
    %94 = tpu.matmul %0, %86, %cst_31 {dimension_numbers = #tpu.dot_dimension_numbers<[1], [0], [0], [1], [0, 0, 1, 1], [], []>} : vector<256x64xf32>, vector<64x128xf32>, vector<256x128xf32> -> vector<256x128xf32>
    %95 = arith.addf %93, %94 : vector<256x128xf32>
    %96 = arith.negf %95 : vector<256x128xf32>
    %97 = math.exp %96 : vector<256x128xf32>
    %cst_32 = arith.constant 1.000000e+00 : f32
    %98 = vector.broadcast %cst_32 : f32 to vector<256x128xf32>
    %99 = arith.addf %98, %97 : vector<256x128xf32>
    %100 = arith.divf %98, %99 : vector<256x128xf32>
    %101 = vector.extract_strided_slice %100 {offsets = [0, 0], sizes = [64, 128], strides = [1, 1]} : vector<256x128xf32> to vector<64x128xf32>
    %102 = vector.extract_strided_slice %100 {offsets = [64, 0], sizes = [64, 128], strides = [1, 1]} : vector<256x128xf32> to vector<64x128xf32>
    %103 = vector.extract_strided_slice %100 {offsets = [128, 0], sizes = [64, 128], strides = [1, 1]} : vector<256x128xf32> to vector<64x128xf32>
    %cst_33 = arith.constant 2.000000e+00 : f32
    %104 = vector.broadcast %cst_33 : f32 to vector<64x128xf32>
    %105 = arith.mulf %104, %103 : vector<64x128xf32>
    %cst_34 = arith.constant 1.000000e+00 : f32
    %106 = vector.broadcast %cst_34 : f32 to vector<64x128xf32>
    %107 = arith.subf %105, %106 : vector<64x128xf32>
    %108 = vector.extract_strided_slice %100 {offsets = [192, 0], sizes = [64, 128], strides = [1, 1]} : vector<256x128xf32> to vector<64x128xf32>
    %109 = arith.mulf %102, %84 : vector<64x128xf32>
    %110 = arith.mulf %101, %107 : vector<64x128xf32>
    %111 = arith.addf %109, %110 : vector<64x128xf32>
    %112 = math.tanh %111 : vector<64x128xf32>
    %113 = arith.mulf %108, %112 : vector<64x128xf32>
    %114 = arith.addf %87, %113 : vector<64x128xf32>
    %c4_i32 = arith.constant 4 : i32
    %115 = arith.index_cast %c4_i32 : i32 to index
    %c0_35 = arith.constant 0 : index
    %c0_36 = arith.constant 0 : index
    %116 = vector.load %arg1[%115, %c0_35, %c0_36] : memref<8x64x128xbf16, #tpu.memory_space<vmem>>, vector<1x64x128xbf16>
    %117 = vector.shape_cast %116 : vector<1x64x128xbf16> to vector<64x128xbf16>
    %118 = arith.extf %117 : vector<64x128xbf16> to vector<64x128xf32>
    %cst_37 = arith.constant dense<0.000000e+00> : vector<256x128xf32>
    %119 = tpu.matmul %1, %118, %cst_37 {dimension_numbers = #tpu.dot_dimension_numbers<[1], [0], [0], [1], [0, 0, 1, 1], [], []>} : vector<256x64xf32>, vector<64x128xf32>, vector<256x128xf32> -> vector<256x128xf32>
    %120 = arith.addf %119, %5 : vector<256x128xf32>
    %cst_38 = arith.constant dense<0.000000e+00> : vector<256x128xf32>
    %121 = tpu.matmul %0, %113, %cst_38 {dimension_numbers = #tpu.dot_dimension_numbers<[1], [0], [0], [1], [0, 0, 1, 1], [], []>} : vector<256x64xf32>, vector<64x128xf32>, vector<256x128xf32> -> vector<256x128xf32>
    %122 = arith.addf %120, %121 : vector<256x128xf32>
    %123 = arith.negf %122 : vector<256x128xf32>
    %124 = math.exp %123 : vector<256x128xf32>
    %cst_39 = arith.constant 1.000000e+00 : f32
    %125 = vector.broadcast %cst_39 : f32 to vector<256x128xf32>
    %126 = arith.addf %125, %124 : vector<256x128xf32>
    %127 = arith.divf %125, %126 : vector<256x128xf32>
    %128 = vector.extract_strided_slice %127 {offsets = [0, 0], sizes = [64, 128], strides = [1, 1]} : vector<256x128xf32> to vector<64x128xf32>
    %129 = vector.extract_strided_slice %127 {offsets = [64, 0], sizes = [64, 128], strides = [1, 1]} : vector<256x128xf32> to vector<64x128xf32>
    %130 = vector.extract_strided_slice %127 {offsets = [128, 0], sizes = [64, 128], strides = [1, 1]} : vector<256x128xf32> to vector<64x128xf32>
    %cst_40 = arith.constant 2.000000e+00 : f32
    %131 = vector.broadcast %cst_40 : f32 to vector<64x128xf32>
    %132 = arith.mulf %131, %130 : vector<64x128xf32>
    %cst_41 = arith.constant 1.000000e+00 : f32
    %133 = vector.broadcast %cst_41 : f32 to vector<64x128xf32>
    %134 = arith.subf %132, %133 : vector<64x128xf32>
    %135 = vector.extract_strided_slice %127 {offsets = [192, 0], sizes = [64, 128], strides = [1, 1]} : vector<256x128xf32> to vector<64x128xf32>
    %136 = arith.mulf %129, %111 : vector<64x128xf32>
    %137 = arith.mulf %128, %134 : vector<64x128xf32>
    %138 = arith.addf %136, %137 : vector<64x128xf32>
    %139 = math.tanh %138 : vector<64x128xf32>
    %140 = arith.mulf %135, %139 : vector<64x128xf32>
    %141 = arith.addf %114, %140 : vector<64x128xf32>
    %c5_i32 = arith.constant 5 : i32
    %142 = arith.index_cast %c5_i32 : i32 to index
    %c0_42 = arith.constant 0 : index
    %c0_43 = arith.constant 0 : index
    %143 = vector.load %arg1[%142, %c0_42, %c0_43] : memref<8x64x128xbf16, #tpu.memory_space<vmem>>, vector<1x64x128xbf16>
    %144 = vector.shape_cast %143 : vector<1x64x128xbf16> to vector<64x128xbf16>
    %145 = arith.extf %144 : vector<64x128xbf16> to vector<64x128xf32>
    %cst_44 = arith.constant dense<0.000000e+00> : vector<256x128xf32>
    %146 = tpu.matmul %1, %145, %cst_44 {dimension_numbers = #tpu.dot_dimension_numbers<[1], [0], [0], [1], [0, 0, 1, 1], [], []>} : vector<256x64xf32>, vector<64x128xf32>, vector<256x128xf32> -> vector<256x128xf32>
    %147 = arith.addf %146, %5 : vector<256x128xf32>
    %cst_45 = arith.constant dense<0.000000e+00> : vector<256x128xf32>
    %148 = tpu.matmul %0, %140, %cst_45 {dimension_numbers = #tpu.dot_dimension_numbers<[1], [0], [0], [1], [0, 0, 1, 1], [], []>} : vector<256x64xf32>, vector<64x128xf32>, vector<256x128xf32> -> vector<256x128xf32>
    %149 = arith.addf %147, %148 : vector<256x128xf32>
    %150 = arith.negf %149 : vector<256x128xf32>
    %151 = math.exp %150 : vector<256x128xf32>
    %cst_46 = arith.constant 1.000000e+00 : f32
    %152 = vector.broadcast %cst_46 : f32 to vector<256x128xf32>
    %153 = arith.addf %152, %151 : vector<256x128xf32>
    %154 = arith.divf %152, %153 : vector<256x128xf32>
    %155 = vector.extract_strided_slice %154 {offsets = [0, 0], sizes = [64, 128], strides = [1, 1]} : vector<256x128xf32> to vector<64x128xf32>
    %156 = vector.extract_strided_slice %154 {offsets = [64, 0], sizes = [64, 128], strides = [1, 1]} : vector<256x128xf32> to vector<64x128xf32>
    %157 = vector.extract_strided_slice %154 {offsets = [128, 0], sizes = [64, 128], strides = [1, 1]} : vector<256x128xf32> to vector<64x128xf32>
    %cst_47 = arith.constant 2.000000e+00 : f32
    %158 = vector.broadcast %cst_47 : f32 to vector<64x128xf32>
    %159 = arith.mulf %158, %157 : vector<64x128xf32>
    %cst_48 = arith.constant 1.000000e+00 : f32
    %160 = vector.broadcast %cst_48 : f32 to vector<64x128xf32>
    %161 = arith.subf %159, %160 : vector<64x128xf32>
    %162 = vector.extract_strided_slice %154 {offsets = [192, 0], sizes = [64, 128], strides = [1, 1]} : vector<256x128xf32> to vector<64x128xf32>
    %163 = arith.mulf %156, %138 : vector<64x128xf32>
    %164 = arith.mulf %155, %161 : vector<64x128xf32>
    %165 = arith.addf %163, %164 : vector<64x128xf32>
    %166 = math.tanh %165 : vector<64x128xf32>
    %167 = arith.mulf %162, %166 : vector<64x128xf32>
    %168 = arith.addf %141, %167 : vector<64x128xf32>
    %c6_i32 = arith.constant 6 : i32
    %169 = arith.index_cast %c6_i32 : i32 to index
    %c0_49 = arith.constant 0 : index
    %c0_50 = arith.constant 0 : index
    %170 = vector.load %arg1[%169, %c0_49, %c0_50] : memref<8x64x128xbf16, #tpu.memory_space<vmem>>, vector<1x64x128xbf16>
    %171 = vector.shape_cast %170 : vector<1x64x128xbf16> to vector<64x128xbf16>
    %172 = arith.extf %171 : vector<64x128xbf16> to vector<64x128xf32>
    %cst_51 = arith.constant dense<0.000000e+00> : vector<256x128xf32>
    %173 = tpu.matmul %1, %172, %cst_51 {dimension_numbers = #tpu.dot_dimension_numbers<[1], [0], [0], [1], [0, 0, 1, 1], [], []>} : vector<256x64xf32>, vector<64x128xf32>, vector<256x128xf32> -> vector<256x128xf32>
    %174 = arith.addf %173, %5 : vector<256x128xf32>
    %cst_52 = arith.constant dense<0.000000e+00> : vector<256x128xf32>
    %175 = tpu.matmul %0, %167, %cst_52 {dimension_numbers = #tpu.dot_dimension_numbers<[1], [0], [0], [1], [0, 0, 1, 1], [], []>} : vector<256x64xf32>, vector<64x128xf32>, vector<256x128xf32> -> vector<256x128xf32>
    %176 = arith.addf %174, %175 : vector<256x128xf32>
    %177 = arith.negf %176 : vector<256x128xf32>
    %178 = math.exp %177 : vector<256x128xf32>
    %cst_53 = arith.constant 1.000000e+00 : f32
    %179 = vector.broadcast %cst_53 : f32 to vector<256x128xf32>
    %180 = arith.addf %179, %178 : vector<256x128xf32>
    %181 = arith.divf %179, %180 : vector<256x128xf32>
    %182 = vector.extract_strided_slice %181 {offsets = [0, 0], sizes = [64, 128], strides = [1, 1]} : vector<256x128xf32> to vector<64x128xf32>
    %183 = vector.extract_strided_slice %181 {offsets = [64, 0], sizes = [64, 128], strides = [1, 1]} : vector<256x128xf32> to vector<64x128xf32>
    %184 = vector.extract_strided_slice %181 {offsets = [128, 0], sizes = [64, 128], strides = [1, 1]} : vector<256x128xf32> to vector<64x128xf32>
    %cst_54 = arith.constant 2.000000e+00 : f32
    %185 = vector.broadcast %cst_54 : f32 to vector<64x128xf32>
    %186 = arith.mulf %185, %184 : vector<64x128xf32>
    %cst_55 = arith.constant 1.000000e+00 : f32
    %187 = vector.broadcast %cst_55 : f32 to vector<64x128xf32>
    %188 = arith.subf %186, %187 : vector<64x128xf32>
    %189 = vector.extract_strided_slice %181 {offsets = [192, 0], sizes = [64, 128], strides = [1, 1]} : vector<256x128xf32> to vector<64x128xf32>
    %190 = arith.mulf %183, %165 : vector<64x128xf32>
    %191 = arith.mulf %182, %188 : vector<64x128xf32>
    %192 = arith.addf %190, %191 : vector<64x128xf32>
    %193 = math.tanh %192 : vector<64x128xf32>
    %194 = arith.mulf %189, %193 : vector<64x128xf32>
    %195 = arith.addf %168, %194 : vector<64x128xf32>
    %c7_i32 = arith.constant 7 : i32
    %196 = arith.index_cast %c7_i32 : i32 to index
    %c0_56 = arith.constant 0 : index
    %c0_57 = arith.constant 0 : index
    %197 = vector.load %arg1[%196, %c0_56, %c0_57] : memref<8x64x128xbf16, #tpu.memory_space<vmem>>, vector<1x64x128xbf16>
    %198 = vector.shape_cast %197 : vector<1x64x128xbf16> to vector<64x128xbf16>
    %199 = arith.extf %198 : vector<64x128xbf16> to vector<64x128xf32>
    %cst_58 = arith.constant dense<0.000000e+00> : vector<256x128xf32>
    %200 = tpu.matmul %1, %199, %cst_58 {dimension_numbers = #tpu.dot_dimension_numbers<[1], [0], [0], [1], [0, 0, 1, 1], [], []>} : vector<256x64xf32>, vector<64x128xf32>, vector<256x128xf32> -> vector<256x128xf32>
    %201 = arith.addf %200, %5 : vector<256x128xf32>
    %cst_59 = arith.constant dense<0.000000e+00> : vector<256x128xf32>
    %202 = tpu.matmul %0, %194, %cst_59 {dimension_numbers = #tpu.dot_dimension_numbers<[1], [0], [0], [1], [0, 0, 1, 1], [], []>} : vector<256x64xf32>, vector<64x128xf32>, vector<256x128xf32> -> vector<256x128xf32>
    %203 = arith.addf %201, %202 : vector<256x128xf32>
    %204 = arith.negf %203 : vector<256x128xf32>
    %205 = math.exp %204 : vector<256x128xf32>
    %cst_60 = arith.constant 1.000000e+00 : f32
    %206 = vector.broadcast %cst_60 : f32 to vector<256x128xf32>
    %207 = arith.addf %206, %205 : vector<256x128xf32>
    %208 = arith.divf %206, %207 : vector<256x128xf32>
    %209 = vector.extract_strided_slice %208 {offsets = [0, 0], sizes = [64, 128], strides = [1, 1]} : vector<256x128xf32> to vector<64x128xf32>
    %210 = vector.extract_strided_slice %208 {offsets = [64, 0], sizes = [64, 128], strides = [1, 1]} : vector<256x128xf32> to vector<64x128xf32>
    %211 = vector.extract_strided_slice %208 {offsets = [128, 0], sizes = [64, 128], strides = [1, 1]} : vector<256x128xf32> to vector<64x128xf32>
    %cst_61 = arith.constant 2.000000e+00 : f32
    %212 = vector.broadcast %cst_61 : f32 to vector<64x128xf32>
    %213 = arith.mulf %212, %211 : vector<64x128xf32>
    %cst_62 = arith.constant 1.000000e+00 : f32
    %214 = vector.broadcast %cst_62 : f32 to vector<64x128xf32>
    %215 = arith.subf %213, %214 : vector<64x128xf32>
    %216 = vector.extract_strided_slice %208 {offsets = [192, 0], sizes = [64, 128], strides = [1, 1]} : vector<256x128xf32> to vector<64x128xf32>
    %217 = arith.mulf %210, %192 : vector<64x128xf32>
    %218 = arith.mulf %209, %215 : vector<64x128xf32>
    %219 = arith.addf %217, %218 : vector<64x128xf32>
    %220 = math.tanh %219 : vector<64x128xf32>
    %221 = arith.mulf %216, %220 : vector<64x128xf32>
    %222 = arith.addf %195, %221 : vector<64x128xf32>
    %c8_i32 = arith.constant 8 : i32
    %223 = vector.broadcast %2 : vector<64x1xf32> to vector<64x128xf32>
    %224 = arith.mulf %222, %223 : vector<64x128xf32>
    %cst_63 = arith.constant dense<0.000000e+00> : vector<128xf32>
    %225 = vector.multi_reduction <add>, %224, %cst_63 [0] : vector<64x128xf32> to vector<128xf32>
    %226 = vector.shape_cast %225 : vector<128xf32> to vector<1x128xf32>
    %c0_64 = arith.constant 0 : index
    %c0_65 = arith.constant 0 : index
    %227 = vector.load %arg6[%c0_64, %c0_65] : memref<1x128xf32, #tpu.memory_space<vmem>>, vector<1x128xf32>
    tpu.vector_store %arg6[%c0_64, %c0_65], %226 {strides = array<i32>} : memref<1x128xf32, #tpu.memory_space<vmem>>, vector<1x128xf32>,
    return
  }
  func.func @transform_0(%arg0: i32) -> (i32, i32, i32) {
    %c0_i32 = arith.constant 0 : i32
    %c0_i32_0 = arith.constant 0 : i32
    %c0_i32_1 = arith.constant 0 : i32
    return %c0_i32, %c0_i32_0, %arg0 : i32, i32, i32
  }
  func.func @transform_1(%arg0: i32) -> (i32, i32) {
    %c0_i32 = arith.constant 0 : i32
    %c0_i32_0 = arith.constant 0 : i32
    %c0_i32_1 = arith.constant 0 : i32
    return %c0_i32, %c0_i32_0 : i32, i32
  }
  func.func @transform_2(%arg0: i32) -> (i32, i32) {
    %c0_i32 = arith.constant 0 : i32
    %c0_i32_0 = arith.constant 0 : i32
    %c0_i32_1 = arith.constant 0 : i32
    return %c0_i32, %c0_i32_0 : i32, i32
  }
  func.func @transform_3(%arg0: i32) -> (i32, i32) {
    %c0_i32 = arith.constant 0 : i32
    %c0_i32_0 = arith.constant 0 : i32
    %c0_i32_1 = arith.constant 0 : i32
    return %c0_i32, %c0_i32_0 : i32, i32
  }
  func.func @transform_4(%arg0: i32) -> (i32, i32) {
    %c0_i32 = arith.constant 0 : i32
    %c0_i32_0 = arith.constant 0 : i32
    %c0_i32_1 = arith.constant 0 : i32
    return %c0_i32, %c0_i32_0 : i32, i32
  }
  func.func @transform_5(%arg0: i32) -> (i32, i32) {
    %c0_i32 = arith.constant 0 : i32
    %c0_i32_0 = arith.constant 0 : i32
    return %c0_i32, %arg0 : i32, i32
  }
}

</mosaic_0001>

<llo_original>
// kernel: tpu_custom_call.1
$region0: #{tpu_custom_call.1}
  #allocation0 [shape = 'u32[]', space=smem, size = 0x4, offset = 0x4, fixed_abs, tag = 'smem constant byte address 0x4 - core index']
  #allocation1 [shape = 'u32[144,128]{1,0:T(1,128)}', space=vmem, size = 0x12000, scoped, tag = 'internal scratch']
  %s0 = inlined_call_operand.vmem [shape: bf16[8,64,128], index: 0, kind: input, shape index: {}]
  %s1 = inlined_call_operand.vmem [shape: f32[256,64], index: 1, kind: input, shape index: {}]
  %s2 = inlined_call_operand.vmem [shape: f32[256,64], index: 2, kind: input, shape index: {}]
  %s3 = inlined_call_operand.vmem [shape: f32[256,1], index: 3, kind: input, shape index: {}]
  %s4 = inlined_call_operand.vmem [shape: f32[64,1], index: 4, kind: input, shape index: {}]
  %s5 = inlined_call_operand.hbm [shape: f32[1,128], index: 5, kind: output, shape index: {}]
  %s6 = sld [smem:[#allocation0]]
  $region30: #{tpu_custom_call.1} parent=0
    _
  %s8 = ssub.s32 1, %s6
  %s9 = scalar_select 0, %s8, %s6
  $region1: #{tpu_custom_call.1} parent=0
    #allocation2 [shape = 'u8[512]{0}', space=vmem, size = 0x400, scoped, tag = 'output window, operand 0, single buffered']
    #allocation3 [shape = 's32[1]{0}', space=sflag, size = 0x4, scoped, tag = 'scoped memory for tpu_custom_call.1']
    %10 = vsyncpa [#allocation3], 0
    // Predicated region
    $region2: #{tpu_custom_call.1} parent=1 // pred_check
      _
    $region3: #{tpu_custom_call.1} parent=1 // pred_check_branch
      %12 = sbr.rel (0) target = $region5
    $region4: #{tpu_custom_call.1} parent=1 // pred_region
      _
    $region5: #{tpu_custom_call.1} parent=1 // pred_fallthru
      _
    // Predicated region
    $region6: #{tpu_custom_call.1} parent=1 // pred_check
      _
    $region7: #{tpu_custom_call.1} parent=1 // pred_check_branch
      %14 = sbr.rel (0) target = $region9
    $region8: #{tpu_custom_call.1} parent=1 // pred_region
      _
    $region9: #{tpu_custom_call.1} parent=1 // pred_fallthru
      _
    // Predicated region
    $region10: #{tpu_custom_call.1} parent=1 // pred_check
      _
    $region11: #{tpu_custom_call.1} parent=1 // pred_check_branch
      %16 = sbr.rel (0) target = $region13
    $region12: #{tpu_custom_call.1} parent=1 // pred_region
      _
    $region13: #{tpu_custom_call.1} parent=1 // pred_fallthru
      _
    // Predicated region
    $region14: #{tpu_custom_call.1} parent=1 // pred_check
      _
    $region15: #{tpu_custom_call.1} parent=1 // pred_check_branch
      %18 = sbr.rel (0) target = $region17
    $region16: #{tpu_custom_call.1} parent=1 // pred_region
      _
    $region17: #{tpu_custom_call.1} parent=1 // pred_fallthru
      _
    // Predicated region
    $region18: #{tpu_custom_call.1} parent=1 // pred_check
      _
    $region19: #{tpu_custom_call.1} parent=1 // pred_check_branch
      %20 = sbr.rel (0) target = $region21
    $region20: #{tpu_custom_call.1} parent=1 // pred_region
      _
    $region21: #{tpu_custom_call.1} parent=1 // pred_fallthru
      _
    %v21 = vld [vmem:[%s1] sm:$0xff]
    %v22 = vld [vmem:[%s1 + $0x8] sm:$0xff]
    %v23 = vld [vmem:[%s1 + $0x10] sm:$0xff]
    %v24 = vld [vmem:[%s1 + $0x18] sm:$0xff]
    %v25 = vld [vmem:[%s1 + $0x20] sm:$0xff]
    %v26 = vld [vmem:[%s1 + $0x28] sm:$0xff]
    %v27 = vld [vmem:[%s1 + $0x30] sm:$0xff]
    %v28 = vld [vmem:[%s1 + $0x38] sm:$0xff]
    %v29 = vld [vmem:[%s1 + $0x40] sm:$0xff]
    %v30 = vld [vmem:[%s1 + $0x48] sm:$0xff]
    %v31 = vld [vmem:[%s1 + $0x50] sm:$0xff]
    %v32 = vld [vmem:[%s1 + $0x58] sm:$0xff]
    %v33 = vld [vmem:[%s1 + $0x60] sm:$0xff]
    %v34 = vld [vmem:[%s1 + $0x68] sm:$0xff]
    %v35 = vld [vmem:[%s1 + $0x70] sm:$0xff]
    %v36 = vld [vmem:[%s1 + $0x78] sm:$0xff]
    %v37 = vld [vmem:[%s1 + $0x80] sm:$0xff]
    %v38 = vld [vmem:[%s1 + $0x88] sm:$0xff]
    %v39 = vld [vmem:[%s1 + $0x90] sm:$0xff]
    %v40 = vld [vmem:[%s1 + $0x98] sm:$0xff]
    %v41 = vld [vmem:[%s1 + $0xa0] sm:$0xff]
    %v42 = vld [vmem:[%s1 + $0xa8] sm:$0xff]
    %v43 = vld [vmem:[%s1 + $0xb0] sm:$0xff]
    %v44 = vld [vmem:[%s1 + $0xb8] sm:$0xff]
    %v45 = vld [vmem:[%s1 + $0xc0] sm:$0xff]
    %v46 = vld [vmem:[%s1 + $0xc8] sm:$0xff]
    %v47 = vld [vmem:[%s1 + $0xd0] sm:$0xff]
    %v48 = vld [vmem:[%s1 + $0xd8] sm:$0xff]
    %v49 = vld [vmem:[%s1 + $0xe0] sm:$0xff]
    %v50 = vld [vmem:[%s1 + $0xe8] sm:$0xff]
    %v51 = vld [vmem:[%s1 + $0xf0] sm:$0xff]
    %v52 = vld [vmem:[%s1 + $0xf8] sm:$0xff]
    %v53 = vld [vmem:[%s2] sm:$0xff]
    %v54 = vld [vmem:[%s2 + $0x8] sm:$0xff]
    %v55 = vld [vmem:[%s2 + $0x10] sm:$0xff]
    %v56 = vld [vmem:[%s2 + $0x18] sm:$0xff]
    %v57 = vld [vmem:[%s2 + $0x20] sm:$0xff]
    %v58 = vld [vmem:[%s2 + $0x28] sm:$0xff]
    %v59 = vld [vmem:[%s2 + $0x30] sm:$0xff]
    %v60 = vld [vmem:[%s2 + $0x38] sm:$0xff]
    %v61 = vld [vmem:[%s2 + $0x40] sm:$0xff]
    %v62 = vld [vmem:[%s2 + $0x48] sm:$0xff]
    %v63 = vld [vmem:[%s2 + $0x50] sm:$0xff]
    %v64 = vld [vmem:[%s2 + $0x58] sm:$0xff]
    %v65 = vld [vmem:[%s2 + $0x60] sm:$0xff]
    %v66 = vld [vmem:[%s2 + $0x68] sm:$0xff]
    %v67 = vld [vmem:[%s2 + $0x70] sm:$0xff]
    %v68 = vld [vmem:[%s2 + $0x78] sm:$0xff]
    %v69 = vld [vmem:[%s2 + $0x80] sm:$0xff]
    %v70 = vld [vmem:[%s2 + $0x88] sm:$0xff]
    %v71 = vld [vmem:[%s2 + $0x90] sm:$0xff]
    %v72 = vld [vmem:[%s2 + $0x98] sm:$0xff]
    %v73 = vld [vmem:[%s2 + $0xa0] sm:$0xff]
    %v74 = vld [vmem:[%s2 + $0xa8] sm:$0xff]
    %v75 = vld [vmem:[%s2 + $0xb0] sm:$0xff]
    %v76 = vld [vmem:[%s2 + $0xb8] sm:$0xff]
    %v77 = vld [vmem:[%s2 + $0xc0] sm:$0xff]
    %v78 = vld [vmem:[%s2 + $0xc8] sm:$0xff]
    %v79 = vld [vmem:[%s2 + $0xd0] sm:$0xff]
    %v80 = vld [vmem:[%s2 + $0xd8] sm:$0xff]
    %v81 = vld [vmem:[%s2 + $0xe0] sm:$0xff]
    %v82 = vld [vmem:[%s2 + $0xe8] sm:$0xff]
    %v83 = vld [vmem:[%s2 + $0xf0] sm:$0xff]
    %v84 = vld [vmem:[%s2 + $0xf8] sm:$0xff]
    %v85 = vld [vmem:[%s4] sm:$0xff]
    %v86 = vld [vmem:[%s4 + $0x8] sm:$0xff]
    %v87 = vld [vmem:[%s4 + $0x10] sm:$0xff]
    %v88 = vld [vmem:[%s4 + $0x18] sm:$0xff]
    %v89 = vld [vmem:[%s4 + $0x20] sm:$0xff]
    %v90 = vld [vmem:[%s4 + $0x28] sm:$0xff]
    %v91 = vld [vmem:[%s4 + $0x30] sm:$0xff]
    %v92 = vld [vmem:[%s4 + $0x38] sm:$0xff]
    %v93 = vld [vmem:[%s3] sm:$0xff]
    %v94 = vld [vmem:[%s3 + $0x8] sm:$0xff]
    %v95 = vld [vmem:[%s3 + $0x10] sm:$0xff]
    %v96 = vld [vmem:[%s3 + $0x18] sm:$0xff]
    %v97 = vld [vmem:[%s3 + $0x20] sm:$0xff]
    %v98 = vld [vmem:[%s3 + $0x28] sm:$0xff]
    %v99 = vld [vmem:[%s3 + $0x30] sm:$0xff]
    %v100 = vld [vmem:[%s3 + $0x38] sm:$0xff]
    %v101 = vld [vmem:[%s3 + $0x40] sm:$0xff]
    %v102 = vld [vmem:[%s3 + $0x48] sm:$0xff]
    %v103 = vld [vmem:[%s3 + $0x50] sm:$0xff]
    %v104 = vld [vmem:[%s3 + $0x58] sm:$0xff]
    %v105 = vld [vmem:[%s3 + $0x60] sm:$0xff]
    %v106 = vld [vmem:[%s3 + $0x68] sm:$0xff]
    %v107 = vld [vmem:[%s3 + $0x70] sm:$0xff]
    %v108 = vld [vmem:[%s3 + $0x78] sm:$0xff]
    %v109 = vld [vmem:[%s3 + $0x80] sm:$0xff]
    %v110 = vld [vmem:[%s3 + $0x88] sm:$0xff]
    %v111 = vld [vmem:[%s3 + $0x90] sm:$0xff]
    %v112 = vld [vmem:[%s3 + $0x98] sm:$0xff]
    %v113 = vld [vmem:[%s3 + $0xa0] sm:$0xff]
    %v114 = vld [vmem:[%s3 + $0xa8] sm:$0xff]
    %v115 = vld [vmem:[%s3 + $0xb0] sm:$0xff]
    %v116 = vld [vmem:[%s3 + $0xb8] sm:$0xff]
    %v117 = vld [vmem:[%s3 + $0xc0] sm:$0xff]
    %v118 = vld [vmem:[%s3 + $0xc8] sm:$0xff]
    %v119 = vld [vmem:[%s3 + $0xd0] sm:$0xff]
    %v120 = vld [vmem:[%s3 + $0xd8] sm:$0xff]
    %v121 = vld [vmem:[%s3 + $0xe0] sm:$0xff]
    %v122 = vld [vmem:[%s3 + $0xe8] sm:$0xff]
    %v123 = vld [vmem:[%s3 + $0xf0] sm:$0xff]
    %v124 = vld [vmem:[%s3 + $0xf8] sm:$0xff]
    %126 = vset.pattern.permute.xlu0 0
    %127 = vperm.xlu0 %126, %v93
    %v128 = vpop.permute.xlu0 %127
    %131 = vset.pattern.permute.xlu0 0
    %132 = vperm.xlu0 %131, %v94
    %v133 = vpop.permute.xlu0 %132
    %136 = vset.pattern.permute.xlu0 0
    %137 = vperm.xlu0 %136, %v95
    %v138 = vpop.permute.xlu0 %137
    %141 = vset.pattern.permute.xlu0 0
    %142 = vperm.xlu0 %141, %v96
    %v143 = vpop.permute.xlu0 %142
    %146 = vset.pattern.permute.xlu0 0
    %147 = vperm.xlu0 %146, %v97
    %v148 = vpop.permute.xlu0 %147
    %151 = vset.pattern.permute.xlu0 0
    %152 = vperm.xlu0 %151, %v98
    %v153 = vpop.permute.xlu0 %152
    %156 = vset.pattern.permute.xlu0 0
    %157 = vperm.xlu0 %156, %v99
    %v158 = vpop.permute.xlu0 %157
    %161 = vset.pattern.permute.xlu0 0
    %162 = vperm.xlu0 %161, %v100
    %v163 = vpop.permute.xlu0 %162
    %166 = vset.pattern.permute.xlu0 0
    %167 = vperm.xlu0 %166, %v101
    %v168 = vpop.permute.xlu0 %167
    %171 = vset.pattern.permute.xlu0 0
    %172 = vperm.xlu0 %171, %v102
    %v173 = vpop.permute.xlu0 %172
    %176 = vset.pattern.permute.xlu0 0
    %177 = vperm.xlu0 %176, %v103
    %v178 = vpop.permute.xlu0 %177
    %181 = vset.pattern.permute.xlu0 0
    %182 = vperm.xlu0 %181, %v104
    %v183 = vpop.permute.xlu0 %182
    %186 = vset.pattern.permute.xlu0 0
    %187 = vperm.xlu0 %186, %v105
    %v188 = vpop.permute.xlu0 %187
    %191 = vset.pattern.permute.xlu0 0
    %192 = vperm.xlu0 %191, %v106
    %v193 = vpop.permute.xlu0 %192
    %196 = vset.pattern.permute.xlu0 0
    %197 = vperm.xlu0 %196, %v107
    %v198 = vpop.permute.xlu0 %197
    %201 = vset.pattern.permute.xlu0 0
    %202 = vperm.xlu0 %201, %v108
    %v203 = vpop.permute.xlu0 %202
    %206 = vset.pattern.permute.xlu0 0
    %207 = vperm.xlu0 %206, %v109
    %v208 = vpop.permute.xlu0 %207
    %211 = vset.pattern.permute.xlu0 0
    %212 = vperm.xlu0 %211, %v110
    %v213 = vpop.permute.xlu0 %212
    %216 = vset.pattern.permute.xlu0 0
    %217 = vperm.xlu0 %216, %v111
    %v218 = vpop.permute.xlu0 %217
    %221 = vset.pattern.permute.xlu0 0
    %222 = vperm.xlu0 %221, %v112
    %v223 = vpop.permute.xlu0 %222
    %226 = vset.pattern.permute.xlu0 0
    %227 = vperm.xlu0 %226, %v113
    %v228 = vpop.permute.xlu0 %227
    %231 = vset.pattern.permute.xlu0 0
    %232 = vperm.xlu0 %231, %v114
    %v233 = vpop.permute.xlu0 %232
    %236 = vset.pattern.permute.xlu0 0
    %237 = vperm.xlu0 %236, %v115
    %v238 = vpop.permute.xlu0 %237
    %241 = vset.pattern.permute.xlu0 0
    %242 = vperm.xlu0 %241, %v116
    %v243 = vpop.permute.xlu0 %242
    %246 = vset.pattern.permute.xlu0 0
    %247 = vperm.xlu0 %246, %v117
    %v248 = vpop.permute.xlu0 %247
    %251 = vset.pattern.permute.xlu0 0
    %252 = vperm.xlu0 %251, %v118
    %v253 = vpop.permute.xlu0 %252
    %256 = vset.pattern.permute.xlu0 0
    %257 = vperm.xlu0 %256, %v119
    %v258 = vpop.permute.xlu0 %257
    %261 = vset.pattern.permute.xlu0 0
    %262 = vperm.xlu0 %261, %v120
    %v263 = vpop.permute.xlu0 %262
    %266 = vset.pattern.permute.xlu0 0
    %267 = vperm.xlu0 %266, %v121
    %v268 = vpop.permute.xlu0 %267
    %271 = vset.pattern.permute.xlu0 0
    %272 = vperm.xlu0 %271, %v122
    %v273 = vpop.permute.xlu0 %272
    %276 = vset.pattern.permute.xlu0 0
    %277 = vperm.xlu0 %276, %v123
    %v278 = vpop.permute.xlu0 %277
    %281 = vset.pattern.permute.xlu0 0
    %282 = vperm.xlu0 %281, %v124
    %v283 = vpop.permute.xlu0 %282
    %v285 = vld [vmem:[%s0] sm:$0xf]
    %v286 = vld [vmem:[%s0 + $0x4] sm:$0xf]
    %v287 = vld [vmem:[%s0 + $0x8] sm:$0xf]
    %v288 = vld [vmem:[%s0 + $0xc] sm:$0xf]
    %v289 = vld [vmem:[%s0 + $0x10] sm:$0xf]
    %v290 = vld [vmem:[%s0 + $0x14] sm:$0xf]
    %v291 = vld [vmem:[%s0 + $0x18] sm:$0xf]
    %v292 = vld [vmem:[%s0 + $0x1c] sm:$0xf]
    %v293 = vunpack.c.l.bf16 %v285
    %v294 = vunpack.c.l.bf16 %v286
    %v295 = vunpack.c.l.bf16 %v287
    %v296 = vunpack.c.l.bf16 %v288
    %v297 = vunpack.c.l.bf16 %v289
    %v298 = vunpack.c.l.bf16 %v290
    %v299 = vunpack.c.l.bf16 %v291
    %v300 = vunpack.c.l.bf16 %v292
    %vm301 = vcmask 523264
    %v303 = vsel %vm301, %v53, 0
    %v306 = vsel %vm301, %v54, 0
    %v309 = vsel %vm301, %v55, 0
    %v312 = vsel %vm301, %v56, 0
    %v315 = vsel %vm301, %v57, 0
    %v318 = vsel %vm301, %v58, 0
    %v321 = vsel %vm301, %v59, 0
    %v324 = vsel %vm301, %v60, 0
    %v327 = vsel %vm301, %v61, 0
    %v330 = vsel %vm301, %v62, 0
    %v333 = vsel %vm301, %v63, 0
    %v336 = vsel %vm301, %v64, 0
    %v339 = vsel %vm301, %v65, 0
    %v342 = vsel %vm301, %v66, 0
    %v345 = vsel %vm301, %v67, 0
    %v348 = vsel %vm301, %v68, 0
    %v351 = vsel %vm301, %v69, 0
    %v354 = vsel %vm301, %v70, 0
    %v357 = vsel %vm301, %v71, 0
    %v360 = vsel %vm301, %v72, 0
    %v363 = vsel %vm301, %v73, 0
    %v366 = vsel %vm301, %v74, 0
    %v369 = vsel %vm301, %v75, 0
    %v372 = vsel %vm301, %v76, 0
    %v375 = vsel %vm301, %v77, 0
    %v378 = vsel %vm301, %v78, 0
    %v381 = vsel %vm301, %v79, 0
    %v384 = vsel %vm301, %v80, 0
    %v387 = vsel %vm301, %v81, 0
    %v390 = vsel %vm301, %v82, 0
    %v393 = vsel %vm301, %v83, 0
    %v396 = vsel %vm301, %v84, 0
    %398 = vmatprep.subr.mxu0 0.0
    %399 = vmatpush1.msra.mxu0 %v293
    %400 = vmatprep.subr.mxu0 0.0
    %401 = vmatpush1.msra.mxu0 %v294
    %402 = vmatprep.subr.mxu0 0.0
    %403 = vmatpush1.msra.mxu0 %v295
    %404 = vmatprep.subr.mxu0 0.0
    %405 = vmatpush1.msra.mxu0 %v296
    %406 = vmatprep.subr.mxu0 0.0
    %407 = vmatpush1.msra.mxu0 %v297
    %408 = vmatprep.subr.mxu0 0.0
    %409 = vmatpush1.msra.mxu0 %v298
    %410 = vmatprep.subr.mxu0 0.0
    %411 = vmatpush1.msra.mxu0 %v299
    %412 = vmatprep.subr.mxu0 0.0
    %413 = vmatpush1.msra.mxu0 %v300
    %414 = vmatprep.subr.mxu0 0.0
    %415 = vmatpush1.msra.mxu0 0.0
    %416 = vmatprep.subr.mxu0 0.0
    %417 = vmatpush1.msra.mxu0 0.0
    %418 = vmatprep.subr.mxu0 0.0
    %419 = vmatpush1.msra.mxu0 0.0
    %420 = vmatprep.subr.mxu0 0.0
    %421 = vmatpush1.msra.mxu0 0.0
    %422 = vmatprep.subr.mxu0 0.0
    %423 = vmatpush1.msra.mxu0 0.0
    %424 = vmatprep.subr.mxu0 0.0
    %425 = vmatpush1.msra.mxu0 0.0
    %426 = vmatprep.subr.mxu0 0.0
    %427 = vmatpush1.msra.mxu0 0.0
    %428 = vmatprep.subr.mxu0 0.0
    %429 = vmatpush1.msra.mxu0 0.0
    %430 = vmatprep.subr.mxu0 0.0
    %431 = vmatpush1.msra.mxu0 0.0
    %432 = vmatprep.subr.mxu0 0.0
    %433 = vmatpush1.msra.mxu0 0.0
    %434 = vmatprep.subr.mxu0 0.0
    %435 = vmatpush1.msra.mxu0 0.0
    %436 = vmatprep.subr.mxu0 0.0
    %437 = vmatpush1.msra.mxu0 0.0
    %438 = vmatprep.subr.mxu0 0.0
    %439 = vmatpush1.msra.mxu0 0.0
    %440 = vmatprep.subr.mxu0 0.0
    %441 = vmatpush1.msra.mxu0 0.0
    %442 = vmatprep.subr.mxu0 0.0
    %443 = vmatpush1.msra.mxu0 0.0
    %444 = vmatprep.subr.mxu0 0.0
    %445 = vmatpush1.msra.mxu0 0.0
    %446 = vmatprep.subr.mxu0 0.0
    %447 = vmatpush1.msra.mxu0 0.0
    %448 = vmatprep.subr.mxu0 0.0
    %449 = vmatpush1.msra.mxu0 0.0
    %450 = vmatprep.subr.mxu0 0.0
    %451 = vmatpush1.msra.mxu0 0.0
    %452 = vmatprep.subr.mxu0 0.0
    %453 = vmatpush1.msra.mxu0 0.0
    %454 = vmatprep.subr.mxu0 0.0
    %455 = vmatpush1.msra.mxu0 0.0
    %456 = vmatprep.subr.mxu0 0.0
    %457 = vmatpush1.msra.mxu0 0.0
    %458 = vmatprep.subr.mxu0 0.0
    %459 = vmatpush1.msra.mxu0 0.0
    %460 = vmatprep.subr.mxu0 0.0
    %461 = vmatpush1.msra.mxu0 0.0
    %462 = vmatprep.mubr.f32.mxu0 0.0
    %463 = vmatmul.mubr.f32.gmra.mrb[0].mxu0 %v303
    %v464 = vpop.f32.mrb[0].mxu0
    %v465 = vadd.f32 %v128, %v464
    %v466 = vpop.f32.mrb[0].mxu0
    %467 = vmatprep.mubr.f32.mxu0 0.0
    %468 = vmatmul.mubr.f32.gmra.mrb[0].mxu0 %v306
    %v469 = vpop.f32.mrb[0].mxu0
    %v470 = vadd.f32 %v133, %v469
    %v471 = vpop.f32.mrb[0].mxu0
    %472 = vmatprep.mubr.f32.mxu0 0.0
    %473 = vmatmul.mubr.f32.gmra.mrb[0].mxu0 %v309
    %v474 = vpop.f32.mrb[0].mxu0
    %v475 = vadd.f32 %v138, %v474
    %v476 = vpop.f32.mrb[0].mxu0
    %477 = vmatprep.mubr.f32.mxu0 0.0
    %478 = vmatmul.mubr.f32.gmra.mrb[0].mxu0 %v312
    %v479 = vpop.f32.mrb[0].mxu0
    %v480 = vadd.f32 %v143, %v479
    %v481 = vpop.f32.mrb[0].mxu0
    %482 = vmatprep.mubr.f32.mxu0 0.0
    %483 = vmatmul.mubr.f32.gmra.mrb[0].mxu0 %v315
    %v484 = vpop.f32.mrb[0].mxu0
    %v485 = vadd.f32 %v148, %v484
    %v486 = vpop.f32.mrb[0].mxu0
    %487 = vmatprep.mubr.f32.mxu0 0.0
    %488 = vmatmul.mubr.f32.gmra.mrb[0].mxu0 %v318
    %v489 = vpop.f32.mrb[0].mxu0
    %v490 = vadd.f32 %v153, %v489
    %v491 = vpop.f32.mrb[0].mxu0
    %492 = vmatprep.mubr.f32.mxu0 0.0
    %493 = vmatmul.mubr.f32.gmra.mrb[0].mxu0 %v321
    %v494 = vpop.f32.mrb[0].mxu0
    %v495 = vadd.f32 %v158, %v494
    %v496 = vpop.f32.mrb[0].mxu0
    %497 = vmatprep.mubr.f32.mxu0 0.0
    %498 = vmatmul.mubr.f32.gmra.mrb[0].mxu0 %v324
    %v499 = vpop.f32.mrb[0].mxu0
    %v500 = vadd.f32 %v163, %v499
    %v501 = vpop.f32.mrb[0].mxu0
    %502 = vmatprep.mubr.f32.mxu0 0.0
    %503 = vmatmul.mubr.f32.gmra.mrb[0].mxu0 %v327
    %v504 = vpop.f32.mrb[0].mxu0
    %v505 = vadd.f32 %v168, %v504
    %v506 = vpop.f32.mrb[0].mxu0
    %507 = vmatprep.mubr.f32.mxu0 0.0
    %508 = vmatmul.mubr.f32.gmra.mrb[0].mxu0 %v330
    %v509 = vpop.f32.mrb[0].mxu0
    %v510 = vadd.f32 %v173, %v509
    %v511 = vpop.f32.mrb[0].mxu0
    %512 = vmatprep.mubr.f32.mxu0 0.0
    %513 = vmatmul.mubr.f32.gmra.mrb[0].mxu0 %v333
    %v514 = vpop.f32.mrb[0].mxu0
    %v515 = vadd.f32 %v178, %v514
    %v516 = vpop.f32.mrb[0].mxu0
    %517 = vmatprep.mubr.f32.mxu0 0.0
    %518 = vmatmul.mubr.f32.gmra.mrb[0].mxu0 %v336
    %v519 = vpop.f32.mrb[0].mxu0
    %v520 = vadd.f32 %v183, %v519
    %v521 = vpop.f32.mrb[0].mxu0
    %522 = vmatprep.mubr.f32.mxu0 0.0
    %523 = vmatmul.mubr.f32.gmra.mrb[0].mxu0 %v339
    %v524 = vpop.f32.mrb[0].mxu0
    %v525 = vadd.f32 %v188, %v524
    %v526 = vpop.f32.mrb[0].mxu0
    %527 = vmatprep.mubr.f32.mxu0 0.0
    %528 = vmatmul.mubr.f32.gmra.mrb[0].mxu0 %v342
    %v529 = vpop.f32.mrb[0].mxu0
    %v530 = vadd.f32 %v193, %v529
    %v531 = vpop.f32.mrb[0].mxu0
    %532 = vmatprep.mubr.f32.mxu0 0.0
    %533 = vmatmul.mubr.f32.gmra.mrb[0].mxu0 %v345
    %v534 = vpop.f32.mrb[0].mxu0
    %v535 = vadd.f32 %v198, %v534
    %v536 = vpop.f32.mrb[0].mxu0
    %537 = vmatprep.mubr.f32.mxu0 0.0
    %538 = vmatmul.mubr.f32.gmra.mrb[0].mxu0 %v348
    %v539 = vpop.f32.mrb[0].mxu0
    %v540 = vadd.f32 %v203, %v539
    %v541 = vpop.f32.mrb[0].mxu0
    %542 = vmatprep.mubr.f32.mxu0 0.0
    %543 = vmatmul.mubr.f32.gmra.mrb[0].mxu0 %v351
    %v544 = vpop.f32.mrb[0].mxu0
    %v545 = vadd.f32 %v208, %v544
    %v546 = vpop.f32.mrb[0].mxu0
    %547 = vmatprep.mubr.f32.mxu0 0.0
    %548 = vmatmul.mubr.f32.gmra.mrb[0].mxu0 %v354
    %v549 = vpop.f32.mrb[0].mxu0
    %v550 = vadd.f32 %v213, %v549
    %v551 = vpop.f32.mrb[0].mxu0
    %552 = vmatprep.mubr.f32.mxu0 0.0
    %553 = vmatmul.mubr.f32.gmra.mrb[0].mxu0 %v357
    %v554 = vpop.f32.mrb[0].mxu0
    %v555 = vadd.f32 %v218, %v554
    %v556 = vpop.f32.mrb[0].mxu0
    %557 = vmatprep.mubr.f32.mxu0 0.0
    %558 = vmatmul.mubr.f32.gmra.mrb[0].mxu0 %v360
    %v559 = vpop.f32.mrb[0].mxu0
    %v560 = vadd.f32 %v223, %v559
    %v561 = vpop.f32.mrb[0].mxu0
    %562 = vmatprep.mubr.f32.mxu0 0.0
    %563 = vmatmul.mubr.f32.gmra.mrb[0].mxu0 %v363
    %v564 = vpop.f32.mrb[0].mxu0
    %v565 = vadd.f32 %v228, %v564
    %v566 = vpop.f32.mrb[0].mxu0
    %567 = vmatprep.mubr.f32.mxu0 0.0
    %568 = vmatmul.mubr.f32.gmra.mrb[0].mxu0 %v366
    %v569 = vpop.f32.mrb[0].mxu0
    %v570 = vadd.f32 %v233, %v569
    %v571 = vpop.f32.mrb[0].mxu0
    %572 = vmatprep.mubr.f32.mxu0 0.0
    %573 = vmatmul.mubr.f32.gmra.mrb[0].mxu0 %v369
    %v574 = vpop.f32.mrb[0].mxu0
    %v575 = vadd.f32 %v238, %v574
    %v576 = vpop.f32.mrb[0].mxu0
    %577 = vmatprep.mubr.f32.mxu0 0.0
    %578 = vmatmul.mubr.f32.gmra.mrb[0].mxu0 %v372
    %v579 = vpop.f32.mrb[0].mxu0
    %v580 = vadd.f32 %v243, %v579
    %v581 = vpop.f32.mrb[0].mxu0
    %582 = vmatprep.mubr.f32.mxu0 0.0
    %583 = vmatmul.mubr.f32.gmra.mrb[0].mxu0 %v375
    %v584 = vpop.f32.mrb[0].mxu0
    %v585 = vadd.f32 %v248, %v584
    %v586 = vpop.f32.mrb[0].mxu0
    %587 = vmatprep.mubr.f32.mxu0 0.0
    %588 = vmatmul.mubr.f32.gmra.mrb[0].mxu0 %v378
    %v589 = vpop.f32.mrb[0].mxu0
    %v590 = vadd.f32 %v253, %v589
    %v591 = vpop.f32.mrb[0].mxu0
    %592 = vmatprep.mubr.f32.mxu0 0.0
    %593 = vmatmul.mubr.f32.gmra.mrb[0].mxu0 %v381
    %v594 = vpop.f32.mrb[0].mxu0
    %v595 = vadd.f32 %v258, %v594
    %v596 = vpop.f32.mrb[0].mxu0
    %597 = vmatprep.mubr.f32.mxu0 0.0
    %598 = vmatmul.mubr.f32.gmra.mrb[0].mxu0 %v384
    %v599 = vpop.f32.mrb[0].mxu0
    %v600 = vadd.f32 %v263, %v599
    %v601 = vpop.f32.mrb[0].mxu0
    %602 = vmatprep.mubr.f32.mxu0 0.0
    %603 = vmatmul.mubr.f32.gmra.mrb[0].mxu0 %v387
    %v604 = vpop.f32.mrb[0].mxu0
    %v605 = vadd.f32 %v268, %v604
    %v606 = vpop.f32.mrb[0].mxu0
    %607 = vmatprep.mubr.f32.mxu0 0.0
    %608 = vmatmul.mubr.f32.gmra.mrb[0].mxu0 %v390
    %v609 = vpop.f32.mrb[0].mxu0
    %v610 = vadd.f32 %v273, %v609
    %v611 = vpop.f32.mrb[0].mxu0
    %612 = vmatprep.mubr.f32.mxu0 0.0
    %613 = vmatmul.mubr.f32.gmra.mrb[0].mxu0 %v393
    %v614 = vpop.f32.mrb[0].mxu0
    %v615 = vadd.f32 %v278, %v614
    %v616 = vpop.f32.mrb[0].mxu0
    %617 = vmatprep.mubr.f32.mxu0 0.0
    %618 = vmatmul.mubr.f32.gmra.mrb[0].mxu0 %v396
    %v619 = vpop.f32.mrb[0].mxu0
    %v620 = vadd.f32 %v283, %v619
    %v621 = vpop.f32.mrb[0].mxu0
    %622 = vdwg.mxu0
    %v624 = vsel %vm301, %v21, 0
    %v627 = vsel %vm301, %v22, 0
    %v630 = vsel %vm301, %v23, 0
    %v633 = vsel %vm301, %v24, 0
    %v636 = vsel %vm301, %v25, 0
    %v639 = vsel %vm301, %v26, 0
    %v642 = vsel %vm301, %v27, 0
    %v645 = vsel %vm301, %v28, 0
    %v648 = vsel %vm301, %v29, 0
    %v651 = vsel %vm301, %v30, 0
    %v654 = vsel %vm301, %v31, 0
    %v657 = vsel %vm301, %v32, 0
    %v660 = vsel %vm301, %v33, 0
    %v663 = vsel %vm301, %v34, 0
    %v666 = vsel %vm301, %v35, 0
    %v669 = vsel %vm301, %v36, 0
    %v672 = vsel %vm301, %v37, 0
    %v675 = vsel %vm301, %v38, 0
    %v678 = vsel %vm301, %v39, 0
    %v681 = vsel %vm301, %v40, 0
    %v684 = vsel %vm301, %v41, 0
    %v687 = vsel %vm301, %v42, 0
    %v690 = vsel %vm301, %v43, 0
    %v693 = vsel %vm301, %v44, 0
    %v696 = vsel %vm301, %v45, 0
    %v699 = vsel %vm301, %v46, 0
    %v702 = vsel %vm301, %v47, 0
    %v705 = vsel %vm301, %v48, 0
    %v708 = vsel %vm301, %v49, 0
    %v711 = vsel %vm301, %v50, 0
    %v714 = vsel %vm301, %v51, 0
    %v717 = vsel %vm301, %v52, 0
    %719 = vmatprep.subr.mxu0 0.0
    %720 = vmatpush1.msra.mxu0 0.0
    %721 = vmatprep.subr.mxu0 0.0
    %722 = vmatpush1.msra.mxu0 0.0
    %723 = vmatprep.subr.mxu0 0.0
    %724 = vmatpush1.msra.mxu0 0.0
    %725 = vmatprep.subr.mxu0 0.0
    %726 = vmatpush1.msra.mxu0 0.0
    %727 = vmatprep.subr.mxu0 0.0
    %728 = vmatpush1.msra.mxu0 0.0
    %729 = vmatprep.subr.mxu0 0.0
    %730 = vmatpush1.msra.mxu0 0.0
    %731 = vmatprep.subr.mxu0 0.0
    %732 = vmatpush1.msra.mxu0 0.0
    %733 = vmatprep.subr.mxu0 0.0
    %734 = vmatpush1.msra.mxu0 0.0
    %735 = vmatprep.subr.mxu0 0.0
    %736 = vmatpush1.msra.mxu0 0.0
    %737 = vmatprep.subr.mxu0 0.0
    %738 = vmatpush1.msra.mxu0 0.0
    %739 = vmatprep.subr.mxu0 0.0
    %740 = vmatpush1.msra.mxu0 0.0
    %741 = vmatprep.subr.mxu0 0.0
    %742 = vmatpush1.msra.mxu0 0.0
    %743 = vmatprep.subr.mxu0 0.0
    %744 = vmatpush1.msra.mxu0 0.0
    %745 = vmatprep.subr.mxu0 0.0
    %746 = vmatpush1.msra.mxu0 0.0
    %747 = vmatprep.subr.mxu0 0.0
    %748 = vmatpush1.msra.mxu0 0.0
    %749 = vmatprep.subr.mxu0 0.0
    %750 = vmatpush1.msra.mxu0 0.0
    %751 = vmatprep.subr.mxu0 0.0
    %752 = vmatpush1.msra.mxu0 0.0
    %753 = vmatprep.subr.mxu0 0.0
    %754 = vmatpush1.msra.mxu0 0.0
    %755 = vmatprep.subr.mxu0 0.0
    %756 = vmatpush1.msra.mxu0 0.0
    %757 = vmatprep.subr.mxu0 0.0
    %758 = vmatpush1.msra.mxu0 0.0
    %759 = vmatprep.subr.mxu0 0.0
    %760 = vmatpush1.msra.mxu0 0.0
    %761 = vmatprep.subr.mxu0 0.0
    %762 = vmatpush1.msra.mxu0 0.0
    %763 = vmatprep.subr.mxu0 0.0
    %764 = vmatpush1.msra.mxu0 0.0
    %765 = vmatprep.subr.mxu0 0.0
    %766 = vmatpush1.msra.mxu0 0.0
    %767 = vmatprep.subr.mxu0 0.0
    %768 = vmatpush1.msra.mxu0 0.0
    %769 = vmatprep.subr.mxu0 0.0
    %770 = vmatpush1.msra.mxu0 0.0
    %771 = vmatprep.subr.mxu0 0.0
    %772 = vmatpush1.msra.mxu0 0.0
    %773 = vmatprep.subr.mxu0 0.0
    %774 = vmatpush1.msra.mxu0 0.0
    %775 = vmatprep.subr.mxu0 0.0
    %776 = vmatpush1.msra.mxu0 0.0
    %777 = vmatprep.subr.mxu0 0.0
    %778 = vmatpush1.msra.mxu0 0.0
    %779 = vmatprep.subr.mxu0 0.0
    %780 = vmatpush1.msra.mxu0 0.0
    %781 = vmatprep.subr.mxu0 0.0
    %782 = vmatpush1.msra.mxu0 0.0
    %783 = vmatprep.mubr.f32.mxu0 0.0
    %784 = vmatmul.mubr.f32.gmra.mrb[0].mxu0 %v624
    %v785 = vpop.f32.mrb[0].mxu0
    %v786 = vadd.f32 0.0, %v785
    %v787 = vpop.f32.mrb[0].mxu0
    %788 = vmatprep.mubr.f32.mxu0 0.0
    %789 = vmatmul.mubr.f32.gmra.mrb[0].mxu0 %v627
    %v790 = vpop.f32.mrb[0].mxu0
    %v791 = vadd.f32 0.0, %v790
    %v792 = vpop.f32.mrb[0].mxu0
    %793 = vmatprep.mubr.f32.mxu0 0.0
    %794 = vmatmul.mubr.f32.gmra.mrb[0].mxu0 %v630
    %v795 = vpop.f32.mrb[0].mxu0
    %v796 = vadd.f32 0.0, %v795
    %v797 = vpop.f32.mrb[0].mxu0
    %798 = vmatprep.mubr.f32.mxu0 0.0
    %799 = vmatmul.mubr.f32.gmra.mrb[0].mxu0 %v633
    %v800 = vpop.f32.mrb[0].mxu0
    %v801 = vadd.f32 0.0, %v800
    %v802 = vpop.f32.mrb[0].mxu0
    %803 = vmatprep.mubr.f32.mxu0 0.0
    %804 = vmatmul.mubr.f32.gmra.mrb[0].mxu0 %v636
    %v805 = vpop.f32.mrb[0].mxu0
    %v806 = vadd.f32 0.0, %v805
    %v807 = vpop.f32.mrb[0].mxu0
    %808 = vmatprep.mubr.f32.mxu0 0.0
    %809 = vmatmul.mubr.f32.gmra.mrb[0].mxu0 %v639
    %v810 = vpop.f32.mrb[0].mxu0
    %v811 = vadd.f32 0.0, %v810
    %v812 = vpop.f32.mrb[0].mxu0
    %813 = vmatprep.mubr.f32.mxu0 0.0
    %814 = vmatmul.mubr.f32.gmra.mrb[0].mxu0 %v642
    %v815 = vpop.f32.mrb[0].mxu0
    %v816 = vadd.f32 0.0, %v815
    %v817 = vpop.f32.mrb[0].mxu0
    %818 = vmatprep.mubr.f32.mxu0 0.0
    %819 = vmatmul.mubr.f32.gmra.mrb[0].mxu0 %v645
    %v820 = vpop.f32.mrb[0].mxu0
    %v821 = vadd.f32 0.0, %v820
    %v822 = vpop.f32.mrb[0].mxu0
    %823 = vmatprep.mubr.f32.mxu0 0.0
    %824 = vmatmul.mubr.f32.gmra.mrb[0].mxu0 %v648
    %v825 = vpop.f32.mrb[0].mxu0
    %v826 = vadd.f32 0.0, %v825
    %v827 = vpop.f32.mrb[0].mxu0
    %828 = vmatprep.mubr.f32.mxu0 0.0
    %829 = vmatmul.mubr.f32.gmra.mrb[0].mxu0 %v651
    %v830 = vpop.f32.mrb[0].mxu0
    %v831 = vadd.f32 0.0, %v830
    %v832 = vpop.f32.mrb[0].mxu0
    %833 = vmatprep.mubr.f32.mxu0 0.0
    %834 = vmatmul.mubr.f32.gmra.mrb[0].mxu0 %v654
    %v835 = vpop.f32.mrb[0].mxu0
    %v836 = vadd.f32 0.0, %v835
    %v837 = vpop.f32.mrb[0].mxu0
    %838 = vmatprep.mubr.f32.mxu0 0.0
    %839 = vmatmul.mubr.f32.gmra.mrb[0].mxu0 %v657
    %v840 = vpop.f32.mrb[0].mxu0
    %v841 = vadd.f32 0.0, %v840
    %v842 = vpop.f32.mrb[0].mxu0
    %843 = vmatprep.mubr.f32.mxu0 0.0
    %844 = vmatmul.mubr.f32.gmra.mrb[0].mxu0 %v660
    %v845 = vpop.f32.mrb[0].mxu0
    %v846 = vadd.f32 0.0, %v845
    %v847 = vpop.f32.mrb[0].mxu0
    %848 = vmatprep.mubr.f32.mxu0 0.0
    %849 = vmatmul.mubr.f32.gmra.mrb[0].mxu0 %v663
    %v850 = vpop.f32.mrb[0].mxu0
    %v851 = vadd.f32 0.0, %v850
    %v852 = vpop.f32.mrb[0].mxu0
    %853 = vmatprep.mubr.f32.mxu0 0.0
    %854 = vmatmul.mubr.f32.gmra.mrb[0].mxu0 %v666
    %v855 = vpop.f32.mrb[0].mxu0
    %v856 = vadd.f32 0.0, %v855
    %v857 = vpop.f32.mrb[0].mxu0
    %858 = vmatprep.mubr.f32.mxu0 0.0
    %859 = vmatmul.mubr.f32.gmra.mrb[0].mxu0 %v669
    %v860 = vpop.f32.mrb[0].mxu0
    %v861 = vadd.f32 0.0, %v860
    %v862 = vpop.f32.mrb[0].mxu0
    %863 = vmatprep.mubr.f32.mxu0 0.0
    %864 = vmatmul.mubr.f32.gmra.mrb[0].mxu0 %v672
    %v865 = vpop.f32.mrb[0].mxu0
    %v866 = vadd.f32 0.0, %v865
    %v867 = vpop.f32.mrb[0].mxu0
    %868 = vmatprep.mubr.f32.mxu0 0.0
    %869 = vmatmul.mubr.f32.gmra.mrb[0].mxu0 %v675
    %v870 = vpop.f32.mrb[0].mxu0
    %v871 = vadd.f32 0.0, %v870
    %v872 = vpop.f32.mrb[0].mxu0
    %873 = vmatprep.mubr.f32.mxu0 0.0
    %874 = vmatmul.mubr.f32.gmra.mrb[0].mxu0 %v678
    %v875 = vpop.f32.mrb[0].mxu0
    %v876 = vadd.f32 0.0, %v875
    %v877 = vpop.f32.mrb[0].mxu0
    %878 = vmatprep.mubr.f32.mxu0 0.0
    %879 = vmatmul.mubr.f32.gmra.mrb[0].mxu0 %v681
    %v880 = vpop.f32.mrb[0].mxu0
    %v881 = vadd.f32 0.0, %v880
    %v882 = vpop.f32.mrb[0].mxu0
    %883 = vmatprep.mubr.f32.mxu0 0.0
    %884 = vmatmul.mubr.f32.gmra.mrb[0].mxu0 %v684
    %v885 = vpop.f32.mrb[0].mxu0
    %v886 = vadd.f32 0.0, %v885
    %v887 = vpop.f32.mrb[0].mxu0
    %888 = vmatprep.mubr.f32.mxu0 0.0
    %889 = vmatmul.mubr.f32.gmra.mrb[0].mxu0 %v687
    %v890 = vpop.f32.mrb[0].mxu0
    %v891 = vadd.f32 0.0, %v890
    %v892 = vpop.f32.mrb[0].mxu0
    %893 = vmatprep.mubr.f32.mxu0 0.0
    %894 = vmatmul.mubr.f32.gmra.mrb[0].mxu0 %v690
    %v895 = vpop.f32.mrb[0].mxu0
    %v896 = vadd.f32 0.0, %v895
    %v897 = vpop.f32.mrb[0].mxu0
    %898 = vmatprep.mubr.f32.mxu0 0.0
    %899 = vmatmul.mubr.f32.gmra.mrb[0].mxu0 %v693
    %v900 = vpop.f32.mrb[0].mxu0
    %v901 = vadd.f32 0.0, %v900
    %v902 = vpop.f32.mrb[0].mxu0
    %903 = vmatprep.mubr.f32.mxu0 0.0
    %904 = vmatmul.mubr.f32.gmra.mrb[0].mxu0 %v696
    %v905 = vpop.f32.mrb[0].mxu0
    %v906 = vadd.f32 0.0, %v905
    %v907 = vpop.f32.mrb[0].mxu0
    %908 = vmatprep.mubr.f32.mxu0 0.0
    %909 = vmatmul.mubr.f32.gmra.mrb[0].mxu0 %v699
    %v910 = vpop.f32.mrb[0].mxu0
    %v911 = vadd.f32 0.0, %v910
    %v912 = vpop.f32.mrb[0].mxu0
    %913 = vmatprep.mubr.f32.mxu0 0.0
    %914 = vmatmul.mubr.f32.gmra.mrb[0].mxu0 %v702
    %v915 = vpop.f32.mrb[0].mxu0
    %v916 = vadd.f32 0.0, %v915
    %v917 = vpop.f32.mrb[0].mxu0
    %918 = vmatprep.mubr.f32.mxu0 0.0
    %919 = vmatmul.mubr.f32.gmra.mrb[0].mxu0 %v705
    %v920 = vpop.f32.mrb[0].mxu0
    %v921 = vadd.f32 0.0, %v920
    %v922 = vpop.f32.mrb[0].mxu0
    %923 = vmatprep.mubr.f32.mxu0 0.0
    %924 = vmatmul.mubr.f32.gmra.mrb[0].mxu0 %v708
    %v925 = vpop.f32.mrb[0].mxu0
    %v926 = vadd.f32 0.0, %v925
    %v927 = vpop.f32.mrb[0].mxu0
    %928 = vmatprep.mubr.f32.mxu0 0.0
    %929 = vmatmul.mubr.f32.gmra.mrb[0].mxu0 %v711
    %v930 = vpop.f32.mrb[0].mxu0
    %v931 = vadd.f32 0.0, %v930
    %v932 = vpop.f32.mrb[0].mxu0
    %933 = vmatprep.mubr.f32.mxu0 0.0
    %934 = vmatmul.mubr.f32.gmra.mrb[0].mxu0 %v714
    %v935 = vpop.f32.mrb[0].mxu0
    %v936 = vadd.f32 0.0, %v935
    %v937 = vpop.f32.mrb[0].mxu0
    %938 = vmatprep.mubr.f32.mxu0 0.0
    %939 = vmatmul.mubr.f32.gmra.mrb[0].mxu0 %v717
    %v940 = vpop.f32.mrb[0].mxu0
    %v941 = vadd.f32 0.0, %v940
    %v942 = vpop.f32.mrb[0].mxu0
    %943 = vdwg.mxu0
    %v944 = vadd.f32 %v465, %v786
    %v945 = vadd.f32 %v470, %v791
    %v946 = vadd.f32 %v475, %v796
    %v947 = vadd.f32 %v480, %v801
    %v948 = vadd.f32 %v485, %v806
    %v949 = vadd.f32 %v490, %v811
    %v950 = vadd.f32 %v495, %v816
    %v951 = vadd.f32 %v500, %v821
    %v952 = vadd.f32 %v505, %v826
    %v953 = vadd.f32 %v510, %v831
    %v954 = vadd.f32 %v515, %v836
    %v955 = vadd.f32 %v520, %v841
    %v956 = vadd.f32 %v525, %v846
    %v957 = vadd.f32 %v530, %v851
    %v958 = vadd.f32 %v535, %v856
    %v959 = vadd.f32 %v540, %v861
    %v960 = vadd.f32 %v545, %v866
    %v961 = vadd.f32 %v550, %v871
    %v962 = vadd.f32 %v555, %v876
    %v963 = vadd.f32 %v560, %v881
    %v964 = vadd.f32 %v565, %v886
    %v965 = vadd.f32 %v570, %v891
    %v966 = vadd.f32 %v575, %v896
    %v967 = vadd.f32 %v580, %v901
    %v968 = vadd.f32 %v585, %v906
    %v969 = vadd.f32 %v590, %v911
    %v970 = vadd.f32 %v595, %v916
    %v971 = vadd.f32 %v600, %v921
    %v972 = vadd.f32 %v605, %v926
    %v973 = vadd.f32 %v610, %v931
    %v974 = vadd.f32 %v615, %v936
    %v975 = vadd.f32 %v620, %v941
    %v976 = vxor.u32 %v944, 2147483648
    %v977 = vxor.u32 %v945, 2147483648
    %v978 = vxor.u32 %v946, 2147483648
    %v979 = vxor.u32 %v947, 2147483648
    %v980 = vxor.u32 %v948, 2147483648
    %v981 = vxor.u32 %v949, 2147483648
    %v982 = vxor.u32 %v950, 2147483648
    %v983 = vxor.u32 %v951, 2147483648
    %v984 = vxor.u32 %v952, 2147483648
    %v985 = vxor.u32 %v953, 2147483648
    %v986 = vxor.u32 %v954, 2147483648
    %v987 = vxor.u32 %v955, 2147483648
    %v988 = vxor.u32 %v956, 2147483648
    %v989 = vxor.u32 %v957, 2147483648
    %v990 = vxor.u32 %v958, 2147483648
    %v991 = vxor.u32 %v959, 2147483648
    %v992 = vxor.u32 %v960, 2147483648
    %v993 = vxor.u32 %v961, 2147483648
    %v994 = vxor.u32 %v962, 2147483648
    %v995 = vxor.u32 %v963, 2147483648
    %v996 = vxor.u32 %v964, 2147483648
    %v997 = vxor.u32 %v965, 2147483648
    %v998 = vxor.u32 %v966, 2147483648
    %v999 = vxor.u32 %v967, 2147483648
    %v1000 = vxor.u32 %v968, 2147483648
    %v1001 = vxor.u32 %v969, 2147483648
    %v1002 = vxor.u32 %v970, 2147483648
    %v1003 = vxor.u32 %v971, 2147483648
    %v1004 = vxor.u32 %v972, 2147483648
    %v1005 = vxor.u32 %v973, 2147483648
    %v1006 = vxor.u32 %v974, 2147483648
    %v1007 = vxor.u32 %v975, 2147483648
    %v1008 = vmul.f32 %v976, 1.442695
    %v1009 = vpow.pop %v1008
    %v1010 = vmul.f32 %v977, 1.442695
    %v1011 = vpow.pop %v1010
    %v1012 = vmul.f32 %v978, 1.442695
    %v1013 = vpow.pop %v1012
    %v1014 = vmul.f32 %v979, 1.442695
    %v1015 = vpow.pop %v1014
    %v1016 = vmul.f32 %v980, 1.442695
    %v1017 = vpow.pop %v1016
    %v1018 = vmul.f32 %v981, 1.442695
    %v1019 = vpow.pop %v1018
    %v1020 = vmul.f32 %v982, 1.442695
    %v1021 = vpow.pop %v1020
    %v1022 = vmul.f32 %v983, 1.442695
    %v1023 = vpow.pop %v1022
    %v1024 = vmul.f32 %v984, 1.442695
    %v1025 = vpow.pop %v1024
    %v1026 = vmul.f32 %v985, 1.442695
    %v1027 = vpow.pop %v1026
    %v1028 = vmul.f32 %v986, 1.442695
    %v1029 = vpow.pop %v1028
    %v1030 = vmul.f32 %v987, 1.442695
    %v1031 = vpow.pop %v1030
    %v1032 = vmul.f32 %v988, 1.442695
    %v1033 = vpow.pop %v1032
    %v1034 = vmul.f32 %v989, 1.442695
    %v1035 = vpow.pop %v1034
    %v1036 = vmul.f32 %v990, 1.442695
    %v1037 = vpow.pop %v1036
    %v1038 = vmul.f32 %v991, 1.442695
    %v1039 = vpow.pop %v1038
    %v1040 = vmul.f32 %v992, 1.442695
    %v1041 = vpow.pop %v1040
    %v1042 = vmul.f32 %v993, 1.442695
    %v1043 = vpow.pop %v1042
    %v1044 = vmul.f32 %v994, 1.442695
    %v1045 = vpow.pop %v1044
    %v1046 = vmul.f32 %v995, 1.442695
    %v1047 = vpow.pop %v1046
    %v1048 = vmul.f32 %v996, 1.442695
    %v1049 = vpow.pop %v1048
    %v1050 = vmul.f32 %v997, 1.442695
    %v1051 = vpow.pop %v1050
    %v1052 = vmul.f32 %v998, 1.442695
    %v1053 = vpow.pop %v1052
    %v1054 = vmul.f32 %v999, 1.442695
    %v1055 = vpow.pop %v1054
    %v1056 = vmul.f32 %v1000, 1.442695
    %v1057 = vpow.pop %v1056
    %v1058 = vmul.f32 %v1001, 1.442695
    %v1059 = vpow.pop %v1058
    %v1060 = vmul.f32 %v1002, 1.442695
    %v1061 = vpow.pop %v1060
    %v1062 = vmul.f32 %v1003, 1.442695
    %v1063 = vpow.pop %v1062
    %v1064 = vmul.f32 %v1004, 1.442695
    %v1065 = vpow.pop %v1064
    %v1066 = vmul.f32 %v1005, 1.442695
    %v1067 = vpow.pop %v1066
    %v1068 = vmul.f32 %v1006, 1.442695
    %v1069 = vpow.pop %v1068
    %v1070 = vmul.f32 %v1007, 1.442695
    %v1071 = vpow.pop %v1070
    %v1072 = vadd.f32 %v1009, 1.0
    %v1073 = vadd.f32 %v1011, 1.0
    %v1074 = vadd.f32 %v1013, 1.0
    %v1075 = vadd.f32 %v1015, 1.0
    %v1076 = vadd.f32 %v1017, 1.0
    %v1077 = vadd.f32 %v1019, 1.0
    %v1078 = vadd.f32 %v1021, 1.0
    %v1079 = vadd.f32 %v1023, 1.0
    %v1080 = vadd.f32 %v1025, 1.0
    %v1081 = vadd.f32 %v1027, 1.0
    %v1082 = vadd.f32 %v1029, 1.0
    %v1083 = vadd.f32 %v1031, 1.0
    %v1084 = vadd.f32 %v1033, 1.0
    %v1085 = vadd.f32 %v1035, 1.0
    %v1086 = vadd.f32 %v1037, 1.0
    %v1087 = vadd.f32 %v1039, 1.0
    %v1088 = vadd.f32 %v1041, 1.0
    %v1089 = vadd.f32 %v1043, 1.0
    %v1090 = vadd.f32 %v1045, 1.0
    %v1091 = vadd.f32 %v1047, 1.0
    %v1092 = vadd.f32 %v1049, 1.0
    %v1093 = vadd.f32 %v1051, 1.0
    %v1094 = vadd.f32 %v1053, 1.0
    %v1095 = vadd.f32 %v1055, 1.0
    %v1096 = vadd.f32 %v1057, 1.0
    %v1097 = vadd.f32 %v1059, 1.0
    %v1098 = vadd.f32 %v1061, 1.0
    %v1099 = vadd.f32 %v1063, 1.0
    %v1100 = vadd.f32 %v1065, 1.0
    %v1101 = vadd.f32 %v1067, 1.0
    %v1102 = vadd.f32 %v1069, 1.0
    %v1103 = vadd.f32 %v1071, 1.0
    %v1104 = vrcp.pop %v1072
    %v1105 = vmul.f32 1.0, %v1104
    %v1106 = vrcp.pop %v1073
    %v1107 = vmul.f32 1.0, %v1106
    %v1108 = vrcp.pop %v1074
    %v1109 = vmul.f32 1.0, %v1108
    %v1110 = vrcp.pop %v1075
    %v1111 = vmul.f32 1.0, %v1110
    %v1112 = vrcp.pop %v1076
    %v1113 = vmul.f32 1.0, %v1112
    %v1114 = vrcp.pop %v1077
    %v1115 = vmul.f32 1.0, %v1114
    %v1116 = vrcp.pop %v1078
    %v1117 = vmul.f32 1.0, %v1116
    %v1118 = vrcp.pop %v1079
    %v1119 = vmul.f32 1.0, %v1118
    %v1120 = vrcp.pop %v1080
    %v1121 = vmul.f32 1.0, %v1120
    %v1122 = vrcp.pop %v1081
    %v1123 = vmul.f32 1.0, %v1122
    %v1124 = vrcp.pop %v1082
    %v1125 = vmul.f32 1.0, %v1124
    %v1126 = vrcp.pop %v1083
    %v1127 = vmul.f32 1.0, %v1126
    %v1128 = vrcp.pop %v1084
    %v1129 = vmul.f32 1.0, %v1128
    %v1130 = vrcp.pop %v1085
    %v1131 = vmul.f32 1.0, %v1130
    %v1132 = vrcp.pop %v1086
    %v1133 = vmul.f32 1.0, %v1132
    %v1134 = vrcp.pop %v1087
    %v1135 = vmul.f32 1.0, %v1134
    %v1136 = vrcp.pop %v1088
    %v1137 = vmul.f32 1.0, %v1136
    %v1138 = vrcp.pop %v1089
    %v1139 = vmul.f32 1.0, %v1138
    %v1140 = vrcp.pop %v1090
    %v1141 = vmul.f32 1.0, %v1140
    %v1142 = vrcp.pop %v1091
    %v1143 = vmul.f32 1.0, %v1142
    %v1144 = vrcp.pop %v1092
    %v1145 = vmul.f32 1.0, %v1144
    %v1146 = vrcp.pop %v1093
    %v1147 = vmul.f32 1.0, %v1146
    %v1148 = vrcp.pop %v1094
    %v1149 = vmul.f32 1.0, %v1148
    %v1150 = vrcp.pop %v1095
    %v1151 = vmul.f32 1.0, %v1150
    %v1152 = vrcp.pop %v1096
    %v1153 = vmul.f32 1.0, %v1152
    %v1154 = vrcp.pop %v1097
    %v1155 = vmul.f32 1.0, %v1154
    %v1156 = vrcp.pop %v1098
    %v1157 = vmul.f32 1.0, %v1156
    %v1158 = vrcp.pop %v1099
    %v1159 = vmul.f32 1.0, %v1158
    %v1160 = vrcp.pop %v1100
    %v1161 = vmul.f32 1.0, %v1160
    %v1162 = vrcp.pop %v1101
    %v1163 = vmul.f32 1.0, %v1162
    %v1164 = vrcp.pop %v1102
    %v1165 = vmul.f32 1.0, %v1164
    %v1166 = vrcp.pop %v1103
    %v1167 = vmul.f32 1.0, %v1166
    %v1168 = vmul.f32 %v1137, 2.0
    %v1169 = vmul.f32 %v1139, 2.0
    %v1170 = vmul.f32 %v1141, 2.0
    %v1171 = vmul.f32 %v1143, 2.0
    %v1172 = vmul.f32 %v1145, 2.0
    %v1173 = vmul.f32 %v1147, 2.0
    %v1174 = vmul.f32 %v1149, 2.0
    %v1175 = vmul.f32 %v1151, 2.0
    %v1176 = vsub.f32 %v1168, 1.0
    %v1177 = vsub.f32 %v1169, 1.0
    %v1178 = vsub.f32 %v1170, 1.0
    %v1179 = vsub.f32 %v1171, 1.0
    %v1180 = vsub.f32 %v1172, 1.0
    %v1181 = vsub.f32 %v1173, 1.0
    %v1182 = vsub.f32 %v1174, 1.0
    %v1183 = vsub.f32 %v1175, 1.0
    %v1184 = vmul.f32 %v1121, 0.0
    %v1185 = vmul.f32 %v1123, 0.0
    %v1186 = vmul.f32 %v1125, 0.0
    %v1187 = vmul.f32 %v1127, 0.0
    %v1188 = vmul.f32 %v1129, 0.0
    %v1189 = vmul.f32 %v1131, 0.0
    %v1190 = vmul.f32 %v1133, 0.0
    %v1191 = vmul.f32 %v1135, 0.0
    %v1192 = vmul.f32 %v1105, %v1176
    %v1193 = vmul.f32 %v1107, %v1177
    %v1194 = vmul.f32 %v1109, %v1178
    %v1195 = vmul.f32 %v1111, %v1179
    %v1196 = vmul.f32 %v1113, %v1180
    %v1197 = vmul.f32 %v1115, %v1181
    %v1198 = vmul.f32 %v1117, %v1182
    %v1199 = vmul.f32 %v1119, %v1183
    %v1200 = vadd.f32 %v1184, %v1192
    %v1201 = vadd.f32 %v1185, %v1193
    %v1202 = vadd.f32 %v1186, %v1194
    %v1203 = vadd.f32 %v1187, %v1195
    %v1204 = vadd.f32 %v1188, %v1196
    %v1205 = vadd.f32 %v1189, %v1197
    %v1206 = vadd.f32 %v1190, %v1198
    %v1207 = vadd.f32 %v1191, %v1199
    %v1208 = vtanh.pop %v1200
    %v1209 = vtanh.pop %v1201
    %v1210 = vtanh.pop %v1202
    %v1211 = vtanh.pop %v1203
    %v1212 = vtanh.pop %v1204
    %v1213 = vtanh.pop %v1205
    %v1214 = vtanh.pop %v1206
    %v1215 = vtanh.pop %v1207
    %v1216 = vmul.f32 %v1153, %v1208
    %v1217 = vmul.f32 %v1155, %v1209
    %v1218 = vmul.f32 %v1157, %v1210
    %v1219 = vmul.f32 %v1159, %v1211
    %v1220 = vmul.f32 %v1161, %v1212
    %v1221 = vmul.f32 %v1163, %v1213
    %v1222 = vmul.f32 %v1165, %v1214
    %v1223 = vmul.f32 %v1167, %v1215
    %v1224 = vadd.f32 %v1216, 0.0
    %v1225 = vadd.f32 %v1217, 0.0
    %v1226 = vadd.f32 %v1218, 0.0
    %v1227 = vadd.f32 %v1219, 0.0
    %v1228 = vadd.f32 %v1220, 0.0
    %v1229 = vadd.f32 %v1221, 0.0
    %v1230 = vadd.f32 %v1222, 0.0
    %v1231 = vadd.f32 %v1223, 0.0
    %s1232 = scalar_lea.vmem %s0, 32
    %v1233 = vld [vmem:[%s1232] sm:$0xf]
    %v1234 = vld [vmem:[%s1232 + $0x4] sm:$0xf]
    %v1235 = vld [vmem:[%s1232 + $0x8] sm:$0xf]
    %v1236 = vld [vmem:[%s1232 + $0xc] sm:$0xf]
    %v1237 = vld [vmem:[%s1232 + $0x10] sm:$0xf]
    %v1238 = vld [vmem:[%s1232 + $0x14] sm:$0xf]
    %v1239 = vld [vmem:[%s1232 + $0x18] sm:$0xf]
    %v1240 = vld [vmem:[%s1232 + $0x1c] sm:$0xf]
    %v1241 = vunpack.c.l.bf16 %v1233
    %v1242 = vunpack.c.l.bf16 %v1234
    %v1243 = vunpack.c.l.bf16 %v1235
    %v1244 = vunpack.c.l.bf16 %v1236
    %v1245 = vunpack.c.l.bf16 %v1237
    %v1246 = vunpack.c.l.bf16 %v1238
    %v1247 = vunpack.c.l.bf16 %v1239
    %v1248 = vunpack.c.l.bf16 %v1240
    %1249 = vmatprep.subr.mxu0 0.0
    %1250 = vmatpush1.msra.mxu0 %v1241
    %1251 = vmatprep.subr.mxu0 0.0
    %1252 = vmatpush1.msra.mxu0 %v1242
    %1253 = vmatprep.subr.mxu0 0.0
    %1254 = vmatpush1.msra.mxu0 %v1243
    %1255 = vmatprep.subr.mxu0 0.0
    %1256 = vmatpush1.msra.mxu0 %v1244
    %1257 = vmatprep.subr.mxu0 0.0
    %1258 = vmatpush1.msra.mxu0 %v1245
    %1259 = vmatprep.subr.mxu0 0.0
    %1260 = vmatpush1.msra.mxu0 %v1246
    %1261 = vmatprep.subr.mxu0 0.0
    %1262 = vmatpush1.msra.mxu0 %v1247
    %1263 = vmatprep.subr.mxu0 0.0
    %1264 = vmatpush1.msra.mxu0 %v1248
    %1265 = vmatprep.subr.mxu0 0.0
    %1266 = vmatpush1.msra.mxu0 0.0
    %1267 = vmatprep.subr.mxu0 0.0
    %1268 = vmatpush1.msra.mxu0 0.0
    %1269 = vmatprep.subr.mxu0 0.0
    %1270 = vmatpush1.msra.mxu0 0.0
    %1271 = vmatprep.subr.mxu0 0.0
    %1272 = vmatpush1.msra.mxu0 0.0
    %1273 = vmatprep.subr.mxu0 0.0
    %1274 = vmatpush1.msra.mxu0 0.0
    %1275 = vmatprep.subr.mxu0 0.0
    %1276 = vmatpush1.msra.mxu0 0.0
    %1277 = vmatprep.subr.mxu0 0.0
    %1278 = vmatpush1.msra.mxu0 0.0
    %1279 = vmatprep.subr.mxu0 0.0
    %1280 = vmatpush1.msra.mxu0 0.0
    %1281 = vmatprep.subr.mxu0 0.0
    %1282 = vmatpush1.msra.mxu0 0.0
    %1283 = vmatprep.subr.mxu0 0.0
    %1284 = vmatpush1.msra.mxu0 0.0
    %1285 = vmatprep.subr.mxu0 0.0
    %1286 = vmatpush1.msra.mxu0 0.0
    %1287 = vmatprep.subr.mxu0 0.0
    %1288 = vmatpush1.msra.mxu0 0.0
    %1289 = vmatprep.subr.mxu0 0.0
    %1290 = vmatpush1.msra.mxu0 0.0
    %1291 = vmatprep.subr.mxu0 0.0
    %1292 = vmatpush1.msra.mxu0 0.0
    %1293 = vmatprep.subr.mxu0 0.0
    %1294 = vmatpush1.msra.mxu0 0.0
    %1295 = vmatprep.subr.mxu0 0.0
    %1296 = vmatpush1.msra.mxu0 0.0
    %1297 = vmatprep.subr.mxu0 0.0
    %1298 = vmatpush1.msra.mxu0 0.0
    %1299 = vmatprep.subr.mxu0 0.0
    %1300 = vmatpush1.msra.mxu0 0.0
    %1301 = vmatprep.subr.mxu0 0.0
    %1302 = vmatpush1.msra.mxu0 0.0
    %1303 = vmatprep.subr.mxu0 0.0
    %1304 = vmatpush1.msra.mxu0 0.0
    %1305 = vmatprep.subr.mxu0 0.0
    %1306 = vmatpush1.msra.mxu0 0.0
    %1307 = vmatprep.subr.mxu0 0.0
    %1308 = vmatpush1.msra.mxu0 0.0
    %1309 = vmatprep.subr.mxu0 0.0
    %1310 = vmatpush1.msra.mxu0 0.0
    %1311 = vmatprep.subr.mxu0 0.0
    %1312 = vmatpush1.msra.mxu0 0.0
    %1313 = vmatprep.mubr.f32.mxu0 0.0
    %1314 = vmatmul.mubr.f32.gmra.mrb[0].mxu0 %v303
    %v1315 = vpop.f32.mrb[0].mxu0
    %v1316 = vadd.f32 %v128, %v1315
    %v1317 = vpop.f32.mrb[0].mxu0
    %1318 = vmatprep.mubr.f32.mxu0 0.0
    %1319 = vmatmul.mubr.f32.gmra.mrb[0].mxu0 %v306
    %v1320 = vpop.f32.mrb[0].mxu0
    %v1321 = vadd.f32 %v133, %v1320
    %v1322 = vpop.f32.mrb[0].mxu0
    %1323 = vmatprep.mubr.f32.mxu0 0.0
    %1324 = vmatmul.mubr.f32.gmra.mrb[0].mxu0 %v309
    %v1325 = vpop.f32.mrb[0].mxu0
    %v1326 = vadd.f32 %v138, %v1325
    %v1327 = vpop.f32.mrb[0].mxu0
    %1328 = vmatprep.mubr.f32.mxu0 0.0
    %1329 = vmatmul.mubr.f32.gmra.mrb[0].mxu0 %v312
    %v1330 = vpop.f32.mrb[0].mxu0
    %v1331 = vadd.f32 %v143, %v1330
    %v1332 = vpop.f32.mrb[0].mxu0
    %1333 = vmatprep.mubr.f32.mxu0 0.0
    %1334 = vmatmul.mubr.f32.gmra.mrb[0].mxu0 %v315
    %v1335 = vpop.f32.mrb[0].mxu0
    %v1336 = vadd.f32 %v148, %v1335
    %v1337 = vpop.f32.mrb[0].mxu0
    %1338 = vmatprep.mubr.f32.mxu0 0.0
    %1339 = vmatmul.mubr.f32.gmra.mrb[0].mxu0 %v318
    %v1340 = vpop.f32.mrb[0].mxu0
    %v1341 = vadd.f32 %v153, %v1340
    %v1342 = vpop.f32.mrb[0].mxu0
    %1343 = vmatprep.mubr.f32.mxu0 0.0
    %1344 = vmatmul.mubr.f32.gmra.mrb[0].mxu0 %v321
    %v1345 = vpop.f32.mrb[0].mxu0
    %v1346 = vadd.f32 %v158, %v1345
    %v1347 = vpop.f32.mrb[0].mxu0
    %1348 = vmatprep.mubr.f32.mxu0 0.0
    %1349 = vmatmul.mubr.f32.gmra.mrb[0].mxu0 %v324
    %v1350 = vpop.f32.mrb[0].mxu0
    %v1351 = vadd.f32 %v163, %v1350
    %v1352 = vpop.f32.mrb[0].mxu0
    %1353 = vmatprep.mubr.f32.mxu0 0.0
    %1354 = vmatmul.mubr.f32.gmra.mrb[0].mxu0 %v327
    %v1355 = vpop.f32.mrb[0].mxu0
    %v1356 = vadd.f32 %v168, %v1355
    %v1357 = vpop.f32.mrb[0].mxu0
    %1358 = vmatprep.mubr.f32.mxu0 0.0
    %1359 = vmatmul.mubr.f32.gmra.mrb[0].mxu0 %v330
    %v1360 = vpop.f32.mrb[0].mxu0
    %v1361 = vadd.f32 %v173, %v1360
    %v1362 = vpop.f32.mrb[0].mxu0
    %1363 = vmatprep.mubr.f32.mxu0 0.0
    %1364 = vmatmul.mubr.f32.gmra.mrb[0].mxu0 %v333
    %v1365 = vpop.f32.mrb[0].mxu0
    %v1366 = vadd.f32 %v178, %v1365
    %v1367 = vpop.f32.mrb[0].mxu0
    %1368 = vmatprep.mubr.f32.mxu0 0.0
    %1369 = vmatmul.mubr.f32.gmra.mrb[0].mxu0 %v336
    %v1370 = vpop.f32.mrb[0].mxu0
    %v1371 = vadd.f32 %v183, %v1370
    %v1372 = vpop.f32.mrb[0].mxu0
    %1373 = vmatprep.mubr.f32.mxu0 0.0
    %1374 = vmatmul.mubr.f32.gmra.mrb[0].mxu0 %v339
    %v1375 = vpop.f32.mrb[0].mxu0
    %v1376 = vadd.f32 %v188, %v1375
    %v1377 = vpop.f32.mrb[0].mxu0
    %1378 = vmatprep.mubr.f32.mxu0 0.0
    %1379 = vmatmul.mubr.f32.gmra.mrb[0].mxu0 %v342
    %v1380 = vpop.f32.mrb[0].mxu0
    %v1381 = vadd.f32 %v193, %v1380
    %v1382 = vpop.f32.mrb[0].mxu0
    %1383 = vmatprep.mubr.f32.mxu0 0.0
    %1384 = vmatmul.mubr.f32.gmra.mrb[0].mxu0 %v345
    %v1385 = vpop.f32.mrb[0].mxu0
    %v1386 = vadd.f32 %v198, %v1385
    %v1387 = vpop.f32.mrb[0].mxu0
    %1388 = vmatprep.mubr.f32.mxu0 0.0
    %1389 = vmatmul.mubr.f32.gmra.mrb[0].mxu0 %v348
    %v1390 = vpop.f32.mrb[0].mxu0
    %v1391 = vadd.f32 %v203, %v1390
    %v1392 = vpop.f32.mrb[0].mxu0
    %1393 = vmatprep.mubr.f32.mxu0 0.0
    %1394 = vmatmul.mubr.f32.gmra.mrb[0].mxu0 %v351
    %v1395 = vpop.f32.mrb[0].mxu0
    %v1396 = vadd.f32 %v208, %v1395
    %v1397 = vpop.f32.mrb[0].mxu0
    %1398 = vmatprep.mubr.f32.mxu0 0.0
    %1399 = vmatmul.mubr.f32.gmra.mrb[0].mxu0 %v354
    %v1400 = vpop.f32.mrb[0].mxu0
    %v1401 = vadd.f32 %v213, %v1400
    %v1402 = vpop.f32.mrb[0].mxu0
    %1403 = vmatprep.mubr.f32.mxu0 0.0
    %1404 = vmatmul.mubr.f32.gmra.mrb[0].mxu0 %v357
    %v1405 = vpop.f32.mrb[0].mxu0
    %v1406 = vadd.f32 %v218, %v1405
    %v1407 = vpop.f32.mrb[0].mxu0
    %1408 = vmatprep.mubr.f32.mxu0 0.0
    %1409 = vmatmul.mubr.f32.gmra.mrb[0].mxu0 %v360
    %v1410 = vpop.f32.mrb[0].mxu0
    %v1411 = vadd.f32 %v223, %v1410
    %v1412 = vpop.f32.mrb[0].mxu0
    %1413 = vmatprep.mubr.f32.mxu0 0.0
    %1414 = vmatmul.mubr.f32.gmra.mrb[0].mxu0 %v363
    %v1415 = vpop.f32.mrb[0].mxu0
    %v1416 = vadd.f32 %v228, %v1415
    %v1417 = vpop.f32.mrb[0].mxu0
    %1418 = vmatprep.mubr.f32.mxu0 0.0
    %1419 = vmatmul.mubr.f32.gmra.mrb[0].mxu0 %v366
    %v1420 = vpop.f32.mrb[0].mxu0
    %v1421 = vadd.f32 %v233, %v1420
    %v1422 = vpop.f32.mrb[0].mxu0
    %1423 = vmatprep.mubr.f32.mxu0 0.0
    %1424 = vmatmul.mubr.f32.gmra.mrb[0].mxu0 %v369
    %v1425 = vpop.f32.mrb[0].mxu0
    %v1426 = vadd.f32 %v238, %v1425
    %v1427 = vpop.f32.mrb[0].mxu0
    %1428 = vmatprep.mubr.f32.mxu0 0.0
    %1429 = vmatmul.mubr.f32.gmra.mrb[0].mxu0 %v372
    %v1430 = vpop.f32.mrb[0].mxu0
    %v1431 = vadd.f32 %v243, %v1430
    %v1432 = vpop.f32.mrb[0].mxu0
    %1433 = vmatprep.mubr.f32.mxu0 0.0
    %1434 = vmatmul.mubr.f32.gmra.mrb[0].mxu0 %v375
    %v1435 = vpop.f32.mrb[0].mxu0
    %v1436 = vadd.f32 %v248, %v1435
    %v1437 = vpop.f32.mrb[0].mxu0
    %1438 = vmatprep.mubr.f32.mxu0 0.0
    %1439 = vmatmul.mubr.f32.gmra.mrb[0].mxu0 %v378
    %v1440 = vpop.f32.mrb[0].mxu0
    %v1441 = vadd.f32 %v253, %v1440
    %v1442 = vpop.f32.mrb[0].mxu0
    %1443 = vmatprep.mubr.f32.mxu0 0.0
    %1444 = vmatmul.mubr.f32.gmra.mrb[0].mxu0 %v381
    %v1445 = vpop.f32.mrb[0].mxu0
    %v1446 = vadd.f32 %v258, %v1445
    %v1447 = vpop.f32.mrb[0].mxu0
    %1448 = vmatprep.mubr.f32.mxu0 0.0
    %1449 = vmatmul.mubr.f32.gmra.mrb[0].mxu0 %v384
    %v1450 = vpop.f32.mrb[0].mxu0
    %v1451 = vadd.f32 %v263, %v1450
    %v1452 = vpop.f32.mrb[0].mxu0
    %1453 = vmatprep.mubr.f32.mxu0 0.0
    %1454 = vmatmul.mubr.f32.gmra.mrb[0].mxu0 %v387
    %v1455 = vpop.f32.mrb[0].mxu0
    %v1456 = vadd.f32 %v268, %v1455
    %v1457 = vpop.f32.mrb[0].mxu0
    %1458 = vmatprep.mubr.f32.mxu0 0.0
    %1459 = vmatmul.mubr.f32.gmra.mrb[0].mxu0 %v390
    %v1460 = vpop.f32.mrb[0].mxu0
    %v1461 = vadd.f32 %v273, %v1460
    %v1462 = vpop.f32.mrb[0].mxu0
    %1463 = vmatprep.mubr.f32.mxu0 0.0
    %1464 = vmatmul.mubr.f32.gmra.mrb[0].mxu0 %v393
    %v1465 = vpop.f32.mrb[0].mxu0
    %v1466 = vadd.f32 %v278, %v1465
    %v1467 = vpop.f32.mrb[0].mxu0
    %1468 = vmatprep.mubr.f32.mxu0 0.0
    %1469 = vmatmul.mubr.f32.gmra.mrb[0].mxu0 %v396
    %v1470 = vpop.f32.mrb[0].mxu0
    %v1471 = vadd.f32 %v283, %v1470
    %v1472 = vpop.f32.mrb[0].mxu0
    %1473 = vdwg.mxu0
    %1474 = vmatprep.subr.mxu0 0.0
    %1475 = vmatpush1.msra.mxu0 %v1216
    %1476 = vmatprep.subr.mxu0 0.0
    %1477 = vmatpush1.msra.mxu0 %v1217
    %1478 = vmatprep.subr.mxu0 0.0
    %1479 = vmatpush1.msra.mxu0 %v1218
    %1480 = vmatprep.subr.mxu0 0.0
    %1481 = vmatpush1.msra.mxu0 %v1219
    %1482 = vmatprep.subr.mxu0 0.0
    %1483 = vmatpush1.msra.mxu0 %v1220
    %1484 = vmatprep.subr.mxu0 0.0
    %1485 = vmatpush1.msra.mxu0 %v1221
    %1486 = vmatprep.subr.mxu0 0.0
    %1487 = vmatpush1.msra.mxu0 %v1222
    %1488 = vmatprep.subr.mxu0 0.0
    %1489 = vmatpush1.msra.mxu0 %v1223
    %1490 = vmatprep.subr.mxu0 0.0
    %1491 = vmatpush1.msra.mxu0 0.0
    %1492 = vmatprep.subr.mxu0 0.0
    %1493 = vmatpush1.msra.mxu0 0.0
    %1494 = vmatprep.subr.mxu0 0.0
    %1495 = vmatpush1.msra.mxu0 0.0
    %1496 = vmatprep.subr.mxu0 0.0
    %1497 = vmatpush1.msra.mxu0 0.0
    %1498 = vmatprep.subr.mxu0 0.0
    %1499 = vmatpush1.msra.mxu0 0.0
    %1500 = vmatprep.subr.mxu0 0.0
    %1501 = vmatpush1.msra.mxu0 0.0
    %1502 = vmatprep.subr.mxu0 0.0
    %1503 = vmatpush1.msra.mxu0 0.0
    %1504 = vmatprep.subr.mxu0 0.0
    %1505 = vmatpush1.msra.mxu0 0.0
    %1506 = vmatprep.subr.mxu0 0.0
    %1507 = vmatpush1.msra.mxu0 0.0
    %1508 = vmatprep.subr.mxu0 0.0
    %1509 = vmatpush1.msra.mxu0 0.0
    %1510 = vmatprep.subr.mxu0 0.0
    %1511 = vmatpush1.msra.mxu0 0.0
    %1512 = vmatprep.subr.mxu0 0.0
    %1513 = vmatpush1.msra.mxu0 0.0
    %1514 = vmatprep.subr.mxu0 0.0
    %1515 = vmatpush1.msra.mxu0 0.0
    %1516 = vmatprep.subr.mxu0 0.0
    %1517 = vmatpush1.msra.mxu0 0.0
    %1518 = vmatprep.subr.mxu0 0.0
    %1519 = vmatpush1.msra.mxu0 0.0
    %1520 = vmatprep.subr.mxu0 0.0
    %1521 = vmatpush1.msra.mxu0 0.0
    %1522 = vmatprep.subr.mxu0 0.0
    %1523 = vmatpush1.msra.mxu0 0.0
    %1524 = vmatprep.subr.mxu0 0.0
    %1525 = vmatpush1.msra.mxu0 0.0
    %1526 = vmatprep.subr.mxu0 0.0
    %1527 = vmatpush1.msra.mxu0 0.0
    %1528 = vmatprep.subr.mxu0 0.0
    %1529 = vmatpush1.msra.mxu0 0.0
    %1530 = vmatprep.subr.mxu0 0.0
    %1531 = vmatpush1.msra.mxu0 0.0
    %1532 = vmatprep.subr.mxu0 0.0
    %1533 = vmatpush1.msra.mxu0 0.0
    %1534 = vmatprep.subr.mxu0 0.0
    %1535 = vmatpush1.msra.mxu0 0.0
    %1536 = vmatprep.subr.mxu0 0.0
    %1537 = vmatpush1.msra.mxu0 0.0
    %1538 = vmatprep.mubr.f32.mxu0 0.0
    %1539 = vmatmul.mubr.f32.gmra.mrb[0].mxu0 %v624
    %v1540 = vpop.f32.mrb[0].mxu0
    %v1541 = vadd.f32 0.0, %v1540
    %v1542 = vpop.f32.mrb[0].mxu0
    %1543 = vmatprep.mubr.f32.mxu0 0.0
    %1544 = vmatmul.mubr.f32.gmra.mrb[0].mxu0 %v627
    %v1545 = vpop.f32.mrb[0].mxu0
    %v1546 = vadd.f32 0.0, %v1545
    %v1547 = vpop.f32.mrb[0].mxu0
    %1548 = vmatprep.mubr.f32.mxu0 0.0
    %1549 = vmatmul.mubr.f32.gmra.mrb[0].mxu0 %v630
    %v1550 = vpop.f32.mrb[0].mxu0
    %v1551 = vadd.f32 0.0, %v1550
    %v1552 = vpop.f32.mrb[0].mxu0
    %1553 = vmatprep.mubr.f32.mxu0 0.0
    %1554 = vmatmul.mubr.f32.gmra.mrb[0].mxu0 %v633
    %v1555 = vpop.f32.mrb[0].mxu0
    %v1556 = vadd.f32 0.0, %v1555
    %v1557 = vpop.f32.mrb[0].mxu0
    %1558 = vmatprep.mubr.f32.mxu0 0.0
    %1559 = vmatmul.mubr.f32.gmra.mrb[0].mxu0 %v636
    %v1560 = vpop.f32.mrb[0].mxu0
    %v1561 = vadd.f32 0.0, %v1560
    %v1562 = vpop.f32.mrb[0].mxu0
    %1563 = vmatprep.mubr.f32.mxu0 0.0
    %1564 = vmatmul.mubr.f32.gmra.mrb[0].mxu0 %v639
    %v1565 = vpop.f32.mrb[0].mxu0
    %v1566 = vadd.f32 0.0, %v1565
    %v1567 = vpop.f32.mrb[0].mxu0
    %1568 = vmatprep.mubr.f32.mxu0 0.0
    %1569 = vmatmul.mubr.f32.gmra.mrb[0].mxu0 %v642
    %v1570 = vpop.f32.mrb[0].mxu0
    %v1571 = vadd.f32 0.0, %v1570
    %v1572 = vpop.f32.mrb[0].mxu0
    %1573 = vmatprep.mubr.f32.mxu0 0.0
    %1574 = vmatmul.mubr.f32.gmra.mrb[0].mxu0 %v645
    %v1575 = vpop.f32.mrb[0].mxu0
    %v1576 = vadd.f32 0.0, %v1575
    %v1577 = vpop.f32.mrb[0].mxu0
    %1578 = vmatprep.mubr.f32.mxu0 0.0
    %1579 = vmatmul.mubr.f32.gmra.mrb[0].mxu0 %v648
    %v1580 = vpop.f32.mrb[0].mxu0
    %v1581 = vadd.f32 0.0, %v1580
    %v1582 = vpop.f32.mrb[0].mxu0
    %1583 = vmatprep.mubr.f32.mxu0 0.0
    %1584 = vmatmul.mubr.f32.gmra.mrb[0].mxu0 %v651
    %v1585 = vpop.f32.mrb[0].mxu0
    %v1586 = vadd.f32 0.0, %v1585
    %v1587 = vpop.f32.mrb[0].mxu0
    %1588 = vmatprep.mubr.f32.mxu0 0.0
    %1589 = vmatmul.mubr.f32.gmra.mrb[0].mxu0 %v654
    %v1590 = vpop.f32.mrb[0].mxu0
    %v1591 = vadd.f32 0.0, %v1590
    %v1592 = vpop.f32.mrb[0].mxu0
    %1593 = vmatprep.mubr.f32.mxu0 0.0
    %1594 = vmatmul.mubr.f32.gmra.mrb[0].mxu0 %v657
    %v1595 = vpop.f32.mrb[0].mxu0
    %v1596 = vadd.f32 0.0, %v1595
    %v1597 = vpop.f32.mrb[0].mxu0
    %1598 = vmatprep.mubr.f32.mxu0 0.0
    %1599 = vmatmul.mubr.f32.gmra.mrb[0].mxu0 %v660
    %v1600 = vpop.f32.mrb[0].mxu0
    %v1601 = vadd.f32 0.0, %v1600
    %v1602 = vpop.f32.mrb[0].mxu0
    %1603 = vmatprep.mubr.f32.mxu0 0.0
    %1604 = vmatmul.mubr.f32.gmra.mrb[0].mxu0 %v663
    %v1605 = vpop.f32.mrb[0].mxu0
    %v1606 = vadd.f32 0.0, %v1605
    %v1607 = vpop.f32.mrb[0].mxu0
    %1608 = vmatprep.mubr.f32.mxu0 0.0
    %1609 = vmatmul.mubr.f32.gmra.mrb[0].mxu0 %v666
    %v1610 = vpop.f32.mrb[0].mxu0
    %v1611 = vadd.f32 0.0, %v1610
    %v1612 = vpop.f32.mrb[0].mxu0
    %1613 = vmatprep.mubr.f32.mxu0 0.0
    %1614 = vmatmul.mubr.f32.gmra.mrb[0].mxu0 %v669
    %v1615 = vpop.f32.mrb[0].mxu0
    %v1616 = vadd.f32 0.0, %v1615
    %v1617 = vpop.f32.mrb[0].mxu0
    %1618 = vmatprep.mubr.f32.mxu0 0.0
    %1619 = vmatmul.mubr.f32.gmra.mrb[0].mxu0 %v672
    %v1620 = vpop.f32.mrb[0].mxu0
    %v1621 = vadd.f32 0.0, %v1620
    %v1622 = vpop.f32.mrb[0].mxu0
    %1623 = vmatprep.mubr.f32.mxu0 0.0
    %1624 = vmatmul.mubr.f32.gmra.mrb[0].mxu0 %v675
    %v1625 = vpop.f32.mrb[0].mxu0
    %v1626 = vadd.f32 0.0, %v1625
    %v1627 = vpop.f32.mrb[0].mxu0
    %1628 = vmatprep.mubr.f32.mxu0 0.0
    %1629 = vmatmul.mubr.f32.gmra.mrb[0].mxu0 %v678
    %v1630 = vpop.f32.mrb[0].mxu0
    %v1631 = vadd.f32 0.0, %v1630
    %v1632 = vpop.f32.mrb[0].mxu0
    %1633 = vmatprep.mubr.f32.mxu0 0.0
    %1634 = vmatmul.mubr.f32.gmra.mrb[0].mxu0 %v681
    %v1635 = vpop.f32.mrb[0].mxu0
    %v1636 = vadd.f32 0.0, %v1635
    %v1637 = vpop.f32.mrb[0].mxu0
    %1638 = vmatprep.mubr.f32.mxu0 0.0
    %1639 = vmatmul.mubr.f32.gmra.mrb[0].mxu0 %v684
    %v1640 = vpop.f32.mrb[0].mxu0
    %v1641 = vadd.f32 0.0, %v1640
    %v1642 = vpop.f32.mrb[0].mxu0
    %1643 = vmatprep.mubr.f32.mxu0 0.0
    %1644 = vmatmul.mubr.f32.gmra.mrb[0].mxu0 %v687
    %v1645 = vpop.f32.mrb[0].mxu0
    %v1646 = vadd.f32 0.0, %v1645
    %v1647 = vpop.f32.mrb[0].mxu0
    %1648 = vmatprep.mubr.f32.mxu0 0.0
    %1649 = vmatmul.mubr.f32.gmra.mrb[0].mxu0 %v690
    %v1650 = vpop.f32.mrb[0].mxu0
    %v1651 = vadd.f32 0.0, %v1650
    %v1652 = vpop.f32.mrb[0].mxu0
    %1653 = vmatprep.mubr.f32.mxu0 0.0
    %1654 = vmatmul.mubr.f32.gmra.mrb[0].mxu0 %v693
    %v1655 = vpop.f32.mrb[0].mxu0
    %v1656 = vadd.f32 0.0, %v1655
    %v1657 = vpop.f32.mrb[0].mxu0
    %1658 = vmatprep.mubr.f32.mxu0 0.0
    %1659 = vmatmul.mubr.f32.gmra.mrb[0].mxu0 %v696
    %v1660 = vpop.f32.mrb[0].mxu0
    %v1661 = vadd.f32 0.0, %v1660
    %v1662 = vpop.f32.mrb[0].mxu0
    %1663 = vmatprep.mubr.f32.mxu0 0.0
    %1664 = vmatmul.mubr.f32.gmra.mrb[0].mxu0 %v699
    %v1665 = vpop.f32.mrb[0].mxu0
    %v1666 = vadd.f32 0.0, %v1665
    %v1667 = vpop.f32.mrb[0].mxu0
    %1668 = vmatprep.mubr.f32.mxu0 0.0
    %1669 = vmatmul.mubr.f32.gmra.mrb[0].mxu0 %v702
    %v1670 = vpop.f32.mrb[0].mxu0
    %v1671 = vadd.f32 0.0, %v1670
    %v1672 = vpop.f32.mrb[0].mxu0
    %1673 = vmatprep.mubr.f32.mxu0 0.0
    %1674 = vmatmul.mubr.f32.gmra.mrb[0].mxu0 %v705
    %v1675 = vpop.f32.mrb[0].mxu0
    %v1676 = vadd.f32 0.0, %v1675
    %v1677 = vpop.f32.mrb[0].mxu0
    %1678 = vmatprep.mubr.f32.mxu0 0.0
    %1679 = vmatmul.mubr.f32.gmra.mrb[0].mxu0 %v708
    %v1680 = vpop.f32.mrb[0].mxu0
    %v1681 = vadd.f32 0.0, %v1680
    %v1682 = vpop.f32.mrb[0].mxu0
    %1683 = vmatprep.mubr.f32.mxu0 0.0
    %1684 = vmatmul.mubr.f32.gmra.mrb[0].mxu0 %v711
    %v1685 = vpop.f32.mrb[0].mxu0
    %v1686 = vadd.f32 0.0, %v1685
    %v1687 = vpop.f32.mrb[0].mxu0
    %1688 = vmatprep.mubr.f32.mxu0 0.0
    %1689 = vmatmul.mubr.f32.gmra.mrb[0].mxu0 %v714
    %v1690 = vpop.f32.mrb[0].mxu0
    %v1691 = vadd.f32 0.0, %v1690
    %v1692 = vpop.f32.mrb[0].mxu0
    %1693 = vmatprep.mubr.f32.mxu0 0.0
    %1694 = vmatmul.mubr.f32.gmra.mrb[0].mxu0 %v717
    %v1695 = vpop.f32.mrb[0].mxu0
    %v1696 = vadd.f32 0.0, %v1695
    %v1697 = vpop.f32.mrb[0].mxu0
    %1698 = vdwg.mxu0
    %v1699 = vadd.f32 %v1316, %v1541
    %v1700 = vadd.f32 %v1321, %v1546
    %v1701 = vadd.f32 %v1326, %v1551
    %v1702 = vadd.f32 %v1331, %v1556
    %v1703 = vadd.f32 %v1336, %v1561
    %v1704 = vadd.f32 %v1341, %v1566
    %v1705 = vadd.f32 %v1346, %v1571
    %v1706 = vadd.f32 %v1351, %v1576
    %v1707 = vadd.f32 %v1356, %v1581
    %v1708 = vadd.f32 %v1361, %v1586
    %v1709 = vadd.f32 %v1366, %v1591
    %v1710 = vadd.f32 %v1371, %v1596
    %v1711 = vadd.f32 %v1376, %v1601
    %v1712 = vadd.f32 %v1381, %v1606
    %v1713 = vadd.f32 %v1386, %v1611
    %v1714 = vadd.f32 %v1391, %v1616
    %v1715 = vadd.f32 %v1396, %v1621
    %v1716 = vadd.f32 %v1401, %v1626
    %v1717 = vadd.f32 %v1406, %v1631
    %v1718 = vadd.f32 %v1411, %v1636
    %v1719 = vadd.f32 %v1416, %v1641
    %v1720 = vadd.f32 %v1421, %v1646
    %v1721 = vadd.f32 %v1426, %v1651
    %v1722 = vadd.f32 %v1431, %v1656
    %v1723 = vadd.f32 %v1436, %v1661
    %v1724 = vadd.f32 %v1441, %v1666
    %v1725 = vadd.f32 %v1446, %v1671
    %v1726 = vadd.f32 %v1451, %v1676
    %v1727 = vadd.f32 %v1456, %v1681
    %v1728 = vadd.f32 %v1461, %v1686
    %v1729 = vadd.f32 %v1466, %v1691
    %v1730 = vadd.f32 %v1471, %v1696
    %v1731 = vxor.u32 %v1699, 2147483648
    %v1732 = vxor.u32 %v1700, 2147483648
    %v1733 = vxor.u32 %v1701, 2147483648
    %v1734 = vxor.u32 %v1702, 2147483648
    %v1735 = vxor.u32 %v1703, 2147483648
    %v1736 = vxor.u32 %v1704, 2147483648
    %v1737 = vxor.u32 %v1705, 2147483648
    %v1738 = vxor.u32 %v1706, 2147483648
    %v1739 = vxor.u32 %v1707, 2147483648
    %v1740 = vxor.u32 %v1708, 2147483648
    %v1741 = vxor.u32 %v1709, 2147483648
    %v1742 = vxor.u32 %v1710, 2147483648
    %v1743 = vxor.u32 %v1711, 2147483648
    %v1744 = vxor.u32 %v1712, 2147483648
    %v1745 = vxor.u32 %v1713, 2147483648
    %v1746 = vxor.u32 %v1714, 2147483648
    %v1747 = vxor.u32 %v1715, 2147483648
    %v1748 = vxor.u32 %v1716, 2147483648
    %v1749 = vxor.u32 %v1717, 2147483648
    %v1750 = vxor.u32 %v1718, 2147483648
    %v1751 = vxor.u32 %v1719, 2147483648
    %v1752 = vxor.u32 %v1720, 2147483648
    %v1753 = vxor.u32 %v1721, 2147483648
    %v1754 = vxor.u32 %v1722, 2147483648
    %v1755 = vxor.u32 %v1723, 2147483648
    %v1756 = vxor.u32 %v1724, 2147483648
    %v1757 = vxor.u32 %v1725, 2147483648
    %v1758 = vxor.u32 %v1726, 2147483648
    %v1759 = vxor.u32 %v1727, 2147483648
    %v1760 = vxor.u32 %v1728, 2147483648
    %v1761 = vxor.u32 %v1729, 2147483648
    %v1762 = vxor.u32 %v1730, 2147483648
    %v1763 = vmul.f32 %v1731, 1.442695
    %v1764 = vpow.pop %v1763
    %v1765 = vmul.f32 %v1732, 1.442695
    %v1766 = vpow.pop %v1765
    %v1767 = vmul.f32 %v1733, 1.442695
    %v1768 = vpow.pop %v1767
    %v1769 = vmul.f32 %v1734, 1.442695
    %v1770 = vpow.pop %v1769
    %v1771 = vmul.f32 %v1735, 1.442695
    %v1772 = vpow.pop %v1771
    %v1773 = vmul.f32 %v1736, 1.442695
    %v1774 = vpow.pop %v1773
    %v1775 = vmul.f32 %v1737, 1.442695
    %v1776 = vpow.pop %v1775
    %v1777 = vmul.f32 %v1738, 1.442695
    %v1778 = vpow.pop %v1777
    %v1779 = vmul.f32 %v1739, 1.442695
    %v1780 = vpow.pop %v1779
    %v1781 = vmul.f32 %v1740, 1.442695
    %v1782 = vpow.pop %v1781
    %v1783 = vmul.f32 %v1741, 1.442695
    %v1784 = vpow.pop %v1783
    %v1785 = vmul.f32 %v1742, 1.442695
    %v1786 = vpow.pop %v1785
    %v1787 = vmul.f32 %v1743, 1.442695
    %v1788 = vpow.pop %v1787
    %v1789 = vmul.f32 %v1744, 1.442695
    %v1790 = vpow.pop %v1789
    %v1791 = vmul.f32 %v1745, 1.442695
    %v1792 = vpow.pop %v1791
    %v1793 = vmul.f32 %v1746, 1.442695
    %v1794 = vpow.pop %v1793
    %v1795 = vmul.f32 %v1747, 1.442695
    %v1796 = vpow.pop %v1795
    %v1797 = vmul.f32 %v1748, 1.442695
    %v1798 = vpow.pop %v1797
    %v1799 = vmul.f32 %v1749, 1.442695
    %v1800 = vpow.pop %v1799
    %v1801 = vmul.f32 %v1750, 1.442695
    %v1802 = vpow.pop %v1801
    %v1803 = vmul.f32 %v1751, 1.442695
    %v1804 = vpow.pop %v1803
    %v1805 = vmul.f32 %v1752, 1.442695
    %v1806 = vpow.pop %v1805
    %v1807 = vmul.f32 %v1753, 1.442695
    %v1808 = vpow.pop %v1807
    %v1809 = vmul.f32 %v1754, 1.442695
    %v1810 = vpow.pop %v1809
    %v1811 = vmul.f32 %v1755, 1.442695
    %v1812 = vpow.pop %v1811
    %v1813 = vmul.f32 %v1756, 1.442695
    %v1814 = vpow.pop %v1813
    %v1815 = vmul.f32 %v1757, 1.442695
    %v1816 = vpow.pop %v1815
    %v1817 = vmul.f32 %v1758, 1.442695
    %v1818 = vpow.pop %v1817
    %v1819 = vmul.f32 %v1759, 1.442695
    %v1820 = vpow.pop %v1819
    %v1821 = vmul.f32 %v1760, 1.442695
    %v1822 = vpow.pop %v1821
    %v1823 = vmul.f32 %v1761, 1.442695
    %v1824 = vpow.pop %v1823
    %v1825 = vmul.f32 %v1762, 1.442695
    %v1826 = vpow.pop %v1825
    %v1827 = vadd.f32 %v1764, 1.0
    %v1828 = vadd.f32 %v1766, 1.0
    %v1829 = vadd.f32 %v1768, 1.0
    %v1830 = vadd.f32 %v1770, 1.0
    %v1831 = vadd.f32 %v1772, 1.0
    %v1832 = vadd.f32 %v1774, 1.0
    %v1833 = vadd.f32 %v1776, 1.0
    %v1834 = vadd.f32 %v1778, 1.0
    %v1835 = vadd.f32 %v1780, 1.0
    %v1836 = vadd.f32 %v1782, 1.0
    %v1837 = vadd.f32 %v1784, 1.0
    %v1838 = vadd.f32 %v1786, 1.0
    %v1839 = vadd.f32 %v1788, 1.0
    %v1840 = vadd.f32 %v1790, 1.0
    %v1841 = vadd.f32 %v1792, 1.0
    %v1842 = vadd.f32 %v1794, 1.0
    %v1843 = vadd.f32 %v1796, 1.0
    %v1844 = vadd.f32 %v1798, 1.0
    %v1845 = vadd.f32 %v1800, 1.0
    %v1846 = vadd.f32 %v1802, 1.0
    %v1847 = vadd.f32 %v1804, 1.0
    %v1848 = vadd.f32 %v1806, 1.0
    %v1849 = vadd.f32 %v1808, 1.0
    %v1850 = vadd.f32 %v1810, 1.0
    %v1851 = vadd.f32 %v1812, 1.0
    %v1852 = vadd.f32 %v1814, 1.0
    %v1853 = vadd.f32 %v1816, 1.0
    %v1854 = vadd.f32 %v1818, 1.0
    %v1855 = vadd.f32 %v1820, 1.0
    %v1856 = vadd.f32 %v1822, 1.0
    %v1857 = vadd.f32 %v1824, 1.0
    %v1858 = vadd.f32 %v1826, 1.0
    %v1859 = vrcp.pop %v1827
    %v1860 = vmul.f32 1.0, %v1859
    %v1861 = vrcp.pop %v1828
    %v1862 = vmul.f32 1.0, %v1861
    %v1863 = vrcp.pop %v1829
    %v1864 = vmul.f32 1.0, %v1863
    %v1865 = vrcp.pop %v1830
    %v1866 = vmul.f32 1.0, %v1865
    %v1867 = vrcp.pop %v1831
    %v1868 = vmul.f32 1.0, %v1867
    %v1869 = vrcp.pop %v1832
    %v1870 = vmul.f32 1.0, %v1869
    %v1871 = vrcp.pop %v1833
    %v1872 = vmul.f32 1.0, %v1871
    %v1873 = vrcp.pop %v1834
    %v1874 = vmul.f32 1.0, %v1873
    %v1875 = vrcp.pop %v1835
    %v1876 = vmul.f32 1.0, %v1875
    %v1877 = vrcp.pop %v1836
    %v1878 = vmul.f32 1.0, %v1877
    %v1879 = vrcp.pop %v1837
    %v1880 = vmul.f32 1.0, %v1879
    %v1881 = vrcp.pop %v1838
    %v1882 = vmul.f32 1.0, %v1881
    %v1883 = vrcp.pop %v1839
    %v1884 = vmul.f32 1.0, %v1883
    %v1885 = vrcp.pop %v1840
    %v1886 = vmul.f32 1.0, %v1885
    %v1887 = vrcp.pop %v1841
    %v1888 = vmul.f32 1.0, %v1887
    %v1889 = vrcp.pop %v1842
    %v1890 = vmul.f32 1.0, %v1889
    %v1891 = vrcp.pop %v1843
    %v1892 = vmul.f32 1.0, %v1891
    %v1893 = vrcp.pop %v1844
    %v1894 = vmul.f32 1.0, %v1893
    %v1895 = vrcp.pop %v1845
    %v1896 = vmul.f32 1.0, %v1895
    %v1897 = vrcp.pop %v1846
    %v1898 = vmul.f32 1.0, %v1897
    %v1899 = vrcp.pop %v1847
    %v1900 = vmul.f32 1.0, %v1899
    %v1901 = vrcp.pop %v1848
    %v1902 = vmul.f32 1.0, %v1901
    %v1903 = vrcp.pop %v1849
    %v1904 = vmul.f32 1.0, %v1903
    %v1905 = vrcp.pop %v1850
    %v1906 = vmul.f32 1.0, %v1905
    %v1907 = vrcp.pop %v1851
    %v1908 = vmul.f32 1.0, %v1907
    %v1909 = vrcp.pop %v1852
    %v1910 = vmul.f32 1.0, %v1909
    %v1911 = vrcp.pop %v1853
    %v1912 = vmul.f32 1.0, %v1911
    %v1913 = vrcp.pop %v1854
    %v1914 = vmul.f32 1.0, %v1913
    %v1915 = vrcp.pop %v1855
    %v1916 = vmul.f32 1.0, %v1915
    %v1917 = vrcp.pop %v1856
    %v1918 = vmul.f32 1.0, %v1917
    %v1919 = vrcp.pop %v1857
    %v1920 = vmul.f32 1.0, %v1919
    %v1921 = vrcp.pop %v1858
    %v1922 = vmul.f32 1.0, %v1921
    %v1923 = vmul.f32 %v1892, 2.0
    %v1924 = vmul.f32 %v1894, 2.0
    %v1925 = vmul.f32 %v1896, 2.0
    %v1926 = vmul.f32 %v1898, 2.0
    %v1927 = vmul.f32 %v1900, 2.0
    %v1928 = vmul.f32 %v1902, 2.0
    %v1929 = vmul.f32 %v1904, 2.0
    %v1930 = vmul.f32 %v1906, 2.0
    %v1931 = vsub.f32 %v1923, 1.0
    %v1932 = vsub.f32 %v1924, 1.0
    %v1933 = vsub.f32 %v1925, 1.0
    %v1934 = vsub.f32 %v1926, 1.0
    %v1935 = vsub.f32 %v1927, 1.0
    %v1936 = vsub.f32 %v1928, 1.0
    %v1937 = vsub.f32 %v1929, 1.0
    %v1938 = vsub.f32 %v1930, 1.0
    %v1939 = vmul.f32 %v1876, %v1200
    %v1940 = vmul.f32 %v1878, %v1201
    %v1941 = vmul.f32 %v1880, %v1202
    %v1942 = vmul.f32 %v1882, %v1203
    %v1943 = vmul.f32 %v1884, %v1204
    %v1944 = vmul.f32 %v1886, %v1205
    %v1945 = vmul.f32 %v1888, %v1206
    %v1946 = vmul.f32 %v1890, %v1207
    %v1947 = vmul.f32 %v1860, %v1931
    %v1948 = vmul.f32 %v1862, %v1932
    %v1949 = vmul.f32 %v1864, %v1933
    %v1950 = vmul.f32 %v1866, %v1934
    %v1951 = vmul.f32 %v1868, %v1935
    %v1952 = vmul.f32 %v1870, %v1936
    %v1953 = vmul.f32 %v1872, %v1937
    %v1954 = vmul.f32 %v1874, %v1938
    %v1955 = vadd.f32 %v1939, %v1947
    %v1956 = vadd.f32 %v1940, %v1948
    %v1957 = vadd.f32 %v1941, %v1949
    %v1958 = vadd.f32 %v1942, %v1950
    %v1959 = vadd.f32 %v1943, %v1951
    %v1960 = vadd.f32 %v1944, %v1952
    %v1961 = vadd.f32 %v1945, %v1953
    %v1962 = vadd.f32 %v1946, %v1954
    %v1963 = vtanh.pop %v1955
    %v1964 = vtanh.pop %v1956
    %v1965 = vtanh.pop %v1957
    %v1966 = vtanh.pop %v1958
    %v1967 = vtanh.pop %v1959
    %v1968 = vtanh.pop %v1960
    %v1969 = vtanh.pop %v1961
    %v1970 = vtanh.pop %v1962
    %v1971 = vmul.f32 %v1908, %v1963
    %v1972 = vmul.f32 %v1910, %v1964
    %v1973 = vmul.f32 %v1912, %v1965
    %v1974 = vmul.f32 %v1914, %v1966
    %v1975 = vmul.f32 %v1916, %v1967
    %v1976 = vmul.f32 %v1918, %v1968
    %v1977 = vmul.f32 %v1920, %v1969
    %v1978 = vmul.f32 %v1922, %v1970
    %v1979 = vadd.f32 %v1224, %v1971
    %v1980 = vadd.f32 %v1225, %v1972
    %v1981 = vadd.f32 %v1226, %v1973
    %v1982 = vadd.f32 %v1227, %v1974
    %v1983 = vadd.f32 %v1228, %v1975
    %v1984 = vadd.f32 %v1229, %v1976
    %v1985 = vadd.f32 %v1230, %v1977
    %v1986 = vadd.f32 %v1231, %v1978
    %s1987 = scalar_lea.vmem %s0, 64
    %v1988 = vld [vmem:[%s1987] sm:$0xf]
    %v1989 = vld [vmem:[%s1987 + $0x4] sm:$0xf]
    %v1990 = vld [vmem:[%s1987 + $0x8] sm:$0xf]
    %v1991 = vld [vmem:[%s1987 + $0xc] sm:$0xf]
    %v1992 = vld [vmem:[%s1987 + $0x10] sm:$0xf]
    %v1993 = vld [vmem:[%s1987 + $0x14] sm:$0xf]
    %v1994 = vld [vmem:[%s1987 + $0x18] sm:$0xf]
    %v1995 = vld [vmem:[%s1987 + $0x1c] sm:$0xf]
    %v1996 = vunpack.c.l.bf16 %v1988
    %v1997 = vunpack.c.l.bf16 %v1989
    %v1998 = vunpack.c.l.bf16 %v1990
    %v1999 = vunpack.c.l.bf16 %v1991
    %v2000 = vunpack.c.l.bf16 %v1992
    %v2001 = vunpack.c.l.bf16 %v1993
    %v2002 = vunpack.c.l.bf16 %v1994
    %v2003 = vunpack.c.l.bf16 %v1995
    %2004 = vmatprep.subr.mxu0 0.0
    %2005 = vmatpush1.msra.mxu0 %v1996
    %2006 = vmatprep.subr.mxu0 0.0
    %2007 = vmatpush1.msra.mxu0 %v1997
    %2008 = vmatprep.subr.mxu0 0.0
    %2009 = vmatpush1.msra.mxu0 %v1998
    %2010 = vmatprep.subr.mxu0 0.0
    %2011 = vmatpush1.msra.mxu0 %v1999
    %2012 = vmatprep.subr.mxu0 0.0
    %2013 = vmatpush1.msra.mxu0 %v2000
    %2014 = vmatprep.subr.mxu0 0.0
    %2015 = vmatpush1.msra.mxu0 %v2001
    %2016 = vmatprep.subr.mxu0 0.0
    %2017 = vmatpush1.msra.mxu0 %v2002
    %2018 = vmatprep.subr.mxu0 0.0
    %2019 = vmatpush1.msra.mxu0 %v2003
    %2020 = vmatprep.subr.mxu0 0.0
    %2021 = vmatpush1.msra.mxu0 0.0
    %2022 = vmatprep.subr.mxu0 0.0
    %2023 = vmatpush1.msra.mxu0 0.0
    %2024 = vmatprep.subr.mxu0 0.0
    %2025 = vmatpush1.msra.mxu0 0.0
    %2026 = vmatprep.subr.mxu0 0.0
    %2027 = vmatpush1.msra.mxu0 0.0
    %2028 = vmatprep.subr.mxu0 0.0
    %2029 = vmatpush1.msra.mxu0 0.0
    %2030 = vmatprep.subr.mxu0 0.0
    %2031 = vmatpush1.msra.mxu0 0.0
    %2032 = vmatprep.subr.mxu0 0.0
    %2033 = vmatpush1.msra.mxu0 0.0
    %2034 = vmatprep.subr.mxu0 0.0
    %2035 = vmatpush1.msra.mxu0 0.0
    %2036 = vmatprep.subr.mxu0 0.0
    %2037 = vmatpush1.msra.mxu0 0.0
    %2038 = vmatprep.subr.mxu0 0.0
    %2039 = vmatpush1.msra.mxu0 0.0
    %2040 = vmatprep.subr.mxu0 0.0
    %2041 = vmatpush1.msra.mxu0 0.0
    %2042 = vmatprep.subr.mxu0 0.0
    %2043 = vmatpush1.msra.mxu0 0.0
    %2044 = vmatprep.subr.mxu0 0.0
    %2045 = vmatpush1.msra.mxu0 0.0
    %2046 = vmatprep.subr.mxu0 0.0
    %2047 = vmatpush1.msra.mxu0 0.0
    %2048 = vmatprep.subr.mxu0 0.0
    %2049 = vmatpush1.msra.mxu0 0.0
    %2050 = vmatprep.subr.mxu0 0.0
    %2051 = vmatpush1.msra.mxu0 0.0
    %2052 = vmatprep.subr.mxu0 0.0
    %2053 = vmatpush1.msra.mxu0 0.0
    %2054 = vmatprep.subr.mxu0 0.0
    %2055 = vmatpush1.msra.mxu0 0.0
    %2056 = vmatprep.subr.mxu0 0.0
    %2057 = vmatpush1.msra.mxu0 0.0
    %2058 = vmatprep.subr.mxu0 0.0
    %2059 = vmatpush1.msra.mxu0 0.0
    %2060 = vmatprep.subr.mxu0 0.0
    %2061 = vmatpush1.msra.mxu0 0.0
    %2062 = vmatprep.subr.mxu0 0.0
    %2063 = vmatpush1.msra.mxu0 0.0
    %2064 = vmatprep.subr.mxu0 0.0
    %2065 = vmatpush1.msra.mxu0 0.0
    %2066 = vmatprep.subr.mxu0 0.0
    %2067 = vmatpush1.msra.mxu0 0.0
    %2068 = vmatprep.mubr.f32.mxu0 0.0
    %2069 = vmatmul.mubr.f32.gmra.mrb[0].mxu0 %v303
    %v2070 = vpop.f32.mrb[0].mxu0
    %v2071 = vadd.f32 %v128, %v2070
    %v2072 = vpop.f32.mrb[0].mxu0
    %2073 = vmatprep.mubr.f32.mxu0 0.0
    %2074 = vmatmul.mubr.f32.gmra.mrb[0].mxu0 %v306
    %v2075 = vpop.f32.mrb[0].mxu0
    %v2076 = vadd.f32 %v133, %v2075
    %v2077 = vpop.f32.mrb[0].mxu0
    %2078 = vmatprep.mubr.f32.mxu0 0.0
    %2079 = vmatmul.mubr.f32.gmra.mrb[0].mxu0 %v309
    %v2080 = vpop.f32.mrb[0].mxu0
    %v2081 = vadd.f32 %v138, %v2080
    %v2082 = vpop.f32.mrb[0].mxu0
    %2083 = vmatprep.mubr.f32.mxu0 0.0
    %2084 = vmatmul.mubr.f32.gmra.mrb[0].mxu0 %v312
    %v2085 = vpop.f32.mrb[0].mxu0
    %v2086 = vadd.f32 %v143, %v2085
    %v2087 = vpop.f32.mrb[0].mxu0
    %2088 = vmatprep.mubr.f32.mxu0 0.0
    %2089 = vmatmul.mubr.f32.gmra.mrb[0].mxu0 %v315
    %v2090 = vpop.f32.mrb[0].mxu0
    %v2091 = vadd.f32 %v148, %v2090
    %v2092 = vpop.f32.mrb[0].mxu0
    %2093 = vmatprep.mubr.f32.mxu0 0.0
    %2094 = vmatmul.mubr.f32.gmra.mrb[0].mxu0 %v318
    %v2095 = vpop.f32.mrb[0].mxu0
    %v2096 = vadd.f32 %v153, %v2095
    %v2097 = vpop.f32.mrb[0].mxu0
    %2098 = vmatprep.mubr.f32.mxu0 0.0
    %2099 = vmatmul.mubr.f32.gmra.mrb[0].mxu0 %v321
    %v2100 = vpop.f32.mrb[0].mxu0
    %v2101 = vadd.f32 %v158, %v2100
    %v2102 = vpop.f32.mrb[0].mxu0
    %2103 = vmatprep.mubr.f32.mxu0 0.0
    %2104 = vmatmul.mubr.f32.gmra.mrb[0].mxu0 %v324
    %v2105 = vpop.f32.mrb[0].mxu0
    %v2106 = vadd.f32 %v163, %v2105
    %v2107 = vpop.f32.mrb[0].mxu0
    %2108 = vmatprep.mubr.f32.mxu0 0.0
    %2109 = vmatmul.mubr.f32.gmra.mrb[0].mxu0 %v327
    %v2110 = vpop.f32.mrb[0].mxu0
    %v2111 = vadd.f32 %v168, %v2110
    %v2112 = vpop.f32.mrb[0].mxu0
    %2113 = vmatprep.mubr.f32.mxu0 0.0
    %2114 = vmatmul.mubr.f32.gmra.mrb[0].mxu0 %v330
    %v2115 = vpop.f32.mrb[0].mxu0
    %v2116 = vadd.f32 %v173, %v2115
    %v2117 = vpop.f32.mrb[0].mxu0
    %2118 = vmatprep.mubr.f32.mxu0 0.0
    %2119 = vmatmul.mubr.f32.gmra.mrb[0].mxu0 %v333
    %v2120 = vpop.f32.mrb[0].mxu0
    %v2121 = vadd.f32 %v178, %v2120
    %v2122 = vpop.f32.mrb[0].mxu0
    %2123 = vmatprep.mubr.f32.mxu0 0.0
    %2124 = vmatmul.mubr.f32.gmra.mrb[0].mxu0 %v336
    %v2125 = vpop.f32.mrb[0].mxu0
    %v2126 = vadd.f32 %v183, %v2125
    %v2127 = vpop.f32.mrb[0].mxu0
    %2128 = vmatprep.mubr.f32.mxu0 0.0
    %2129 = vmatmul.mubr.f32.gmra.mrb[0].mxu0 %v339
    %v2130 = vpop.f32.mrb[0].mxu0
    %v2131 = vadd.f32 %v188, %v2130
    %v2132 = vpop.f32.mrb[0].mxu0
    %2133 = vmatprep.mubr.f32.mxu0 0.0
    %2134 = vmatmul.mubr.f32.gmra.mrb[0].mxu0 %v342
    %v2135 = vpop.f32.mrb[0].mxu0
    %v2136 = vadd.f32 %v193, %v2135
    %v2137 = vpop.f32.mrb[0].mxu0
    %2138 = vmatprep.mubr.f32.mxu0 0.0
    %2139 = vmatmul.mubr.f32.gmra.mrb[0].mxu0 %v345
    %v2140 = vpop.f32.mrb[0].mxu0
    %v2141 = vadd.f32 %v198, %v2140
    %v2142 = vpop.f32.mrb[0].mxu0
    %2143 = vmatprep.mubr.f32.mxu0 0.0
    %2144 = vmatmul.mubr.f32.gmra.mrb[0].mxu0 %v348
    %v2145 = vpop.f32.mrb[0].mxu0
    %v2146 = vadd.f32 %v203, %v2145
    %v2147 = vpop.f32.mrb[0].mxu0
    %2148 = vmatprep.mubr.f32.mxu0 0.0
    %2149 = vmatmul.mubr.f32.gmra.mrb[0].mxu0 %v351
    %v2150 = vpop.f32.mrb[0].mxu0
    %v2151 = vadd.f32 %v208, %v2150
    %v2152 = vpop.f32.mrb[0].mxu0
    %2153 = vmatprep.mubr.f32.mxu0 0.0
    %2154 = vmatmul.mubr.f32.gmra.mrb[0].mxu0 %v354
    %v2155 = vpop.f32.mrb[0].mxu0
    %v2156 = vadd.f32 %v213, %v2155
    %v2157 = vpop.f32.mrb[0].mxu0
    %2158 = vmatprep.mubr.f32.mxu0 0.0
    %2159 = vmatmul.mubr.f32.gmra.mrb[0].mxu0 %v357
    %v2160 = vpop.f32.mrb[0].mxu0
    %v2161 = vadd.f32 %v218, %v2160
    %v2162 = vpop.f32.mrb[0].mxu0
    %2163 = vmatprep.mubr.f32.mxu0 0.0
    %2164 = vmatmul.mubr.f32.gmra.mrb[0].mxu0 %v360
    %v2165 = vpop.f32.mrb[0].mxu0
    %v2166 = vadd.f32 %v223, %v2165
    %v2167 = vpop.f32.mrb[0].mxu0
    %2168 = vmatprep.mubr.f32.mxu0 0.0
    %2169 = vmatmul.mubr.f32.gmra.mrb[0].mxu0 %v363
    %v2170 = vpop.f32.mrb[0].mxu0
    %v2171 = vadd.f32 %v228, %v2170
    %v2172 = vpop.f32.mrb[0].mxu0
    %2173 = vmatprep.mubr.f32.mxu0 0.0
    %2174 = vmatmul.mubr.f32.gmra.mrb[0].mxu0 %v366
    %v2175 = vpop.f32.mrb[0].mxu0
    %v2176 = vadd.f32 %v233, %v2175
    %v2177 = vpop.f32.mrb[0].mxu0
    %2178 = vmatprep.mubr.f32.mxu0 0.0
    %2179 = vmatmul.mubr.f32.gmra.mrb[0].mxu0 %v369
    %v2180 = vpop.f32.mrb[0].mxu0
    %v2181 = vadd.f32 %v238, %v2180
    %v2182 = vpop.f32.mrb[0].mxu0
    %2183 = vmatprep.mubr.f32.mxu0 0.0
    %2184 = vmatmul.mubr.f32.gmra.mrb[0].mxu0 %v372
    %v2185 = vpop.f32.mrb[0].mxu0
    %v2186 = vadd.f32 %v243, %v2185
    %v2187 = vpop.f32.mrb[0].mxu0
    %2188 = vmatprep.mubr.f32.mxu0 0.0
    %2189 = vmatmul.mubr.f32.gmra.mrb[0].mxu0 %v375
    %v2190 = vpop.f32.mrb[0].mxu0
    %v2191 = vadd.f32 %v248, %v2190
    %v2192 = vpop.f32.mrb[0].mxu0
    %2193 = vmatprep.mubr.f32.mxu0 0.0
    %2194 = vmatmul.mubr.f32.gmra.mrb[0].mxu0 %v378
    %v2195 = vpop.f32.mrb[0].mxu0
    %v2196 = vadd.f32 %v253, %v2195
    %v2197 = vpop.f32.mrb[0].mxu0
    %2198 = vmatprep.mubr.f32.mxu0 0.0
    %2199 = vmatmul.mubr.f32.gmra.mrb[0].mxu0 %v381
    %v2200 = vpop.f32.mrb[0].mxu0
    %v2201 = vadd.f32 %v258, %v2200
    %v2202 = vpop.f32.mrb[0].mxu0
    %2203 = vmatprep.mubr.f32.mxu0 0.0
    %2204 = vmatmul.mubr.f32.gmra.mrb[0].mxu0 %v384
    %v2205 = vpop.f32.mrb[0].mxu0
    %v2206 = vadd.f32 %v263, %v2205
    %v2207 = vpop.f32.mrb[0].mxu0
    %2208 = vmatprep.mubr.f32.mxu0 0.0
    %2209 = vmatmul.mubr.f32.gmra.mrb[0].mxu0 %v387
    %v2210 = vpop.f32.mrb[0].mxu0
    %v2211 = vadd.f32 %v268, %v2210
    %v2212 = vpop.f32.mrb[0].mxu0
    %2213 = vmatprep.mubr.f32.mxu0 0.0
    %2214 = vmatmul.mubr.f32.gmra.mrb[0].mxu0 %v390
    %v2215 = vpop.f32.mrb[0].mxu0
    %v2216 = vadd.f32 %v273, %v2215
    %v2217 = vpop.f32.mrb[0].mxu0
    %2218 = vmatprep.mubr.f32.mxu0 0.0
    %2219 = vmatmul.mubr.f32.gmra.mrb[0].mxu0 %v393
    %v2220 = vpop.f32.mrb[0].mxu0
    %v2221 = vadd.f32 %v278, %v2220
    %v2222 = vpop.f32.mrb[0].mxu0
    %2223 = vmatprep.mubr.f32.mxu0 0.0
    %2224 = vmatmul.mubr.f32.gmra.mrb[0].mxu0 %v396
    %v2225 = vpop.f32.mrb[0].mxu0
    %v2226 = vadd.f32 %v283, %v2225
    %v2227 = vpop.f32.mrb[0].mxu0
    %2228 = vdwg.mxu0
    %2229 = vmatprep.subr.mxu0 0.0
    %2230 = vmatpush1.msra.mxu0 %v1971
    %2231 = vmatprep.subr.mxu0 0.0
    %2232 = vmatpush1.msra.mxu0 %v1972
    %2233 = vmatprep.subr.mxu0 0.0
    %2234 = vmatpush1.msra.mxu0 %v1973
    %2235 = vmatprep.subr.mxu0 0.0
    %2236 = vmatpush1.msra.mxu0 %v1974
    %2237 = vmatprep.subr.mxu0 0.0
    %2238 = vmatpush1.msra.mxu0 %v1975
    %2239 = vmatprep.subr.mxu0 0.0
    %2240 = vmatpush1.msra.mxu0 %v1976
    %2241 = vmatprep.subr.mxu0 0.0
    %2242 = vmatpush1.msra.mxu0 %v1977
    %2243 = vmatprep.subr.mxu0 0.0
    %2244 = vmatpush1.msra.mxu0 %v1978
    %2245 = vmatprep.subr.mxu0 0.0
    %2246 = vmatpush1.msra.mxu0 0.0
    %2247 = vmatprep.subr.mxu0 0.0
    %2248 = vmatpush1.msra.mxu0 0.0
    %2249 = vmatprep.subr.mxu0 0.0
    %2250 = vmatpush1.msra.mxu0 0.0
    %2251 = vmatprep.subr.mxu0 0.0
    %2252 = vmatpush1.msra.mxu0 0.0
    %2253 = vmatprep.subr.mxu0 0.0
    %2254 = vmatpush1.msra.mxu0 0.0
    %2255 = vmatprep.subr.mxu0 0.0
    %2256 = vmatpush1.msra.mxu0 0.0
    %2257 = vmatprep.subr.mxu0 0.0
    %2258 = vmatpush1.msra.mxu0 0.0
    %2259 = vmatprep.subr.mxu0 0.0
    %2260 = vmatpush1.msra.mxu0 0.0
    %2261 = vmatprep.subr.mxu0 0.0
    %2262 = vmatpush1.msra.mxu0 0.0
    %2263 = vmatprep.subr.mxu0 0.0
    %2264 = vmatpush1.msra.mxu0 0.0
    %2265 = vmatprep.subr.mxu0 0.0
    %2266 = vmatpush1.msra.mxu0 0.0
    %2267 = vmatprep.subr.mxu0 0.0
    %2268 = vmatpush1.msra.mxu0 0.0
    %2269 = vmatprep.subr.mxu0 0.0
    %2270 = vmatpush1.msra.mxu0 0.0
    %2271 = vmatprep.subr.mxu0 0.0
    %2272 = vmatpush1.msra.mxu0 0.0
    %2273 = vmatprep.subr.mxu0 0.0
    %2274 = vmatpush1.msra.mxu0 0.0
    %2275 = vmatprep.subr.mxu0 0.0
    %2276 = vmatpush1.msra.mxu0 0.0
    %2277 = vmatprep.subr.mxu0 0.0
    %2278 = vmatpush1.msra.mxu0 0.0
    %2279 = vmatprep.subr.mxu0 0.0
    %2280 = vmatpush1.msra.mxu0 0.0
    %2281 = vmatprep.subr.mxu0 0.0
    %2282 = vmatpush1.msra.mxu0 0.0
    %2283 = vmatprep.subr.mxu0 0.0
    %2284 = vmatpush1.msra.mxu0 0.0
    %2285 = vmatprep.subr.mxu0 0.0
    %2286 = vmatpush1.msra.mxu0 0.0
    %2287 = vmatprep.subr.mxu0 0.0
    %2288 = vmatpush1.msra.mxu0 0.0
    %2289 = vmatprep.subr.mxu0 0.0
    %2290 = vmatpush1.msra.mxu0 0.0
    %2291 = vmatprep.subr.mxu0 0.0
    %2292 = vmatpush1.msra.mxu0 0.0
    %2293 = vmatprep.mubr.f32.mxu0 0.0
    %2294 = vmatmul.mubr.f32.gmra.mrb[0].mxu0 %v624
    %v2295 = vpop.f32.mrb[0].mxu0
    %v2296 = vadd.f32 0.0, %v2295
    %v2297 = vpop.f32.mrb[0].mxu0
    %2298 = vmatprep.mubr.f32.mxu0 0.0
    %2299 = vmatmul.mubr.f32.gmra.mrb[0].mxu0 %v627
    %v2300 = vpop.f32.mrb[0].mxu0
    %v2301 = vadd.f32 0.0, %v2300
    %v2302 = vpop.f32.mrb[0].mxu0
    %2303 = vmatprep.mubr.f32.mxu0 0.0
    %2304 = vmatmul.mubr.f32.gmra.mrb[0].mxu0 %v630
    %v2305 = vpop.f32.mrb[0].mxu0
    %v2306 = vadd.f32 0.0, %v2305
    %v2307 = vpop.f32.mrb[0].mxu0
    %2308 = vmatprep.mubr.f32.mxu0 0.0
    %2309 = vmatmul.mubr.f32.gmra.mrb[0].mxu0 %v633
    %v2310 = vpop.f32.mrb[0].mxu0
    %v2311 = vadd.f32 0.0, %v2310
    %v2312 = vpop.f32.mrb[0].mxu0
    %2313 = vmatprep.mubr.f32.mxu0 0.0
    %2314 = vmatmul.mubr.f32.gmra.mrb[0].mxu0 %v636
    %v2315 = vpop.f32.mrb[0].mxu0
    %v2316 = vadd.f32 0.0, %v2315
    %v2317 = vpop.f32.mrb[0].mxu0
    %2318 = vmatprep.mubr.f32.mxu0 0.0
    %2319 = vmatmul.mubr.f32.gmra.mrb[0].mxu0 %v639
    %v2320 = vpop.f32.mrb[0].mxu0
    %v2321 = vadd.f32 0.0, %v2320
    %v2322 = vpop.f32.mrb[0].mxu0
    %2323 = vmatprep.mubr.f32.mxu0 0.0
    %2324 = vmatmul.mubr.f32.gmra.mrb[0].mxu0 %v642
    %v2325 = vpop.f32.mrb[0].mxu0
    %v2326 = vadd.f32 0.0, %v2325
    %v2327 = vpop.f32.mrb[0].mxu0
    %2328 = vmatprep.mubr.f32.mxu0 0.0
    %2329 = vmatmul.mubr.f32.gmra.mrb[0].mxu0 %v645
    %v2330 = vpop.f32.mrb[0].mxu0
    %v2331 = vadd.f32 0.0, %v2330
    %v2332 = vpop.f32.mrb[0].mxu0
    %2333 = vmatprep.mubr.f32.mxu0 0.0
    %2334 = vmatmul.mubr.f32.gmra.mrb[0].mxu0 %v648
    %v2335 = vpop.f32.mrb[0].mxu0
    %v2336 = vadd.f32 0.0, %v2335
    %v2337 = vpop.f32.mrb[0].mxu0
    %2338 = vmatprep.mubr.f32.mxu0 0.0
    %2339 = vmatmul.mubr.f32.gmra.mrb[0].mxu0 %v651
    %v2340 = vpop.f32.mrb[0].mxu0
    %v2341 = vadd.f32 0.0, %v2340
    %v2342 = vpop.f32.mrb[0].mxu0
    %2343 = vmatprep.mubr.f32.mxu0 0.0
    %2344 = vmatmul.mubr.f32.gmra.mrb[0].mxu0 %v654
    %v2345 = vpop.f32.mrb[0].mxu0
    %v2346 = vadd.f32 0.0, %v2345
    %v2347 = vpop.f32.mrb[0].mxu0
    %2348 = vmatprep.mubr.f32.mxu0 0.0
    %2349 = vmatmul.mubr.f32.gmra.mrb[0].mxu0 %v657
    %v2350 = vpop.f32.mrb[0].mxu0
    %v2351 = vadd.f32 0.0, %v2350
    %v2352 = vpop.f32.mrb[0].mxu0
    %2353 = vmatprep.mubr.f32.mxu0 0.0
    %2354 = vmatmul.mubr.f32.gmra.mrb[0].mxu0 %v660
    %v2355 = vpop.f32.mrb[0].mxu0
    %v2356 = vadd.f32 0.0, %v2355
    %v2357 = vpop.f32.mrb[0].mxu0
    %2358 = vmatprep.mubr.f32.mxu0 0.0
    %2359 = vmatmul.mubr.f32.gmra.mrb[0].mxu0 %v663
    %v2360 = vpop.f32.mrb[0].mxu0
    %v2361 = vadd.f32 0.0, %v2360
    %v2362 = vpop.f32.mrb[0].mxu0
    %2363 = vmatprep.mubr.f32.mxu0 0.0
    %2364 = vmatmul.mubr.f32.gmra.mrb[0].mxu0 %v666
    %v2365 = vpop.f32.mrb[0].mxu0
    %v2366 = vadd.f32 0.0, %v2365
    %v2367 = vpop.f32.mrb[0].mxu0
    %2368 = vmatprep.mubr.f32.mxu0 0.0
    %2369 = vmatmul.mubr.f32.gmra.mrb[0].mxu0 %v669
    %v2370 = vpop.f32.mrb[0].mxu0
    %v2371 = vadd.f32 0.0, %v2370
    %v2372 = vpop.f32.mrb[0].mxu0
    %2373 = vmatprep.mubr.f32.mxu0 0.0
    %2374 = vmatmul.mubr.f32.gmra.mrb[0].mxu0 %v672
    %v2375 = vpop.f32.mrb[0].mxu0
    %v2376 = vadd.f32 0.0, %v2375
    %v2377 = vpop.f32.mrb[0].mxu0
    %2378 = vmatprep.mubr.f32.mxu0 0.0
    %2379 = vmatmul.mubr.f32.gmra.mrb[0].mxu0 %v675
    %v2380 = vpop.f32.mrb[0].mxu0
    %v2381 = vadd.f32 0.0, %v2380
    %v2382 = vpop.f32.mrb[0].mxu0
    %2383 = vmatprep.mubr.f32.mxu0 0.0
    %2384 = vmatmul.mubr.f32.gmra.mrb[0].mxu0 %v678
    %v2385 = vpop.f32.mrb[0].mxu0
    %v2386 = vadd.f32 0.0, %v2385
    %v2387 = vpop.f32.mrb[0].mxu0
    %2388 = vmatprep.mubr.f32.mxu0 0.0
    %2389 = vmatmul.mubr.f32.gmra.mrb[0].mxu0 %v681
    %v2390 = vpop.f32.mrb[0].mxu0
    %v2391 = vadd.f32 0.0, %v2390
    %v2392 = vpop.f32.mrb[0].mxu0
    %2393 = vmatprep.mubr.f32.mxu0 0.0
    %2394 = vmatmul.mubr.f32.gmra.mrb[0].mxu0 %v684
    %v2395 = vpop.f32.mrb[0].mxu0
    %v2396 = vadd.f32 0.0, %v2395
    %v2397 = vpop.f32.mrb[0].mxu0
    %2398 = vmatprep.mubr.f32.mxu0 0.0
    %2399 = vmatmul.mubr.f32.gmra.mrb[0].mxu0 %v687
    %v2400 = vpop.f32.mrb[0].mxu0
    %v2401 = vadd.f32 0.0, %v2400
    %v2402 = vpop.f32.mrb[0].mxu0
    %2403 = vmatprep.mubr.f32.mxu0 0.0
    %2404 = vmatmul.mubr.f32.gmra.mrb[0].mxu0 %v690
    %v2405 = vpop.f32.mrb[0].mxu0
    %v2406 = vadd.f32 0.0, %v2405
    %v2407 = vpop.f32.mrb[0].mxu0
    %2408 = vmatprep.mubr.f32.mxu0 0.0
    %2409 = vmatmul.mubr.f32.gmra.mrb[0].mxu0 %v693
    %v2410 = vpop.f32.mrb[0].mxu0
    %v2411 = vadd.f32 0.0, %v2410
    %v2412 = vpop.f32.mrb[0].mxu0
    %2413 = vmatprep.mubr.f32.mxu0 0.0
    %2414 = vmatmul.mubr.f32.gmra.mrb[0].mxu0 %v696
    %v2415 = vpop.f32.mrb[0].mxu0
    %v2416 = vadd.f32 0.0, %v2415
    %v2417 = vpop.f32.mrb[0].mxu0
    %2418 = vmatprep.mubr.f32.mxu0 0.0
    %2419 = vmatmul.mubr.f32.gmra.mrb[0].mxu0 %v699
    %v2420 = vpop.f32.mrb[0].mxu0
    %v2421 = vadd.f32 0.0, %v2420
    %v2422 = vpop.f32.mrb[0].mxu0
    %2423 = vmatprep.mubr.f32.mxu0 0.0
    %2424 = vmatmul.mubr.f32.gmra.mrb[0].mxu0 %v702
    %v2425 = vpop.f32.mrb[0].mxu0
    %v2426 = vadd.f32 0.0, %v2425
    %v2427 = vpop.f32.mrb[0].mxu0
    %2428 = vmatprep.mubr.f32.mxu0 0.0
    %2429 = vmatmul.mubr.f32.gmra.mrb[0].mxu0 %v705
    %v2430 = vpop.f32.mrb[0].mxu0
    %v2431 = vadd.f32 0.0, %v2430
    %v2432 = vpop.f32.mrb[0].mxu0
    %2433 = vmatprep.mubr.f32.mxu0 0.0
    %2434 = vmatmul.mubr.f32.gmra.mrb[0].mxu0 %v708
    %v2435 = vpop.f32.mrb[0].mxu0
    %v2436 = vadd.f32 0.0, %v2435
    %v2437 = vpop.f32.mrb[0].mxu0
    %2438 = vmatprep.mubr.f32.mxu0 0.0
    %2439 = vmatmul.mubr.f32.gmra.mrb[0].mxu0 %v711
    %v2440 = vpop.f32.mrb[0].mxu0
    %v2441 = vadd.f32 0.0, %v2440
    %v2442 = vpop.f32.mrb[0].mxu0
    %2443 = vmatprep.mubr.f32.mxu0 0.0
    %2444 = vmatmul.mubr.f32.gmra.mrb[0].mxu0 %v714
    %v2445 = vpop.f32.mrb[0].mxu0
    %v2446 = vadd.f32 0.0, %v2445
    %v2447 = vpop.f32.mrb[0].mxu0
    %2448 = vmatprep.mubr.f32.mxu0 0.0
    %2449 = vmatmul.mubr.f32.gmra.mrb[0].mxu0 %v717
    %v2450 = vpop.f32.mrb[0].mxu0
    %v2451 = vadd.f32 0.0, %v2450
    %v2452 = vpop.f32.mrb[0].mxu0
    %2453 = vdwg.mxu0
    %v2454 = vadd.f32 %v2071, %v2296
    %v2455 = vadd.f32 %v2076, %v2301
    %v2456 = vadd.f32 %v2081, %v2306
    %v2457 = vadd.f32 %v2086, %v2311
    %v2458 = vadd.f32 %v2091, %v2316
    %v2459 = vadd.f32 %v2096, %v2321
    %v2460 = vadd.f32 %v2101, %v2326
    %v2461 = vadd.f32 %v2106, %v2331
    %v2462 = vadd.f32 %v2111, %v2336
    %v2463 = vadd.f32 %v2116, %v2341
    %v2464 = vadd.f32 %v2121, %v2346
    %v2465 = vadd.f32 %v2126, %v2351
    %v2466 = vadd.f32 %v2131, %v2356
    %v2467 = vadd.f32 %v2136, %v2361
    %v2468 = vadd.f32 %v2141, %v2366
    %v2469 = vadd.f32 %v2146, %v2371
    %v2470 = vadd.f32 %v2151, %v2376
    %v2471 = vadd.f32 %v2156, %v2381
    %v2472 = vadd.f32 %v2161, %v2386
    %v2473 = vadd.f32 %v2166, %v2391
    %v2474 = vadd.f32 %v2171, %v2396
    %v2475 = vadd.f32 %v2176, %v2401
    %v2476 = vadd.f32 %v2181, %v2406
    %v2477 = vadd.f32 %v2186, %v2411
    %v2478 = vadd.f32 %v2191, %v2416
    %v2479 = vadd.f32 %v2196, %v2421
    %v2480 = vadd.f32 %v2201, %v2426
    %v2481 = vadd.f32 %v2206, %v2431
    %v2482 = vadd.f32 %v2211, %v2436
    %v2483 = vadd.f32 %v2216, %v2441
    %v2484 = vadd.f32 %v2221, %v2446
    %v2485 = vadd.f32 %v2226, %v2451
    %v2486 = vxor.u32 %v2454, 2147483648
    %v2487 = vxor.u32 %v2455, 2147483648
    %v2488 = vxor.u32 %v2456, 2147483648
    %v2489 = vxor.u32 %v2457, 2147483648
    %v2490 = vxor.u32 %v2458, 2147483648
    %v2491 = vxor.u32 %v2459, 2147483648
    %v2492 = vxor.u32 %v2460, 2147483648
    %v2493 = vxor.u32 %v2461, 2147483648
    %v2494 = vxor.u32 %v2462, 2147483648
    %v2495 = vxor.u32 %v2463, 2147483648
    %v2496 = vxor.u32 %v2464, 2147483648
    %v2497 = vxor.u32 %v2465, 2147483648
    %v2498 = vxor.u32 %v2466, 2147483648
    %v2499 = vxor.u32 %v2467, 2147483648
    %v2500 = vxor.u32 %v2468, 2147483648
    %v2501 = vxor.u32 %v2469, 2147483648
    %v2502 = vxor.u32 %v2470, 2147483648
    %v2503 = vxor.u32 %v2471, 2147483648
    %v2504 = vxor.u32 %v2472, 2147483648
    %v2505 = vxor.u32 %v2473, 2147483648
    %v2506 = vxor.u32 %v2474, 2147483648
    %v2507 = vxor.u32 %v2475, 2147483648
    %v2508 = vxor.u32 %v2476, 2147483648
    %v2509 = vxor.u32 %v2477, 2147483648
    %v2510 = vxor.u32 %v2478, 2147483648
    %v2511 = vxor.u32 %v2479, 2147483648
    %v2512 = vxor.u32 %v2480, 2147483648
    %v2513 = vxor.u32 %v2481, 2147483648
    %v2514 = vxor.u32 %v2482, 2147483648
    %v2515 = vxor.u32 %v2483, 2147483648
    %v2516 = vxor.u32 %v2484, 2147483648
    %v2517 = vxor.u32 %v2485, 2147483648
    %v2518 = vmul.f32 %v2486, 1.442695
    %v2519 = vpow.pop %v2518
    %v2520 = vmul.f32 %v2487, 1.442695
    %v2521 = vpow.pop %v2520
    %v2522 = vmul.f32 %v2488, 1.442695
    %v2523 = vpow.pop %v2522
    %v2524 = vmul.f32 %v2489, 1.442695
    %v2525 = vpow.pop %v2524
    %v2526 = vmul.f32 %v2490, 1.442695
    %v2527 = vpow.pop %v2526
    %v2528 = vmul.f32 %v2491, 1.442695
    %v2529 = vpow.pop %v2528
    %v2530 = vmul.f32 %v2492, 1.442695
    %v2531 = vpow.pop %v2530
    %v2532 = vmul.f32 %v2493, 1.442695
    %v2533 = vpow.pop %v2532
    %v2534 = vmul.f32 %v2494, 1.442695
    %v2535 = vpow.pop %v2534
    %v2536 = vmul.f32 %v2495, 1.442695
    %v2537 = vpow.pop %v2536
    %v2538 = vmul.f32 %v2496, 1.442695
    %v2539 = vpow.pop %v2538
    %v2540 = vmul.f32 %v2497, 1.442695
    %v2541 = vpow.pop %v2540
    %v2542 = vmul.f32 %v2498, 1.442695
    %v2543 = vpow.pop %v2542
    %v2544 = vmul.f32 %v2499, 1.442695
    %v2545 = vpow.pop %v2544
    %v2546 = vmul.f32 %v2500, 1.442695
    %v2547 = vpow.pop %v2546
    %v2548 = vmul.f32 %v2501, 1.442695
    %v2549 = vpow.pop %v2548
    %v2550 = vmul.f32 %v2502, 1.442695
    %v2551 = vpow.pop %v2550
    %v2552 = vmul.f32 %v2503, 1.442695
    %v2553 = vpow.pop %v2552
    %v2554 = vmul.f32 %v2504, 1.442695
    %v2555 = vpow.pop %v2554
    %v2556 = vmul.f32 %v2505, 1.442695
    %v2557 = vpow.pop %v2556
    %v2558 = vmul.f32 %v2506, 1.442695
    %v2559 = vpow.pop %v2558
    %v2560 = vmul.f32 %v2507, 1.442695
    %v2561 = vpow.pop %v2560
    %v2562 = vmul.f32 %v2508, 1.442695
    %v2563 = vpow.pop %v2562
    %v2564 = vmul.f32 %v2509, 1.442695
    %v2565 = vpow.pop %v2564
    %v2566 = vmul.f32 %v2510, 1.442695
    %v2567 = vpow.pop %v2566
    %v2568 = vmul.f32 %v2511, 1.442695
    %v2569 = vpow.pop %v2568
    %v2570 = vmul.f32 %v2512, 1.442695
    %v2571 = vpow.pop %v2570
    %v2572 = vmul.f32 %v2513, 1.442695
    %v2573 = vpow.pop %v2572
    %v2574 = vmul.f32 %v2514, 1.442695
    %v2575 = vpow.pop %v2574
    %v2576 = vmul.f32 %v2515, 1.442695
    %v2577 = vpow.pop %v2576
    %v2578 = vmul.f32 %v2516, 1.442695
    %v2579 = vpow.pop %v2578
    %v2580 = vmul.f32 %v2517, 1.442695
    %v2581 = vpow.pop %v2580
    %v2582 = vadd.f32 %v2519, 1.0
    %v2583 = vadd.f32 %v2521, 1.0
    %v2584 = vadd.f32 %v2523, 1.0
    %v2585 = vadd.f32 %v2525, 1.0
    %v2586 = vadd.f32 %v2527, 1.0
    %v2587 = vadd.f32 %v2529, 1.0
    %v2588 = vadd.f32 %v2531, 1.0
    %v2589 = vadd.f32 %v2533, 1.0
    %v2590 = vadd.f32 %v2535, 1.0
    %v2591 = vadd.f32 %v2537, 1.0
    %v2592 = vadd.f32 %v2539, 1.0
    %v2593 = vadd.f32 %v2541, 1.0
    %v2594 = vadd.f32 %v2543, 1.0
    %v2595 = vadd.f32 %v2545, 1.0
    %v2596 = vadd.f32 %v2547, 1.0
    %v2597 = vadd.f32 %v2549, 1.0
    %v2598 = vadd.f32 %v2551, 1.0
    %v2599 = vadd.f32 %v2553, 1.0
    %v2600 = vadd.f32 %v2555, 1.0
    %v2601 = vadd.f32 %v2557, 1.0
    %v2602 = vadd.f32 %v2559, 1.0
    %v2603 = vadd.f32 %v2561, 1.0
    %v2604 = vadd.f32 %v2563, 1.0
    %v2605 = vadd.f32 %v2565, 1.0
    %v2606 = vadd.f32 %v2567, 1.0
    %v2607 = vadd.f32 %v2569, 1.0
    %v2608 = vadd.f32 %v2571, 1.0
    %v2609 = vadd.f32 %v2573, 1.0
    %v2610 = vadd.f32 %v2575, 1.0
    %v2611 = vadd.f32 %v2577, 1.0
    %v2612 = vadd.f32 %v2579, 1.0
    %v2613 = vadd.f32 %v2581, 1.0
    %v2614 = vrcp.pop %v2582
    %v2615 = vmul.f32 1.0, %v2614
    %v2616 = vrcp.pop %v2583
    %v2617 = vmul.f32 1.0, %v2616
    %v2618 = vrcp.pop %v2584
    %v2619 = vmul.f32 1.0, %v2618
    %v2620 = vrcp.pop %v2585
    %v2621 = vmul.f32 1.0, %v2620
    %v2622 = vrcp.pop %v2586
    %v2623 = vmul.f32 1.0, %v2622
    %v2624 = vrcp.pop %v2587
    %v2625 = vmul.f32 1.0, %v2624
    %v2626 = vrcp.pop %v2588
    %v2627 = vmul.f32 1.0, %v2626
    %v2628 = vrcp.pop %v2589
    %v2629 = vmul.f32 1.0, %v2628
    %v2630 = vrcp.pop %v2590
    %v2631 = vmul.f32 1.0, %v2630
    %v2632 = vrcp.pop %v2591
    %v2633 = vmul.f32 1.0, %v2632
    %v2634 = vrcp.pop %v2592
    %v2635 = vmul.f32 1.0, %v2634
    %v2636 = vrcp.pop %v2593
    %v2637 = vmul.f32 1.0, %v2636
    %v2638 = vrcp.pop %v2594
    %v2639 = vmul.f32 1.0, %v2638
    %v2640 = vrcp.pop %v2595
    %v2641 = vmul.f32 1.0, %v2640
    %v2642 = vrcp.pop %v2596
    %v2643 = vmul.f32 1.0, %v2642
    %v2644 = vrcp.pop %v2597
    %v2645 = vmul.f32 1.0, %v2644
    %v2646 = vrcp.pop %v2598
    %v2647 = vmul.f32 1.0, %v2646
    %v2648 = vrcp.pop %v2599
    %v2649 = vmul.f32 1.0, %v2648
    %v2650 = vrcp.pop %v2600
    %v2651 = vmul.f32 1.0, %v2650
    %v2652 = vrcp.pop %v2601
    %v2653 = vmul.f32 1.0, %v2652
    %v2654 = vrcp.pop %v2602
    %v2655 = vmul.f32 1.0, %v2654
    %v2656 = vrcp.pop %v2603
    %v2657 = vmul.f32 1.0, %v2656
    %v2658 = vrcp.pop %v2604
    %v2659 = vmul.f32 1.0, %v2658
    %v2660 = vrcp.pop %v2605
    %v2661 = vmul.f32 1.0, %v2660
    %v2662 = vrcp.pop %v2606
    %v2663 = vmul.f32 1.0, %v2662
    %v2664 = vrcp.pop %v2607
    %v2665 = vmul.f32 1.0, %v2664
    %v2666 = vrcp.pop %v2608
    %v2667 = vmul.f32 1.0, %v2666
    %v2668 = vrcp.pop %v2609
    %v2669 = vmul.f32 1.0, %v2668
    %v2670 = vrcp.pop %v2610
    %v2671 = vmul.f32 1.0, %v2670
    %v2672 = vrcp.pop %v2611
    %v2673 = vmul.f32 1.0, %v2672
    %v2674 = vrcp.pop %v2612
    %v2675 = vmul.f32 1.0, %v2674
    %v2676 = vrcp.pop %v2613
    %v2677 = vmul.f32 1.0, %v2676
    %v2678 = vmul.f32 %v2647, 2.0
    %v2679 = vmul.f32 %v2649, 2.0
    %v2680 = vmul.f32 %v2651, 2.0
    %v2681 = vmul.f32 %v2653, 2.0
    %v2682 = vmul.f32 %v2655, 2.0
    %v2683 = vmul.f32 %v2657, 2.0
    %v2684 = vmul.f32 %v2659, 2.0
    %v2685 = vmul.f32 %v2661, 2.0
    %v2686 = vsub.f32 %v2678, 1.0
    %v2687 = vsub.f32 %v2679, 1.0
    %v2688 = vsub.f32 %v2680, 1.0
    %v2689 = vsub.f32 %v2681, 1.0
    %v2690 = vsub.f32 %v2682, 1.0
    %v2691 = vsub.f32 %v2683, 1.0
    %v2692 = vsub.f32 %v2684, 1.0
    %v2693 = vsub.f32 %v2685, 1.0
    %v2694 = vmul.f32 %v2631, %v1955
    %v2695 = vmul.f32 %v2633, %v1956
    %v2696 = vmul.f32 %v2635, %v1957
    %v2697 = vmul.f32 %v2637, %v1958
    %v2698 = vmul.f32 %v2639, %v1959
    %v2699 = vmul.f32 %v2641, %v1960
    %v2700 = vmul.f32 %v2643, %v1961
    %v2701 = vmul.f32 %v2645, %v1962
    %v2702 = vmul.f32 %v2615, %v2686
    %v2703 = vmul.f32 %v2617, %v2687
    %v2704 = vmul.f32 %v2619, %v2688
    %v2705 = vmul.f32 %v2621, %v2689
    %v2706 = vmul.f32 %v2623, %v2690
    %v2707 = vmul.f32 %v2625, %v2691
    %v2708 = vmul.f32 %v2627, %v2692
    %v2709 = vmul.f32 %v2629, %v2693
    %v2710 = vadd.f32 %v2694, %v2702
    %v2711 = vadd.f32 %v2695, %v2703
    %v2712 = vadd.f32 %v2696, %v2704
    %v2713 = vadd.f32 %v2697, %v2705
    %v2714 = vadd.f32 %v2698, %v2706
    %v2715 = vadd.f32 %v2699, %v2707
    %v2716 = vadd.f32 %v2700, %v2708
    %v2717 = vadd.f32 %v2701, %v2709
    %v2718 = vtanh.pop %v2710
    %v2719 = vtanh.pop %v2711
    %v2720 = vtanh.pop %v2712
    %v2721 = vtanh.pop %v2713
    %v2722 = vtanh.pop %v2714
    %v2723 = vtanh.pop %v2715
    %v2724 = vtanh.pop %v2716
    %v2725 = vtanh.pop %v2717
    %v2726 = vmul.f32 %v2663, %v2718
    %v2727 = vmul.f32 %v2665, %v2719
    %v2728 = vmul.f32 %v2667, %v2720
    %v2729 = vmul.f32 %v2669, %v2721
    %v2730 = vmul.f32 %v2671, %v2722
    %v2731 = vmul.f32 %v2673, %v2723
    %v2732 = vmul.f32 %v2675, %v2724
    %v2733 = vmul.f32 %v2677, %v2725
    %v2734 = vadd.f32 %v1979, %v2726
    %v2735 = vadd.f32 %v1980, %v2727
    %v2736 = vadd.f32 %v1981, %v2728
    %v2737 = vadd.f32 %v1982, %v2729
    %v2738 = vadd.f32 %v1983, %v2730
    %v2739 = vadd.f32 %v1984, %v2731
    %v2740 = vadd.f32 %v1985, %v2732
    %v2741 = vadd.f32 %v1986, %v2733
    %s2742 = scalar_lea.vmem %s0, 96
    %v2743 = vld [vmem:[%s2742] sm:$0xf]
    %v2744 = vld [vmem:[%s2742 + $0x4] sm:$0xf]
    %v2745 = vld [vmem:[%s2742 + $0x8] sm:$0xf]
    %v2746 = vld [vmem:[%s2742 + $0xc] sm:$0xf]
    %v2747 = vld [vmem:[%s2742 + $0x10] sm:$0xf]
    %v2748 = vld [vmem:[%s2742 + $0x14] sm:$0xf]
    %v2749 = vld [vmem:[%s2742 + $0x18] sm:$0xf]
    %v2750 = vld [vmem:[%s2742 + $0x1c] sm:$0xf]
    %v2751 = vunpack.c.l.bf16 %v2743
    %v2752 = vunpack.c.l.bf16 %v2744
    %v2753 = vunpack.c.l.bf16 %v2745
    %v2754 = vunpack.c.l.bf16 %v2746
    %v2755 = vunpack.c.l.bf16 %v2747
    %v2756 = vunpack.c.l.bf16 %v2748
    %v2757 = vunpack.c.l.bf16 %v2749
    %v2758 = vunpack.c.l.bf16 %v2750
    %2759 = vmatprep.subr.mxu0 0.0
    %2760 = vmatpush1.msra.mxu0 %v2751
    %2761 = vmatprep.subr.mxu0 0.0
    %2762 = vmatpush1.msra.mxu0 %v2752
    %2763 = vmatprep.subr.mxu0 0.0
    %2764 = vmatpush1.msra.mxu0 %v2753
    %2765 = vmatprep.subr.mxu0 0.0
    %2766 = vmatpush1.msra.mxu0 %v2754
    %2767 = vmatprep.subr.mxu0 0.0
    %2768 = vmatpush1.msra.mxu0 %v2755
    %2769 = vmatprep.subr.mxu0 0.0
    %2770 = vmatpush1.msra.mxu0 %v2756
    %2771 = vmatprep.subr.mxu0 0.0
    %2772 = vmatpush1.msra.mxu0 %v2757
    %2773 = vmatprep.subr.mxu0 0.0
    %2774 = vmatpush1.msra.mxu0 %v2758
    %2775 = vmatprep.subr.mxu0 0.0
    %2776 = vmatpush1.msra.mxu0 0.0
    %2777 = vmatprep.subr.mxu0 0.0
    %2778 = vmatpush1.msra.mxu0 0.0
    %2779 = vmatprep.subr.mxu0 0.0
    %2780 = vmatpush1.msra.mxu0 0.0
    %2781 = vmatprep.subr.mxu0 0.0
    %2782 = vmatpush1.msra.mxu0 0.0
    %2783 = vmatprep.subr.mxu0 0.0
    %2784 = vmatpush1.msra.mxu0 0.0
    %2785 = vmatprep.subr.mxu0 0.0
    %2786 = vmatpush1.msra.mxu0 0.0
    %2787 = vmatprep.subr.mxu0 0.0
    %2788 = vmatpush1.msra.mxu0 0.0
    %2789 = vmatprep.subr.mxu0 0.0
    %2790 = vmatpush1.msra.mxu0 0.0
    %2791 = vmatprep.subr.mxu0 0.0
    %2792 = vmatpush1.msra.mxu0 0.0
    %2793 = vmatprep.subr.mxu0 0.0
    %2794 = vmatpush1.msra.mxu0 0.0
    %2795 = vmatprep.subr.mxu0 0.0
    %2796 = vmatpush1.msra.mxu0 0.0
    %2797 = vmatprep.subr.mxu0 0.0
    %2798 = vmatpush1.msra.mxu0 0.0
    %2799 = vmatprep.subr.mxu0 0.0
    %2800 = vmatpush1.msra.mxu0 0.0
    %2801 = vmatprep.subr.mxu0 0.0
    %2802 = vmatpush1.msra.mxu0 0.0
    %2803 = vmatprep.subr.mxu0 0.0
    %2804 = vmatpush1.msra.mxu0 0.0
    %2805 = vmatprep.subr.mxu0 0.0
    %2806 = vmatpush1.msra.mxu0 0.0
    %2807 = vmatprep.subr.mxu0 0.0
    %2808 = vmatpush1.msra.mxu0 0.0
    %2809 = vmatprep.subr.mxu0 0.0
    %2810 = vmatpush1.msra.mxu0 0.0
    %2811 = vmatprep.subr.mxu0 0.0
    %2812 = vmatpush1.msra.mxu0 0.0
    %2813 = vmatprep.subr.mxu0 0.0
    %2814 = vmatpush1.msra.mxu0 0.0
    %2815 = vmatprep.subr.mxu0 0.0
    %2816 = vmatpush1.msra.mxu0 0.0
    %2817 = vmatprep.subr.mxu0 0.0
    %2818 = vmatpush1.msra.mxu0 0.0
    %2819 = vmatprep.subr.mxu0 0.0
    %2820 = vmatpush1.msra.mxu0 0.0
    %2821 = vmatprep.subr.mxu0 0.0
    %2822 = vmatpush1.msra.mxu0 0.0
    %2823 = vmatprep.mubr.f32.mxu0 0.0
    %2824 = vmatmul.mubr.f32.gmra.mrb[0].mxu0 %v303
    %v2825 = vpop.f32.mrb[0].mxu0
    %v2826 = vadd.f32 %v128, %v2825
    %v2827 = vpop.f32.mrb[0].mxu0
    %2828 = vmatprep.mubr.f32.mxu0 0.0
    %2829 = vmatmul.mubr.f32.gmra.mrb[0].mxu0 %v306
    %v2830 = vpop.f32.mrb[0].mxu0
    %v2831 = vadd.f32 %v133, %v2830
    %v2832 = vpop.f32.mrb[0].mxu0
    %2833 = vmatprep.mubr.f32.mxu0 0.0
    %2834 = vmatmul.mubr.f32.gmra.mrb[0].mxu0 %v309
    %v2835 = vpop.f32.mrb[0].mxu0
    %v2836 = vadd.f32 %v138, %v2835
    %v2837 = vpop.f32.mrb[0].mxu0
    %2838 = vmatprep.mubr.f32.mxu0 0.0
    %2839 = vmatmul.mubr.f32.gmra.mrb[0].mxu0 %v312
    %v2840 = vpop.f32.mrb[0].mxu0
    %v2841 = vadd.f32 %v143, %v2840
    %v2842 = vpop.f32.mrb[0].mxu0
    %2843 = vmatprep.mubr.f32.mxu0 0.0
    %2844 = vmatmul.mubr.f32.gmra.mrb[0].mxu0 %v315
    %v2845 = vpop.f32.mrb[0].mxu0
    %v2846 = vadd.f32 %v148, %v2845
    %v2847 = vpop.f32.mrb[0].mxu0
    %2848 = vmatprep.mubr.f32.mxu0 0.0
    %2849 = vmatmul.mubr.f32.gmra.mrb[0].mxu0 %v318
    %v2850 = vpop.f32.mrb[0].mxu0
    %v2851 = vadd.f32 %v153, %v2850
    %v2852 = vpop.f32.mrb[0].mxu0
    %2853 = vmatprep.mubr.f32.mxu0 0.0
    %2854 = vmatmul.mubr.f32.gmra.mrb[0].mxu0 %v321
    %v2855 = vpop.f32.mrb[0].mxu0
    %v2856 = vadd.f32 %v158, %v2855
    %v2857 = vpop.f32.mrb[0].mxu0
    %2858 = vmatprep.mubr.f32.mxu0 0.0
    %2859 = vmatmul.mubr.f32.gmra.mrb[0].mxu0 %v324
    %v2860 = vpop.f32.mrb[0].mxu0
    %v2861 = vadd.f32 %v163, %v2860
    %v2862 = vpop.f32.mrb[0].mxu0
    %2863 = vmatprep.mubr.f32.mxu0 0.0
    %2864 = vmatmul.mubr.f32.gmra.mrb[0].mxu0 %v327
    %v2865 = vpop.f32.mrb[0].mxu0
    %v2866 = vadd.f32 %v168, %v2865
    %v2867 = vpop.f32.mrb[0].mxu0
    %2868 = vmatprep.mubr.f32.mxu0 0.0
    %2869 = vmatmul.mubr.f32.gmra.mrb[0].mxu0 %v330
    %v2870 = vpop.f32.mrb[0].mxu0
    %v2871 = vadd.f32 %v173, %v2870
    %v2872 = vpop.f32.mrb[0].mxu0
    %2873 = vmatprep.mubr.f32.mxu0 0.0
    %2874 = vmatmul.mubr.f32.gmra.mrb[0].mxu0 %v333
    %v2875 = vpop.f32.mrb[0].mxu0
    %v2876 = vadd.f32 %v178, %v2875
    %v2877 = vpop.f32.mrb[0].mxu0
    %2878 = vmatprep.mubr.f32.mxu0 0.0
    %2879 = vmatmul.mubr.f32.gmra.mrb[0].mxu0 %v336
    %v2880 = vpop.f32.mrb[0].mxu0
    %v2881 = vadd.f32 %v183, %v2880
    %v2882 = vpop.f32.mrb[0].mxu0
    %2883 = vmatprep.mubr.f32.mxu0 0.0
    %2884 = vmatmul.mubr.f32.gmra.mrb[0].mxu0 %v339
    %v2885 = vpop.f32.mrb[0].mxu0
    %v2886 = vadd.f32 %v188, %v2885
    %v2887 = vpop.f32.mrb[0].mxu0
    %2888 = vmatprep.mubr.f32.mxu0 0.0
    %2889 = vmatmul.mubr.f32.gmra.mrb[0].mxu0 %v342
    %v2890 = vpop.f32.mrb[0].mxu0
    %v2891 = vadd.f32 %v193, %v2890
    %v2892 = vpop.f32.mrb[0].mxu0
    %2893 = vmatprep.mubr.f32.mxu0 0.0
    %2894 = vmatmul.mubr.f32.gmra.mrb[0].mxu0 %v345
    %v2895 = vpop.f32.mrb[0].mxu0
    %v2896 = vadd.f32 %v198, %v2895
    %v2897 = vpop.f32.mrb[0].mxu0
    %2898 = vmatprep.mubr.f32.mxu0 0.0
    %2899 = vmatmul.mubr.f32.gmra.mrb[0].mxu0 %v348
    %v2900 = vpop.f32.mrb[0].mxu0
    %v2901 = vadd.f32 %v203, %v2900
    %v2902 = vpop.f32.mrb[0].mxu0
    %2903 = vmatprep.mubr.f32.mxu0 0.0
    %2904 = vmatmul.mubr.f32.gmra.mrb[0].mxu0 %v351
    %v2905 = vpop.f32.mrb[0].mxu0
    %v2906 = vadd.f32 %v208, %v2905
    %v2907 = vpop.f32.mrb[0].mxu0
    %2908 = vmatprep.mubr.f32.mxu0 0.0
    %2909 = vmatmul.mubr.f32.gmra.mrb[0].mxu0 %v354
    %v2910 = vpop.f32.mrb[0].mxu0
    %v2911 = vadd.f32 %v213, %v2910
    %v2912 = vpop.f32.mrb[0].mxu0
    %2913 = vmatprep.mubr.f32.mxu0 0.0
    %2914 = vmatmul.mubr.f32.gmra.mrb[0].mxu0 %v357
    %v2915 = vpop.f32.mrb[0].mxu0
    %v2916 = vadd.f32 %v218, %v2915
    %v2917 = vpop.f32.mrb[0].mxu0
    %2918 = vmatprep.mubr.f32.mxu0 0.0
    %2919 = vmatmul.mubr.f32.gmra.mrb[0].mxu0 %v360
    %v2920 = vpop.f32.mrb[0].mxu0
    %v2921 = vadd.f32 %v223, %v2920
    %v2922 = vpop.f32.mrb[0].mxu0
    %2923 = vmatprep.mubr.f32.mxu0 0.0
    %2924 = vmatmul.mubr.f32.gmra.mrb[0].mxu0 %v363
    %v2925 = vpop.f32.mrb[0].mxu0
    %v2926 = vadd.f32 %v228, %v2925
    %v2927 = vpop.f32.mrb[0].mxu0
    %2928 = vmatprep.mubr.f32.mxu0 0.0
    %2929 = vmatmul.mubr.f32.gmra.mrb[0].mxu0 %v366
    %v2930 = vpop.f32.mrb[0].mxu0
    %v2931 = vadd.f32 %v233, %v2930
    %v2932 = vpop.f32.mrb[0].mxu0
    %2933 = vmatprep.mubr.f32.mxu0 0.0
    %2934 = vmatmul.mubr.f32.gmra.mrb[0].mxu0 %v369
    %v2935 = vpop.f32.mrb[0].mxu0
    %v2936 = vadd.f32 %v238, %v2935
    %v2937 = vpop.f32.mrb[0].mxu0
    %2938 = vmatprep.mubr.f32.mxu0 0.0
    %2939 = vmatmul.mubr.f32.gmra.mrb[0].mxu0 %v372
    %v2940 = vpop.f32.mrb[0].mxu0
    %v2941 = vadd.f32 %v243, %v2940
    %v2942 = vpop.f32.mrb[0].mxu0
    %2943 = vmatprep.mubr.f32.mxu0 0.0
    %2944 = vmatmul.mubr.f32.gmra.mrb[0].mxu0 %v375
    %v2945 = vpop.f32.mrb[0].mxu0
    %v2946 = vadd.f32 %v248, %v2945
    %v2947 = vpop.f32.mrb[0].mxu0
    %2948 = vmatprep.mubr.f32.mxu0 0.0
    %2949 = vmatmul.mubr.f32.gmra.mrb[0].mxu0 %v378
    %v2950 = vpop.f32.mrb[0].mxu0
    %v2951 = vadd.f32 %v253, %v2950
    %v2952 = vpop.f32.mrb[0].mxu0
    %2953 = vmatprep.mubr.f32.mxu0 0.0
    %2954 = vmatmul.mubr.f32.gmra.mrb[0].mxu0 %v381
    %v2955 = vpop.f32.mrb[0].mxu0
    %v2956 = vadd.f32 %v258, %v2955
    %v2957 = vpop.f32.mrb[0].mxu0
    %2958 = vmatprep.mubr.f32.mxu0 0.0
    %2959 = vmatmul.mubr.f32.gmra.mrb[0].mxu0 %v384
    %v2960 = vpop.f32.mrb[0].mxu0
    %v2961 = vadd.f32 %v263, %v2960
    %v2962 = vpop.f32.mrb[0].mxu0
    %2963 = vmatprep.mubr.f32.mxu0 0.0
    %2964 = vmatmul.mubr.f32.gmra.mrb[0].mxu0 %v387
    %v2965 = vpop.f32.mrb[0].mxu0
    %v2966 = vadd.f32 %v268, %v2965
    %v2967 = vpop.f32.mrb[0].mxu0
    %2968 = vmatprep.mubr.f32.mxu0 0.0
    %2969 = vmatmul.mubr.f32.gmra.mrb[0].mxu0 %v390
    %v2970 = vpop.f32.mrb[0].mxu0
    %v2971 = vadd.f32 %v273, %v2970
    %v2972 = vpop.f32.mrb[0].mxu0
    %2973 = vmatprep.mubr.f32.mxu0 0.0
    %2974 = vmatmul.mubr.f32.gmra.mrb[0].mxu0 %v393
    %v2975 = vpop.f32.mrb[0].mxu0
    %v2976 = vadd.f32 %v278, %v2975
    %v2977 = vpop.f32.mrb[0].mxu0
    %2978 = vmatprep.mubr.f32.mxu0 0.0
    %2979 = vmatmul.mubr.f32.gmra.mrb[0].mxu0 %v396
    %v2980 = vpop.f32.mrb[0].mxu0
    %v2981 = vadd.f32 %v283, %v2980
    %v2982 = vpop.f32.mrb[0].mxu0
    %2983 = vdwg.mxu0
    %2984 = vmatprep.subr.mxu0 0.0
    %2985 = vmatpush1.msra.mxu0 %v2726
    %2986 = vmatprep.subr.mxu0 0.0
    %2987 = vmatpush1.msra.mxu0 %v2727
    %2988 = vmatprep.subr.mxu0 0.0
    %2989 = vmatpush1.msra.mxu0 %v2728
    %2990 = vmatprep.subr.mxu0 0.0
    %2991 = vmatpush1.msra.mxu0 %v2729
    %2992 = vmatprep.subr.mxu0 0.0
    %2993 = vmatpush1.msra.mxu0 %v2730
    %2994 = vmatprep.subr.mxu0 0.0
    %2995 = vmatpush1.msra.mxu0 %v2731
    %2996 = vmatprep.subr.mxu0 0.0
    %2997 = vmatpush1.msra.mxu0 %v2732
    %2998 = vmatprep.subr.mxu0 0.0
    %2999 = vmatpush1.msra.mxu0 %v2733
    %3000 = vmatprep.subr.mxu0 0.0
    %3001 = vmatpush1.msra.mxu0 0.0
    %3002 = vmatprep.subr.mxu0 0.0
    %3003 = vmatpush1.msra.mxu0 0.0
    %3004 = vmatprep.subr.mxu0 0.0
    %3005 = vmatpush1.msra.mxu0 0.0
    %3006 = vmatprep.subr.mxu0 0.0
    %3007 = vmatpush1.msra.mxu0 0.0
    %3008 = vmatprep.subr.mxu0 0.0
    %3009 = vmatpush1.msra.mxu0 0.0
    %3010 = vmatprep.subr.mxu0 0.0
    %3011 = vmatpush1.msra.mxu0 0.0
    %3012 = vmatprep.subr.mxu0 0.0
    %3013 = vmatpush1.msra.mxu0 0.0
    %3014 = vmatprep.subr.mxu0 0.0
    %3015 = vmatpush1.msra.mxu0 0.0
    %3016 = vmatprep.subr.mxu0 0.0
    %3017 = vmatpush1.msra.mxu0 0.0
    %3018 = vmatprep.subr.mxu0 0.0
    %3019 = vmatpush1.msra.mxu0 0.0
    %3020 = vmatprep.subr.mxu0 0.0
    %3021 = vmatpush1.msra.mxu0 0.0
    %3022 = vmatprep.subr.mxu0 0.0
    %3023 = vmatpush1.msra.mxu0 0.0
    %3024 = vmatprep.subr.mxu0 0.0
    %3025 = vmatpush1.msra.mxu0 0.0
    %3026 = vmatprep.subr.mxu0 0.0
    %3027 = vmatpush1.msra.mxu0 0.0
    %3028 = vmatprep.subr.mxu0 0.0
    %3029 = vmatpush1.msra.mxu0 0.0
    %3030 = vmatprep.subr.mxu0 0.0
    %3031 = vmatpush1.msra.mxu0 0.0
    %3032 = vmatprep.subr.mxu0 0.0
    %3033 = vmatpush1.msra.mxu0 0.0
    %3034 = vmatprep.subr.mxu0 0.0
    %3035 = vmatpush1.msra.mxu0 0.0
    %3036 = vmatprep.subr.mxu0 0.0
    %3037 = vmatpush1.msra.mxu0 0.0
    %3038 = vmatprep.subr.mxu0 0.0
    %3039 = vmatpush1.msra.mxu0 0.0
    %3040 = vmatprep.subr.mxu0 0.0
    %3041 = vmatpush1.msra.mxu0 0.0
    %3042 = vmatprep.subr.mxu0 0.0
    %3043 = vmatpush1.msra.mxu0 0.0
    %3044 = vmatprep.subr.mxu0 0.0
    %3045 = vmatpush1.msra.mxu0 0.0
    %3046 = vmatprep.subr.mxu0 0.0
    %3047 = vmatpush1.msra.mxu0 0.0
    %3048 = vmatprep.mubr.f32.mxu0 0.0
    %3049 = vmatmul.mubr.f32.gmra.mrb[0].mxu0 %v624
    %v3050 = vpop.f32.mrb[0].mxu0
    %v3051 = vadd.f32 0.0, %v3050
    %v3052 = vpop.f32.mrb[0].mxu0
    %3053 = vmatprep.mubr.f32.mxu0 0.0
    %3054 = vmatmul.mubr.f32.gmra.mrb[0].mxu0 %v627
    %v3055 = vpop.f32.mrb[0].mxu0
    %v3056 = vadd.f32 0.0, %v3055
    %v3057 = vpop.f32.mrb[0].mxu0
    %3058 = vmatprep.mubr.f32.mxu0 0.0
    %3059 = vmatmul.mubr.f32.gmra.mrb[0].mxu0 %v630
    %v3060 = vpop.f32.mrb[0].mxu0
    %v3061 = vadd.f32 0.0, %v3060
    %v3062 = vpop.f32.mrb[0].mxu0
    %3063 = vmatprep.mubr.f32.mxu0 0.0
    %3064 = vmatmul.mubr.f32.gmra.mrb[0].mxu0 %v633
    %v3065 = vpop.f32.mrb[0].mxu0
    %v3066 = vadd.f32 0.0, %v3065
    %v3067 = vpop.f32.mrb[0].mxu0
    %3068 = vmatprep.mubr.f32.mxu0 0.0
    %3069 = vmatmul.mubr.f32.gmra.mrb[0].mxu0 %v636
    %v3070 = vpop.f32.mrb[0].mxu0
    %v3071 = vadd.f32 0.0, %v3070
    %v3072 = vpop.f32.mrb[0].mxu0
    %3073 = vmatprep.mubr.f32.mxu0 0.0
    %3074 = vmatmul.mubr.f32.gmra.mrb[0].mxu0 %v639
    %v3075 = vpop.f32.mrb[0].mxu0
    %v3076 = vadd.f32 0.0, %v3075
    %v3077 = vpop.f32.mrb[0].mxu0
    %3078 = vmatprep.mubr.f32.mxu0 0.0
    %3079 = vmatmul.mubr.f32.gmra.mrb[0].mxu0 %v642
    %v3080 = vpop.f32.mrb[0].mxu0
    %v3081 = vadd.f32 0.0, %v3080
    %v3082 = vpop.f32.mrb[0].mxu0
    %3083 = vmatprep.mubr.f32.mxu0 0.0
    %3084 = vmatmul.mubr.f32.gmra.mrb[0].mxu0 %v645
    %v3085 = vpop.f32.mrb[0].mxu0
    %v3086 = vadd.f32 0.0, %v3085
    %v3087 = vpop.f32.mrb[0].mxu0
    %3088 = vmatprep.mubr.f32.mxu0 0.0
    %3089 = vmatmul.mubr.f32.gmra.mrb[0].mxu0 %v648
    %v3090 = vpop.f32.mrb[0].mxu0
    %v3091 = vadd.f32 0.0, %v3090
    %v3092 = vpop.f32.mrb[0].mxu0
    %3093 = vmatprep.mubr.f32.mxu0 0.0
    %3094 = vmatmul.mubr.f32.gmra.mrb[0].mxu0 %v651
    %v3095 = vpop.f32.mrb[0].mxu0
    %v3096 = vadd.f32 0.0, %v3095
    %v3097 = vpop.f32.mrb[0].mxu0
    %3098 = vmatprep.mubr.f32.mxu0 0.0
    %3099 = vmatmul.mubr.f32.gmra.mrb[0].mxu0 %v654
    %v3100 = vpop.f32.mrb[0].mxu0
    %v3101 = vadd.f32 0.0, %v3100
    %v3102 = vpop.f32.mrb[0].mxu0
    %3103 = vmatprep.mubr.f32.mxu0 0.0
    %3104 = vmatmul.mubr.f32.gmra.mrb[0].mxu0 %v657
    %v3105 = vpop.f32.mrb[0].mxu0
    %v3106 = vadd.f32 0.0, %v3105
    %v3107 = vpop.f32.mrb[0].mxu0
    %3108 = vmatprep.mubr.f32.mxu0 0.0
    %3109 = vmatmul.mubr.f32.gmra.mrb[0].mxu0 %v660
    %v3110 = vpop.f32.mrb[0].mxu0
    %v3111 = vadd.f32 0.0, %v3110
    %v3112 = vpop.f32.mrb[0].mxu0
    %3113 = vmatprep.mubr.f32.mxu0 0.0
    %3114 = vmatmul.mubr.f32.gmra.mrb[0].mxu0 %v663
    %v3115 = vpop.f32.mrb[0].mxu0
    %v3116 = vadd.f32 0.0, %v3115
    %v3117 = vpop.f32.mrb[0].mxu0
    %3118 = vmatprep.mubr.f32.mxu0 0.0
    %3119 = vmatmul.mubr.f32.gmra.mrb[0].mxu0 %v666
    %v3120 = vpop.f32.mrb[0].mxu0
    %v3121 = vadd.f32 0.0, %v3120
    %v3122 = vpop.f32.mrb[0].mxu0
    %3123 = vmatprep.mubr.f32.mxu0 0.0
    %3124 = vmatmul.mubr.f32.gmra.mrb[0].mxu0 %v669
    %v3125 = vpop.f32.mrb[0].mxu0
    %v3126 = vadd.f32 0.0, %v3125
    %v3127 = vpop.f32.mrb[0].mxu0
    %3128 = vmatprep.mubr.f32.mxu0 0.0
    %3129 = vmatmul.mubr.f32.gmra.mrb[0].mxu0 %v672
    %v3130 = vpop.f32.mrb[0].mxu0
    %v3131 = vadd.f32 0.0, %v3130
    %v3132 = vpop.f32.mrb[0].mxu0
    %3133 = vmatprep.mubr.f32.mxu0 0.0
    %3134 = vmatmul.mubr.f32.gmra.mrb[0].mxu0 %v675
    %v3135 = vpop.f32.mrb[0].mxu0
    %v3136 = vadd.f32 0.0, %v3135
    %v3137 = vpop.f32.mrb[0].mxu0
    %3138 = vmatprep.mubr.f32.mxu0 0.0
    %3139 = vmatmul.mubr.f32.gmra.mrb[0].mxu0 %v678
    %v3140 = vpop.f32.mrb[0].mxu0
    %v3141 = vadd.f32 0.0, %v3140
    %v3142 = vpop.f32.mrb[0].mxu0
    %3143 = vmatprep.mubr.f32.mxu0 0.0
    %3144 = vmatmul.mubr.f32.gmra.mrb[0].mxu0 %v681
    %v3145 = vpop.f32.mrb[0].mxu0
    %v3146 = vadd.f32 0.0, %v3145
    %v3147 = vpop.f32.mrb[0].mxu0
    %3148 = vmatprep.mubr.f32.mxu0 0.0
    %3149 = vmatmul.mubr.f32.gmra.mrb[0].mxu0 %v684
    %v3150 = vpop.f32.mrb[0].mxu0
    %v3151 = vadd.f32 0.0, %v3150
    %v3152 = vpop.f32.mrb[0].mxu0
    %3153 = vmatprep.mubr.f32.mxu0 0.0
    %3154 = vmatmul.mubr.f32.gmra.mrb[0].mxu0 %v687
    %v3155 = vpop.f32.mrb[0].mxu0
    %v3156 = vadd.f32 0.0, %v3155
    %v3157 = vpop.f32.mrb[0].mxu0
    %3158 = vmatprep.mubr.f32.mxu0 0.0
    %3159 = vmatmul.mubr.f32.gmra.mrb[0].mxu0 %v690
    %v3160 = vpop.f32.mrb[0].mxu0
    %v3161 = vadd.f32 0.0, %v3160
    %v3162 = vpop.f32.mrb[0].mxu0
    %3163 = vmatprep.mubr.f32.mxu0 0.0
    %3164 = vmatmul.mubr.f32.gmra.mrb[0].mxu0 %v693
    %v3165 = vpop.f32.mrb[0].mxu0
    %v3166 = vadd.f32 0.0, %v3165
    %v3167 = vpop.f32.mrb[0].mxu0
    %3168 = vmatprep.mubr.f32.mxu0 0.0
    %3169 = vmatmul.mubr.f32.gmra.mrb[0].mxu0 %v696
    %v3170 = vpop.f32.mrb[0].mxu0
    %v3171 = vadd.f32 0.0, %v3170
    %v3172 = vpop.f32.mrb[0].mxu0
    %3173 = vmatprep.mubr.f32.mxu0 0.0
    %3174 = vmatmul.mubr.f32.gmra.mrb[0].mxu0 %v699
    %v3175 = vpop.f32.mrb[0].mxu0
    %v3176 = vadd.f32 0.0, %v3175
    %v3177 = vpop.f32.mrb[0].mxu0
    %3178 = vmatprep.mubr.f32.mxu0 0.0
    %3179 = vmatmul.mubr.f32.gmra.mrb[0].mxu0 %v702
    %v3180 = vpop.f32.mrb[0].mxu0
    %v3181 = vadd.f32 0.0, %v3180
    %v3182 = vpop.f32.mrb[0].mxu0
    %3183 = vmatprep.mubr.f32.mxu0 0.0
    %3184 = vmatmul.mubr.f32.gmra.mrb[0].mxu0 %v705
    %v3185 = vpop.f32.mrb[0].mxu0
    %v3186 = vadd.f32 0.0, %v3185
    %v3187 = vpop.f32.mrb[0].mxu0
    %3188 = vmatprep.mubr.f32.mxu0 0.0
    %3189 = vmatmul.mubr.f32.gmra.mrb[0].mxu0 %v708
    %v3190 = vpop.f32.mrb[0].mxu0
    %v3191 = vadd.f32 0.0, %v3190
    %v3192 = vpop.f32.mrb[0].mxu0
    %3193 = vmatprep.mubr.f32.mxu0 0.0
    %3194 = vmatmul.mubr.f32.gmra.mrb[0].mxu0 %v711
    %v3195 = vpop.f32.mrb[0].mxu0
    %v3196 = vadd.f32 0.0, %v3195
    %v3197 = vpop.f32.mrb[0].mxu0
    %3198 = vmatprep.mubr.f32.mxu0 0.0
    %3199 = vmatmul.mubr.f32.gmra.mrb[0].mxu0 %v714
    %v3200 = vpop.f32.mrb[0].mxu0
    %v3201 = vadd.f32 0.0, %v3200
    %v3202 = vpop.f32.mrb[0].mxu0
    %3203 = vmatprep.mubr.f32.mxu0 0.0
    %3204 = vmatmul.mubr.f32.gmra.mrb[0].mxu0 %v717
    %v3205 = vpop.f32.mrb[0].mxu0
    %v3206 = vadd.f32 0.0, %v3205
    %v3207 = vpop.f32.mrb[0].mxu0
    %3208 = vdwg.mxu0
    %v3209 = vadd.f32 %v2826, %v3051
    %v3210 = vadd.f32 %v2831, %v3056
    %v3211 = vadd.f32 %v2836, %v3061
    %v3212 = vadd.f32 %v2841, %v3066
    %v3213 = vadd.f32 %v2846, %v3071
    %v3214 = vadd.f32 %v2851, %v3076
    %v3215 = vadd.f32 %v2856, %v3081
    %v3216 = vadd.f32 %v2861, %v3086
    %v3217 = vadd.f32 %v2866, %v3091
    %v3218 = vadd.f32 %v2871, %v3096
    %v3219 = vadd.f32 %v2876, %v3101
    %v3220 = vadd.f32 %v2881, %v3106
    %v3221 = vadd.f32 %v2886, %v3111
    %v3222 = vadd.f32 %v2891, %v3116
    %v3223 = vadd.f32 %v2896, %v3121
    %v3224 = vadd.f32 %v2901, %v3126
    %v3225 = vadd.f32 %v2906, %v3131
    %v3226 = vadd.f32 %v2911, %v3136
    %v3227 = vadd.f32 %v2916, %v3141
    %v3228 = vadd.f32 %v2921, %v3146
    %v3229 = vadd.f32 %v2926, %v3151
    %v3230 = vadd.f32 %v2931, %v3156
    %v3231 = vadd.f32 %v2936, %v3161
    %v3232 = vadd.f32 %v2941, %v3166
    %v3233 = vadd.f32 %v2946, %v3171
    %v3234 = vadd.f32 %v2951, %v3176
    %v3235 = vadd.f32 %v2956, %v3181
    %v3236 = vadd.f32 %v2961, %v3186
    %v3237 = vadd.f32 %v2966, %v3191
    %v3238 = vadd.f32 %v2971, %v3196
    %v3239 = vadd.f32 %v2976, %v3201
    %v3240 = vadd.f32 %v2981, %v3206
    %v3241 = vxor.u32 %v3209, 2147483648
    %v3242 = vxor.u32 %v3210, 2147483648
    %v3243 = vxor.u32 %v3211, 2147483648
    %v3244 = vxor.u32 %v3212, 2147483648
    %v3245 = vxor.u32 %v3213, 2147483648
    %v3246 = vxor.u32 %v3214, 2147483648
    %v3247 = vxor.u32 %v3215, 2147483648
    %v3248 = vxor.u32 %v3216, 2147483648
    %v3249 = vxor.u32 %v3217, 2147483648
    %v3250 = vxor.u32 %v3218, 2147483648
    %v3251 = vxor.u32 %v3219, 2147483648
    %v3252 = vxor.u32 %v3220, 2147483648
    %v3253 = vxor.u32 %v3221, 2147483648
    %v3254 = vxor.u32 %v3222, 2147483648
    %v3255 = vxor.u32 %v3223, 2147483648
    %v3256 = vxor.u32 %v3224, 2147483648
    %v3257 = vxor.u32 %v3225, 2147483648
    %v3258 = vxor.u32 %v3226, 2147483648
    %v3259 = vxor.u32 %v3227, 2147483648
    %v3260 = vxor.u32 %v3228, 2147483648
    %v3261 = vxor.u32 %v3229, 2147483648
    %v3262 = vxor.u32 %v3230, 2147483648
    %v3263 = vxor.u32 %v3231, 2147483648
    %v3264 = vxor.u32 %v3232, 2147483648
    %v3265 = vxor.u32 %v3233, 2147483648
    %v3266 = vxor.u32 %v3234, 2147483648
    %v3267 = vxor.u32 %v3235, 2147483648
    %v3268 = vxor.u32 %v3236, 2147483648
    %v3269 = vxor.u32 %v3237, 2147483648
    %v3270 = vxor.u32 %v3238, 2147483648
    %v3271 = vxor.u32 %v3239, 2147483648
    %v3272 = vxor.u32 %v3240, 2147483648
    %v3273 = vmul.f32 %v3241, 1.442695
    %v3274 = vpow.pop %v3273
    %v3275 = vmul.f32 %v3242, 1.442695
    %v3276 = vpow.pop %v3275
    %v3277 = vmul.f32 %v3243, 1.442695
    %v3278 = vpow.pop %v3277
    %v3279 = vmul.f32 %v3244, 1.442695
    %v3280 = vpow.pop %v3279
    %v3281 = vmul.f32 %v3245, 1.442695
    %v3282 = vpow.pop %v3281
    %v3283 = vmul.f32 %v3246, 1.442695
    %v3284 = vpow.pop %v3283
    %v3285 = vmul.f32 %v3247, 1.442695
    %v3286 = vpow.pop %v3285
    %v3287 = vmul.f32 %v3248, 1.442695
    %v3288 = vpow.pop %v3287
    %v3289 = vmul.f32 %v3249, 1.442695
    %v3290 = vpow.pop %v3289
    %v3291 = vmul.f32 %v3250, 1.442695
    %v3292 = vpow.pop %v3291
    %v3293 = vmul.f32 %v3251, 1.442695
    %v3294 = vpow.pop %v3293
    %v3295 = vmul.f32 %v3252, 1.442695
    %v3296 = vpow.pop %v3295
    %v3297 = vmul.f32 %v3253, 1.442695
    %v3298 = vpow.pop %v3297
    %v3299 = vmul.f32 %v3254, 1.442695
    %v3300 = vpow.pop %v3299
    %v3301 = vmul.f32 %v3255, 1.442695
    %v3302 = vpow.pop %v3301
    %v3303 = vmul.f32 %v3256, 1.442695
    %v3304 = vpow.pop %v3303
    %v3305 = vmul.f32 %v3257, 1.442695
    %v3306 = vpow.pop %v3305
    %v3307 = vmul.f32 %v3258, 1.442695
    %v3308 = vpow.pop %v3307
    %v3309 = vmul.f32 %v3259, 1.442695
    %v3310 = vpow.pop %v3309
    %v3311 = vmul.f32 %v3260, 1.442695
    %v3312 = vpow.pop %v3311
    %v3313 = vmul.f32 %v3261, 1.442695
    %v3314 = vpow.pop %v3313
    %v3315 = vmul.f32 %v3262, 1.442695
    %v3316 = vpow.pop %v3315
    %v3317 = vmul.f32 %v3263, 1.442695
    %v3318 = vpow.pop %v3317
    %v3319 = vmul.f32 %v3264, 1.442695
    %v3320 = vpow.pop %v3319
    %v3321 = vmul.f32 %v3265, 1.442695
    %v3322 = vpow.pop %v3321
    %v3323 = vmul.f32 %v3266, 1.442695
    %v3324 = vpow.pop %v3323
    %v3325 = vmul.f32 %v3267, 1.442695
    %v3326 = vpow.pop %v3325
    %v3327 = vmul.f32 %v3268, 1.442695
    %v3328 = vpow.pop %v3327
    %v3329 = vmul.f32 %v3269, 1.442695
    %v3330 = vpow.pop %v3329
    %v3331 = vmul.f32 %v3270, 1.442695
    %v3332 = vpow.pop %v3331
    %v3333 = vmul.f32 %v3271, 1.442695
    %v3334 = vpow.pop %v3333
    %v3335 = vmul.f32 %v3272, 1.442695
    %v3336 = vpow.pop %v3335
    %v3337 = vadd.f32 %v3274, 1.0
    %v3338 = vadd.f32 %v3276, 1.0
    %v3339 = vadd.f32 %v3278, 1.0
    %v3340 = vadd.f32 %v3280, 1.0
    %v3341 = vadd.f32 %v3282, 1.0
    %v3342 = vadd.f32 %v3284, 1.0
    %v3343 = vadd.f32 %v3286, 1.0
    %v3344 = vadd.f32 %v3288, 1.0
    %v3345 = vadd.f32 %v3290, 1.0
    %v3346 = vadd.f32 %v3292, 1.0
    %v3347 = vadd.f32 %v3294, 1.0
    %v3348 = vadd.f32 %v3296, 1.0
    %v3349 = vadd.f32 %v3298, 1.0
    %v3350 = vadd.f32 %v3300, 1.0
    %v3351 = vadd.f32 %v3302, 1.0
    %v3352 = vadd.f32 %v3304, 1.0
    %v3353 = vadd.f32 %v3306, 1.0
    %v3354 = vadd.f32 %v3308, 1.0
    %v3355 = vadd.f32 %v3310, 1.0
    %v3356 = vadd.f32 %v3312, 1.0
    %v3357 = vadd.f32 %v3314, 1.0
    %v3358 = vadd.f32 %v3316, 1.0
    %v3359 = vadd.f32 %v3318, 1.0
    %v3360 = vadd.f32 %v3320, 1.0
    %v3361 = vadd.f32 %v3322, 1.0
    %v3362 = vadd.f32 %v3324, 1.0
    %v3363 = vadd.f32 %v3326, 1.0
    %v3364 = vadd.f32 %v3328, 1.0
    %v3365 = vadd.f32 %v3330, 1.0
    %v3366 = vadd.f32 %v3332, 1.0
    %v3367 = vadd.f32 %v3334, 1.0
    %v3368 = vadd.f32 %v3336, 1.0
    %v3369 = vrcp.pop %v3337
    %v3370 = vmul.f32 1.0, %v3369
    %v3371 = vrcp.pop %v3338
    %v3372 = vmul.f32 1.0, %v3371
    %v3373 = vrcp.pop %v3339
    %v3374 = vmul.f32 1.0, %v3373
    %v3375 = vrcp.pop %v3340
    %v3376 = vmul.f32 1.0, %v3375
    %v3377 = vrcp.pop %v3341
    %v3378 = vmul.f32 1.0, %v3377
    %v3379 = vrcp.pop %v3342
    %v3380 = vmul.f32 1.0, %v3379
    %v3381 = vrcp.pop %v3343
    %v3382 = vmul.f32 1.0, %v3381
    %v3383 = vrcp.pop %v3344
    %v3384 = vmul.f32 1.0, %v3383
    %v3385 = vrcp.pop %v3345
    %v3386 = vmul.f32 1.0, %v3385
    %v3387 = vrcp.pop %v3346
    %v3388 = vmul.f32 1.0, %v3387
    %v3389 = vrcp.pop %v3347
    %v3390 = vmul.f32 1.0, %v3389
    %v3391 = vrcp.pop %v3348
    %v3392 = vmul.f32 1.0, %v3391
    %v3393 = vrcp.pop %v3349
    %v3394 = vmul.f32 1.0, %v3393
    %v3395 = vrcp.pop %v3350
    %v3396 = vmul.f32 1.0, %v3395
    %v3397 = vrcp.pop %v3351
    %v3398 = vmul.f32 1.0, %v3397
    %v3399 = vrcp.pop %v3352
    %v3400 = vmul.f32 1.0, %v3399
    %v3401 = vrcp.pop %v3353
    %v3402 = vmul.f32 1.0, %v3401
    %v3403 = vrcp.pop %v3354
    %v3404 = vmul.f32 1.0, %v3403
    %v3405 = vrcp.pop %v3355
    %v3406 = vmul.f32 1.0, %v3405
    %v3407 = vrcp.pop %v3356
    %v3408 = vmul.f32 1.0, %v3407
    %v3409 = vrcp.pop %v3357
    %v3410 = vmul.f32 1.0, %v3409
    %v3411 = vrcp.pop %v3358
    %v3412 = vmul.f32 1.0, %v3411
    %v3413 = vrcp.pop %v3359
    %v3414 = vmul.f32 1.0, %v3413
    %v3415 = vrcp.pop %v3360
    %v3416 = vmul.f32 1.0, %v3415
    %v3417 = vrcp.pop %v3361
    %v3418 = vmul.f32 1.0, %v3417
    %v3419 = vrcp.pop %v3362
    %v3420 = vmul.f32 1.0, %v3419
    %v3421 = vrcp.pop %v3363
    %v3422 = vmul.f32 1.0, %v3421
    %v3423 = vrcp.pop %v3364
    %v3424 = vmul.f32 1.0, %v3423
    %v3425 = vrcp.pop %v3365
    %v3426 = vmul.f32 1.0, %v3425
    %v3427 = vrcp.pop %v3366
    %v3428 = vmul.f32 1.0, %v3427
    %v3429 = vrcp.pop %v3367
    %v3430 = vmul.f32 1.0, %v3429
    %v3431 = vrcp.pop %v3368
    %v3432 = vmul.f32 1.0, %v3431
    %v3433 = vmul.f32 %v3402, 2.0
    %v3434 = vmul.f32 %v3404, 2.0
    %v3435 = vmul.f32 %v3406, 2.0
    %v3436 = vmul.f32 %v3408, 2.0
    %v3437 = vmul.f32 %v3410, 2.0
    %v3438 = vmul.f32 %v3412, 2.0
    %v3439 = vmul.f32 %v3414, 2.0
    %v3440 = vmul.f32 %v3416, 2.0
    %v3441 = vsub.f32 %v3433, 1.0
    %v3442 = vsub.f32 %v3434, 1.0
    %v3443 = vsub.f32 %v3435, 1.0
    %v3444 = vsub.f32 %v3436, 1.0
    %v3445 = vsub.f32 %v3437, 1.0
    %v3446 = vsub.f32 %v3438, 1.0
    %v3447 = vsub.f32 %v3439, 1.0
    %v3448 = vsub.f32 %v3440, 1.0
    %v3449 = vmul.f32 %v3386, %v2710
    %v3450 = vmul.f32 %v3388, %v2711
    %v3451 = vmul.f32 %v3390, %v2712
    %v3452 = vmul.f32 %v3392, %v2713
    %v3453 = vmul.f32 %v3394, %v2714
    %v3454 = vmul.f32 %v3396, %v2715
    %v3455 = vmul.f32 %v3398, %v2716
    %v3456 = vmul.f32 %v3400, %v2717
    %v3457 = vmul.f32 %v3370, %v3441
    %v3458 = vmul.f32 %v3372, %v3442
    %v3459 = vmul.f32 %v3374, %v3443
    %v3460 = vmul.f32 %v3376, %v3444
    %v3461 = vmul.f32 %v3378, %v3445
    %v3462 = vmul.f32 %v3380, %v3446
    %v3463 = vmul.f32 %v3382, %v3447
    %v3464 = vmul.f32 %v3384, %v3448
    %v3465 = vadd.f32 %v3449, %v3457
    %v3466 = vadd.f32 %v3450, %v3458
    %v3467 = vadd.f32 %v3451, %v3459
    %v3468 = vadd.f32 %v3452, %v3460
    %v3469 = vadd.f32 %v3453, %v3461
    %v3470 = vadd.f32 %v3454, %v3462
    %v3471 = vadd.f32 %v3455, %v3463
    %v3472 = vadd.f32 %v3456, %v3464
    %v3473 = vtanh.pop %v3465
    %v3474 = vtanh.pop %v3466
    %v3475 = vtanh.pop %v3467
    %v3476 = vtanh.pop %v3468
    %v3477 = vtanh.pop %v3469
    %v3478 = vtanh.pop %v3470
    %v3479 = vtanh.pop %v3471
    %v3480 = vtanh.pop %v3472
    %v3481 = vmul.f32 %v3418, %v3473
    %v3482 = vmul.f32 %v3420, %v3474
    %v3483 = vmul.f32 %v3422, %v3475
    %v3484 = vmul.f32 %v3424, %v3476
    %v3485 = vmul.f32 %v3426, %v3477
    %v3486 = vmul.f32 %v3428, %v3478
    %v3487 = vmul.f32 %v3430, %v3479
    %v3488 = vmul.f32 %v3432, %v3480
    %v3489 = vadd.f32 %v2734, %v3481
    %v3490 = vadd.f32 %v2735, %v3482
    %v3491 = vadd.f32 %v2736, %v3483
    %v3492 = vadd.f32 %v2737, %v3484
    %v3493 = vadd.f32 %v2738, %v3485
    %v3494 = vadd.f32 %v2739, %v3486
    %v3495 = vadd.f32 %v2740, %v3487
    %v3496 = vadd.f32 %v2741, %v3488
    %s3497 = scalar_lea.vmem %s0, 128
    %v3498 = vld [vmem:[%s3497] sm:$0xf]
    %v3499 = vld [vmem:[%s3497 + $0x4] sm:$0xf]
    %v3500 = vld [vmem:[%s3497 + $0x8] sm:$0xf]
    %v3501 = vld [vmem:[%s3497 + $0xc] sm:$0xf]
    %v3502 = vld [vmem:[%s3497 + $0x10] sm:$0xf]
    %v3503 = vld [vmem:[%s3497 + $0x14] sm:$0xf]
    %v3504 = vld [vmem:[%s3497 + $0x18] sm:$0xf]
    %v3505 = vld [vmem:[%s3497 + $0x1c] sm:$0xf]
    %v3506 = vunpack.c.l.bf16 %v3498
    %v3507 = vunpack.c.l.bf16 %v3499
    %v3508 = vunpack.c.l.bf16 %v3500
    %v3509 = vunpack.c.l.bf16 %v3501
    %v3510 = vunpack.c.l.bf16 %v3502
    %v3511 = vunpack.c.l.bf16 %v3503
    %v3512 = vunpack.c.l.bf16 %v3504
    %v3513 = vunpack.c.l.bf16 %v3505
    %3514 = vmatprep.subr.mxu0 0.0
    %3515 = vmatpush1.msra.mxu0 %v3506
    %3516 = vmatprep.subr.mxu0 0.0
    %3517 = vmatpush1.msra.mxu0 %v3507
    %3518 = vmatprep.subr.mxu0 0.0
    %3519 = vmatpush1.msra.mxu0 %v3508
    %3520 = vmatprep.subr.mxu0 0.0
    %3521 = vmatpush1.msra.mxu0 %v3509
    %3522 = vmatprep.subr.mxu0 0.0
    %3523 = vmatpush1.msra.mxu0 %v3510
    %3524 = vmatprep.subr.mxu0 0.0
    %3525 = vmatpush1.msra.mxu0 %v3511
    %3526 = vmatprep.subr.mxu0 0.0
    %3527 = vmatpush1.msra.mxu0 %v3512
    %3528 = vmatprep.subr.mxu0 0.0
    %3529 = vmatpush1.msra.mxu0 %v3513
    %3530 = vmatprep.subr.mxu0 0.0
    %3531 = vmatpush1.msra.mxu0 0.0
    %3532 = vmatprep.subr.mxu0 0.0
    %3533 = vmatpush1.msra.mxu0 0.0
    %3534 = vmatprep.subr.mxu0 0.0
    %3535 = vmatpush1.msra.mxu0 0.0
    %3536 = vmatprep.subr.mxu0 0.0
    %3537 = vmatpush1.msra.mxu0 0.0
    %3538 = vmatprep.subr.mxu0 0.0
    %3539 = vmatpush1.msra.mxu0 0.0
    %3540 = vmatprep.subr.mxu0 0.0
    %3541 = vmatpush1.msra.mxu0 0.0
    %3542 = vmatprep.subr.mxu0 0.0
    %3543 = vmatpush1.msra.mxu0 0.0
    %3544 = vmatprep.subr.mxu0 0.0
    %3545 = vmatpush1.msra.mxu0 0.0
    %3546 = vmatprep.subr.mxu0 0.0
    %3547 = vmatpush1.msra.mxu0 0.0
    %3548 = vmatprep.subr.mxu0 0.0
    %3549 = vmatpush1.msra.mxu0 0.0
    %3550 = vmatprep.subr.mxu0 0.0
    %3551 = vmatpush1.msra.mxu0 0.0
    %3552 = vmatprep.subr.mxu0 0.0
    %3553 = vmatpush1.msra.mxu0 0.0
    %3554 = vmatprep.subr.mxu0 0.0
    %3555 = vmatpush1.msra.mxu0 0.0
    %3556 = vmatprep.subr.mxu0 0.0
    %3557 = vmatpush1.msra.mxu0 0.0
    %3558 = vmatprep.subr.mxu0 0.0
    %3559 = vmatpush1.msra.mxu0 0.0
    %3560 = vmatprep.subr.mxu0 0.0
    %3561 = vmatpush1.msra.mxu0 0.0
    %3562 = vmatprep.subr.mxu0 0.0
    %3563 = vmatpush1.msra.mxu0 0.0
    %3564 = vmatprep.subr.mxu0 0.0
    %3565 = vmatpush1.msra.mxu0 0.0
    %3566 = vmatprep.subr.mxu0 0.0
    %3567 = vmatpush1.msra.mxu0 0.0
    %3568 = vmatprep.subr.mxu0 0.0
    %3569 = vmatpush1.msra.mxu0 0.0
    %3570 = vmatprep.subr.mxu0 0.0
    %3571 = vmatpush1.msra.mxu0 0.0
    %3572 = vmatprep.subr.mxu0 0.0
    %3573 = vmatpush1.msra.mxu0 0.0
    %3574 = vmatprep.subr.mxu0 0.0
    %3575 = vmatpush1.msra.mxu0 0.0
    %3576 = vmatprep.subr.mxu0 0.0
    %3577 = vmatpush1.msra.mxu0 0.0
    %3578 = vmatprep.mubr.f32.mxu0 0.0
    %3579 = vmatmul.mubr.f32.gmra.mrb[0].mxu0 %v303
    %v3580 = vpop.f32.mrb[0].mxu0
    %v3581 = vadd.f32 %v128, %v3580
    %v3582 = vpop.f32.mrb[0].mxu0
    %3583 = vmatprep.mubr.f32.mxu0 0.0
    %3584 = vmatmul.mubr.f32.gmra.mrb[0].mxu0 %v306
    %v3585 = vpop.f32.mrb[0].mxu0
    %v3586 = vadd.f32 %v133, %v3585
    %v3587 = vpop.f32.mrb[0].mxu0
    %3588 = vmatprep.mubr.f32.mxu0 0.0
    %3589 = vmatmul.mubr.f32.gmra.mrb[0].mxu0 %v309
    %v3590 = vpop.f32.mrb[0].mxu0
    %v3591 = vadd.f32 %v138, %v3590
    %v3592 = vpop.f32.mrb[0].mxu0
    %3593 = vmatprep.mubr.f32.mxu0 0.0
    %3594 = vmatmul.mubr.f32.gmra.mrb[0].mxu0 %v312
    %v3595 = vpop.f32.mrb[0].mxu0
    %v3596 = vadd.f32 %v143, %v3595
    %v3597 = vpop.f32.mrb[0].mxu0
    %3598 = vmatprep.mubr.f32.mxu0 0.0
    %3599 = vmatmul.mubr.f32.gmra.mrb[0].mxu0 %v315
    %v3600 = vpop.f32.mrb[0].mxu0
    %v3601 = vadd.f32 %v148, %v3600
    %v3602 = vpop.f32.mrb[0].mxu0
    %3603 = vmatprep.mubr.f32.mxu0 0.0
    %3604 = vmatmul.mubr.f32.gmra.mrb[0].mxu0 %v318
    %v3605 = vpop.f32.mrb[0].mxu0
    %v3606 = vadd.f32 %v153, %v3605
    %v3607 = vpop.f32.mrb[0].mxu0
    %3608 = vmatprep.mubr.f32.mxu0 0.0
    %3609 = vmatmul.mubr.f32.gmra.mrb[0].mxu0 %v321
    %v3610 = vpop.f32.mrb[0].mxu0
    %v3611 = vadd.f32 %v158, %v3610
    %v3612 = vpop.f32.mrb[0].mxu0
    %3613 = vmatprep.mubr.f32.mxu0 0.0
    %3614 = vmatmul.mubr.f32.gmra.mrb[0].mxu0 %v324
    %v3615 = vpop.f32.mrb[0].mxu0
    %v3616 = vadd.f32 %v163, %v3615
    %v3617 = vpop.f32.mrb[0].mxu0
    %3618 = vmatprep.mubr.f32.mxu0 0.0
    %3619 = vmatmul.mubr.f32.gmra.mrb[0].mxu0 %v327
    %v3620 = vpop.f32.mrb[0].mxu0
    %v3621 = vadd.f32 %v168, %v3620
    %v3622 = vpop.f32.mrb[0].mxu0
    %3623 = vmatprep.mubr.f32.mxu0 0.0
    %3624 = vmatmul.mubr.f32.gmra.mrb[0].mxu0 %v330
    %v3625 = vpop.f32.mrb[0].mxu0
    %v3626 = vadd.f32 %v173, %v3625
    %v3627 = vpop.f32.mrb[0].mxu0
    %3628 = vmatprep.mubr.f32.mxu0 0.0
    %3629 = vmatmul.mubr.f32.gmra.mrb[0].mxu0 %v333
    %v3630 = vpop.f32.mrb[0].mxu0
    %v3631 = vadd.f32 %v178, %v3630
    %v3632 = vpop.f32.mrb[0].mxu0
    %3633 = vmatprep.mubr.f32.mxu0 0.0
    %3634 = vmatmul.mubr.f32.gmra.mrb[0].mxu0 %v336
    %v3635 = vpop.f32.mrb[0].mxu0
    %v3636 = vadd.f32 %v183, %v3635
    %v3637 = vpop.f32.mrb[0].mxu0
    %3638 = vmatprep.mubr.f32.mxu0 0.0
    %3639 = vmatmul.mubr.f32.gmra.mrb[0].mxu0 %v339
    %v3640 = vpop.f32.mrb[0].mxu0
    %v3641 = vadd.f32 %v188, %v3640
    %v3642 = vpop.f32.mrb[0].mxu0
    %3643 = vmatprep.mubr.f32.mxu0 0.0
    %3644 = vmatmul.mubr.f32.gmra.mrb[0].mxu0 %v342
    %v3645 = vpop.f32.mrb[0].mxu0
    %v3646 = vadd.f32 %v193, %v3645
    %v3647 = vpop.f32.mrb[0].mxu0
    %3648 = vmatprep.mubr.f32.mxu0 0.0
    %3649 = vmatmul.mubr.f32.gmra.mrb[0].mxu0 %v345
    %v3650 = vpop.f32.mrb[0].mxu0
    %v3651 = vadd.f32 %v198, %v3650
    %v3652 = vpop.f32.mrb[0].mxu0
    %3653 = vmatprep.mubr.f32.mxu0 0.0
    %3654 = vmatmul.mubr.f32.gmra.mrb[0].mxu0 %v348
    %v3655 = vpop.f32.mrb[0].mxu0
    %v3656 = vadd.f32 %v203, %v3655
    %v3657 = vpop.f32.mrb[0].mxu0
    %3658 = vmatprep.mubr.f32.mxu0 0.0
    %3659 = vmatmul.mubr.f32.gmra.mrb[0].mxu0 %v351
    %v3660 = vpop.f32.mrb[0].mxu0
    %v3661 = vadd.f32 %v208, %v3660
    %v3662 = vpop.f32.mrb[0].mxu0
    %3663 = vmatprep.mubr.f32.mxu0 0.0
    %3664 = vmatmul.mubr.f32.gmra.mrb[0].mxu0 %v354
    %v3665 = vpop.f32.mrb[0].mxu0
    %v3666 = vadd.f32 %v213, %v3665
    %v3667 = vpop.f32.mrb[0].mxu0
    %3668 = vmatprep.mubr.f32.mxu0 0.0
    %3669 = vmatmul.mubr.f32.gmra.mrb[0].mxu0 %v357
    %v3670 = vpop.f32.mrb[0].mxu0
    %v3671 = vadd.f32 %v218, %v3670
    %v3672 = vpop.f32.mrb[0].mxu0
    %3673 = vmatprep.mubr.f32.mxu0 0.0
    %3674 = vmatmul.mubr.f32.gmra.mrb[0].mxu0 %v360
    %v3675 = vpop.f32.mrb[0].mxu0
    %v3676 = vadd.f32 %v223, %v3675
    %v3677 = vpop.f32.mrb[0].mxu0
    %3678 = vmatprep.mubr.f32.mxu0 0.0
    %3679 = vmatmul.mubr.f32.gmra.mrb[0].mxu0 %v363
    %v3680 = vpop.f32.mrb[0].mxu0
    %v3681 = vadd.f32 %v228, %v3680
    %v3682 = vpop.f32.mrb[0].mxu0
    %3683 = vmatprep.mubr.f32.mxu0 0.0
    %3684 = vmatmul.mubr.f32.gmra.mrb[0].mxu0 %v366
    %v3685 = vpop.f32.mrb[0].mxu0
    %v3686 = vadd.f32 %v233, %v3685
    %v3687 = vpop.f32.mrb[0].mxu0
    %3688 = vmatprep.mubr.f32.mxu0 0.0
    %3689 = vmatmul.mubr.f32.gmra.mrb[0].mxu0 %v369
    %v3690 = vpop.f32.mrb[0].mxu0
    %v3691 = vadd.f32 %v238, %v3690
    %v3692 = vpop.f32.mrb[0].mxu0
    %3693 = vmatprep.mubr.f32.mxu0 0.0
    %3694 = vmatmul.mubr.f32.gmra.mrb[0].mxu0 %v372
    %v3695 = vpop.f32.mrb[0].mxu0
    %v3696 = vadd.f32 %v243, %v3695
    %v3697 = vpop.f32.mrb[0].mxu0
    %3698 = vmatprep.mubr.f32.mxu0 0.0
    %3699 = vmatmul.mubr.f32.gmra.mrb[0].mxu0 %v375
    %v3700 = vpop.f32.mrb[0].mxu0
    %v3701 = vadd.f32 %v248, %v3700
    %v3702 = vpop.f32.mrb[0].mxu0
    %3703 = vmatprep.mubr.f32.mxu0 0.0
    %3704 = vmatmul.mubr.f32.gmra.mrb[0].mxu0 %v378
    %v3705 = vpop.f32.mrb[0].mxu0
    %v3706 = vadd.f32 %v253, %v3705
    %v3707 = vpop.f32.mrb[0].mxu0
    %3708 = vmatprep.mubr.f32.mxu0 0.0
    %3709 = vmatmul.mubr.f32.gmra.mrb[0].mxu0 %v381
    %v3710 = vpop.f32.mrb[0].mxu0
    %v3711 = vadd.f32 %v258, %v3710
    %v3712 = vpop.f32.mrb[0].mxu0
    %3713 = vmatprep.mubr.f32.mxu0 0.0
    %3714 = vmatmul.mubr.f32.gmra.mrb[0].mxu0 %v384
    %v3715 = vpop.f32.mrb[0].mxu0
    %v3716 = vadd.f32 %v263, %v3715
    %v3717 = vpop.f32.mrb[0].mxu0
    %3718 = vmatprep.mubr.f32.mxu0 0.0
    %3719 = vmatmul.mubr.f32.gmra.mrb[0].mxu0 %v387
    %v3720 = vpop.f32.mrb[0].mxu0
    %v3721 = vadd.f32 %v268, %v3720
    %v3722 = vpop.f32.mrb[0].mxu0
    %3723 = vmatprep.mubr.f32.mxu0 0.0
    %3724 = vmatmul.mubr.f32.gmra.mrb[0].mxu0 %v390
    %v3725 = vpop.f32.mrb[0].mxu0
    %v3726 = vadd.f32 %v273, %v3725
    %v3727 = vpop.f32.mrb[0].mxu0
    %3728 = vmatprep.mubr.f32.mxu0 0.0
    %3729 = vmatmul.mubr.f32.gmra.mrb[0].mxu0 %v393
    %v3730 = vpop.f32.mrb[0].mxu0
    %v3731 = vadd.f32 %v278, %v3730
    %v3732 = vpop.f32.mrb[0].mxu0
    %3733 = vmatprep.mubr.f32.mxu0 0.0
    %3734 = vmatmul.mubr.f32.gmra.mrb[0].mxu0 %v396
    %v3735 = vpop.f32.mrb[0].mxu0
    %v3736 = vadd.f32 %v283, %v3735
    %v3737 = vpop.f32.mrb[0].mxu0
    %3738 = vdwg.mxu0
    %3739 = vmatprep.subr.mxu0 0.0
    %3740 = vmatpush1.msra.mxu0 %v3481
    %3741 = vmatprep.subr.mxu0 0.0
    %3742 = vmatpush1.msra.mxu0 %v3482
    %3743 = vmatprep.subr.mxu0 0.0
    %3744 = vmatpush1.msra.mxu0 %v3483
    %3745 = vmatprep.subr.mxu0 0.0
    %3746 = vmatpush1.msra.mxu0 %v3484
    %3747 = vmatprep.subr.mxu0 0.0
    %3748 = vmatpush1.msra.mxu0 %v3485
    %3749 = vmatprep.subr.mxu0 0.0
    %3750 = vmatpush1.msra.mxu0 %v3486
    %3751 = vmatprep.subr.mxu0 0.0
    %3752 = vmatpush1.msra.mxu0 %v3487
    %3753 = vmatprep.subr.mxu0 0.0
    %3754 = vmatpush1.msra.mxu0 %v3488
    %3755 = vmatprep.subr.mxu0 0.0
    %3756 = vmatpush1.msra.mxu0 0.0
    %3757 = vmatprep.subr.mxu0 0.0
    %3758 = vmatpush1.msra.mxu0 0.0
    %3759 = vmatprep.subr.mxu0 0.0
    %3760 = vmatpush1.msra.mxu0 0.0
    %3761 = vmatprep.subr.mxu0 0.0
    %3762 = vmatpush1.msra.mxu0 0.0
    %3763 = vmatprep.subr.mxu0 0.0
    %3764 = vmatpush1.msra.mxu0 0.0
    %3765 = vmatprep.subr.mxu0 0.0
    %3766 = vmatpush1.msra.mxu0 0.0
    %3767 = vmatprep.subr.mxu0 0.0
    %3768 = vmatpush1.msra.mxu0 0.0
    %3769 = vmatprep.subr.mxu0 0.0
    %3770 = vmatpush1.msra.mxu0 0.0
    %3771 = vmatprep.subr.mxu0 0.0
    %3772 = vmatpush1.msra.mxu0 0.0
    %3773 = vmatprep.subr.mxu0 0.0
    %3774 = vmatpush1.msra.mxu0 0.0
    %3775 = vmatprep.subr.mxu0 0.0
    %3776 = vmatpush1.msra.mxu0 0.0
    %3777 = vmatprep.subr.mxu0 0.0
    %3778 = vmatpush1.msra.mxu0 0.0
    %3779 = vmatprep.subr.mxu0 0.0
    %3780 = vmatpush1.msra.mxu0 0.0
    %3781 = vmatprep.subr.mxu0 0.0
    %3782 = vmatpush1.msra.mxu0 0.0
    %3783 = vmatprep.subr.mxu0 0.0
    %3784 = vmatpush1.msra.mxu0 0.0
    %3785 = vmatprep.subr.mxu0 0.0
    %3786 = vmatpush1.msra.mxu0 0.0
    %3787 = vmatprep.subr.mxu0 0.0
    %3788 = vmatpush1.msra.mxu0 0.0
    %3789 = vmatprep.subr.mxu0 0.0
    %3790 = vmatpush1.msra.mxu0 0.0
    %3791 = vmatprep.subr.mxu0 0.0
    %3792 = vmatpush1.msra.mxu0 0.0
    %3793 = vmatprep.subr.mxu0 0.0
    %3794 = vmatpush1.msra.mxu0 0.0
    %3795 = vmatprep.subr.mxu0 0.0
    %3796 = vmatpush1.msra.mxu0 0.0
    %3797 = vmatprep.subr.mxu0 0.0
    %3798 = vmatpush1.msra.mxu0 0.0
    %3799 = vmatprep.subr.mxu0 0.0
    %3800 = vmatpush1.msra.mxu0 0.0
    %3801 = vmatprep.subr.mxu0 0.0
    %3802 = vmatpush1.msra.mxu0 0.0
    %3803 = vmatprep.mubr.f32.mxu0 0.0
    %3804 = vmatmul.mubr.f32.gmra.mrb[0].mxu0 %v624
    %v3805 = vpop.f32.mrb[0].mxu0
    %v3806 = vadd.f32 0.0, %v3805
    %v3807 = vpop.f32.mrb[0].mxu0
    %3808 = vmatprep.mubr.f32.mxu0 0.0
    %3809 = vmatmul.mubr.f32.gmra.mrb[0].mxu0 %v627
    %v3810 = vpop.f32.mrb[0].mxu0
    %v3811 = vadd.f32 0.0, %v3810
    %v3812 = vpop.f32.mrb[0].mxu0
    %3813 = vmatprep.mubr.f32.mxu0 0.0
    %3814 = vmatmul.mubr.f32.gmra.mrb[0].mxu0 %v630
    %v3815 = vpop.f32.mrb[0].mxu0
    %v3816 = vadd.f32 0.0, %v3815
    %v3817 = vpop.f32.mrb[0].mxu0
    %3818 = vmatprep.mubr.f32.mxu0 0.0
    %3819 = vmatmul.mubr.f32.gmra.mrb[0].mxu0 %v633
    %v3820 = vpop.f32.mrb[0].mxu0
    %v3821 = vadd.f32 0.0, %v3820
    %v3822 = vpop.f32.mrb[0].mxu0
    %3823 = vmatprep.mubr.f32.mxu0 0.0
    %3824 = vmatmul.mubr.f32.gmra.mrb[0].mxu0 %v636
    %v3825 = vpop.f32.mrb[0].mxu0
    %v3826 = vadd.f32 0.0, %v3825
    %v3827 = vpop.f32.mrb[0].mxu0
    %3828 = vmatprep.mubr.f32.mxu0 0.0
    %3829 = vmatmul.mubr.f32.gmra.mrb[0].mxu0 %v639
    %v3830 = vpop.f32.mrb[0].mxu0
    %v3831 = vadd.f32 0.0, %v3830
    %v3832 = vpop.f32.mrb[0].mxu0
    %3833 = vmatprep.mubr.f32.mxu0 0.0
    %3834 = vmatmul.mubr.f32.gmra.mrb[0].mxu0 %v642
    %v3835 = vpop.f32.mrb[0].mxu0
    %v3836 = vadd.f32 0.0, %v3835
    %v3837 = vpop.f32.mrb[0].mxu0
    %3838 = vmatprep.mubr.f32.mxu0 0.0
    %3839 = vmatmul.mubr.f32.gmra.mrb[0].mxu0 %v645
    %v3840 = vpop.f32.mrb[0].mxu0
    %v3841 = vadd.f32 0.0, %v3840
    %v3842 = vpop.f32.mrb[0].mxu0
    %3843 = vmatprep.mubr.f32.mxu0 0.0
    %3844 = vmatmul.mubr.f32.gmra.mrb[0].mxu0 %v648
    %v3845 = vpop.f32.mrb[0].mxu0
    %v3846 = vadd.f32 0.0, %v3845
    %v3847 = vpop.f32.mrb[0].mxu0
    %3848 = vmatprep.mubr.f32.mxu0 0.0
    %3849 = vmatmul.mubr.f32.gmra.mrb[0].mxu0 %v651
    %v3850 = vpop.f32.mrb[0].mxu0
    %v3851 = vadd.f32 0.0, %v3850
    %v3852 = vpop.f32.mrb[0].mxu0
    %3853 = vmatprep.mubr.f32.mxu0 0.0
    %3854 = vmatmul.mubr.f32.gmra.mrb[0].mxu0 %v654
    %v3855 = vpop.f32.mrb[0].mxu0
    %v3856 = vadd.f32 0.0, %v3855
    %v3857 = vpop.f32.mrb[0].mxu0
    %3858 = vmatprep.mubr.f32.mxu0 0.0
    %3859 = vmatmul.mubr.f32.gmra.mrb[0].mxu0 %v657
    %v3860 = vpop.f32.mrb[0].mxu0
    %v3861 = vadd.f32 0.0, %v3860
    %v3862 = vpop.f32.mrb[0].mxu0
    %3863 = vmatprep.mubr.f32.mxu0 0.0
    %3864 = vmatmul.mubr.f32.gmra.mrb[0].mxu0 %v660
    %v3865 = vpop.f32.mrb[0].mxu0
    %v3866 = vadd.f32 0.0, %v3865
    %v3867 = vpop.f32.mrb[0].mxu0
    %3868 = vmatprep.mubr.f32.mxu0 0.0
    %3869 = vmatmul.mubr.f32.gmra.mrb[0].mxu0 %v663
    %v3870 = vpop.f32.mrb[0].mxu0
    %v3871 = vadd.f32 0.0, %v3870
    %v3872 = vpop.f32.mrb[0].mxu0
    %3873 = vmatprep.mubr.f32.mxu0 0.0
    %3874 = vmatmul.mubr.f32.gmra.mrb[0].mxu0 %v666
    %v3875 = vpop.f32.mrb[0].mxu0
    %v3876 = vadd.f32 0.0, %v3875
    %v3877 = vpop.f32.mrb[0].mxu0
    %3878 = vmatprep.mubr.f32.mxu0 0.0
    %3879 = vmatmul.mubr.f32.gmra.mrb[0].mxu0 %v669
    %v3880 = vpop.f32.mrb[0].mxu0
    %v3881 = vadd.f32 0.0, %v3880
    %v3882 = vpop.f32.mrb[0].mxu0
    %3883 = vmatprep.mubr.f32.mxu0 0.0
    %3884 = vmatmul.mubr.f32.gmra.mrb[0].mxu0 %v672
    %v3885 = vpop.f32.mrb[0].mxu0
    %v3886 = vadd.f32 0.0, %v3885
    %v3887 = vpop.f32.mrb[0].mxu0
    %3888 = vmatprep.mubr.f32.mxu0 0.0
    %3889 = vmatmul.mubr.f32.gmra.mrb[0].mxu0 %v675
    %v3890 = vpop.f32.mrb[0].mxu0
    %v3891 = vadd.f32 0.0, %v3890
    %v3892 = vpop.f32.mrb[0].mxu0
    %3893 = vmatprep.mubr.f32.mxu0 0.0
    %3894 = vmatmul.mubr.f32.gmra.mrb[0].mxu0 %v678
    %v3895 = vpop.f32.mrb[0].mxu0
    %v3896 = vadd.f32 0.0, %v3895
    %v3897 = vpop.f32.mrb[0].mxu0
    %3898 = vmatprep.mubr.f32.mxu0 0.0
    %3899 = vmatmul.mubr.f32.gmra.mrb[0].mxu0 %v681
    %v3900 = vpop.f32.mrb[0].mxu0
    %v3901 = vadd.f32 0.0, %v3900
    %v3902 = vpop.f32.mrb[0].mxu0
    %3903 = vmatprep.mubr.f32.mxu0 0.0
    %3904 = vmatmul.mubr.f32.gmra.mrb[0].mxu0 %v684
    %v3905 = vpop.f32.mrb[0].mxu0
    %v3906 = vadd.f32 0.0, %v3905
    %v3907 = vpop.f32.mrb[0].mxu0
    %3908 = vmatprep.mubr.f32.mxu0 0.0
    %3909 = vmatmul.mubr.f32.gmra.mrb[0].mxu0 %v687
    %v3910 = vpop.f32.mrb[0].mxu0
    %v3911 = vadd.f32 0.0, %v3910
    %v3912 = vpop.f32.mrb[0].mxu0
    %3913 = vmatprep.mubr.f32.mxu0 0.0
    %3914 = vmatmul.mubr.f32.gmra.mrb[0].mxu0 %v690
    %v3915 = vpop.f32.mrb[0].mxu0
    %v3916 = vadd.f32 0.0, %v3915
    %v3917 = vpop.f32.mrb[0].mxu0
    %3918 = vmatprep.mubr.f32.mxu0 0.0
    %3919 = vmatmul.mubr.f32.gmra.mrb[0].mxu0 %v693
    %v3920 = vpop.f32.mrb[0].mxu0
    %v3921 = vadd.f32 0.0, %v3920
    %v3922 = vpop.f32.mrb[0].mxu0
    %3923 = vmatprep.mubr.f32.mxu0 0.0
    %3924 = vmatmul.mubr.f32.gmra.mrb[0].mxu0 %v696
    %v3925 = vpop.f32.mrb[0].mxu0
    %v3926 = vadd.f32 0.0, %v3925
    %v3927 = vpop.f32.mrb[0].mxu0
    %3928 = vmatprep.mubr.f32.mxu0 0.0
    %3929 = vmatmul.mubr.f32.gmra.mrb[0].mxu0 %v699
    %v3930 = vpop.f32.mrb[0].mxu0
    %v3931 = vadd.f32 0.0, %v3930
    %v3932 = vpop.f32.mrb[0].mxu0
    %3933 = vmatprep.mubr.f32.mxu0 0.0
    %3934 = vmatmul.mubr.f32.gmra.mrb[0].mxu0 %v702
    %v3935 = vpop.f32.mrb[0].mxu0
    %v3936 = vadd.f32 0.0, %v3935
    %v3937 = vpop.f32.mrb[0].mxu0
    %3938 = vmatprep.mubr.f32.mxu0 0.0
    %3939 = vmatmul.mubr.f32.gmra.mrb[0].mxu0 %v705
    %v3940 = vpop.f32.mrb[0].mxu0
    %v3941 = vadd.f32 0.0, %v3940
    %v3942 = vpop.f32.mrb[0].mxu0
    %3943 = vmatprep.mubr.f32.mxu0 0.0
    %3944 = vmatmul.mubr.f32.gmra.mrb[0].mxu0 %v708
    %v3945 = vpop.f32.mrb[0].mxu0
    %v3946 = vadd.f32 0.0, %v3945
    %v3947 = vpop.f32.mrb[0].mxu0
    %3948 = vmatprep.mubr.f32.mxu0 0.0
    %3949 = vmatmul.mubr.f32.gmra.mrb[0].mxu0 %v711
    %v3950 = vpop.f32.mrb[0].mxu0
    %v3951 = vadd.f32 0.0, %v3950
    %v3952 = vpop.f32.mrb[0].mxu0
    %3953 = vmatprep.mubr.f32.mxu0 0.0
    %3954 = vmatmul.mubr.f32.gmra.mrb[0].mxu0 %v714
    %v3955 = vpop.f32.mrb[0].mxu0
    %v3956 = vadd.f32 0.0, %v3955
    %v3957 = vpop.f32.mrb[0].mxu0
    %3958 = vmatprep.mubr.f32.mxu0 0.0
    %3959 = vmatmul.mubr.f32.gmra.mrb[0].mxu0 %v717
    %v3960 = vpop.f32.mrb[0].mxu0
    %v3961 = vadd.f32 0.0, %v3960
    %v3962 = vpop.f32.mrb[0].mxu0
    %3963 = vdwg.mxu0
    %v3964 = vadd.f32 %v3581, %v3806
    %v3965 = vadd.f32 %v3586, %v3811
    %v3966 = vadd.f32 %v3591, %v3816
    %v3967 = vadd.f32 %v3596, %v3821
    %v3968 = vadd.f32 %v3601, %v3826
    %v3969 = vadd.f32 %v3606, %v3831
    %v3970 = vadd.f32 %v3611, %v3836
    %v3971 = vadd.f32 %v3616, %v3841
    %v3972 = vadd.f32 %v3621, %v3846
    %v3973 = vadd.f32 %v3626, %v3851
    %v3974 = vadd.f32 %v3631, %v3856
    %v3975 = vadd.f32 %v3636, %v3861
    %v3976 = vadd.f32 %v3641, %v3866
    %v3977 = vadd.f32 %v3646, %v3871
    %v3978 = vadd.f32 %v3651, %v3876
    %v3979 = vadd.f32 %v3656, %v3881
    %v3980 = vadd.f32 %v3661, %v3886
    %v3981 = vadd.f32 %v3666, %v3891
    %v3982 = vadd.f32 %v3671, %v3896
    %v3983 = vadd.f32 %v3676, %v3901
    %v3984 = vadd.f32 %v3681, %v3906
    %v3985 = vadd.f32 %v3686, %v3911
    %v3986 = vadd.f32 %v3691, %v3916
    %v3987 = vadd.f32 %v3696, %v3921
    %v3988 = vadd.f32 %v3701, %v3926
    %v3989 = vadd.f32 %v3706, %v3931
    %v3990 = vadd.f32 %v3711, %v3936
    %v3991 = vadd.f32 %v3716, %v3941
    %v3992 = vadd.f32 %v3721, %v3946
    %v3993 = vadd.f32 %v3726, %v3951
    %v3994 = vadd.f32 %v3731, %v3956
    %v3995 = vadd.f32 %v3736, %v3961
    %v3996 = vxor.u32 %v3964, 2147483648
    %v3997 = vxor.u32 %v3965, 2147483648
    %v3998 = vxor.u32 %v3966, 2147483648
    %v3999 = vxor.u32 %v3967, 2147483648
    %v4000 = vxor.u32 %v3968, 2147483648
    %v4001 = vxor.u32 %v3969, 2147483648
    %v4002 = vxor.u32 %v3970, 2147483648
    %v4003 = vxor.u32 %v3971, 2147483648
    %v4004 = vxor.u32 %v3972, 2147483648
    %v4005 = vxor.u32 %v3973, 2147483648
    %v4006 = vxor.u32 %v3974, 2147483648
    %v4007 = vxor.u32 %v3975, 2147483648
    %v4008 = vxor.u32 %v3976, 2147483648
    %v4009 = vxor.u32 %v3977, 2147483648
    %v4010 = vxor.u32 %v3978, 2147483648
    %v4011 = vxor.u32 %v3979, 2147483648
    %v4012 = vxor.u32 %v3980, 2147483648
    %v4013 = vxor.u32 %v3981, 2147483648
    %v4014 = vxor.u32 %v3982, 2147483648
    %v4015 = vxor.u32 %v3983, 2147483648
    %v4016 = vxor.u32 %v3984, 2147483648
    %v4017 = vxor.u32 %v3985, 2147483648
    %v4018 = vxor.u32 %v3986, 2147483648
    %v4019 = vxor.u32 %v3987, 2147483648
    %v4020 = vxor.u32 %v3988, 2147483648
    %v4021 = vxor.u32 %v3989, 2147483648
    %v4022 = vxor.u32 %v3990, 2147483648
    %v4023 = vxor.u32 %v3991, 2147483648
    %v4024 = vxor.u32 %v3992, 2147483648
    %v4025 = vxor.u32 %v3993, 2147483648
    %v4026 = vxor.u32 %v3994, 2147483648
    %v4027 = vxor.u32 %v3995, 2147483648
    %v4028 = vmul.f32 %v3996, 1.442695
    %v4029 = vpow.pop %v4028
    %v4030 = vmul.f32 %v3997, 1.442695
    %v4031 = vpow.pop %v4030
    %v4032 = vmul.f32 %v3998, 1.442695
    %v4033 = vpow.pop %v4032
    %v4034 = vmul.f32 %v3999, 1.442695
    %v4035 = vpow.pop %v4034
    %v4036 = vmul.f32 %v4000, 1.442695
    %v4037 = vpow.pop %v4036
    %v4038 = vmul.f32 %v4001, 1.442695
    %v4039 = vpow.pop %v4038
    %v4040 = vmul.f32 %v4002, 1.442695
    %v4041 = vpow.pop %v4040
    %v4042 = vmul.f32 %v4003, 1.442695
    %v4043 = vpow.pop %v4042
    %v4044 = vmul.f32 %v4004, 1.442695
    %v4045 = vpow.pop %v4044
    %v4046 = vmul.f32 %v4005, 1.442695
    %v4047 = vpow.pop %v4046
    %v4048 = vmul.f32 %v4006, 1.442695
    %v4049 = vpow.pop %v4048
    %v4050 = vmul.f32 %v4007, 1.442695
    %v4051 = vpow.pop %v4050
    %v4052 = vmul.f32 %v4008, 1.442695
    %v4053 = vpow.pop %v4052
    %v4054 = vmul.f32 %v4009, 1.442695
    %v4055 = vpow.pop %v4054
    %v4056 = vmul.f32 %v4010, 1.442695
    %v4057 = vpow.pop %v4056
    %v4058 = vmul.f32 %v4011, 1.442695
    %v4059 = vpow.pop %v4058
    %v4060 = vmul.f32 %v4012, 1.442695
    %v4061 = vpow.pop %v4060
    %v4062 = vmul.f32 %v4013, 1.442695
    %v4063 = vpow.pop %v4062
    %v4064 = vmul.f32 %v4014, 1.442695
    %v4065 = vpow.pop %v4064
    %v4066 = vmul.f32 %v4015, 1.442695
    %v4067 = vpow.pop %v4066
    %v4068 = vmul.f32 %v4016, 1.442695
    %v4069 = vpow.pop %v4068
    %v4070 = vmul.f32 %v4017, 1.442695
    %v4071 = vpow.pop %v4070
    %v4072 = vmul.f32 %v4018, 1.442695
    %v4073 = vpow.pop %v4072
    %v4074 = vmul.f32 %v4019, 1.442695
    %v4075 = vpow.pop %v4074
    %v4076 = vmul.f32 %v4020, 1.442695
    %v4077 = vpow.pop %v4076
    %v4078 = vmul.f32 %v4021, 1.442695
    %v4079 = vpow.pop %v4078
    %v4080 = vmul.f32 %v4022, 1.442695
    %v4081 = vpow.pop %v4080
    %v4082 = vmul.f32 %v4023, 1.442695
    %v4083 = vpow.pop %v4082
    %v4084 = vmul.f32 %v4024, 1.442695
    %v4085 = vpow.pop %v4084
    %v4086 = vmul.f32 %v4025, 1.442695
    %v4087 = vpow.pop %v4086
    %v4088 = vmul.f32 %v4026, 1.442695
    %v4089 = vpow.pop %v4088
    %v4090 = vmul.f32 %v4027, 1.442695
    %v4091 = vpow.pop %v4090
    %v4092 = vadd.f32 %v4029, 1.0
    %v4093 = vadd.f32 %v4031, 1.0
    %v4094 = vadd.f32 %v4033, 1.0
    %v4095 = vadd.f32 %v4035, 1.0
    %v4096 = vadd.f32 %v4037, 1.0
    %v4097 = vadd.f32 %v4039, 1.0
    %v4098 = vadd.f32 %v4041, 1.0
    %v4099 = vadd.f32 %v4043, 1.0
    %v4100 = vadd.f32 %v4045, 1.0
    %v4101 = vadd.f32 %v4047, 1.0
    %v4102 = vadd.f32 %v4049, 1.0
    %v4103 = vadd.f32 %v4051, 1.0
    %v4104 = vadd.f32 %v4053, 1.0
    %v4105 = vadd.f32 %v4055, 1.0
    %v4106 = vadd.f32 %v4057, 1.0
    %v4107 = vadd.f32 %v4059, 1.0
    %v4108 = vadd.f32 %v4061, 1.0
    %v4109 = vadd.f32 %v4063, 1.0
    %v4110 = vadd.f32 %v4065, 1.0
    %v4111 = vadd.f32 %v4067, 1.0
    %v4112 = vadd.f32 %v4069, 1.0
    %v4113 = vadd.f32 %v4071, 1.0
    %v4114 = vadd.f32 %v4073, 1.0
    %v4115 = vadd.f32 %v4075, 1.0
    %v4116 = vadd.f32 %v4077, 1.0
    %v4117 = vadd.f32 %v4079, 1.0
    %v4118 = vadd.f32 %v4081, 1.0
    %v4119 = vadd.f32 %v4083, 1.0
    %v4120 = vadd.f32 %v4085, 1.0
    %v4121 = vadd.f32 %v4087, 1.0
    %v4122 = vadd.f32 %v4089, 1.0
    %v4123 = vadd.f32 %v4091, 1.0
    %v4124 = vrcp.pop %v4092
    %v4125 = vmul.f32 1.0, %v4124
    %v4126 = vrcp.pop %v4093
    %v4127 = vmul.f32 1.0, %v4126
    %v4128 = vrcp.pop %v4094
    %v4129 = vmul.f32 1.0, %v4128
    %v4130 = vrcp.pop %v4095
    %v4131 = vmul.f32 1.0, %v4130
    %v4132 = vrcp.pop %v4096
    %v4133 = vmul.f32 1.0, %v4132
    %v4134 = vrcp.pop %v4097
    %v4135 = vmul.f32 1.0, %v4134
    %v4136 = vrcp.pop %v4098
    %v4137 = vmul.f32 1.0, %v4136
    %v4138 = vrcp.pop %v4099
    %v4139 = vmul.f32 1.0, %v4138
    %v4140 = vrcp.pop %v4100
    %v4141 = vmul.f32 1.0, %v4140
    %v4142 = vrcp.pop %v4101
    %v4143 = vmul.f32 1.0, %v4142
    %v4144 = vrcp.pop %v4102
    %v4145 = vmul.f32 1.0, %v4144
    %v4146 = vrcp.pop %v4103
    %v4147 = vmul.f32 1.0, %v4146
    %v4148 = vrcp.pop %v4104
    %v4149 = vmul.f32 1.0, %v4148
    %v4150 = vrcp.pop %v4105
    %v4151 = vmul.f32 1.0, %v4150
    %v4152 = vrcp.pop %v4106
    %v4153 = vmul.f32 1.0, %v4152
    %v4154 = vrcp.pop %v4107
    %v4155 = vmul.f32 1.0, %v4154
    %v4156 = vrcp.pop %v4108
    %v4157 = vmul.f32 1.0, %v4156
    %v4158 = vrcp.pop %v4109
    %v4159 = vmul.f32 1.0, %v4158
    %v4160 = vrcp.pop %v4110
    %v4161 = vmul.f32 1.0, %v4160
    %v4162 = vrcp.pop %v4111
    %v4163 = vmul.f32 1.0, %v4162
    %v4164 = vrcp.pop %v4112
    %v4165 = vmul.f32 1.0, %v4164
    %v4166 = vrcp.pop %v4113
    %v4167 = vmul.f32 1.0, %v4166
    %v4168 = vrcp.pop %v4114
    %v4169 = vmul.f32 1.0, %v4168
    %v4170 = vrcp.pop %v4115
    %v4171 = vmul.f32 1.0, %v4170
    %v4172 = vrcp.pop %v4116
    %v4173 = vmul.f32 1.0, %v4172
    %v4174 = vrcp.pop %v4117
    %v4175 = vmul.f32 1.0, %v4174
    %v4176 = vrcp.pop %v4118
    %v4177 = vmul.f32 1.0, %v4176
    %v4178 = vrcp.pop %v4119
    %v4179 = vmul.f32 1.0, %v4178
    %v4180 = vrcp.pop %v4120
    %v4181 = vmul.f32 1.0, %v4180
    %v4182 = vrcp.pop %v4121
    %v4183 = vmul.f32 1.0, %v4182
    %v4184 = vrcp.pop %v4122
    %v4185 = vmul.f32 1.0, %v4184
    %v4186 = vrcp.pop %v4123
    %v4187 = vmul.f32 1.0, %v4186
    %v4188 = vmul.f32 %v4157, 2.0
    %v4189 = vmul.f32 %v4159, 2.0
    %v4190 = vmul.f32 %v4161, 2.0
    %v4191 = vmul.f32 %v4163, 2.0
    %v4192 = vmul.f32 %v4165, 2.0
    %v4193 = vmul.f32 %v4167, 2.0
    %v4194 = vmul.f32 %v4169, 2.0
    %v4195 = vmul.f32 %v4171, 2.0
    %v4196 = vsub.f32 %v4188, 1.0
    %v4197 = vsub.f32 %v4189, 1.0
    %v4198 = vsub.f32 %v4190, 1.0
    %v4199 = vsub.f32 %v4191, 1.0
    %v4200 = vsub.f32 %v4192, 1.0
    %v4201 = vsub.f32 %v4193, 1.0
    %v4202 = vsub.f32 %v4194, 1.0
    %v4203 = vsub.f32 %v4195, 1.0
    %v4204 = vmul.f32 %v4141, %v3465
    %v4205 = vmul.f32 %v4143, %v3466
    %v4206 = vmul.f32 %v4145, %v3467
    %v4207 = vmul.f32 %v4147, %v3468
    %v4208 = vmul.f32 %v4149, %v3469
    %v4209 = vmul.f32 %v4151, %v3470
    %v4210 = vmul.f32 %v4153, %v3471
    %v4211 = vmul.f32 %v4155, %v3472
    %v4212 = vmul.f32 %v4125, %v4196
    %v4213 = vmul.f32 %v4127, %v4197
    %v4214 = vmul.f32 %v4129, %v4198
    %v4215 = vmul.f32 %v4131, %v4199
    %v4216 = vmul.f32 %v4133, %v4200
    %v4217 = vmul.f32 %v4135, %v4201
    %v4218 = vmul.f32 %v4137, %v4202
    %v4219 = vmul.f32 %v4139, %v4203
    %v4220 = vadd.f32 %v4204, %v4212
    %v4221 = vadd.f32 %v4205, %v4213
    %v4222 = vadd.f32 %v4206, %v4214
    %v4223 = vadd.f32 %v4207, %v4215
    %v4224 = vadd.f32 %v4208, %v4216
    %v4225 = vadd.f32 %v4209, %v4217
    %v4226 = vadd.f32 %v4210, %v4218
    %v4227 = vadd.f32 %v4211, %v4219
    %v4228 = vtanh.pop %v4220
    %v4229 = vtanh.pop %v4221
    %v4230 = vtanh.pop %v4222
    %v4231 = vtanh.pop %v4223
    %v4232 = vtanh.pop %v4224
    %v4233 = vtanh.pop %v4225
    %v4234 = vtanh.pop %v4226
    %v4235 = vtanh.pop %v4227
    %v4236 = vmul.f32 %v4173, %v4228
    %v4237 = vmul.f32 %v4175, %v4229
    %v4238 = vmul.f32 %v4177, %v4230
    %v4239 = vmul.f32 %v4179, %v4231
    %v4240 = vmul.f32 %v4181, %v4232
    %v4241 = vmul.f32 %v4183, %v4233
    %v4242 = vmul.f32 %v4185, %v4234
    %v4243 = vmul.f32 %v4187, %v4235
    %v4244 = vadd.f32 %v3489, %v4236
    %v4245 = vadd.f32 %v3490, %v4237
    %v4246 = vadd.f32 %v3491, %v4238
    %v4247 = vadd.f32 %v3492, %v4239
    %v4248 = vadd.f32 %v3493, %v4240
    %v4249 = vadd.f32 %v3494, %v4241
    %v4250 = vadd.f32 %v3495, %v4242
    %v4251 = vadd.f32 %v3496, %v4243
    %s4252 = scalar_lea.vmem %s0, 160
    %v4253 = vld [vmem:[%s4252] sm:$0xf]
    %v4254 = vld [vmem:[%s4252 + $0x4] sm:$0xf]
    %v4255 = vld [vmem:[%s4252 + $0x8] sm:$0xf]
    %v4256 = vld [vmem:[%s4252 + $0xc] sm:$0xf]
    %v4257 = vld [vmem:[%s4252 + $0x10] sm:$0xf]
    %v4258 = vld [vmem:[%s4252 + $0x14] sm:$0xf]
    %v4259 = vld [vmem:[%s4252 + $0x18] sm:$0xf]
    %v4260 = vld [vmem:[%s4252 + $0x1c] sm:$0xf]
    %v4261 = vunpack.c.l.bf16 %v4253
    %v4262 = vunpack.c.l.bf16 %v4254
    %v4263 = vunpack.c.l.bf16 %v4255
    %v4264 = vunpack.c.l.bf16 %v4256
    %v4265 = vunpack.c.l.bf16 %v4257
    %v4266 = vunpack.c.l.bf16 %v4258
    %v4267 = vunpack.c.l.bf16 %v4259
    %v4268 = vunpack.c.l.bf16 %v4260
    %4269 = vmatprep.subr.mxu0 0.0
    %4270 = vmatpush1.msra.mxu0 %v4261
    %4271 = vmatprep.subr.mxu0 0.0
    %4272 = vmatpush1.msra.mxu0 %v4262
    %4273 = vmatprep.subr.mxu0 0.0
    %4274 = vmatpush1.msra.mxu0 %v4263
    %4275 = vmatprep.subr.mxu0 0.0
    %4276 = vmatpush1.msra.mxu0 %v4264
    %4277 = vmatprep.subr.mxu0 0.0
    %4278 = vmatpush1.msra.mxu0 %v4265
    %4279 = vmatprep.subr.mxu0 0.0
    %4280 = vmatpush1.msra.mxu0 %v4266
    %4281 = vmatprep.subr.mxu0 0.0
    %4282 = vmatpush1.msra.mxu0 %v4267
    %4283 = vmatprep.subr.mxu0 0.0
    %4284 = vmatpush1.msra.mxu0 %v4268
    %4285 = vmatprep.subr.mxu0 0.0
    %4286 = vmatpush1.msra.mxu0 0.0
    %4287 = vmatprep.subr.mxu0 0.0
    %4288 = vmatpush1.msra.mxu0 0.0
    %4289 = vmatprep.subr.mxu0 0.0
    %4290 = vmatpush1.msra.mxu0 0.0
    %4291 = vmatprep.subr.mxu0 0.0
    %4292 = vmatpush1.msra.mxu0 0.0
    %4293 = vmatprep.subr.mxu0 0.0
    %4294 = vmatpush1.msra.mxu0 0.0
    %4295 = vmatprep.subr.mxu0 0.0
    %4296 = vmatpush1.msra.mxu0 0.0
    %4297 = vmatprep.subr.mxu0 0.0
    %4298 = vmatpush1.msra.mxu0 0.0
    %4299 = vmatprep.subr.mxu0 0.0
    %4300 = vmatpush1.msra.mxu0 0.0
    %4301 = vmatprep.subr.mxu0 0.0
    %4302 = vmatpush1.msra.mxu0 0.0
    %4303 = vmatprep.subr.mxu0 0.0
    %4304 = vmatpush1.msra.mxu0 0.0
    %4305 = vmatprep.subr.mxu0 0.0
    %4306 = vmatpush1.msra.mxu0 0.0
    %4307 = vmatprep.subr.mxu0 0.0
    %4308 = vmatpush1.msra.mxu0 0.0
    %4309 = vmatprep.subr.mxu0 0.0
    %4310 = vmatpush1.msra.mxu0 0.0
    %4311 = vmatprep.subr.mxu0 0.0
    %4312 = vmatpush1.msra.mxu0 0.0
    %4313 = vmatprep.subr.mxu0 0.0
    %4314 = vmatpush1.msra.mxu0 0.0
    %4315 = vmatprep.subr.mxu0 0.0
    %4316 = vmatpush1.msra.mxu0 0.0
    %4317 = vmatprep.subr.mxu0 0.0
    %4318 = vmatpush1.msra.mxu0 0.0
    %4319 = vmatprep.subr.mxu0 0.0
    %4320 = vmatpush1.msra.mxu0 0.0
    %4321 = vmatprep.subr.mxu0 0.0
    %4322 = vmatpush1.msra.mxu0 0.0
    %4323 = vmatprep.subr.mxu0 0.0
    %4324 = vmatpush1.msra.mxu0 0.0
    %4325 = vmatprep.subr.mxu0 0.0
    %4326 = vmatpush1.msra.mxu0 0.0
    %4327 = vmatprep.subr.mxu0 0.0
    %4328 = vmatpush1.msra.mxu0 0.0
    %4329 = vmatprep.subr.mxu0 0.0
    %4330 = vmatpush1.msra.mxu0 0.0
    %4331 = vmatprep.subr.mxu0 0.0
    %4332 = vmatpush1.msra.mxu0 0.0
    %4333 = vmatprep.mubr.f32.mxu0 0.0
    %4334 = vmatmul.mubr.f32.gmra.mrb[0].mxu0 %v303
    %v4335 = vpop.f32.mrb[0].mxu0
    %v4336 = vadd.f32 %v128, %v4335
    %v4337 = vpop.f32.mrb[0].mxu0
    %4338 = vmatprep.mubr.f32.mxu0 0.0
    %4339 = vmatmul.mubr.f32.gmra.mrb[0].mxu0 %v306
    %v4340 = vpop.f32.mrb[0].mxu0
    %v4341 = vadd.f32 %v133, %v4340
    %v4342 = vpop.f32.mrb[0].mxu0
    %4343 = vmatprep.mubr.f32.mxu0 0.0
    %4344 = vmatmul.mubr.f32.gmra.mrb[0].mxu0 %v309
    %v4345 = vpop.f32.mrb[0].mxu0
    %v4346 = vadd.f32 %v138, %v4345
    %v4347 = vpop.f32.mrb[0].mxu0
    %4348 = vmatprep.mubr.f32.mxu0 0.0
    %4349 = vmatmul.mubr.f32.gmra.mrb[0].mxu0 %v312
    %v4350 = vpop.f32.mrb[0].mxu0
    %v4351 = vadd.f32 %v143, %v4350
    %v4352 = vpop.f32.mrb[0].mxu0
    %4353 = vmatprep.mubr.f32.mxu0 0.0
    %4354 = vmatmul.mubr.f32.gmra.mrb[0].mxu0 %v315
    %v4355 = vpop.f32.mrb[0].mxu0
    %v4356 = vadd.f32 %v148, %v4355
    %v4357 = vpop.f32.mrb[0].mxu0
    %4358 = vmatprep.mubr.f32.mxu0 0.0
    %4359 = vmatmul.mubr.f32.gmra.mrb[0].mxu0 %v318
    %v4360 = vpop.f32.mrb[0].mxu0
    %v4361 = vadd.f32 %v153, %v4360
    %v4362 = vpop.f32.mrb[0].mxu0
    %4363 = vmatprep.mubr.f32.mxu0 0.0
    %4364 = vmatmul.mubr.f32.gmra.mrb[0].mxu0 %v321
    %v4365 = vpop.f32.mrb[0].mxu0
    %v4366 = vadd.f32 %v158, %v4365
    %v4367 = vpop.f32.mrb[0].mxu0
    %4368 = vmatprep.mubr.f32.mxu0 0.0
    %4369 = vmatmul.mubr.f32.gmra.mrb[0].mxu0 %v324
    %v4370 = vpop.f32.mrb[0].mxu0
    %v4371 = vadd.f32 %v163, %v4370
    %v4372 = vpop.f32.mrb[0].mxu0
    %4373 = vmatprep.mubr.f32.mxu0 0.0
    %4374 = vmatmul.mubr.f32.gmra.mrb[0].mxu0 %v327
    %v4375 = vpop.f32.mrb[0].mxu0
    %v4376 = vadd.f32 %v168, %v4375
    %v4377 = vpop.f32.mrb[0].mxu0
    %4378 = vmatprep.mubr.f32.mxu0 0.0
    %4379 = vmatmul.mubr.f32.gmra.mrb[0].mxu0 %v330
    %v4380 = vpop.f32.mrb[0].mxu0
    %v4381 = vadd.f32 %v173, %v4380
    %v4382 = vpop.f32.mrb[0].mxu0
    %4383 = vmatprep.mubr.f32.mxu0 0.0
    %4384 = vmatmul.mubr.f32.gmra.mrb[0].mxu0 %v333
    %v4385 = vpop.f32.mrb[0].mxu0
    %v4386 = vadd.f32 %v178, %v4385
    %v4387 = vpop.f32.mrb[0].mxu0
    %4388 = vmatprep.mubr.f32.mxu0 0.0
    %4389 = vmatmul.mubr.f32.gmra.mrb[0].mxu0 %v336
    %v4390 = vpop.f32.mrb[0].mxu0
    %v4391 = vadd.f32 %v183, %v4390
    %v4392 = vpop.f32.mrb[0].mxu0
    %4393 = vmatprep.mubr.f32.mxu0 0.0
    %4394 = vmatmul.mubr.f32.gmra.mrb[0].mxu0 %v339
    %v4395 = vpop.f32.mrb[0].mxu0
    %v4396 = vadd.f32 %v188, %v4395
    %v4397 = vpop.f32.mrb[0].mxu0
    %4398 = vmatprep.mubr.f32.mxu0 0.0
    %4399 = vmatmul.mubr.f32.gmra.mrb[0].mxu0 %v342
    %v4400 = vpop.f32.mrb[0].mxu0
    %v4401 = vadd.f32 %v193, %v4400
    %v4402 = vpop.f32.mrb[0].mxu0
    %4403 = vmatprep.mubr.f32.mxu0 0.0
    %4404 = vmatmul.mubr.f32.gmra.mrb[0].mxu0 %v345
    %v4405 = vpop.f32.mrb[0].mxu0
    %v4406 = vadd.f32 %v198, %v4405
    %v4407 = vpop.f32.mrb[0].mxu0
    %4408 = vmatprep.mubr.f32.mxu0 0.0
    %4409 = vmatmul.mubr.f32.gmra.mrb[0].mxu0 %v348
    %v4410 = vpop.f32.mrb[0].mxu0
    %v4411 = vadd.f32 %v203, %v4410
    %v4412 = vpop.f32.mrb[0].mxu0
    %4413 = vmatprep.mubr.f32.mxu0 0.0
    %4414 = vmatmul.mubr.f32.gmra.mrb[0].mxu0 %v351
    %v4415 = vpop.f32.mrb[0].mxu0
    %v4416 = vadd.f32 %v208, %v4415
    %v4417 = vpop.f32.mrb[0].mxu0
    %4418 = vmatprep.mubr.f32.mxu0 0.0
    %4419 = vmatmul.mubr.f32.gmra.mrb[0].mxu0 %v354
    %v4420 = vpop.f32.mrb[0].mxu0
    %v4421 = vadd.f32 %v213, %v4420
    %v4422 = vpop.f32.mrb[0].mxu0
    %4423 = vmatprep.mubr.f32.mxu0 0.0
    %4424 = vmatmul.mubr.f32.gmra.mrb[0].mxu0 %v357
    %v4425 = vpop.f32.mrb[0].mxu0
    %v4426 = vadd.f32 %v218, %v4425
    %v4427 = vpop.f32.mrb[0].mxu0
    %4428 = vmatprep.mubr.f32.mxu0 0.0
    %4429 = vmatmul.mubr.f32.gmra.mrb[0].mxu0 %v360
    %v4430 = vpop.f32.mrb[0].mxu0
    %v4431 = vadd.f32 %v223, %v4430
    %v4432 = vpop.f32.mrb[0].mxu0
    %4433 = vmatprep.mubr.f32.mxu0 0.0
    %4434 = vmatmul.mubr.f32.gmra.mrb[0].mxu0 %v363
    %v4435 = vpop.f32.mrb[0].mxu0
    %v4436 = vadd.f32 %v228, %v4435
    %v4437 = vpop.f32.mrb[0].mxu0
    %4438 = vmatprep.mubr.f32.mxu0 0.0
    %4439 = vmatmul.mubr.f32.gmra.mrb[0].mxu0 %v366
    %v4440 = vpop.f32.mrb[0].mxu0
    %v4441 = vadd.f32 %v233, %v4440
    %v4442 = vpop.f32.mrb[0].mxu0
    %4443 = vmatprep.mubr.f32.mxu0 0.0
    %4444 = vmatmul.mubr.f32.gmra.mrb[0].mxu0 %v369
    %v4445 = vpop.f32.mrb[0].mxu0
    %v4446 = vadd.f32 %v238, %v4445
    %v4447 = vpop.f32.mrb[0].mxu0
    %4448 = vmatprep.mubr.f32.mxu0 0.0
    %4449 = vmatmul.mubr.f32.gmra.mrb[0].mxu0 %v372
    %v4450 = vpop.f32.mrb[0].mxu0
    %v4451 = vadd.f32 %v243, %v4450
    %v4452 = vpop.f32.mrb[0].mxu0
    %4453 = vmatprep.mubr.f32.mxu0 0.0
    %4454 = vmatmul.mubr.f32.gmra.mrb[0].mxu0 %v375
    %v4455 = vpop.f32.mrb[0].mxu0
    %v4456 = vadd.f32 %v248, %v4455
    %v4457 = vpop.f32.mrb[0].mxu0
    %4458 = vmatprep.mubr.f32.mxu0 0.0
    %4459 = vmatmul.mubr.f32.gmra.mrb[0].mxu0 %v378
    %v4460 = vpop.f32.mrb[0].mxu0
    %v4461 = vadd.f32 %v253, %v4460
    %v4462 = vpop.f32.mrb[0].mxu0
    %4463 = vmatprep.mubr.f32.mxu0 0.0
    %4464 = vmatmul.mubr.f32.gmra.mrb[0].mxu0 %v381
    %v4465 = vpop.f32.mrb[0].mxu0
    %v4466 = vadd.f32 %v258, %v4465
    %v4467 = vpop.f32.mrb[0].mxu0
    %4468 = vmatprep.mubr.f32.mxu0 0.0
    %4469 = vmatmul.mubr.f32.gmra.mrb[0].mxu0 %v384
    %v4470 = vpop.f32.mrb[0].mxu0
    %v4471 = vadd.f32 %v263, %v4470
    %v4472 = vpop.f32.mrb[0].mxu0
    %4473 = vmatprep.mubr.f32.mxu0 0.0
    %4474 = vmatmul.mubr.f32.gmra.mrb[0].mxu0 %v387
    %v4475 = vpop.f32.mrb[0].mxu0
    %v4476 = vadd.f32 %v268, %v4475
    %v4477 = vpop.f32.mrb[0].mxu0
    %4478 = vmatprep.mubr.f32.mxu0 0.0
    %4479 = vmatmul.mubr.f32.gmra.mrb[0].mxu0 %v390
    %v4480 = vpop.f32.mrb[0].mxu0
    %v4481 = vadd.f32 %v273, %v4480
    %v4482 = vpop.f32.mrb[0].mxu0
    %4483 = vmatprep.mubr.f32.mxu0 0.0
    %4484 = vmatmul.mubr.f32.gmra.mrb[0].mxu0 %v393
    %v4485 = vpop.f32.mrb[0].mxu0
    %v4486 = vadd.f32 %v278, %v4485
    %v4487 = vpop.f32.mrb[0].mxu0
    %4488 = vmatprep.mubr.f32.mxu0 0.0
    %4489 = vmatmul.mubr.f32.gmra.mrb[0].mxu0 %v396
    %v4490 = vpop.f32.mrb[0].mxu0
    %v4491 = vadd.f32 %v283, %v4490
    %v4492 = vpop.f32.mrb[0].mxu0
    %4493 = vdwg.mxu0
    %4494 = vmatprep.subr.mxu0 0.0
    %4495 = vmatpush1.msra.mxu0 %v4236
    %4496 = vmatprep.subr.mxu0 0.0
    %4497 = vmatpush1.msra.mxu0 %v4237
    %4498 = vmatprep.subr.mxu0 0.0
    %4499 = vmatpush1.msra.mxu0 %v4238
    %4500 = vmatprep.subr.mxu0 0.0
    %4501 = vmatpush1.msra.mxu0 %v4239
    %4502 = vmatprep.subr.mxu0 0.0
    %4503 = vmatpush1.msra.mxu0 %v4240
    %4504 = vmatprep.subr.mxu0 0.0
    %4505 = vmatpush1.msra.mxu0 %v4241
    %4506 = vmatprep.subr.mxu0 0.0
    %4507 = vmatpush1.msra.mxu0 %v4242
    %4508 = vmatprep.subr.mxu0 0.0
    %4509 = vmatpush1.msra.mxu0 %v4243
    %4510 = vmatprep.subr.mxu0 0.0
    %4511 = vmatpush1.msra.mxu0 0.0
    %4512 = vmatprep.subr.mxu0 0.0
    %4513 = vmatpush1.msra.mxu0 0.0
    %4514 = vmatprep.subr.mxu0 0.0
    %4515 = vmatpush1.msra.mxu0 0.0
    %4516 = vmatprep.subr.mxu0 0.0
    %4517 = vmatpush1.msra.mxu0 0.0
    %4518 = vmatprep.subr.mxu0 0.0
    %4519 = vmatpush1.msra.mxu0 0.0
    %4520 = vmatprep.subr.mxu0 0.0
    %4521 = vmatpush1.msra.mxu0 0.0
    %4522 = vmatprep.subr.mxu0 0.0
    %4523 = vmatpush1.msra.mxu0 0.0
    %4524 = vmatprep.subr.mxu0 0.0
    %4525 = vmatpush1.msra.mxu0 0.0
    %4526 = vmatprep.subr.mxu0 0.0
    %4527 = vmatpush1.msra.mxu0 0.0
    %4528 = vmatprep.subr.mxu0 0.0
    %4529 = vmatpush1.msra.mxu0 0.0
    %4530 = vmatprep.subr.mxu0 0.0
    %4531 = vmatpush1.msra.mxu0 0.0
    %4532 = vmatprep.subr.mxu0 0.0
    %4533 = vmatpush1.msra.mxu0 0.0
    %4534 = vmatprep.subr.mxu0 0.0
    %4535 = vmatpush1.msra.mxu0 0.0
    %4536 = vmatprep.subr.mxu0 0.0
    %4537 = vmatpush1.msra.mxu0 0.0
    %4538 = vmatprep.subr.mxu0 0.0
    %4539 = vmatpush1.msra.mxu0 0.0
    %4540 = vmatprep.subr.mxu0 0.0
    %4541 = vmatpush1.msra.mxu0 0.0
    %4542 = vmatprep.subr.mxu0 0.0
    %4543 = vmatpush1.msra.mxu0 0.0
    %4544 = vmatprep.subr.mxu0 0.0
    %4545 = vmatpush1.msra.mxu0 0.0
    %4546 = vmatprep.subr.mxu0 0.0
    %4547 = vmatpush1.msra.mxu0 0.0
    %4548 = vmatprep.subr.mxu0 0.0
    %4549 = vmatpush1.msra.mxu0 0.0
    %4550 = vmatprep.subr.mxu0 0.0
    %4551 = vmatpush1.msra.mxu0 0.0
    %4552 = vmatprep.subr.mxu0 0.0
    %4553 = vmatpush1.msra.mxu0 0.0
    %4554 = vmatprep.subr.mxu0 0.0
    %4555 = vmatpush1.msra.mxu0 0.0
    %4556 = vmatprep.subr.mxu0 0.0
    %4557 = vmatpush1.msra.mxu0 0.0
    %4558 = vmatprep.mubr.f32.mxu0 0.0
    %4559 = vmatmul.mubr.f32.gmra.mrb[0].mxu0 %v624
    %v4560 = vpop.f32.mrb[0].mxu0
    %v4561 = vadd.f32 0.0, %v4560
    %v4562 = vpop.f32.mrb[0].mxu0
    %4563 = vmatprep.mubr.f32.mxu0 0.0
    %4564 = vmatmul.mubr.f32.gmra.mrb[0].mxu0 %v627
    %v4565 = vpop.f32.mrb[0].mxu0
    %v4566 = vadd.f32 0.0, %v4565
    %v4567 = vpop.f32.mrb[0].mxu0
    %4568 = vmatprep.mubr.f32.mxu0 0.0
    %4569 = vmatmul.mubr.f32.gmra.mrb[0].mxu0 %v630
    %v4570 = vpop.f32.mrb[0].mxu0
    %v4571 = vadd.f32 0.0, %v4570
    %v4572 = vpop.f32.mrb[0].mxu0
    %4573 = vmatprep.mubr.f32.mxu0 0.0
    %4574 = vmatmul.mubr.f32.gmra.mrb[0].mxu0 %v633
    %v4575 = vpop.f32.mrb[0].mxu0
    %v4576 = vadd.f32 0.0, %v4575
    %v4577 = vpop.f32.mrb[0].mxu0
    %4578 = vmatprep.mubr.f32.mxu0 0.0
    %4579 = vmatmul.mubr.f32.gmra.mrb[0].mxu0 %v636
    %v4580 = vpop.f32.mrb[0].mxu0
    %v4581 = vadd.f32 0.0, %v4580
    %v4582 = vpop.f32.mrb[0].mxu0
    %4583 = vmatprep.mubr.f32.mxu0 0.0
    %4584 = vmatmul.mubr.f32.gmra.mrb[0].mxu0 %v639
    %v4585 = vpop.f32.mrb[0].mxu0
    %v4586 = vadd.f32 0.0, %v4585
    %v4587 = vpop.f32.mrb[0].mxu0
    %4588 = vmatprep.mubr.f32.mxu0 0.0
    %4589 = vmatmul.mubr.f32.gmra.mrb[0].mxu0 %v642
    %v4590 = vpop.f32.mrb[0].mxu0
    %v4591 = vadd.f32 0.0, %v4590
    %v4592 = vpop.f32.mrb[0].mxu0
    %4593 = vmatprep.mubr.f32.mxu0 0.0
    %4594 = vmatmul.mubr.f32.gmra.mrb[0].mxu0 %v645
    %v4595 = vpop.f32.mrb[0].mxu0
    %v4596 = vadd.f32 0.0, %v4595
    %v4597 = vpop.f32.mrb[0].mxu0
    %4598 = vmatprep.mubr.f32.mxu0 0.0
    %4599 = vmatmul.mubr.f32.gmra.mrb[0].mxu0 %v648
    %v4600 = vpop.f32.mrb[0].mxu0
    %v4601 = vadd.f32 0.0, %v4600
    %v4602 = vpop.f32.mrb[0].mxu0
    %4603 = vmatprep.mubr.f32.mxu0 0.0
    %4604 = vmatmul.mubr.f32.gmra.mrb[0].mxu0 %v651
    %v4605 = vpop.f32.mrb[0].mxu0
    %v4606 = vadd.f32 0.0, %v4605
    %v4607 = vpop.f32.mrb[0].mxu0
    %4608 = vmatprep.mubr.f32.mxu0 0.0
    %4609 = vmatmul.mubr.f32.gmra.mrb[0].mxu0 %v654
    %v4610 = vpop.f32.mrb[0].mxu0
    %v4611 = vadd.f32 0.0, %v4610
    %v4612 = vpop.f32.mrb[0].mxu0
    %4613 = vmatprep.mubr.f32.mxu0 0.0
    %4614 = vmatmul.mubr.f32.gmra.mrb[0].mxu0 %v657
    %v4615 = vpop.f32.mrb[0].mxu0
    %v4616 = vadd.f32 0.0, %v4615
    %v4617 = vpop.f32.mrb[0].mxu0
    %4618 = vmatprep.mubr.f32.mxu0 0.0
    %4619 = vmatmul.mubr.f32.gmra.mrb[0].mxu0 %v660
    %v4620 = vpop.f32.mrb[0].mxu0
    %v4621 = vadd.f32 0.0, %v4620
    %v4622 = vpop.f32.mrb[0].mxu0
    %4623 = vmatprep.mubr.f32.mxu0 0.0
    %4624 = vmatmul.mubr.f32.gmra.mrb[0].mxu0 %v663
    %v4625 = vpop.f32.mrb[0].mxu0
    %v4626 = vadd.f32 0.0, %v4625
    %v4627 = vpop.f32.mrb[0].mxu0
    %4628 = vmatprep.mubr.f32.mxu0 0.0
    %4629 = vmatmul.mubr.f32.gmra.mrb[0].mxu0 %v666
    %v4630 = vpop.f32.mrb[0].mxu0
    %v4631 = vadd.f32 0.0, %v4630
    %v4632 = vpop.f32.mrb[0].mxu0
    %4633 = vmatprep.mubr.f32.mxu0 0.0
    %4634 = vmatmul.mubr.f32.gmra.mrb[0].mxu0 %v669
    %v4635 = vpop.f32.mrb[0].mxu0
    %v4636 = vadd.f32 0.0, %v4635
    %v4637 = vpop.f32.mrb[0].mxu0
    %4638 = vmatprep.mubr.f32.mxu0 0.0
    %4639 = vmatmul.mubr.f32.gmra.mrb[0].mxu0 %v672
    %v4640 = vpop.f32.mrb[0].mxu0
    %v4641 = vadd.f32 0.0, %v4640
    %v4642 = vpop.f32.mrb[0].mxu0
    %4643 = vmatprep.mubr.f32.mxu0 0.0
    %4644 = vmatmul.mubr.f32.gmra.mrb[0].mxu0 %v675
    %v4645 = vpop.f32.mrb[0].mxu0
    %v4646 = vadd.f32 0.0, %v4645
    %v4647 = vpop.f32.mrb[0].mxu0
    %4648 = vmatprep.mubr.f32.mxu0 0.0
    %4649 = vmatmul.mubr.f32.gmra.mrb[0].mxu0 %v678
    %v4650 = vpop.f32.mrb[0].mxu0
    %v4651 = vadd.f32 0.0, %v4650
    %v4652 = vpop.f32.mrb[0].mxu0
    %4653 = vmatprep.mubr.f32.mxu0 0.0
    %4654 = vmatmul.mubr.f32.gmra.mrb[0].mxu0 %v681
    %v4655 = vpop.f32.mrb[0].mxu0
    %v4656 = vadd.f32 0.0, %v4655
    %v4657 = vpop.f32.mrb[0].mxu0
    %4658 = vmatprep.mubr.f32.mxu0 0.0
    %4659 = vmatmul.mubr.f32.gmra.mrb[0].mxu0 %v684
    %v4660 = vpop.f32.mrb[0].mxu0
    %v4661 = vadd.f32 0.0, %v4660
    %v4662 = vpop.f32.mrb[0].mxu0
    %4663 = vmatprep.mubr.f32.mxu0 0.0
    %4664 = vmatmul.mubr.f32.gmra.mrb[0].mxu0 %v687
    %v4665 = vpop.f32.mrb[0].mxu0
    %v4666 = vadd.f32 0.0, %v4665
    %v4667 = vpop.f32.mrb[0].mxu0
    %4668 = vmatprep.mubr.f32.mxu0 0.0
    %4669 = vmatmul.mubr.f32.gmra.mrb[0].mxu0 %v690
    %v4670 = vpop.f32.mrb[0].mxu0
    %v4671 = vadd.f32 0.0, %v4670
    %v4672 = vpop.f32.mrb[0].mxu0
    %4673 = vmatprep.mubr.f32.mxu0 0.0
    %4674 = vmatmul.mubr.f32.gmra.mrb[0].mxu0 %v693
    %v4675 = vpop.f32.mrb[0].mxu0
    %v4676 = vadd.f32 0.0, %v4675
    %v4677 = vpop.f32.mrb[0].mxu0
    %4678 = vmatprep.mubr.f32.mxu0 0.0
    %4679 = vmatmul.mubr.f32.gmra.mrb[0].mxu0 %v696
    %v4680 = vpop.f32.mrb[0].mxu0
    %v4681 = vadd.f32 0.0, %v4680
    %v4682 = vpop.f32.mrb[0].mxu0
    %4683 = vmatprep.mubr.f32.mxu0 0.0
    %4684 = vmatmul.mubr.f32.gmra.mrb[0].mxu0 %v699
    %v4685 = vpop.f32.mrb[0].mxu0
    %v4686 = vadd.f32 0.0, %v4685
    %v4687 = vpop.f32.mrb[0].mxu0
    %4688 = vmatprep.mubr.f32.mxu0 0.0
    %4689 = vmatmul.mubr.f32.gmra.mrb[0].mxu0 %v702
    %v4690 = vpop.f32.mrb[0].mxu0
    %v4691 = vadd.f32 0.0, %v4690
    %v4692 = vpop.f32.mrb[0].mxu0
    %4693 = vmatprep.mubr.f32.mxu0 0.0
    %4694 = vmatmul.mubr.f32.gmra.mrb[0].mxu0 %v705
    %v4695 = vpop.f32.mrb[0].mxu0
    %v4696 = vadd.f32 0.0, %v4695
    %v4697 = vpop.f32.mrb[0].mxu0
    %4698 = vmatprep.mubr.f32.mxu0 0.0
    %4699 = vmatmul.mubr.f32.gmra.mrb[0].mxu0 %v708
    %v4700 = vpop.f32.mrb[0].mxu0
    %v4701 = vadd.f32 0.0, %v4700
    %v4702 = vpop.f32.mrb[0].mxu0
    %4703 = vmatprep.mubr.f32.mxu0 0.0
    %4704 = vmatmul.mubr.f32.gmra.mrb[0].mxu0 %v711
    %v4705 = vpop.f32.mrb[0].mxu0
    %v4706 = vadd.f32 0.0, %v4705
    %v4707 = vpop.f32.mrb[0].mxu0
    %4708 = vmatprep.mubr.f32.mxu0 0.0
    %4709 = vmatmul.mubr.f32.gmra.mrb[0].mxu0 %v714
    %v4710 = vpop.f32.mrb[0].mxu0
    %v4711 = vadd.f32 0.0, %v4710
    %v4712 = vpop.f32.mrb[0].mxu0
    %4713 = vmatprep.mubr.f32.mxu0 0.0
    %4714 = vmatmul.mubr.f32.gmra.mrb[0].mxu0 %v717
    %v4715 = vpop.f32.mrb[0].mxu0
    %v4716 = vadd.f32 0.0, %v4715
    %v4717 = vpop.f32.mrb[0].mxu0
    %4718 = vdwg.mxu0
    %v4719 = vadd.f32 %v4336, %v4561
    %v4720 = vadd.f32 %v4341, %v4566
    %v4721 = vadd.f32 %v4346, %v4571
    %v4722 = vadd.f32 %v4351, %v4576
    %v4723 = vadd.f32 %v4356, %v4581
    %v4724 = vadd.f32 %v4361, %v4586
    %v4725 = vadd.f32 %v4366, %v4591
    %v4726 = vadd.f32 %v4371, %v4596
    %v4727 = vadd.f32 %v4376, %v4601
    %v4728 = vadd.f32 %v4381, %v4606
    %v4729 = vadd.f32 %v4386, %v4611
    %v4730 = vadd.f32 %v4391, %v4616
    %v4731 = vadd.f32 %v4396, %v4621
    %v4732 = vadd.f32 %v4401, %v4626
    %v4733 = vadd.f32 %v4406, %v4631
    %v4734 = vadd.f32 %v4411, %v4636
    %v4735 = vadd.f32 %v4416, %v4641
    %v4736 = vadd.f32 %v4421, %v4646
    %v4737 = vadd.f32 %v4426, %v4651
    %v4738 = vadd.f32 %v4431, %v4656
    %v4739 = vadd.f32 %v4436, %v4661
    %v4740 = vadd.f32 %v4441, %v4666
    %v4741 = vadd.f32 %v4446, %v4671
    %v4742 = vadd.f32 %v4451, %v4676
    %v4743 = vadd.f32 %v4456, %v4681
    %v4744 = vadd.f32 %v4461, %v4686
    %v4745 = vadd.f32 %v4466, %v4691
    %v4746 = vadd.f32 %v4471, %v4696
    %v4747 = vadd.f32 %v4476, %v4701
    %v4748 = vadd.f32 %v4481, %v4706
    %v4749 = vadd.f32 %v4486, %v4711
    %v4750 = vadd.f32 %v4491, %v4716
    %v4751 = vxor.u32 %v4719, 2147483648
    %v4752 = vxor.u32 %v4720, 2147483648
    %v4753 = vxor.u32 %v4721, 2147483648
    %v4754 = vxor.u32 %v4722, 2147483648
    %v4755 = vxor.u32 %v4723, 2147483648
    %v4756 = vxor.u32 %v4724, 2147483648
    %v4757 = vxor.u32 %v4725, 2147483648
    %v4758 = vxor.u32 %v4726, 2147483648
    %v4759 = vxor.u32 %v4727, 2147483648
    %v4760 = vxor.u32 %v4728, 2147483648
    %v4761 = vxor.u32 %v4729, 2147483648
    %v4762 = vxor.u32 %v4730, 2147483648
    %v4763 = vxor.u32 %v4731, 2147483648
    %v4764 = vxor.u32 %v4732, 2147483648
    %v4765 = vxor.u32 %v4733, 2147483648
    %v4766 = vxor.u32 %v4734, 2147483648
    %v4767 = vxor.u32 %v4735, 2147483648
    %v4768 = vxor.u32 %v4736, 2147483648
    %v4769 = vxor.u32 %v4737, 2147483648
    %v4770 = vxor.u32 %v4738, 2147483648
    %v4771 = vxor.u32 %v4739, 2147483648
    %v4772 = vxor.u32 %v4740, 2147483648
    %v4773 = vxor.u32 %v4741, 2147483648
    %v4774 = vxor.u32 %v4742, 2147483648
    %v4775 = vxor.u32 %v4743, 2147483648
    %v4776 = vxor.u32 %v4744, 2147483648
    %v4777 = vxor.u32 %v4745, 2147483648
    %v4778 = vxor.u32 %v4746, 2147483648
    %v4779 = vxor.u32 %v4747, 2147483648
    %v4780 = vxor.u32 %v4748, 2147483648
    %v4781 = vxor.u32 %v4749, 2147483648
    %v4782 = vxor.u32 %v4750, 2147483648
    %v4783 = vmul.f32 %v4751, 1.442695
    %v4784 = vpow.pop %v4783
    %v4785 = vmul.f32 %v4752, 1.442695
    %v4786 = vpow.pop %v4785
    %v4787 = vmul.f32 %v4753, 1.442695
    %v4788 = vpow.pop %v4787
    %v4789 = vmul.f32 %v4754, 1.442695
    %v4790 = vpow.pop %v4789
    %v4791 = vmul.f32 %v4755, 1.442695
    %v4792 = vpow.pop %v4791
    %v4793 = vmul.f32 %v4756, 1.442695
    %v4794 = vpow.pop %v4793
    %v4795 = vmul.f32 %v4757, 1.442695
    %v4796 = vpow.pop %v4795
    %v4797 = vmul.f32 %v4758, 1.442695
    %v4798 = vpow.pop %v4797
    %v4799 = vmul.f32 %v4759, 1.442695
    %v4800 = vpow.pop %v4799
    %v4801 = vmul.f32 %v4760, 1.442695
    %v4802 = vpow.pop %v4801
    %v4803 = vmul.f32 %v4761, 1.442695
    %v4804 = vpow.pop %v4803
    %v4805 = vmul.f32 %v4762, 1.442695
    %v4806 = vpow.pop %v4805
    %v4807 = vmul.f32 %v4763, 1.442695
    %v4808 = vpow.pop %v4807
    %v4809 = vmul.f32 %v4764, 1.442695
    %v4810 = vpow.pop %v4809
    %v4811 = vmul.f32 %v4765, 1.442695
    %v4812 = vpow.pop %v4811
    %v4813 = vmul.f32 %v4766, 1.442695
    %v4814 = vpow.pop %v4813
    %v4815 = vmul.f32 %v4767, 1.442695
    %v4816 = vpow.pop %v4815
    %v4817 = vmul.f32 %v4768, 1.442695
    %v4818 = vpow.pop %v4817
    %v4819 = vmul.f32 %v4769, 1.442695
    %v4820 = vpow.pop %v4819
    %v4821 = vmul.f32 %v4770, 1.442695
    %v4822 = vpow.pop %v4821
    %v4823 = vmul.f32 %v4771, 1.442695
    %v4824 = vpow.pop %v4823
    %v4825 = vmul.f32 %v4772, 1.442695
    %v4826 = vpow.pop %v4825
    %v4827 = vmul.f32 %v4773, 1.442695
    %v4828 = vpow.pop %v4827
    %v4829 = vmul.f32 %v4774, 1.442695
    %v4830 = vpow.pop %v4829
    %v4831 = vmul.f32 %v4775, 1.442695
    %v4832 = vpow.pop %v4831
    %v4833 = vmul.f32 %v4776, 1.442695
    %v4834 = vpow.pop %v4833
    %v4835 = vmul.f32 %v4777, 1.442695
    %v4836 = vpow.pop %v4835
    %v4837 = vmul.f32 %v4778, 1.442695
    %v4838 = vpow.pop %v4837
    %v4839 = vmul.f32 %v4779, 1.442695
    %v4840 = vpow.pop %v4839
    %v4841 = vmul.f32 %v4780, 1.442695
    %v4842 = vpow.pop %v4841
    %v4843 = vmul.f32 %v4781, 1.442695
    %v4844 = vpow.pop %v4843
    %v4845 = vmul.f32 %v4782, 1.442695
    %v4846 = vpow.pop %v4845
    %v4847 = vadd.f32 %v4784, 1.0
    %v4848 = vadd.f32 %v4786, 1.0
    %v4849 = vadd.f32 %v4788, 1.0
    %v4850 = vadd.f32 %v4790, 1.0
    %v4851 = vadd.f32 %v4792, 1.0
    %v4852 = vadd.f32 %v4794, 1.0
    %v4853 = vadd.f32 %v4796, 1.0
    %v4854 = vadd.f32 %v4798, 1.0
    %v4855 = vadd.f32 %v4800, 1.0
    %v4856 = vadd.f32 %v4802, 1.0
    %v4857 = vadd.f32 %v4804, 1.0
    %v4858 = vadd.f32 %v4806, 1.0
    %v4859 = vadd.f32 %v4808, 1.0
    %v4860 = vadd.f32 %v4810, 1.0
    %v4861 = vadd.f32 %v4812, 1.0
    %v4862 = vadd.f32 %v4814, 1.0
    %v4863 = vadd.f32 %v4816, 1.0
    %v4864 = vadd.f32 %v4818, 1.0
    %v4865 = vadd.f32 %v4820, 1.0
    %v4866 = vadd.f32 %v4822, 1.0
    %v4867 = vadd.f32 %v4824, 1.0
    %v4868 = vadd.f32 %v4826, 1.0
    %v4869 = vadd.f32 %v4828, 1.0
    %v4870 = vadd.f32 %v4830, 1.0
    %v4871 = vadd.f32 %v4832, 1.0
    %v4872 = vadd.f32 %v4834, 1.0
    %v4873 = vadd.f32 %v4836, 1.0
    %v4874 = vadd.f32 %v4838, 1.0
    %v4875 = vadd.f32 %v4840, 1.0
    %v4876 = vadd.f32 %v4842, 1.0
    %v4877 = vadd.f32 %v4844, 1.0
    %v4878 = vadd.f32 %v4846, 1.0
    %v4879 = vrcp.pop %v4847
    %v4880 = vmul.f32 1.0, %v4879
    %v4881 = vrcp.pop %v4848
    %v4882 = vmul.f32 1.0, %v4881
    %v4883 = vrcp.pop %v4849
    %v4884 = vmul.f32 1.0, %v4883
    %v4885 = vrcp.pop %v4850
    %v4886 = vmul.f32 1.0, %v4885
    %v4887 = vrcp.pop %v4851
    %v4888 = vmul.f32 1.0, %v4887
    %v4889 = vrcp.pop %v4852
    %v4890 = vmul.f32 1.0, %v4889
    %v4891 = vrcp.pop %v4853
    %v4892 = vmul.f32 1.0, %v4891
    %v4893 = vrcp.pop %v4854
    %v4894 = vmul.f32 1.0, %v4893
    %v4895 = vrcp.pop %v4855
    %v4896 = vmul.f32 1.0, %v4895
    %v4897 = vrcp.pop %v4856
    %v4898 = vmul.f32 1.0, %v4897
    %v4899 = vrcp.pop %v4857
    %v4900 = vmul.f32 1.0, %v4899
    %v4901 = vrcp.pop %v4858
    %v4902 = vmul.f32 1.0, %v4901
    %v4903 = vrcp.pop %v4859
    %v4904 = vmul.f32 1.0, %v4903
    %v4905 = vrcp.pop %v4860
    %v4906 = vmul.f32 1.0, %v4905
    %v4907 = vrcp.pop %v4861
    %v4908 = vmul.f32 1.0, %v4907
    %v4909 = vrcp.pop %v4862
    %v4910 = vmul.f32 1.0, %v4909
    %v4911 = vrcp.pop %v4863
    %v4912 = vmul.f32 1.0, %v4911
    %v4913 = vrcp.pop %v4864
    %v4914 = vmul.f32 1.0, %v4913
    %v4915 = vrcp.pop %v4865
    %v4916 = vmul.f32 1.0, %v4915
    %v4917 = vrcp.pop %v4866
    %v4918 = vmul.f32 1.0, %v4917
    %v4919 = vrcp.pop %v4867
    %v4920 = vmul.f32 1.0, %v4919
    %v4921 = vrcp.pop %v4868
    %v4922 = vmul.f32 1.0, %v4921
    %v4923 = vrcp.pop %v4869
    %v4924 = vmul.f32 1.0, %v4923
    %v4925 = vrcp.pop %v4870
    %v4926 = vmul.f32 1.0, %v4925
    %v4927 = vrcp.pop %v4871
    %v4928 = vmul.f32 1.0, %v4927
    %v4929 = vrcp.pop %v4872
    %v4930 = vmul.f32 1.0, %v4929
    %v4931 = vrcp.pop %v4873
    %v4932 = vmul.f32 1.0, %v4931
    %v4933 = vrcp.pop %v4874
    %v4934 = vmul.f32 1.0, %v4933
    %v4935 = vrcp.pop %v4875
    %v4936 = vmul.f32 1.0, %v4935
    %v4937 = vrcp.pop %v4876
    %v4938 = vmul.f32 1.0, %v4937
    %v4939 = vrcp.pop %v4877
    %v4940 = vmul.f32 1.0, %v4939
    %v4941 = vrcp.pop %v4878
    %v4942 = vmul.f32 1.0, %v4941
    %v4943 = vmul.f32 %v4912, 2.0
    %v4944 = vmul.f32 %v4914, 2.0
    %v4945 = vmul.f32 %v4916, 2.0
    %v4946 = vmul.f32 %v4918, 2.0
    %v4947 = vmul.f32 %v4920, 2.0
    %v4948 = vmul.f32 %v4922, 2.0
    %v4949 = vmul.f32 %v4924, 2.0
    %v4950 = vmul.f32 %v4926, 2.0
    %v4951 = vsub.f32 %v4943, 1.0
    %v4952 = vsub.f32 %v4944, 1.0
    %v4953 = vsub.f32 %v4945, 1.0
    %v4954 = vsub.f32 %v4946, 1.0
    %v4955 = vsub.f32 %v4947, 1.0
    %v4956 = vsub.f32 %v4948, 1.0
    %v4957 = vsub.f32 %v4949, 1.0
    %v4958 = vsub.f32 %v4950, 1.0
    %v4959 = vmul.f32 %v4896, %v4220
    %v4960 = vmul.f32 %v4898, %v4221
    %v4961 = vmul.f32 %v4900, %v4222
    %v4962 = vmul.f32 %v4902, %v4223
    %v4963 = vmul.f32 %v4904, %v4224
    %v4964 = vmul.f32 %v4906, %v4225
    %v4965 = vmul.f32 %v4908, %v4226
    %v4966 = vmul.f32 %v4910, %v4227
    %v4967 = vmul.f32 %v4880, %v4951
    %v4968 = vmul.f32 %v4882, %v4952
    %v4969 = vmul.f32 %v4884, %v4953
    %v4970 = vmul.f32 %v4886, %v4954
    %v4971 = vmul.f32 %v4888, %v4955
    %v4972 = vmul.f32 %v4890, %v4956
    %v4973 = vmul.f32 %v4892, %v4957
    %v4974 = vmul.f32 %v4894, %v4958
    %v4975 = vadd.f32 %v4959, %v4967
    %v4976 = vadd.f32 %v4960, %v4968
    %v4977 = vadd.f32 %v4961, %v4969
    %v4978 = vadd.f32 %v4962, %v4970
    %v4979 = vadd.f32 %v4963, %v4971
    %v4980 = vadd.f32 %v4964, %v4972
    %v4981 = vadd.f32 %v4965, %v4973
    %v4982 = vadd.f32 %v4966, %v4974
    %v4983 = vtanh.pop %v4975
    %v4984 = vtanh.pop %v4976
    %v4985 = vtanh.pop %v4977
    %v4986 = vtanh.pop %v4978
    %v4987 = vtanh.pop %v4979
    %v4988 = vtanh.pop %v4980
    %v4989 = vtanh.pop %v4981
    %v4990 = vtanh.pop %v4982
    %v4991 = vmul.f32 %v4928, %v4983
    %v4992 = vmul.f32 %v4930, %v4984
    %v4993 = vmul.f32 %v4932, %v4985
    %v4994 = vmul.f32 %v4934, %v4986
    %v4995 = vmul.f32 %v4936, %v4987
    %v4996 = vmul.f32 %v4938, %v4988
    %v4997 = vmul.f32 %v4940, %v4989
    %v4998 = vmul.f32 %v4942, %v4990
    %v4999 = vadd.f32 %v4244, %v4991
    %v5000 = vadd.f32 %v4245, %v4992
    %v5001 = vadd.f32 %v4246, %v4993
    %v5002 = vadd.f32 %v4247, %v4994
    %v5003 = vadd.f32 %v4248, %v4995
    %v5004 = vadd.f32 %v4249, %v4996
    %v5005 = vadd.f32 %v4250, %v4997
    %v5006 = vadd.f32 %v4251, %v4998
    %s5007 = scalar_lea.vmem %s0, 192
    %v5008 = vld [vmem:[%s5007] sm:$0xf]
    %v5009 = vld [vmem:[%s5007 + $0x4] sm:$0xf]
    %v5010 = vld [vmem:[%s5007 + $0x8] sm:$0xf]
    %v5011 = vld [vmem:[%s5007 + $0xc] sm:$0xf]
    %v5012 = vld [vmem:[%s5007 + $0x10] sm:$0xf]
    %v5013 = vld [vmem:[%s5007 + $0x14] sm:$0xf]
    %v5014 = vld [vmem:[%s5007 + $0x18] sm:$0xf]
    %v5015 = vld [vmem:[%s5007 + $0x1c] sm:$0xf]
    %v5016 = vunpack.c.l.bf16 %v5008
    %v5017 = vunpack.c.l.bf16 %v5009
    %v5018 = vunpack.c.l.bf16 %v5010
    %v5019 = vunpack.c.l.bf16 %v5011
    %v5020 = vunpack.c.l.bf16 %v5012
    %v5021 = vunpack.c.l.bf16 %v5013
    %v5022 = vunpack.c.l.bf16 %v5014
    %v5023 = vunpack.c.l.bf16 %v5015
    %5024 = vmatprep.subr.mxu0 0.0
    %5025 = vmatpush1.msra.mxu0 %v5016
    %5026 = vmatprep.subr.mxu0 0.0
    %5027 = vmatpush1.msra.mxu0 %v5017
    %5028 = vmatprep.subr.mxu0 0.0
    %5029 = vmatpush1.msra.mxu0 %v5018
    %5030 = vmatprep.subr.mxu0 0.0
    %5031 = vmatpush1.msra.mxu0 %v5019
    %5032 = vmatprep.subr.mxu0 0.0
    %5033 = vmatpush1.msra.mxu0 %v5020
    %5034 = vmatprep.subr.mxu0 0.0
    %5035 = vmatpush1.msra.mxu0 %v5021
    %5036 = vmatprep.subr.mxu0 0.0
    %5037 = vmatpush1.msra.mxu0 %v5022
    %5038 = vmatprep.subr.mxu0 0.0
    %5039 = vmatpush1.msra.mxu0 %v5023
    %5040 = vmatprep.subr.mxu0 0.0
    %5041 = vmatpush1.msra.mxu0 0.0
    %5042 = vmatprep.subr.mxu0 0.0
    %5043 = vmatpush1.msra.mxu0 0.0
    %5044 = vmatprep.subr.mxu0 0.0
    %5045 = vmatpush1.msra.mxu0 0.0
    %5046 = vmatprep.subr.mxu0 0.0
    %5047 = vmatpush1.msra.mxu0 0.0
    %5048 = vmatprep.subr.mxu0 0.0
    %5049 = vmatpush1.msra.mxu0 0.0
    %5050 = vmatprep.subr.mxu0 0.0
    %5051 = vmatpush1.msra.mxu0 0.0
    %5052 = vmatprep.subr.mxu0 0.0
    %5053 = vmatpush1.msra.mxu0 0.0
    %5054 = vmatprep.subr.mxu0 0.0
    %5055 = vmatpush1.msra.mxu0 0.0
    %5056 = vmatprep.subr.mxu0 0.0
    %5057 = vmatpush1.msra.mxu0 0.0
    %5058 = vmatprep.subr.mxu0 0.0
    %5059 = vmatpush1.msra.mxu0 0.0
    %5060 = vmatprep.subr.mxu0 0.0
    %5061 = vmatpush1.msra.mxu0 0.0
    %5062 = vmatprep.subr.mxu0 0.0
    %5063 = vmatpush1.msra.mxu0 0.0
    %5064 = vmatprep.subr.mxu0 0.0
    %5065 = vmatpush1.msra.mxu0 0.0
    %5066 = vmatprep.subr.mxu0 0.0
    %5067 = vmatpush1.msra.mxu0 0.0
    %5068 = vmatprep.subr.mxu0 0.0
    %5069 = vmatpush1.msra.mxu0 0.0
    %5070 = vmatprep.subr.mxu0 0.0
    %5071 = vmatpush1.msra.mxu0 0.0
    %5072 = vmatprep.subr.mxu0 0.0
    %5073 = vmatpush1.msra.mxu0 0.0
    %5074 = vmatprep.subr.mxu0 0.0
    %5075 = vmatpush1.msra.mxu0 0.0
    %5076 = vmatprep.subr.mxu0 0.0
    %5077 = vmatpush1.msra.mxu0 0.0
    %5078 = vmatprep.subr.mxu0 0.0
    %5079 = vmatpush1.msra.mxu0 0.0
    %5080 = vmatprep.subr.mxu0 0.0
    %5081 = vmatpush1.msra.mxu0 0.0
    %5082 = vmatprep.subr.mxu0 0.0
    %5083 = vmatpush1.msra.mxu0 0.0
    %5084 = vmatprep.subr.mxu0 0.0
    %5085 = vmatpush1.msra.mxu0 0.0
    %5086 = vmatprep.subr.mxu0 0.0
    %5087 = vmatpush1.msra.mxu0 0.0
    %5088 = vmatprep.mubr.f32.mxu0 0.0
    %5089 = vmatmul.mubr.f32.gmra.mrb[0].mxu0 %v303
    %v5090 = vpop.f32.mrb[0].mxu0
    %v5091 = vadd.f32 %v128, %v5090
    %v5092 = vpop.f32.mrb[0].mxu0
    %5093 = vmatprep.mubr.f32.mxu0 0.0
    %5094 = vmatmul.mubr.f32.gmra.mrb[0].mxu0 %v306
    %v5095 = vpop.f32.mrb[0].mxu0
    %v5096 = vadd.f32 %v133, %v5095
    %v5097 = vpop.f32.mrb[0].mxu0
    %5098 = vmatprep.mubr.f32.mxu0 0.0
    %5099 = vmatmul.mubr.f32.gmra.mrb[0].mxu0 %v309
    %v5100 = vpop.f32.mrb[0].mxu0
    %v5101 = vadd.f32 %v138, %v5100
    %v5102 = vpop.f32.mrb[0].mxu0
    %5103 = vmatprep.mubr.f32.mxu0 0.0
    %5104 = vmatmul.mubr.f32.gmra.mrb[0].mxu0 %v312
    %v5105 = vpop.f32.mrb[0].mxu0
    %v5106 = vadd.f32 %v143, %v5105
    %v5107 = vpop.f32.mrb[0].mxu0
    %5108 = vmatprep.mubr.f32.mxu0 0.0
    %5109 = vmatmul.mubr.f32.gmra.mrb[0].mxu0 %v315
    %v5110 = vpop.f32.mrb[0].mxu0
    %v5111 = vadd.f32 %v148, %v5110
    %v5112 = vpop.f32.mrb[0].mxu0
    %5113 = vmatprep.mubr.f32.mxu0 0.0
    %5114 = vmatmul.mubr.f32.gmra.mrb[0].mxu0 %v318
    %v5115 = vpop.f32.mrb[0].mxu0
    %v5116 = vadd.f32 %v153, %v5115
    %v5117 = vpop.f32.mrb[0].mxu0
    %5118 = vmatprep.mubr.f32.mxu0 0.0
    %5119 = vmatmul.mubr.f32.gmra.mrb[0].mxu0 %v321
    %v5120 = vpop.f32.mrb[0].mxu0
    %v5121 = vadd.f32 %v158, %v5120
    %v5122 = vpop.f32.mrb[0].mxu0
    %5123 = vmatprep.mubr.f32.mxu0 0.0
    %5124 = vmatmul.mubr.f32.gmra.mrb[0].mxu0 %v324
    %v5125 = vpop.f32.mrb[0].mxu0
    %v5126 = vadd.f32 %v163, %v5125
    %v5127 = vpop.f32.mrb[0].mxu0
    %5128 = vmatprep.mubr.f32.mxu0 0.0
    %5129 = vmatmul.mubr.f32.gmra.mrb[0].mxu0 %v327
    %v5130 = vpop.f32.mrb[0].mxu0
    %v5131 = vadd.f32 %v168, %v5130
    %v5132 = vpop.f32.mrb[0].mxu0
    %5133 = vmatprep.mubr.f32.mxu0 0.0
    %5134 = vmatmul.mubr.f32.gmra.mrb[0].mxu0 %v330
    %v5135 = vpop.f32.mrb[0].mxu0
    %v5136 = vadd.f32 %v173, %v5135
    %v5137 = vpop.f32.mrb[0].mxu0
    %5138 = vmatprep.mubr.f32.mxu0 0.0
    %5139 = vmatmul.mubr.f32.gmra.mrb[0].mxu0 %v333
    %v5140 = vpop.f32.mrb[0].mxu0
    %v5141 = vadd.f32 %v178, %v5140
    %v5142 = vpop.f32.mrb[0].mxu0
    %5143 = vmatprep.mubr.f32.mxu0 0.0
    %5144 = vmatmul.mubr.f32.gmra.mrb[0].mxu0 %v336
    %v5145 = vpop.f32.mrb[0].mxu0
    %v5146 = vadd.f32 %v183, %v5145
    %v5147 = vpop.f32.mrb[0].mxu0
    %5148 = vmatprep.mubr.f32.mxu0 0.0
    %5149 = vmatmul.mubr.f32.gmra.mrb[0].mxu0 %v339
    %v5150 = vpop.f32.mrb[0].mxu0
    %v5151 = vadd.f32 %v188, %v5150
    %v5152 = vpop.f32.mrb[0].mxu0
    %5153 = vmatprep.mubr.f32.mxu0 0.0
    %5154 = vmatmul.mubr.f32.gmra.mrb[0].mxu0 %v342
    %v5155 = vpop.f32.mrb[0].mxu0
    %v5156 = vadd.f32 %v193, %v5155
    %v5157 = vpop.f32.mrb[0].mxu0
    %5158 = vmatprep.mubr.f32.mxu0 0.0
    %5159 = vmatmul.mubr.f32.gmra.mrb[0].mxu0 %v345
    %v5160 = vpop.f32.mrb[0].mxu0
    %v5161 = vadd.f32 %v198, %v5160
    %v5162 = vpop.f32.mrb[0].mxu0
    %5163 = vmatprep.mubr.f32.mxu0 0.0
    %5164 = vmatmul.mubr.f32.gmra.mrb[0].mxu0 %v348
    %v5165 = vpop.f32.mrb[0].mxu0
    %v5166 = vadd.f32 %v203, %v5165
    %v5167 = vpop.f32.mrb[0].mxu0
    %5168 = vmatprep.mubr.f32.mxu0 0.0
    %5169 = vmatmul.mubr.f32.gmra.mrb[0].mxu0 %v351
    %v5170 = vpop.f32.mrb[0].mxu0
    %v5171 = vadd.f32 %v208, %v5170
    %v5172 = vpop.f32.mrb[0].mxu0
    %5173 = vmatprep.mubr.f32.mxu0 0.0
    %5174 = vmatmul.mubr.f32.gmra.mrb[0].mxu0 %v354
    %v5175 = vpop.f32.mrb[0].mxu0
    %v5176 = vadd.f32 %v213, %v5175
    %v5177 = vpop.f32.mrb[0].mxu0
    %5178 = vmatprep.mubr.f32.mxu0 0.0
    %5179 = vmatmul.mubr.f32.gmra.mrb[0].mxu0 %v357
    %v5180 = vpop.f32.mrb[0].mxu0
    %v5181 = vadd.f32 %v218, %v5180
    %v5182 = vpop.f32.mrb[0].mxu0
    %5183 = vmatprep.mubr.f32.mxu0 0.0
    %5184 = vmatmul.mubr.f32.gmra.mrb[0].mxu0 %v360
    %v5185 = vpop.f32.mrb[0].mxu0
    %v5186 = vadd.f32 %v223, %v5185
    %v5187 = vpop.f32.mrb[0].mxu0
    %5188 = vmatprep.mubr.f32.mxu0 0.0
    %5189 = vmatmul.mubr.f32.gmra.mrb[0].mxu0 %v363
    %v5190 = vpop.f32.mrb[0].mxu0
    %v5191 = vadd.f32 %v228, %v5190
    %v5192 = vpop.f32.mrb[0].mxu0
    %5193 = vmatprep.mubr.f32.mxu0 0.0
    %5194 = vmatmul.mubr.f32.gmra.mrb[0].mxu0 %v366
    %v5195 = vpop.f32.mrb[0].mxu0
    %v5196 = vadd.f32 %v233, %v5195
    %v5197 = vpop.f32.mrb[0].mxu0
    %5198 = vmatprep.mubr.f32.mxu0 0.0
    %5199 = vmatmul.mubr.f32.gmra.mrb[0].mxu0 %v369
    %v5200 = vpop.f32.mrb[0].mxu0
    %v5201 = vadd.f32 %v238, %v5200
    %v5202 = vpop.f32.mrb[0].mxu0
    %5203 = vmatprep.mubr.f32.mxu0 0.0
    %5204 = vmatmul.mubr.f32.gmra.mrb[0].mxu0 %v372
    %v5205 = vpop.f32.mrb[0].mxu0
    %v5206 = vadd.f32 %v243, %v5205
    %v5207 = vpop.f32.mrb[0].mxu0
    %5208 = vmatprep.mubr.f32.mxu0 0.0
    %5209 = vmatmul.mubr.f32.gmra.mrb[0].mxu0 %v375
    %v5210 = vpop.f32.mrb[0].mxu0
    %v5211 = vadd.f32 %v248, %v5210
    %v5212 = vpop.f32.mrb[0].mxu0
    %5213 = vmatprep.mubr.f32.mxu0 0.0
    %5214 = vmatmul.mubr.f32.gmra.mrb[0].mxu0 %v378
    %v5215 = vpop.f32.mrb[0].mxu0
    %v5216 = vadd.f32 %v253, %v5215
    %v5217 = vpop.f32.mrb[0].mxu0
    %5218 = vmatprep.mubr.f32.mxu0 0.0
    %5219 = vmatmul.mubr.f32.gmra.mrb[0].mxu0 %v381
    %v5220 = vpop.f32.mrb[0].mxu0
    %v5221 = vadd.f32 %v258, %v5220
    %v5222 = vpop.f32.mrb[0].mxu0
    %5223 = vmatprep.mubr.f32.mxu0 0.0
    %5224 = vmatmul.mubr.f32.gmra.mrb[0].mxu0 %v384
    %v5225 = vpop.f32.mrb[0].mxu0
    %v5226 = vadd.f32 %v263, %v5225
    %v5227 = vpop.f32.mrb[0].mxu0
    %5228 = vmatprep.mubr.f32.mxu0 0.0
    %5229 = vmatmul.mubr.f32.gmra.mrb[0].mxu0 %v387
    %v5230 = vpop.f32.mrb[0].mxu0
    %v5231 = vadd.f32 %v268, %v5230
    %v5232 = vpop.f32.mrb[0].mxu0
    %5233 = vmatprep.mubr.f32.mxu0 0.0
    %5234 = vmatmul.mubr.f32.gmra.mrb[0].mxu0 %v390
    %v5235 = vpop.f32.mrb[0].mxu0
    %v5236 = vadd.f32 %v273, %v5235
    %v5237 = vpop.f32.mrb[0].mxu0
    %5238 = vmatprep.mubr.f32.mxu0 0.0
    %5239 = vmatmul.mubr.f32.gmra.mrb[0].mxu0 %v393
    %v5240 = vpop.f32.mrb[0].mxu0
    %v5241 = vadd.f32 %v278, %v5240
    %v5242 = vpop.f32.mrb[0].mxu0
    %5243 = vmatprep.mubr.f32.mxu0 0.0
    %5244 = vmatmul.mubr.f32.gmra.mrb[0].mxu0 %v396
    %v5245 = vpop.f32.mrb[0].mxu0
    %v5246 = vadd.f32 %v283, %v5245
    %v5247 = vpop.f32.mrb[0].mxu0
    %5248 = vdwg.mxu0
    %5249 = vmatprep.subr.mxu0 0.0
    %5250 = vmatpush1.msra.mxu0 %v4991
    %5251 = vmatprep.subr.mxu0 0.0
    %5252 = vmatpush1.msra.mxu0 %v4992
    %5253 = vmatprep.subr.mxu0 0.0
    %5254 = vmatpush1.msra.mxu0 %v4993
    %5255 = vmatprep.subr.mxu0 0.0
    %5256 = vmatpush1.msra.mxu0 %v4994
    %5257 = vmatprep.subr.mxu0 0.0
    %5258 = vmatpush1.msra.mxu0 %v4995
    %5259 = vmatprep.subr.mxu0 0.0
    %5260 = vmatpush1.msra.mxu0 %v4996
    %5261 = vmatprep.subr.mxu0 0.0
    %5262 = vmatpush1.msra.mxu0 %v4997
    %5263 = vmatprep.subr.mxu0 0.0
    %5264 = vmatpush1.msra.mxu0 %v4998
    %5265 = vmatprep.subr.mxu0 0.0
    %5266 = vmatpush1.msra.mxu0 0.0
    %5267 = vmatprep.subr.mxu0 0.0
    %5268 = vmatpush1.msra.mxu0 0.0
    %5269 = vmatprep.subr.mxu0 0.0
    %5270 = vmatpush1.msra.mxu0 0.0
    %5271 = vmatprep.subr.mxu0 0.0
    %5272 = vmatpush1.msra.mxu0 0.0
    %5273 = vmatprep.subr.mxu0 0.0
    %5274 = vmatpush1.msra.mxu0 0.0
    %5275 = vmatprep.subr.mxu0 0.0
    %5276 = vmatpush1.msra.mxu0 0.0
    %5277 = vmatprep.subr.mxu0 0.0
    %5278 = vmatpush1.msra.mxu0 0.0
    %5279 = vmatprep.subr.mxu0 0.0
    %5280 = vmatpush1.msra.mxu0 0.0
    %5281 = vmatprep.subr.mxu0 0.0
    %5282 = vmatpush1.msra.mxu0 0.0
    %5283 = vmatprep.subr.mxu0 0.0
    %5284 = vmatpush1.msra.mxu0 0.0
    %5285 = vmatprep.subr.mxu0 0.0
    %5286 = vmatpush1.msra.mxu0 0.0
    %5287 = vmatprep.subr.mxu0 0.0
    %5288 = vmatpush1.msra.mxu0 0.0
    %5289 = vmatprep.subr.mxu0 0.0
    %5290 = vmatpush1.msra.mxu0 0.0
    %5291 = vmatprep.subr.mxu0 0.0
    %5292 = vmatpush1.msra.mxu0 0.0
    %5293 = vmatprep.subr.mxu0 0.0
    %5294 = vmatpush1.msra.mxu0 0.0
    %5295 = vmatprep.subr.mxu0 0.0
    %5296 = vmatpush1.msra.mxu0 0.0
    %5297 = vmatprep.subr.mxu0 0.0
    %5298 = vmatpush1.msra.mxu0 0.0
    %5299 = vmatprep.subr.mxu0 0.0
    %5300 = vmatpush1.msra.mxu0 0.0
    %5301 = vmatprep.subr.mxu0 0.0
    %5302 = vmatpush1.msra.mxu0 0.0
    %5303 = vmatprep.subr.mxu0 0.0
    %5304 = vmatpush1.msra.mxu0 0.0
    %5305 = vmatprep.subr.mxu0 0.0
    %5306 = vmatpush1.msra.mxu0 0.0
    %5307 = vmatprep.subr.mxu0 0.0
    %5308 = vmatpush1.msra.mxu0 0.0
    %5309 = vmatprep.subr.mxu0 0.0
    %5310 = vmatpush1.msra.mxu0 0.0
    %5311 = vmatprep.subr.mxu0 0.0
    %5312 = vmatpush1.msra.mxu0 0.0
    %5313 = vmatprep.mubr.f32.mxu0 0.0
    %5314 = vmatmul.mubr.f32.gmra.mrb[0].mxu0 %v624
    %v5315 = vpop.f32.mrb[0].mxu0
    %v5316 = vadd.f32 0.0, %v5315
    %v5317 = vpop.f32.mrb[0].mxu0
    %5318 = vmatprep.mubr.f32.mxu0 0.0
    %5319 = vmatmul.mubr.f32.gmra.mrb[0].mxu0 %v627
    %v5320 = vpop.f32.mrb[0].mxu0
    %v5321 = vadd.f32 0.0, %v5320
    %v5322 = vpop.f32.mrb[0].mxu0
    %5323 = vmatprep.mubr.f32.mxu0 0.0
    %5324 = vmatmul.mubr.f32.gmra.mrb[0].mxu0 %v630
    %v5325 = vpop.f32.mrb[0].mxu0
    %v5326 = vadd.f32 0.0, %v5325
    %v5327 = vpop.f32.mrb[0].mxu0
    %5328 = vmatprep.mubr.f32.mxu0 0.0
    %5329 = vmatmul.mubr.f32.gmra.mrb[0].mxu0 %v633
    %v5330 = vpop.f32.mrb[0].mxu0
    %v5331 = vadd.f32 0.0, %v5330
    %v5332 = vpop.f32.mrb[0].mxu0
    %5333 = vmatprep.mubr.f32.mxu0 0.0
    %5334 = vmatmul.mubr.f32.gmra.mrb[0].mxu0 %v636
    %v5335 = vpop.f32.mrb[0].mxu0
    %v5336 = vadd.f32 0.0, %v5335
    %v5337 = vpop.f32.mrb[0].mxu0
    %5338 = vmatprep.mubr.f32.mxu0 0.0
    %5339 = vmatmul.mubr.f32.gmra.mrb[0].mxu0 %v639
    %v5340 = vpop.f32.mrb[0].mxu0
    %v5341 = vadd.f32 0.0, %v5340
    %v5342 = vpop.f32.mrb[0].mxu0
    %5343 = vmatprep.mubr.f32.mxu0 0.0
    %5344 = vmatmul.mubr.f32.gmra.mrb[0].mxu0 %v642
    %v5345 = vpop.f32.mrb[0].mxu0
    %v5346 = vadd.f32 0.0, %v5345
    %v5347 = vpop.f32.mrb[0].mxu0
    %5348 = vmatprep.mubr.f32.mxu0 0.0
    %5349 = vmatmul.mubr.f32.gmra.mrb[0].mxu0 %v645
    %v5350 = vpop.f32.mrb[0].mxu0
    %v5351 = vadd.f32 0.0, %v5350
    %v5352 = vpop.f32.mrb[0].mxu0
    %5353 = vmatprep.mubr.f32.mxu0 0.0
    %5354 = vmatmul.mubr.f32.gmra.mrb[0].mxu0 %v648
    %v5355 = vpop.f32.mrb[0].mxu0
    %v5356 = vadd.f32 0.0, %v5355
    %v5357 = vpop.f32.mrb[0].mxu0
    %5358 = vmatprep.mubr.f32.mxu0 0.0
    %5359 = vmatmul.mubr.f32.gmra.mrb[0].mxu0 %v651
    %v5360 = vpop.f32.mrb[0].mxu0
    %v5361 = vadd.f32 0.0, %v5360
    %v5362 = vpop.f32.mrb[0].mxu0
    %5363 = vmatprep.mubr.f32.mxu0 0.0
    %5364 = vmatmul.mubr.f32.gmra.mrb[0].mxu0 %v654
    %v5365 = vpop.f32.mrb[0].mxu0
    %v5366 = vadd.f32 0.0, %v5365
    %v5367 = vpop.f32.mrb[0].mxu0
    %5368 = vmatprep.mubr.f32.mxu0 0.0
    %5369 = vmatmul.mubr.f32.gmra.mrb[0].mxu0 %v657
    %v5370 = vpop.f32.mrb[0].mxu0
    %v5371 = vadd.f32 0.0, %v5370
    %v5372 = vpop.f32.mrb[0].mxu0
    %5373 = vmatprep.mubr.f32.mxu0 0.0
    %5374 = vmatmul.mubr.f32.gmra.mrb[0].mxu0 %v660
    %v5375 = vpop.f32.mrb[0].mxu0
    %v5376 = vadd.f32 0.0, %v5375
    %v5377 = vpop.f32.mrb[0].mxu0
    %5378 = vmatprep.mubr.f32.mxu0 0.0
    %5379 = vmatmul.mubr.f32.gmra.mrb[0].mxu0 %v663
    %v5380 = vpop.f32.mrb[0].mxu0
    %v5381 = vadd.f32 0.0, %v5380
    %v5382 = vpop.f32.mrb[0].mxu0
    %5383 = vmatprep.mubr.f32.mxu0 0.0
    %5384 = vmatmul.mubr.f32.gmra.mrb[0].mxu0 %v666
    %v5385 = vpop.f32.mrb[0].mxu0
    %v5386 = vadd.f32 0.0, %v5385
    %v5387 = vpop.f32.mrb[0].mxu0
    %5388 = vmatprep.mubr.f32.mxu0 0.0
    %5389 = vmatmul.mubr.f32.gmra.mrb[0].mxu0 %v669
    %v5390 = vpop.f32.mrb[0].mxu0
    %v5391 = vadd.f32 0.0, %v5390
    %v5392 = vpop.f32.mrb[0].mxu0
    %5393 = vmatprep.mubr.f32.mxu0 0.0
    %5394 = vmatmul.mubr.f32.gmra.mrb[0].mxu0 %v672
    %v5395 = vpop.f32.mrb[0].mxu0
    %v5396 = vadd.f32 0.0, %v5395
    %v5397 = vpop.f32.mrb[0].mxu0
    %5398 = vmatprep.mubr.f32.mxu0 0.0
    %5399 = vmatmul.mubr.f32.gmra.mrb[0].mxu0 %v675
    %v5400 = vpop.f32.mrb[0].mxu0
    %v5401 = vadd.f32 0.0, %v5400
    %v5402 = vpop.f32.mrb[0].mxu0
    %5403 = vmatprep.mubr.f32.mxu0 0.0
    %5404 = vmatmul.mubr.f32.gmra.mrb[0].mxu0 %v678
    %v5405 = vpop.f32.mrb[0].mxu0
    %v5406 = vadd.f32 0.0, %v5405
    %v5407 = vpop.f32.mrb[0].mxu0
    %5408 = vmatprep.mubr.f32.mxu0 0.0
    %5409 = vmatmul.mubr.f32.gmra.mrb[0].mxu0 %v681
    %v5410 = vpop.f32.mrb[0].mxu0
    %v5411 = vadd.f32 0.0, %v5410
    %v5412 = vpop.f32.mrb[0].mxu0
    %5413 = vmatprep.mubr.f32.mxu0 0.0
    %5414 = vmatmul.mubr.f32.gmra.mrb[0].mxu0 %v684
    %v5415 = vpop.f32.mrb[0].mxu0
    %v5416 = vadd.f32 0.0, %v5415
    %v5417 = vpop.f32.mrb[0].mxu0
    %5418 = vmatprep.mubr.f32.mxu0 0.0
    %5419 = vmatmul.mubr.f32.gmra.mrb[0].mxu0 %v687
    %v5420 = vpop.f32.mrb[0].mxu0
    %v5421 = vadd.f32 0.0, %v5420
    %v5422 = vpop.f32.mrb[0].mxu0
    %5423 = vmatprep.mubr.f32.mxu0 0.0
    %5424 = vmatmul.mubr.f32.gmra.mrb[0].mxu0 %v690
    %v5425 = vpop.f32.mrb[0].mxu0
    %v5426 = vadd.f32 0.0, %v5425
    %v5427 = vpop.f32.mrb[0].mxu0
    %5428 = vmatprep.mubr.f32.mxu0 0.0
    %5429 = vmatmul.mubr.f32.gmra.mrb[0].mxu0 %v693
    %v5430 = vpop.f32.mrb[0].mxu0
    %v5431 = vadd.f32 0.0, %v5430
    %v5432 = vpop.f32.mrb[0].mxu0
    %5433 = vmatprep.mubr.f32.mxu0 0.0
    %5434 = vmatmul.mubr.f32.gmra.mrb[0].mxu0 %v696
    %v5435 = vpop.f32.mrb[0].mxu0
    %v5436 = vadd.f32 0.0, %v5435
    %v5437 = vpop.f32.mrb[0].mxu0
    %5438 = vmatprep.mubr.f32.mxu0 0.0
    %5439 = vmatmul.mubr.f32.gmra.mrb[0].mxu0 %v699
    %v5440 = vpop.f32.mrb[0].mxu0
    %v5441 = vadd.f32 0.0, %v5440
    %v5442 = vpop.f32.mrb[0].mxu0
    %5443 = vmatprep.mubr.f32.mxu0 0.0
    %5444 = vmatmul.mubr.f32.gmra.mrb[0].mxu0 %v702
    %v5445 = vpop.f32.mrb[0].mxu0
    %v5446 = vadd.f32 0.0, %v5445
    %v5447 = vpop.f32.mrb[0].mxu0
    %5448 = vmatprep.mubr.f32.mxu0 0.0
    %5449 = vmatmul.mubr.f32.gmra.mrb[0].mxu0 %v705
    %v5450 = vpop.f32.mrb[0].mxu0
    %v5451 = vadd.f32 0.0, %v5450
    %v5452 = vpop.f32.mrb[0].mxu0
    %5453 = vmatprep.mubr.f32.mxu0 0.0
    %5454 = vmatmul.mubr.f32.gmra.mrb[0].mxu0 %v708
    %v5455 = vpop.f32.mrb[0].mxu0
    %v5456 = vadd.f32 0.0, %v5455
    %v5457 = vpop.f32.mrb[0].mxu0
    %5458 = vmatprep.mubr.f32.mxu0 0.0
    %5459 = vmatmul.mubr.f32.gmra.mrb[0].mxu0 %v711
    %v5460 = vpop.f32.mrb[0].mxu0
    %v5461 = vadd.f32 0.0, %v5460
    %v5462 = vpop.f32.mrb[0].mxu0
    %5463 = vmatprep.mubr.f32.mxu0 0.0
    %5464 = vmatmul.mubr.f32.gmra.mrb[0].mxu0 %v714
    %v5465 = vpop.f32.mrb[0].mxu0
    %v5466 = vadd.f32 0.0, %v5465
    %v5467 = vpop.f32.mrb[0].mxu0
    %5468 = vmatprep.mubr.f32.mxu0 0.0
    %5469 = vmatmul.mubr.f32.gmra.mrb[0].mxu0 %v717
    %v5470 = vpop.f32.mrb[0].mxu0
    %v5471 = vadd.f32 0.0, %v5470
    %v5472 = vpop.f32.mrb[0].mxu0
    %5473 = vdwg.mxu0
    %v5474 = vadd.f32 %v5091, %v5316
    %v5475 = vadd.f32 %v5096, %v5321
    %v5476 = vadd.f32 %v5101, %v5326
    %v5477 = vadd.f32 %v5106, %v5331
    %v5478 = vadd.f32 %v5111, %v5336
    %v5479 = vadd.f32 %v5116, %v5341
    %v5480 = vadd.f32 %v5121, %v5346
    %v5481 = vadd.f32 %v5126, %v5351
    %v5482 = vadd.f32 %v5131, %v5356
    %v5483 = vadd.f32 %v5136, %v5361
    %v5484 = vadd.f32 %v5141, %v5366
    %v5485 = vadd.f32 %v5146, %v5371
    %v5486 = vadd.f32 %v5151, %v5376
    %v5487 = vadd.f32 %v5156, %v5381
    %v5488 = vadd.f32 %v5161, %v5386
    %v5489 = vadd.f32 %v5166, %v5391
    %v5490 = vadd.f32 %v5171, %v5396
    %v5491 = vadd.f32 %v5176, %v5401
    %v5492 = vadd.f32 %v5181, %v5406
    %v5493 = vadd.f32 %v5186, %v5411
    %v5494 = vadd.f32 %v5191, %v5416
    %v5495 = vadd.f32 %v5196, %v5421
    %v5496 = vadd.f32 %v5201, %v5426
    %v5497 = vadd.f32 %v5206, %v5431
    %v5498 = vadd.f32 %v5211, %v5436
    %v5499 = vadd.f32 %v5216, %v5441
    %v5500 = vadd.f32 %v5221, %v5446
    %v5501 = vadd.f32 %v5226, %v5451
    %v5502 = vadd.f32 %v5231, %v5456
    %v5503 = vadd.f32 %v5236, %v5461
    %v5504 = vadd.f32 %v5241, %v5466
    %v5505 = vadd.f32 %v5246, %v5471
    %v5506 = vxor.u32 %v5474, 2147483648
    %v5507 = vxor.u32 %v5475, 2147483648
    %v5508 = vxor.u32 %v5476, 2147483648
    %v5509 = vxor.u32 %v5477, 2147483648
    %v5510 = vxor.u32 %v5478, 2147483648
    %v5511 = vxor.u32 %v5479, 2147483648
    %v5512 = vxor.u32 %v5480, 2147483648
    %v5513 = vxor.u32 %v5481, 2147483648
    %v5514 = vxor.u32 %v5482, 2147483648
    %v5515 = vxor.u32 %v5483, 2147483648
    %v5516 = vxor.u32 %v5484, 2147483648
    %v5517 = vxor.u32 %v5485, 2147483648
    %v5518 = vxor.u32 %v5486, 2147483648
    %v5519 = vxor.u32 %v5487, 2147483648
    %v5520 = vxor.u32 %v5488, 2147483648
    %v5521 = vxor.u32 %v5489, 2147483648
    %v5522 = vxor.u32 %v5490, 2147483648
    %v5523 = vxor.u32 %v5491, 2147483648
    %v5524 = vxor.u32 %v5492, 2147483648
    %v5525 = vxor.u32 %v5493, 2147483648
    %v5526 = vxor.u32 %v5494, 2147483648
    %v5527 = vxor.u32 %v5495, 2147483648
    %v5528 = vxor.u32 %v5496, 2147483648
    %v5529 = vxor.u32 %v5497, 2147483648
    %v5530 = vxor.u32 %v5498, 2147483648
    %v5531 = vxor.u32 %v5499, 2147483648
    %v5532 = vxor.u32 %v5500, 2147483648
    %v5533 = vxor.u32 %v5501, 2147483648
    %v5534 = vxor.u32 %v5502, 2147483648
    %v5535 = vxor.u32 %v5503, 2147483648
    %v5536 = vxor.u32 %v5504, 2147483648
    %v5537 = vxor.u32 %v5505, 2147483648
    %v5538 = vmul.f32 %v5506, 1.442695
    %v5539 = vpow.pop %v5538
    %v5540 = vmul.f32 %v5507, 1.442695
    %v5541 = vpow.pop %v5540
    %v5542 = vmul.f32 %v5508, 1.442695
    %v5543 = vpow.pop %v5542
    %v5544 = vmul.f32 %v5509, 1.442695
    %v5545 = vpow.pop %v5544
    %v5546 = vmul.f32 %v5510, 1.442695
    %v5547 = vpow.pop %v5546
    %v5548 = vmul.f32 %v5511, 1.442695
    %v5549 = vpow.pop %v5548
    %v5550 = vmul.f32 %v5512, 1.442695
    %v5551 = vpow.pop %v5550
    %v5552 = vmul.f32 %v5513, 1.442695
    %v5553 = vpow.pop %v5552
    %v5554 = vmul.f32 %v5514, 1.442695
    %v5555 = vpow.pop %v5554
    %v5556 = vmul.f32 %v5515, 1.442695
    %v5557 = vpow.pop %v5556
    %v5558 = vmul.f32 %v5516, 1.442695
    %v5559 = vpow.pop %v5558
    %v5560 = vmul.f32 %v5517, 1.442695
    %v5561 = vpow.pop %v5560
    %v5562 = vmul.f32 %v5518, 1.442695
    %v5563 = vpow.pop %v5562
    %v5564 = vmul.f32 %v5519, 1.442695
    %v5565 = vpow.pop %v5564
    %v5566 = vmul.f32 %v5520, 1.442695
    %v5567 = vpow.pop %v5566
    %v5568 = vmul.f32 %v5521, 1.442695
    %v5569 = vpow.pop %v5568
    %v5570 = vmul.f32 %v5522, 1.442695
    %v5571 = vpow.pop %v5570
    %v5572 = vmul.f32 %v5523, 1.442695
    %v5573 = vpow.pop %v5572
    %v5574 = vmul.f32 %v5524, 1.442695
    %v5575 = vpow.pop %v5574
    %v5576 = vmul.f32 %v5525, 1.442695
    %v5577 = vpow.pop %v5576
    %v5578 = vmul.f32 %v5526, 1.442695
    %v5579 = vpow.pop %v5578
    %v5580 = vmul.f32 %v5527, 1.442695
    %v5581 = vpow.pop %v5580
    %v5582 = vmul.f32 %v5528, 1.442695
    %v5583 = vpow.pop %v5582
    %v5584 = vmul.f32 %v5529, 1.442695
    %v5585 = vpow.pop %v5584
    %v5586 = vmul.f32 %v5530, 1.442695
    %v5587 = vpow.pop %v5586
    %v5588 = vmul.f32 %v5531, 1.442695
    %v5589 = vpow.pop %v5588
    %v5590 = vmul.f32 %v5532, 1.442695
    %v5591 = vpow.pop %v5590
    %v5592 = vmul.f32 %v5533, 1.442695
    %v5593 = vpow.pop %v5592
    %v5594 = vmul.f32 %v5534, 1.442695
    %v5595 = vpow.pop %v5594
    %v5596 = vmul.f32 %v5535, 1.442695
    %v5597 = vpow.pop %v5596
    %v5598 = vmul.f32 %v5536, 1.442695
    %v5599 = vpow.pop %v5598
    %v5600 = vmul.f32 %v5537, 1.442695
    %v5601 = vpow.pop %v5600
    %v5602 = vadd.f32 %v5539, 1.0
    %v5603 = vadd.f32 %v5541, 1.0
    %v5604 = vadd.f32 %v5543, 1.0
    %v5605 = vadd.f32 %v5545, 1.0
    %v5606 = vadd.f32 %v5547, 1.0
    %v5607 = vadd.f32 %v5549, 1.0
    %v5608 = vadd.f32 %v5551, 1.0
    %v5609 = vadd.f32 %v5553, 1.0
    %v5610 = vadd.f32 %v5555, 1.0
    %v5611 = vadd.f32 %v5557, 1.0
    %v5612 = vadd.f32 %v5559, 1.0
    %v5613 = vadd.f32 %v5561, 1.0
    %v5614 = vadd.f32 %v5563, 1.0
    %v5615 = vadd.f32 %v5565, 1.0
    %v5616 = vadd.f32 %v5567, 1.0
    %v5617 = vadd.f32 %v5569, 1.0
    %v5618 = vadd.f32 %v5571, 1.0
    %v5619 = vadd.f32 %v5573, 1.0
    %v5620 = vadd.f32 %v5575, 1.0
    %v5621 = vadd.f32 %v5577, 1.0
    %v5622 = vadd.f32 %v5579, 1.0
    %v5623 = vadd.f32 %v5581, 1.0
    %v5624 = vadd.f32 %v5583, 1.0
    %v5625 = vadd.f32 %v5585, 1.0
    %v5626 = vadd.f32 %v5587, 1.0
    %v5627 = vadd.f32 %v5589, 1.0
    %v5628 = vadd.f32 %v5591, 1.0
    %v5629 = vadd.f32 %v5593, 1.0
    %v5630 = vadd.f32 %v5595, 1.0
    %v5631 = vadd.f32 %v5597, 1.0
    %v5632 = vadd.f32 %v5599, 1.0
    %v5633 = vadd.f32 %v5601, 1.0
    %v5634 = vrcp.pop %v5602
    %v5635 = vmul.f32 1.0, %v5634
    %v5636 = vrcp.pop %v5603
    %v5637 = vmul.f32 1.0, %v5636
    %v5638 = vrcp.pop %v5604
    %v5639 = vmul.f32 1.0, %v5638
    %v5640 = vrcp.pop %v5605
    %v5641 = vmul.f32 1.0, %v5640
    %v5642 = vrcp.pop %v5606
    %v5643 = vmul.f32 1.0, %v5642
    %v5644 = vrcp.pop %v5607
    %v5645 = vmul.f32 1.0, %v5644
    %v5646 = vrcp.pop %v5608
    %v5647 = vmul.f32 1.0, %v5646
    %v5648 = vrcp.pop %v5609
    %v5649 = vmul.f32 1.0, %v5648
    %v5650 = vrcp.pop %v5610
    %v5651 = vmul.f32 1.0, %v5650
    %v5652 = vrcp.pop %v5611
    %v5653 = vmul.f32 1.0, %v5652
    %v5654 = vrcp.pop %v5612
    %v5655 = vmul.f32 1.0, %v5654
    %v5656 = vrcp.pop %v5613
    %v5657 = vmul.f32 1.0, %v5656
    %v5658 = vrcp.pop %v5614
    %v5659 = vmul.f32 1.0, %v5658
    %v5660 = vrcp.pop %v5615
    %v5661 = vmul.f32 1.0, %v5660
    %v5662 = vrcp.pop %v5616
    %v5663 = vmul.f32 1.0, %v5662
    %v5664 = vrcp.pop %v5617
    %v5665 = vmul.f32 1.0, %v5664
    %v5666 = vrcp.pop %v5618
    %v5667 = vmul.f32 1.0, %v5666
    %v5668 = vrcp.pop %v5619
    %v5669 = vmul.f32 1.0, %v5668
    %v5670 = vrcp.pop %v5620
    %v5671 = vmul.f32 1.0, %v5670
    %v5672 = vrcp.pop %v5621
    %v5673 = vmul.f32 1.0, %v5672
    %v5674 = vrcp.pop %v5622
    %v5675 = vmul.f32 1.0, %v5674
    %v5676 = vrcp.pop %v5623
    %v5677 = vmul.f32 1.0, %v5676
    %v5678 = vrcp.pop %v5624
    %v5679 = vmul.f32 1.0, %v5678
    %v5680 = vrcp.pop %v5625
    %v5681 = vmul.f32 1.0, %v5680
    %v5682 = vrcp.pop %v5626
    %v5683 = vmul.f32 1.0, %v5682
    %v5684 = vrcp.pop %v5627
    %v5685 = vmul.f32 1.0, %v5684
    %v5686 = vrcp.pop %v5628
    %v5687 = vmul.f32 1.0, %v5686
    %v5688 = vrcp.pop %v5629
    %v5689 = vmul.f32 1.0, %v5688
    %v5690 = vrcp.pop %v5630
    %v5691 = vmul.f32 1.0, %v5690
    %v5692 = vrcp.pop %v5631
    %v5693 = vmul.f32 1.0, %v5692
    %v5694 = vrcp.pop %v5632
    %v5695 = vmul.f32 1.0, %v5694
    %v5696 = vrcp.pop %v5633
    %v5697 = vmul.f32 1.0, %v5696
    %v5698 = vmul.f32 %v5667, 2.0
    %v5699 = vmul.f32 %v5669, 2.0
    %v5700 = vmul.f32 %v5671, 2.0
    %v5701 = vmul.f32 %v5673, 2.0
    %v5702 = vmul.f32 %v5675, 2.0
    %v5703 = vmul.f32 %v5677, 2.0
    %v5704 = vmul.f32 %v5679, 2.0
    %v5705 = vmul.f32 %v5681, 2.0
    %v5706 = vsub.f32 %v5698, 1.0
    %v5707 = vsub.f32 %v5699, 1.0
    %v5708 = vsub.f32 %v5700, 1.0
    %v5709 = vsub.f32 %v5701, 1.0
    %v5710 = vsub.f32 %v5702, 1.0
    %v5711 = vsub.f32 %v5703, 1.0
    %v5712 = vsub.f32 %v5704, 1.0
    %v5713 = vsub.f32 %v5705, 1.0
    %v5714 = vmul.f32 %v5651, %v4975
    %v5715 = vmul.f32 %v5653, %v4976
    %v5716 = vmul.f32 %v5655, %v4977
    %v5717 = vmul.f32 %v5657, %v4978
    %v5718 = vmul.f32 %v5659, %v4979
    %v5719 = vmul.f32 %v5661, %v4980
    %v5720 = vmul.f32 %v5663, %v4981
    %v5721 = vmul.f32 %v5665, %v4982
    %v5722 = vmul.f32 %v5635, %v5706
    %v5723 = vmul.f32 %v5637, %v5707
    %v5724 = vmul.f32 %v5639, %v5708
    %v5725 = vmul.f32 %v5641, %v5709
    %v5726 = vmul.f32 %v5643, %v5710
    %v5727 = vmul.f32 %v5645, %v5711
    %v5728 = vmul.f32 %v5647, %v5712
    %v5729 = vmul.f32 %v5649, %v5713
    %v5730 = vadd.f32 %v5714, %v5722
    %v5731 = vadd.f32 %v5715, %v5723
    %v5732 = vadd.f32 %v5716, %v5724
    %v5733 = vadd.f32 %v5717, %v5725
    %v5734 = vadd.f32 %v5718, %v5726
    %v5735 = vadd.f32 %v5719, %v5727
    %v5736 = vadd.f32 %v5720, %v5728
    %v5737 = vadd.f32 %v5721, %v5729
    %v5738 = vtanh.pop %v5730
    %v5739 = vtanh.pop %v5731
    %v5740 = vtanh.pop %v5732
    %v5741 = vtanh.pop %v5733
    %v5742 = vtanh.pop %v5734
    %v5743 = vtanh.pop %v5735
    %v5744 = vtanh.pop %v5736
    %v5745 = vtanh.pop %v5737
    %v5746 = vmul.f32 %v5683, %v5738
    %v5747 = vmul.f32 %v5685, %v5739
    %v5748 = vmul.f32 %v5687, %v5740
    %v5749 = vmul.f32 %v5689, %v5741
    %v5750 = vmul.f32 %v5691, %v5742
    %v5751 = vmul.f32 %v5693, %v5743
    %v5752 = vmul.f32 %v5695, %v5744
    %v5753 = vmul.f32 %v5697, %v5745
    %v5754 = vadd.f32 %v4999, %v5746
    %v5755 = vadd.f32 %v5000, %v5747
    %v5756 = vadd.f32 %v5001, %v5748
    %v5757 = vadd.f32 %v5002, %v5749
    %v5758 = vadd.f32 %v5003, %v5750
    %v5759 = vadd.f32 %v5004, %v5751
    %v5760 = vadd.f32 %v5005, %v5752
    %v5761 = vadd.f32 %v5006, %v5753
    %s5762 = scalar_lea.vmem %s0, 224
    %v5763 = vld [vmem:[%s5762] sm:$0xf]
    %v5764 = vld [vmem:[%s5762 + $0x4] sm:$0xf]
    %v5765 = vld [vmem:[%s5762 + $0x8] sm:$0xf]
    %v5766 = vld [vmem:[%s5762 + $0xc] sm:$0xf]
    %v5767 = vld [vmem:[%s5762 + $0x10] sm:$0xf]
    %v5768 = vld [vmem:[%s5762 + $0x14] sm:$0xf]
    %v5769 = vld [vmem:[%s5762 + $0x18] sm:$0xf]
    %v5770 = vld [vmem:[%s5762 + $0x1c] sm:$0xf]
    %v5771 = vunpack.c.l.bf16 %v5763
    %v5772 = vunpack.c.l.bf16 %v5764
    %v5773 = vunpack.c.l.bf16 %v5765
    %v5774 = vunpack.c.l.bf16 %v5766
    %v5775 = vunpack.c.l.bf16 %v5767
    %v5776 = vunpack.c.l.bf16 %v5768
    %v5777 = vunpack.c.l.bf16 %v5769
    %v5778 = vunpack.c.l.bf16 %v5770
    %5779 = vmatprep.subr.mxu0 0.0
    %5780 = vmatpush1.msra.mxu0 %v5771
    %5781 = vmatprep.subr.mxu0 0.0
    %5782 = vmatpush1.msra.mxu0 %v5772
    %5783 = vmatprep.subr.mxu0 0.0
    %5784 = vmatpush1.msra.mxu0 %v5773
    %5785 = vmatprep.subr.mxu0 0.0
    %5786 = vmatpush1.msra.mxu0 %v5774
    %5787 = vmatprep.subr.mxu0 0.0
    %5788 = vmatpush1.msra.mxu0 %v5775
    %5789 = vmatprep.subr.mxu0 0.0
    %5790 = vmatpush1.msra.mxu0 %v5776
    %5791 = vmatprep.subr.mxu0 0.0
    %5792 = vmatpush1.msra.mxu0 %v5777
    %5793 = vmatprep.subr.mxu0 0.0
    %5794 = vmatpush1.msra.mxu0 %v5778
    %5795 = vmatprep.subr.mxu0 0.0
    %5796 = vmatpush1.msra.mxu0 0.0
    %5797 = vmatprep.subr.mxu0 0.0
    %5798 = vmatpush1.msra.mxu0 0.0
    %5799 = vmatprep.subr.mxu0 0.0
    %5800 = vmatpush1.msra.mxu0 0.0
    %5801 = vmatprep.subr.mxu0 0.0
    %5802 = vmatpush1.msra.mxu0 0.0
    %5803 = vmatprep.subr.mxu0 0.0
    %5804 = vmatpush1.msra.mxu0 0.0
    %5805 = vmatprep.subr.mxu0 0.0
    %5806 = vmatpush1.msra.mxu0 0.0
    %5807 = vmatprep.subr.mxu0 0.0
    %5808 = vmatpush1.msra.mxu0 0.0
    %5809 = vmatprep.subr.mxu0 0.0
    %5810 = vmatpush1.msra.mxu0 0.0
    %5811 = vmatprep.subr.mxu0 0.0
    %5812 = vmatpush1.msra.mxu0 0.0
    %5813 = vmatprep.subr.mxu0 0.0
    %5814 = vmatpush1.msra.mxu0 0.0
    %5815 = vmatprep.subr.mxu0 0.0
    %5816 = vmatpush1.msra.mxu0 0.0
    %5817 = vmatprep.subr.mxu0 0.0
    %5818 = vmatpush1.msra.mxu0 0.0
    %5819 = vmatprep.subr.mxu0 0.0
    %5820 = vmatpush1.msra.mxu0 0.0
    %5821 = vmatprep.subr.mxu0 0.0
    %5822 = vmatpush1.msra.mxu0 0.0
    %5823 = vmatprep.subr.mxu0 0.0
    %5824 = vmatpush1.msra.mxu0 0.0
    %5825 = vmatprep.subr.mxu0 0.0
    %5826 = vmatpush1.msra.mxu0 0.0
    %5827 = vmatprep.subr.mxu0 0.0
    %5828 = vmatpush1.msra.mxu0 0.0
    %5829 = vmatprep.subr.mxu0 0.0
    %5830 = vmatpush1.msra.mxu0 0.0
    %5831 = vmatprep.subr.mxu0 0.0
    %5832 = vmatpush1.msra.mxu0 0.0
    %5833 = vmatprep.subr.mxu0 0.0
    %5834 = vmatpush1.msra.mxu0 0.0
    %5835 = vmatprep.subr.mxu0 0.0
    %5836 = vmatpush1.msra.mxu0 0.0
    %5837 = vmatprep.subr.mxu0 0.0
    %5838 = vmatpush1.msra.mxu0 0.0
    %5839 = vmatprep.subr.mxu0 0.0
    %5840 = vmatpush1.msra.mxu0 0.0
    %5841 = vmatprep.subr.mxu0 0.0
    %5842 = vmatpush1.msra.mxu0 0.0
    %5843 = vmatprep.mubr.f32.mxu0 0.0
    %5844 = vmatmul.mubr.f32.gmra.mrb[0].mxu0 %v303
    %v5845 = vpop.f32.mrb[0].mxu0
    %v5846 = vadd.f32 %v128, %v5845
    %v5847 = vpop.f32.mrb[0].mxu0
    %5848 = vmatprep.mubr.f32.mxu0 0.0
    %5849 = vmatmul.mubr.f32.gmra.mrb[0].mxu0 %v306
    %v5850 = vpop.f32.mrb[0].mxu0
    %v5851 = vadd.f32 %v133, %v5850
    %v5852 = vpop.f32.mrb[0].mxu0
    %5853 = vmatprep.mubr.f32.mxu0 0.0
    %5854 = vmatmul.mubr.f32.gmra.mrb[0].mxu0 %v309
    %v5855 = vpop.f32.mrb[0].mxu0
    %v5856 = vadd.f32 %v138, %v5855
    %v5857 = vpop.f32.mrb[0].mxu0
    %5858 = vmatprep.mubr.f32.mxu0 0.0
    %5859 = vmatmul.mubr.f32.gmra.mrb[0].mxu0 %v312
    %v5860 = vpop.f32.mrb[0].mxu0
    %v5861 = vadd.f32 %v143, %v5860
    %v5862 = vpop.f32.mrb[0].mxu0
    %5863 = vmatprep.mubr.f32.mxu0 0.0
    %5864 = vmatmul.mubr.f32.gmra.mrb[0].mxu0 %v315
    %v5865 = vpop.f32.mrb[0].mxu0
    %v5866 = vadd.f32 %v148, %v5865
    %v5867 = vpop.f32.mrb[0].mxu0
    %5868 = vmatprep.mubr.f32.mxu0 0.0
    %5869 = vmatmul.mubr.f32.gmra.mrb[0].mxu0 %v318
    %v5870 = vpop.f32.mrb[0].mxu0
    %v5871 = vadd.f32 %v153, %v5870
    %v5872 = vpop.f32.mrb[0].mxu0
    %5873 = vmatprep.mubr.f32.mxu0 0.0
    %5874 = vmatmul.mubr.f32.gmra.mrb[0].mxu0 %v321
    %v5875 = vpop.f32.mrb[0].mxu0
    %v5876 = vadd.f32 %v158, %v5875
    %v5877 = vpop.f32.mrb[0].mxu0
    %5878 = vmatprep.mubr.f32.mxu0 0.0
    %5879 = vmatmul.mubr.f32.gmra.mrb[0].mxu0 %v324
    %v5880 = vpop.f32.mrb[0].mxu0
    %v5881 = vadd.f32 %v163, %v5880
    %v5882 = vpop.f32.mrb[0].mxu0
    %5883 = vmatprep.mubr.f32.mxu0 0.0
    %5884 = vmatmul.mubr.f32.gmra.mrb[0].mxu0 %v327
    %v5885 = vpop.f32.mrb[0].mxu0
    %v5886 = vadd.f32 %v168, %v5885
    %v5887 = vpop.f32.mrb[0].mxu0
    %5888 = vmatprep.mubr.f32.mxu0 0.0
    %5889 = vmatmul.mubr.f32.gmra.mrb[0].mxu0 %v330
    %v5890 = vpop.f32.mrb[0].mxu0
    %v5891 = vadd.f32 %v173, %v5890
    %v5892 = vpop.f32.mrb[0].mxu0
    %5893 = vmatprep.mubr.f32.mxu0 0.0
    %5894 = vmatmul.mubr.f32.gmra.mrb[0].mxu0 %v333
    %v5895 = vpop.f32.mrb[0].mxu0
    %v5896 = vadd.f32 %v178, %v5895
    %v5897 = vpop.f32.mrb[0].mxu0
    %5898 = vmatprep.mubr.f32.mxu0 0.0
    %5899 = vmatmul.mubr.f32.gmra.mrb[0].mxu0 %v336
    %v5900 = vpop.f32.mrb[0].mxu0
    %v5901 = vadd.f32 %v183, %v5900
    %v5902 = vpop.f32.mrb[0].mxu0
    %5903 = vmatprep.mubr.f32.mxu0 0.0
    %5904 = vmatmul.mubr.f32.gmra.mrb[0].mxu0 %v339
    %v5905 = vpop.f32.mrb[0].mxu0
    %v5906 = vadd.f32 %v188, %v5905
    %v5907 = vpop.f32.mrb[0].mxu0
    %5908 = vmatprep.mubr.f32.mxu0 0.0
    %5909 = vmatmul.mubr.f32.gmra.mrb[0].mxu0 %v342
    %v5910 = vpop.f32.mrb[0].mxu0
    %v5911 = vadd.f32 %v193, %v5910
    %v5912 = vpop.f32.mrb[0].mxu0
    %5913 = vmatprep.mubr.f32.mxu0 0.0
    %5914 = vmatmul.mubr.f32.gmra.mrb[0].mxu0 %v345
    %v5915 = vpop.f32.mrb[0].mxu0
    %v5916 = vadd.f32 %v198, %v5915
    %v5917 = vpop.f32.mrb[0].mxu0
    %5918 = vmatprep.mubr.f32.mxu0 0.0
    %5919 = vmatmul.mubr.f32.gmra.mrb[0].mxu0 %v348
    %v5920 = vpop.f32.mrb[0].mxu0
    %v5921 = vadd.f32 %v203, %v5920
    %v5922 = vpop.f32.mrb[0].mxu0
    %5923 = vmatprep.mubr.f32.mxu0 0.0
    %5924 = vmatmul.mubr.f32.gmra.mrb[0].mxu0 %v351
    %v5925 = vpop.f32.mrb[0].mxu0
    %v5926 = vadd.f32 %v208, %v5925
    %v5927 = vpop.f32.mrb[0].mxu0
    %5928 = vmatprep.mubr.f32.mxu0 0.0
    %5929 = vmatmul.mubr.f32.gmra.mrb[0].mxu0 %v354
    %v5930 = vpop.f32.mrb[0].mxu0
    %v5931 = vadd.f32 %v213, %v5930
    %v5932 = vpop.f32.mrb[0].mxu0
    %5933 = vmatprep.mubr.f32.mxu0 0.0
    %5934 = vmatmul.mubr.f32.gmra.mrb[0].mxu0 %v357
    %v5935 = vpop.f32.mrb[0].mxu0
    %v5936 = vadd.f32 %v218, %v5935
    %v5937 = vpop.f32.mrb[0].mxu0
    %5938 = vmatprep.mubr.f32.mxu0 0.0
    %5939 = vmatmul.mubr.f32.gmra.mrb[0].mxu0 %v360
    %v5940 = vpop.f32.mrb[0].mxu0
    %v5941 = vadd.f32 %v223, %v5940
    %v5942 = vpop.f32.mrb[0].mxu0
    %5943 = vmatprep.mubr.f32.mxu0 0.0
    %5944 = vmatmul.mubr.f32.gmra.mrb[0].mxu0 %v363
    %v5945 = vpop.f32.mrb[0].mxu0
    %v5946 = vadd.f32 %v228, %v5945
    %v5947 = vpop.f32.mrb[0].mxu0
    %5948 = vmatprep.mubr.f32.mxu0 0.0
    %5949 = vmatmul.mubr.f32.gmra.mrb[0].mxu0 %v366
    %v5950 = vpop.f32.mrb[0].mxu0
    %v5951 = vadd.f32 %v233, %v5950
    %v5952 = vpop.f32.mrb[0].mxu0
    %5953 = vmatprep.mubr.f32.mxu0 0.0
    %5954 = vmatmul.mubr.f32.gmra.mrb[0].mxu0 %v369
    %v5955 = vpop.f32.mrb[0].mxu0
    %v5956 = vadd.f32 %v238, %v5955
    %v5957 = vpop.f32.mrb[0].mxu0
    %5958 = vmatprep.mubr.f32.mxu0 0.0
    %5959 = vmatmul.mubr.f32.gmra.mrb[0].mxu0 %v372
    %v5960 = vpop.f32.mrb[0].mxu0
    %v5961 = vadd.f32 %v243, %v5960
    %v5962 = vpop.f32.mrb[0].mxu0
    %5963 = vmatprep.mubr.f32.mxu0 0.0
    %5964 = vmatmul.mubr.f32.gmra.mrb[0].mxu0 %v375
    %v5965 = vpop.f32.mrb[0].mxu0
    %v5966 = vadd.f32 %v248, %v5965
    %v5967 = vpop.f32.mrb[0].mxu0
    %5968 = vmatprep.mubr.f32.mxu0 0.0
    %5969 = vmatmul.mubr.f32.gmra.mrb[0].mxu0 %v378
    %v5970 = vpop.f32.mrb[0].mxu0
    %v5971 = vadd.f32 %v253, %v5970
    %v5972 = vpop.f32.mrb[0].mxu0
    %5973 = vmatprep.mubr.f32.mxu0 0.0
    %5974 = vmatmul.mubr.f32.gmra.mrb[0].mxu0 %v381
    %v5975 = vpop.f32.mrb[0].mxu0
    %v5976 = vadd.f32 %v258, %v5975
    %v5977 = vpop.f32.mrb[0].mxu0
    %5978 = vmatprep.mubr.f32.mxu0 0.0
    %5979 = vmatmul.mubr.f32.gmra.mrb[0].mxu0 %v384
    %v5980 = vpop.f32.mrb[0].mxu0
    %v5981 = vadd.f32 %v263, %v5980
    %v5982 = vpop.f32.mrb[0].mxu0
    %5983 = vmatprep.mubr.f32.mxu0 0.0
    %5984 = vmatmul.mubr.f32.gmra.mrb[0].mxu0 %v387
    %v5985 = vpop.f32.mrb[0].mxu0
    %v5986 = vadd.f32 %v268, %v5985
    %v5987 = vpop.f32.mrb[0].mxu0
    %5988 = vmatprep.mubr.f32.mxu0 0.0
    %5989 = vmatmul.mubr.f32.gmra.mrb[0].mxu0 %v390
    %v5990 = vpop.f32.mrb[0].mxu0
    %v5991 = vadd.f32 %v273, %v5990
    %v5992 = vpop.f32.mrb[0].mxu0
    %5993 = vmatprep.mubr.f32.mxu0 0.0
    %5994 = vmatmul.mubr.f32.gmra.mrb[0].mxu0 %v393
    %v5995 = vpop.f32.mrb[0].mxu0
    %v5996 = vadd.f32 %v278, %v5995
    %v5997 = vpop.f32.mrb[0].mxu0
    %5998 = vmatprep.mubr.f32.mxu0 0.0
    %5999 = vmatmul.mubr.f32.gmra.mrb[0].mxu0 %v396
    %v6000 = vpop.f32.mrb[0].mxu0
    %v6001 = vadd.f32 %v283, %v6000
    %v6002 = vpop.f32.mrb[0].mxu0
    %6003 = vdwg.mxu0
    %6004 = vmatprep.subr.mxu0 0.0
    %6005 = vmatpush1.msra.mxu0 %v5746
    %6006 = vmatprep.subr.mxu0 0.0
    %6007 = vmatpush1.msra.mxu0 %v5747
    %6008 = vmatprep.subr.mxu0 0.0
    %6009 = vmatpush1.msra.mxu0 %v5748
    %6010 = vmatprep.subr.mxu0 0.0
    %6011 = vmatpush1.msra.mxu0 %v5749
    %6012 = vmatprep.subr.mxu0 0.0
    %6013 = vmatpush1.msra.mxu0 %v5750
    %6014 = vmatprep.subr.mxu0 0.0
    %6015 = vmatpush1.msra.mxu0 %v5751
    %6016 = vmatprep.subr.mxu0 0.0
    %6017 = vmatpush1.msra.mxu0 %v5752
    %6018 = vmatprep.subr.mxu0 0.0
    %6019 = vmatpush1.msra.mxu0 %v5753
    %6020 = vmatprep.subr.mxu0 0.0
    %6021 = vmatpush1.msra.mxu0 0.0
    %6022 = vmatprep.subr.mxu0 0.0
    %6023 = vmatpush1.msra.mxu0 0.0
    %6024 = vmatprep.subr.mxu0 0.0
    %6025 = vmatpush1.msra.mxu0 0.0
    %6026 = vmatprep.subr.mxu0 0.0
    %6027 = vmatpush1.msra.mxu0 0.0
    %6028 = vmatprep.subr.mxu0 0.0
    %6029 = vmatpush1.msra.mxu0 0.0
    %6030 = vmatprep.subr.mxu0 0.0
    %6031 = vmatpush1.msra.mxu0 0.0
    %6032 = vmatprep.subr.mxu0 0.0
    %6033 = vmatpush1.msra.mxu0 0.0
    %6034 = vmatprep.subr.mxu0 0.0
    %6035 = vmatpush1.msra.mxu0 0.0
    %6036 = vmatprep.subr.mxu0 0.0
    %6037 = vmatpush1.msra.mxu0 0.0
    %6038 = vmatprep.subr.mxu0 0.0
    %6039 = vmatpush1.msra.mxu0 0.0
    %6040 = vmatprep.subr.mxu0 0.0
    %6041 = vmatpush1.msra.mxu0 0.0
    %6042 = vmatprep.subr.mxu0 0.0
    %6043 = vmatpush1.msra.mxu0 0.0
    %6044 = vmatprep.subr.mxu0 0.0
    %6045 = vmatpush1.msra.mxu0 0.0
    %6046 = vmatprep.subr.mxu0 0.0
    %6047 = vmatpush1.msra.mxu0 0.0
    %6048 = vmatprep.subr.mxu0 0.0
    %6049 = vmatpush1.msra.mxu0 0.0
    %6050 = vmatprep.subr.mxu0 0.0
    %6051 = vmatpush1.msra.mxu0 0.0
    %6052 = vmatprep.subr.mxu0 0.0
    %6053 = vmatpush1.msra.mxu0 0.0
    %6054 = vmatprep.subr.mxu0 0.0
    %6055 = vmatpush1.msra.mxu0 0.0
    %6056 = vmatprep.subr.mxu0 0.0
    %6057 = vmatpush1.msra.mxu0 0.0
    %6058 = vmatprep.subr.mxu0 0.0
    %6059 = vmatpush1.msra.mxu0 0.0
    %6060 = vmatprep.subr.mxu0 0.0
    %6061 = vmatpush1.msra.mxu0 0.0
    %6062 = vmatprep.subr.mxu0 0.0
    %6063 = vmatpush1.msra.mxu0 0.0
    %6064 = vmatprep.subr.mxu0 0.0
    %6065 = vmatpush1.msra.mxu0 0.0
    %6066 = vmatprep.subr.mxu0 0.0
    %6067 = vmatpush1.msra.mxu0 0.0
    %6068 = vmatprep.mubr.f32.mxu0 0.0
    %6069 = vmatmul.mubr.f32.gmra.mrb[0].mxu0 %v624
    %v6070 = vpop.f32.mrb[0].mxu0
    %v6071 = vadd.f32 0.0, %v6070
    %v6072 = vpop.f32.mrb[0].mxu0
    %6073 = vmatprep.mubr.f32.mxu0 0.0
    %6074 = vmatmul.mubr.f32.gmra.mrb[0].mxu0 %v627
    %v6075 = vpop.f32.mrb[0].mxu0
    %v6076 = vadd.f32 0.0, %v6075
    %v6077 = vpop.f32.mrb[0].mxu0
    %6078 = vmatprep.mubr.f32.mxu0 0.0
    %6079 = vmatmul.mubr.f32.gmra.mrb[0].mxu0 %v630
    %v6080 = vpop.f32.mrb[0].mxu0
    %v6081 = vadd.f32 0.0, %v6080
    %v6082 = vpop.f32.mrb[0].mxu0
    %6083 = vmatprep.mubr.f32.mxu0 0.0
    %6084 = vmatmul.mubr.f32.gmra.mrb[0].mxu0 %v633
    %v6085 = vpop.f32.mrb[0].mxu0
    %v6086 = vadd.f32 0.0, %v6085
    %v6087 = vpop.f32.mrb[0].mxu0
    %6088 = vmatprep.mubr.f32.mxu0 0.0
    %6089 = vmatmul.mubr.f32.gmra.mrb[0].mxu0 %v636
    %v6090 = vpop.f32.mrb[0].mxu0
    %v6091 = vadd.f32 0.0, %v6090
    %v6092 = vpop.f32.mrb[0].mxu0
    %6093 = vmatprep.mubr.f32.mxu0 0.0
    %6094 = vmatmul.mubr.f32.gmra.mrb[0].mxu0 %v639
    %v6095 = vpop.f32.mrb[0].mxu0
    %v6096 = vadd.f32 0.0, %v6095
    %v6097 = vpop.f32.mrb[0].mxu0
    %6098 = vmatprep.mubr.f32.mxu0 0.0
    %6099 = vmatmul.mubr.f32.gmra.mrb[0].mxu0 %v642
    %v6100 = vpop.f32.mrb[0].mxu0
    %v6101 = vadd.f32 0.0, %v6100
    %v6102 = vpop.f32.mrb[0].mxu0
    %6103 = vmatprep.mubr.f32.mxu0 0.0
    %6104 = vmatmul.mubr.f32.gmra.mrb[0].mxu0 %v645
    %v6105 = vpop.f32.mrb[0].mxu0
    %v6106 = vadd.f32 0.0, %v6105
    %v6107 = vpop.f32.mrb[0].mxu0
    %6108 = vmatprep.mubr.f32.mxu0 0.0
    %6109 = vmatmul.mubr.f32.gmra.mrb[0].mxu0 %v648
    %v6110 = vpop.f32.mrb[0].mxu0
    %v6111 = vadd.f32 0.0, %v6110
    %v6112 = vpop.f32.mrb[0].mxu0
    %6113 = vmatprep.mubr.f32.mxu0 0.0
    %6114 = vmatmul.mubr.f32.gmra.mrb[0].mxu0 %v651
    %v6115 = vpop.f32.mrb[0].mxu0
    %v6116 = vadd.f32 0.0, %v6115
    %v6117 = vpop.f32.mrb[0].mxu0
    %6118 = vmatprep.mubr.f32.mxu0 0.0
    %6119 = vmatmul.mubr.f32.gmra.mrb[0].mxu0 %v654
    %v6120 = vpop.f32.mrb[0].mxu0
    %v6121 = vadd.f32 0.0, %v6120
    %v6122 = vpop.f32.mrb[0].mxu0
    %6123 = vmatprep.mubr.f32.mxu0 0.0
    %6124 = vmatmul.mubr.f32.gmra.mrb[0].mxu0 %v657
    %v6125 = vpop.f32.mrb[0].mxu0
    %v6126 = vadd.f32 0.0, %v6125
    %v6127 = vpop.f32.mrb[0].mxu0
    %6128 = vmatprep.mubr.f32.mxu0 0.0
    %6129 = vmatmul.mubr.f32.gmra.mrb[0].mxu0 %v660
    %v6130 = vpop.f32.mrb[0].mxu0
    %v6131 = vadd.f32 0.0, %v6130
    %v6132 = vpop.f32.mrb[0].mxu0
    %6133 = vmatprep.mubr.f32.mxu0 0.0
    %6134 = vmatmul.mubr.f32.gmra.mrb[0].mxu0 %v663
    %v6135 = vpop.f32.mrb[0].mxu0
    %v6136 = vadd.f32 0.0, %v6135
    %v6137 = vpop.f32.mrb[0].mxu0
    %6138 = vmatprep.mubr.f32.mxu0 0.0
    %6139 = vmatmul.mubr.f32.gmra.mrb[0].mxu0 %v666
    %v6140 = vpop.f32.mrb[0].mxu0
    %v6141 = vadd.f32 0.0, %v6140
    %v6142 = vpop.f32.mrb[0].mxu0
    %6143 = vmatprep.mubr.f32.mxu0 0.0
    %6144 = vmatmul.mubr.f32.gmra.mrb[0].mxu0 %v669
    %v6145 = vpop.f32.mrb[0].mxu0
    %v6146 = vadd.f32 0.0, %v6145
    %v6147 = vpop.f32.mrb[0].mxu0
    %6148 = vmatprep.mubr.f32.mxu0 0.0
    %6149 = vmatmul.mubr.f32.gmra.mrb[0].mxu0 %v672
    %v6150 = vpop.f32.mrb[0].mxu0
    %v6151 = vadd.f32 0.0, %v6150
    %v6152 = vpop.f32.mrb[0].mxu0
    %6153 = vmatprep.mubr.f32.mxu0 0.0
    %6154 = vmatmul.mubr.f32.gmra.mrb[0].mxu0 %v675
    %v6155 = vpop.f32.mrb[0].mxu0
    %v6156 = vadd.f32 0.0, %v6155
    %v6157 = vpop.f32.mrb[0].mxu0
    %6158 = vmatprep.mubr.f32.mxu0 0.0
    %6159 = vmatmul.mubr.f32.gmra.mrb[0].mxu0 %v678
    %v6160 = vpop.f32.mrb[0].mxu0
    %v6161 = vadd.f32 0.0, %v6160
    %v6162 = vpop.f32.mrb[0].mxu0
    %6163 = vmatprep.mubr.f32.mxu0 0.0
    %6164 = vmatmul.mubr.f32.gmra.mrb[0].mxu0 %v681
    %v6165 = vpop.f32.mrb[0].mxu0
    %v6166 = vadd.f32 0.0, %v6165
    %v6167 = vpop.f32.mrb[0].mxu0
    %6168 = vmatprep.mubr.f32.mxu0 0.0
    %6169 = vmatmul.mubr.f32.gmra.mrb[0].mxu0 %v684
    %v6170 = vpop.f32.mrb[0].mxu0
    %v6171 = vadd.f32 0.0, %v6170
    %v6172 = vpop.f32.mrb[0].mxu0
    %6173 = vmatprep.mubr.f32.mxu0 0.0
    %6174 = vmatmul.mubr.f32.gmra.mrb[0].mxu0 %v687
    %v6175 = vpop.f32.mrb[0].mxu0
    %v6176 = vadd.f32 0.0, %v6175
    %v6177 = vpop.f32.mrb[0].mxu0
    %6178 = vmatprep.mubr.f32.mxu0 0.0
    %6179 = vmatmul.mubr.f32.gmra.mrb[0].mxu0 %v690
    %v6180 = vpop.f32.mrb[0].mxu0
    %v6181 = vadd.f32 0.0, %v6180
    %v6182 = vpop.f32.mrb[0].mxu0
    %6183 = vmatprep.mubr.f32.mxu0 0.0
    %6184 = vmatmul.mubr.f32.gmra.mrb[0].mxu0 %v693
    %v6185 = vpop.f32.mrb[0].mxu0
    %v6186 = vadd.f32 0.0, %v6185
    %v6187 = vpop.f32.mrb[0].mxu0
    %6188 = vmatprep.mubr.f32.mxu0 0.0
    %6189 = vmatmul.mubr.f32.gmra.mrb[0].mxu0 %v696
    %v6190 = vpop.f32.mrb[0].mxu0
    %v6191 = vadd.f32 0.0, %v6190
    %v6192 = vpop.f32.mrb[0].mxu0
    %6193 = vmatprep.mubr.f32.mxu0 0.0
    %6194 = vmatmul.mubr.f32.gmra.mrb[0].mxu0 %v699
    %v6195 = vpop.f32.mrb[0].mxu0
    %v6196 = vadd.f32 0.0, %v6195
    %v6197 = vpop.f32.mrb[0].mxu0
    %6198 = vmatprep.mubr.f32.mxu0 0.0
    %6199 = vmatmul.mubr.f32.gmra.mrb[0].mxu0 %v702
    %v6200 = vpop.f32.mrb[0].mxu0
    %v6201 = vadd.f32 0.0, %v6200
    %v6202 = vpop.f32.mrb[0].mxu0
    %6203 = vmatprep.mubr.f32.mxu0 0.0
    %6204 = vmatmul.mubr.f32.gmra.mrb[0].mxu0 %v705
    %v6205 = vpop.f32.mrb[0].mxu0
    %v6206 = vadd.f32 0.0, %v6205
    %v6207 = vpop.f32.mrb[0].mxu0
    %6208 = vmatprep.mubr.f32.mxu0 0.0
    %6209 = vmatmul.mubr.f32.gmra.mrb[0].mxu0 %v708
    %v6210 = vpop.f32.mrb[0].mxu0
    %v6211 = vadd.f32 0.0, %v6210
    %v6212 = vpop.f32.mrb[0].mxu0
    %6213 = vmatprep.mubr.f32.mxu0 0.0
    %6214 = vmatmul.mubr.f32.gmra.mrb[0].mxu0 %v711
    %v6215 = vpop.f32.mrb[0].mxu0
    %v6216 = vadd.f32 0.0, %v6215
    %v6217 = vpop.f32.mrb[0].mxu0
    %6218 = vmatprep.mubr.f32.mxu0 0.0
    %6219 = vmatmul.mubr.f32.gmra.mrb[0].mxu0 %v714
    %v6220 = vpop.f32.mrb[0].mxu0
    %v6221 = vadd.f32 0.0, %v6220
    %v6222 = vpop.f32.mrb[0].mxu0
    %6223 = vmatprep.mubr.f32.mxu0 0.0
    %6224 = vmatmul.mubr.f32.gmra.mrb[0].mxu0 %v717
    %v6225 = vpop.f32.mrb[0].mxu0
    %v6226 = vadd.f32 0.0, %v6225
    %v6227 = vpop.f32.mrb[0].mxu0
    %6228 = vdwg.mxu0
    %v6229 = vadd.f32 %v5846, %v6071
    %v6230 = vadd.f32 %v5851, %v6076
    %v6231 = vadd.f32 %v5856, %v6081
    %v6232 = vadd.f32 %v5861, %v6086
    %v6233 = vadd.f32 %v5866, %v6091
    %v6234 = vadd.f32 %v5871, %v6096
    %v6235 = vadd.f32 %v5876, %v6101
    %v6236 = vadd.f32 %v5881, %v6106
    %v6237 = vadd.f32 %v5886, %v6111
    %v6238 = vadd.f32 %v5891, %v6116
    %v6239 = vadd.f32 %v5896, %v6121
    %v6240 = vadd.f32 %v5901, %v6126
    %v6241 = vadd.f32 %v5906, %v6131
    %v6242 = vadd.f32 %v5911, %v6136
    %v6243 = vadd.f32 %v5916, %v6141
    %v6244 = vadd.f32 %v5921, %v6146
    %v6245 = vadd.f32 %v5926, %v6151
    %v6246 = vadd.f32 %v5931, %v6156
    %v6247 = vadd.f32 %v5936, %v6161
    %v6248 = vadd.f32 %v5941, %v6166
    %v6249 = vadd.f32 %v5946, %v6171
    %v6250 = vadd.f32 %v5951, %v6176
    %v6251 = vadd.f32 %v5956, %v6181
    %v6252 = vadd.f32 %v5961, %v6186
    %v6253 = vadd.f32 %v5966, %v6191
    %v6254 = vadd.f32 %v5971, %v6196
    %v6255 = vadd.f32 %v5976, %v6201
    %v6256 = vadd.f32 %v5981, %v6206
    %v6257 = vadd.f32 %v5986, %v6211
    %v6258 = vadd.f32 %v5991, %v6216
    %v6259 = vadd.f32 %v5996, %v6221
    %v6260 = vadd.f32 %v6001, %v6226
    %v6261 = vxor.u32 %v6229, 2147483648
    %v6262 = vxor.u32 %v6230, 2147483648
    %v6263 = vxor.u32 %v6231, 2147483648
    %v6264 = vxor.u32 %v6232, 2147483648
    %v6265 = vxor.u32 %v6233, 2147483648
    %v6266 = vxor.u32 %v6234, 2147483648
    %v6267 = vxor.u32 %v6235, 2147483648
    %v6268 = vxor.u32 %v6236, 2147483648
    %v6269 = vxor.u32 %v6237, 2147483648
    %v6270 = vxor.u32 %v6238, 2147483648
    %v6271 = vxor.u32 %v6239, 2147483648
    %v6272 = vxor.u32 %v6240, 2147483648
    %v6273 = vxor.u32 %v6241, 2147483648
    %v6274 = vxor.u32 %v6242, 2147483648
    %v6275 = vxor.u32 %v6243, 2147483648
    %v6276 = vxor.u32 %v6244, 2147483648
    %v6277 = vxor.u32 %v6245, 2147483648
    %v6278 = vxor.u32 %v6246, 2147483648
    %v6279 = vxor.u32 %v6247, 2147483648
    %v6280 = vxor.u32 %v6248, 2147483648
    %v6281 = vxor.u32 %v6249, 2147483648
    %v6282 = vxor.u32 %v6250, 2147483648
    %v6283 = vxor.u32 %v6251, 2147483648
    %v6284 = vxor.u32 %v6252, 2147483648
    %v6285 = vxor.u32 %v6253, 2147483648
    %v6286 = vxor.u32 %v6254, 2147483648
    %v6287 = vxor.u32 %v6255, 2147483648
    %v6288 = vxor.u32 %v6256, 2147483648
    %v6289 = vxor.u32 %v6257, 2147483648
    %v6290 = vxor.u32 %v6258, 2147483648
    %v6291 = vxor.u32 %v6259, 2147483648
    %v6292 = vxor.u32 %v6260, 2147483648
    %v6293 = vmul.f32 %v6261, 1.442695
    %v6294 = vpow.pop %v6293
    %v6295 = vmul.f32 %v6262, 1.442695
    %v6296 = vpow.pop %v6295
    %v6297 = vmul.f32 %v6263, 1.442695
    %v6298 = vpow.pop %v6297
    %v6299 = vmul.f32 %v6264, 1.442695
    %v6300 = vpow.pop %v6299
    %v6301 = vmul.f32 %v6265, 1.442695
    %v6302 = vpow.pop %v6301
    %v6303 = vmul.f32 %v6266, 1.442695
    %v6304 = vpow.pop %v6303
    %v6305 = vmul.f32 %v6267, 1.442695
    %v6306 = vpow.pop %v6305
    %v6307 = vmul.f32 %v6268, 1.442695
    %v6308 = vpow.pop %v6307
    %v6309 = vmul.f32 %v6269, 1.442695
    %v6310 = vpow.pop %v6309
    %v6311 = vmul.f32 %v6270, 1.442695
    %v6312 = vpow.pop %v6311
    %v6313 = vmul.f32 %v6271, 1.442695
    %v6314 = vpow.pop %v6313
    %v6315 = vmul.f32 %v6272, 1.442695
    %v6316 = vpow.pop %v6315
    %v6317 = vmul.f32 %v6273, 1.442695
    %v6318 = vpow.pop %v6317
    %v6319 = vmul.f32 %v6274, 1.442695
    %v6320 = vpow.pop %v6319
    %v6321 = vmul.f32 %v6275, 1.442695
    %v6322 = vpow.pop %v6321
    %v6323 = vmul.f32 %v6276, 1.442695
    %v6324 = vpow.pop %v6323
    %v6325 = vmul.f32 %v6277, 1.442695
    %v6326 = vpow.pop %v6325
    %v6327 = vmul.f32 %v6278, 1.442695
    %v6328 = vpow.pop %v6327
    %v6329 = vmul.f32 %v6279, 1.442695
    %v6330 = vpow.pop %v6329
    %v6331 = vmul.f32 %v6280, 1.442695
    %v6332 = vpow.pop %v6331
    %v6333 = vmul.f32 %v6281, 1.442695
    %v6334 = vpow.pop %v6333
    %v6335 = vmul.f32 %v6282, 1.442695
    %v6336 = vpow.pop %v6335
    %v6337 = vmul.f32 %v6283, 1.442695
    %v6338 = vpow.pop %v6337
    %v6339 = vmul.f32 %v6284, 1.442695
    %v6340 = vpow.pop %v6339
    %v6341 = vmul.f32 %v6285, 1.442695
    %v6342 = vpow.pop %v6341
    %v6343 = vmul.f32 %v6286, 1.442695
    %v6344 = vpow.pop %v6343
    %v6345 = vmul.f32 %v6287, 1.442695
    %v6346 = vpow.pop %v6345
    %v6347 = vmul.f32 %v6288, 1.442695
    %v6348 = vpow.pop %v6347
    %v6349 = vmul.f32 %v6289, 1.442695
    %v6350 = vpow.pop %v6349
    %v6351 = vmul.f32 %v6290, 1.442695
    %v6352 = vpow.pop %v6351
    %v6353 = vmul.f32 %v6291, 1.442695
    %v6354 = vpow.pop %v6353
    %v6355 = vmul.f32 %v6292, 1.442695
    %v6356 = vpow.pop %v6355
    %v6357 = vadd.f32 %v6294, 1.0
    %v6358 = vadd.f32 %v6296, 1.0
    %v6359 = vadd.f32 %v6298, 1.0
    %v6360 = vadd.f32 %v6300, 1.0
    %v6361 = vadd.f32 %v6302, 1.0
    %v6362 = vadd.f32 %v6304, 1.0
    %v6363 = vadd.f32 %v6306, 1.0
    %v6364 = vadd.f32 %v6308, 1.0
    %v6365 = vadd.f32 %v6310, 1.0
    %v6366 = vadd.f32 %v6312, 1.0
    %v6367 = vadd.f32 %v6314, 1.0
    %v6368 = vadd.f32 %v6316, 1.0
    %v6369 = vadd.f32 %v6318, 1.0
    %v6370 = vadd.f32 %v6320, 1.0
    %v6371 = vadd.f32 %v6322, 1.0
    %v6372 = vadd.f32 %v6324, 1.0
    %v6373 = vadd.f32 %v6326, 1.0
    %v6374 = vadd.f32 %v6328, 1.0
    %v6375 = vadd.f32 %v6330, 1.0
    %v6376 = vadd.f32 %v6332, 1.0
    %v6377 = vadd.f32 %v6334, 1.0
    %v6378 = vadd.f32 %v6336, 1.0
    %v6379 = vadd.f32 %v6338, 1.0
    %v6380 = vadd.f32 %v6340, 1.0
    %v6381 = vadd.f32 %v6342, 1.0
    %v6382 = vadd.f32 %v6344, 1.0
    %v6383 = vadd.f32 %v6346, 1.0
    %v6384 = vadd.f32 %v6348, 1.0
    %v6385 = vadd.f32 %v6350, 1.0
    %v6386 = vadd.f32 %v6352, 1.0
    %v6387 = vadd.f32 %v6354, 1.0
    %v6388 = vadd.f32 %v6356, 1.0
    %v6389 = vrcp.pop %v6357
    %v6390 = vmul.f32 1.0, %v6389
    %v6391 = vrcp.pop %v6358
    %v6392 = vmul.f32 1.0, %v6391
    %v6393 = vrcp.pop %v6359
    %v6394 = vmul.f32 1.0, %v6393
    %v6395 = vrcp.pop %v6360
    %v6396 = vmul.f32 1.0, %v6395
    %v6397 = vrcp.pop %v6361
    %v6398 = vmul.f32 1.0, %v6397
    %v6399 = vrcp.pop %v6362
    %v6400 = vmul.f32 1.0, %v6399
    %v6401 = vrcp.pop %v6363
    %v6402 = vmul.f32 1.0, %v6401
    %v6403 = vrcp.pop %v6364
    %v6404 = vmul.f32 1.0, %v6403
    %v6405 = vrcp.pop %v6365
    %v6406 = vmul.f32 1.0, %v6405
    %v6407 = vrcp.pop %v6366
    %v6408 = vmul.f32 1.0, %v6407
    %v6409 = vrcp.pop %v6367
    %v6410 = vmul.f32 1.0, %v6409
    %v6411 = vrcp.pop %v6368
    %v6412 = vmul.f32 1.0, %v6411
    %v6413 = vrcp.pop %v6369
    %v6414 = vmul.f32 1.0, %v6413
    %v6415 = vrcp.pop %v6370
    %v6416 = vmul.f32 1.0, %v6415
    %v6417 = vrcp.pop %v6371
    %v6418 = vmul.f32 1.0, %v6417
    %v6419 = vrcp.pop %v6372
    %v6420 = vmul.f32 1.0, %v6419
    %v6421 = vrcp.pop %v6373
    %v6422 = vmul.f32 1.0, %v6421
    %v6423 = vrcp.pop %v6374
    %v6424 = vmul.f32 1.0, %v6423
    %v6425 = vrcp.pop %v6375
    %v6426 = vmul.f32 1.0, %v6425
    %v6427 = vrcp.pop %v6376
    %v6428 = vmul.f32 1.0, %v6427
    %v6429 = vrcp.pop %v6377
    %v6430 = vmul.f32 1.0, %v6429
    %v6431 = vrcp.pop %v6378
    %v6432 = vmul.f32 1.0, %v6431
    %v6433 = vrcp.pop %v6379
    %v6434 = vmul.f32 1.0, %v6433
    %v6435 = vrcp.pop %v6380
    %v6436 = vmul.f32 1.0, %v6435
    %v6437 = vrcp.pop %v6381
    %v6438 = vmul.f32 1.0, %v6437
    %v6439 = vrcp.pop %v6382
    %v6440 = vmul.f32 1.0, %v6439
    %v6441 = vrcp.pop %v6383
    %v6442 = vmul.f32 1.0, %v6441
    %v6443 = vrcp.pop %v6384
    %v6444 = vmul.f32 1.0, %v6443
    %v6445 = vrcp.pop %v6385
    %v6446 = vmul.f32 1.0, %v6445
    %v6447 = vrcp.pop %v6386
    %v6448 = vmul.f32 1.0, %v6447
    %v6449 = vrcp.pop %v6387
    %v6450 = vmul.f32 1.0, %v6449
    %v6451 = vrcp.pop %v6388
    %v6452 = vmul.f32 1.0, %v6451
    %v6453 = vmul.f32 %v6422, 2.0
    %v6454 = vmul.f32 %v6424, 2.0
    %v6455 = vmul.f32 %v6426, 2.0
    %v6456 = vmul.f32 %v6428, 2.0
    %v6457 = vmul.f32 %v6430, 2.0
    %v6458 = vmul.f32 %v6432, 2.0
    %v6459 = vmul.f32 %v6434, 2.0
    %v6460 = vmul.f32 %v6436, 2.0
    %v6461 = vsub.f32 %v6453, 1.0
    %v6462 = vsub.f32 %v6454, 1.0
    %v6463 = vsub.f32 %v6455, 1.0
    %v6464 = vsub.f32 %v6456, 1.0
    %v6465 = vsub.f32 %v6457, 1.0
    %v6466 = vsub.f32 %v6458, 1.0
    %v6467 = vsub.f32 %v6459, 1.0
    %v6468 = vsub.f32 %v6460, 1.0
    %v6469 = vmul.f32 %v6406, %v5730
    %v6470 = vmul.f32 %v6408, %v5731
    %v6471 = vmul.f32 %v6410, %v5732
    %v6472 = vmul.f32 %v6412, %v5733
    %v6473 = vmul.f32 %v6414, %v5734
    %v6474 = vmul.f32 %v6416, %v5735
    %v6475 = vmul.f32 %v6418, %v5736
    %v6476 = vmul.f32 %v6420, %v5737
    %v6477 = vmul.f32 %v6390, %v6461
    %v6478 = vmul.f32 %v6392, %v6462
    %v6479 = vmul.f32 %v6394, %v6463
    %v6480 = vmul.f32 %v6396, %v6464
    %v6481 = vmul.f32 %v6398, %v6465
    %v6482 = vmul.f32 %v6400, %v6466
    %v6483 = vmul.f32 %v6402, %v6467
    %v6484 = vmul.f32 %v6404, %v6468
    %v6485 = vadd.f32 %v6469, %v6477
    %v6486 = vadd.f32 %v6470, %v6478
    %v6487 = vadd.f32 %v6471, %v6479
    %v6488 = vadd.f32 %v6472, %v6480
    %v6489 = vadd.f32 %v6473, %v6481
    %v6490 = vadd.f32 %v6474, %v6482
    %v6491 = vadd.f32 %v6475, %v6483
    %v6492 = vadd.f32 %v6476, %v6484
    %v6493 = vtanh.pop %v6485
    %v6494 = vtanh.pop %v6486
    %v6495 = vtanh.pop %v6487
    %v6496 = vtanh.pop %v6488
    %v6497 = vtanh.pop %v6489
    %v6498 = vtanh.pop %v6490
    %v6499 = vtanh.pop %v6491
    %v6500 = vtanh.pop %v6492
    %v6501 = vmul.f32 %v6438, %v6493
    %v6502 = vmul.f32 %v6440, %v6494
    %v6503 = vmul.f32 %v6442, %v6495
    %v6504 = vmul.f32 %v6444, %v6496
    %v6505 = vmul.f32 %v6446, %v6497
    %v6506 = vmul.f32 %v6448, %v6498
    %v6507 = vmul.f32 %v6450, %v6499
    %v6508 = vmul.f32 %v6452, %v6500
    %v6509 = vadd.f32 %v5754, %v6501
    %v6510 = vadd.f32 %v5755, %v6502
    %v6511 = vadd.f32 %v5756, %v6503
    %v6512 = vadd.f32 %v5757, %v6504
    %v6513 = vadd.f32 %v5758, %v6505
    %v6514 = vadd.f32 %v5759, %v6506
    %v6515 = vadd.f32 %v5760, %v6507
    %v6516 = vadd.f32 %v5761, %v6508
    %6518 = vset.pattern.permute.xlu0 0
    %6519 = vperm.xlu0 %6518, %v85
    %v6520 = vpop.permute.xlu0 %6519
    %6523 = vset.pattern.permute.xlu0 0
    %6524 = vperm.xlu0 %6523, %v86
    %v6525 = vpop.permute.xlu0 %6524
    %6528 = vset.pattern.permute.xlu0 0
    %6529 = vperm.xlu0 %6528, %v87
    %v6530 = vpop.permute.xlu0 %6529
    %6533 = vset.pattern.permute.xlu0 0
    %6534 = vperm.xlu0 %6533, %v88
    %v6535 = vpop.permute.xlu0 %6534
    %6538 = vset.pattern.permute.xlu0 0
    %6539 = vperm.xlu0 %6538, %v89
    %v6540 = vpop.permute.xlu0 %6539
    %6543 = vset.pattern.permute.xlu0 0
    %6544 = vperm.xlu0 %6543, %v90
    %v6545 = vpop.permute.xlu0 %6544
    %6548 = vset.pattern.permute.xlu0 0
    %6549 = vperm.xlu0 %6548, %v91
    %v6550 = vpop.permute.xlu0 %6549
    %6553 = vset.pattern.permute.xlu0 0
    %6554 = vperm.xlu0 %6553, %v92
    %v6555 = vpop.permute.xlu0 %6554
    %v6557 = vmul.f32 %v6509, %v6520
    %v6558 = vmul.f32 %v6510, %v6525
    %v6559 = vmul.f32 %v6511, %v6530
    %v6560 = vmul.f32 %v6512, %v6535
    %v6561 = vmul.f32 %v6513, %v6540
    %v6562 = vmul.f32 %v6514, %v6545
    %v6563 = vmul.f32 %v6515, %v6550
    %v6564 = vmul.f32 %v6516, %v6555
    %v6565 = vadd.f32 %v6557, %v6558
    %v6566 = vadd.f32 %v6565, %v6559
    %v6567 = vadd.f32 %v6566, %v6560
    %v6568 = vadd.f32 %v6567, %v6561
    %v6569 = vadd.f32 %v6568, %v6562
    %v6570 = vadd.f32 %v6569, %v6563
    %v6571 = vadd.f32 %v6570, %v6564
    %v6572 = vrot.slane %v6571, 4
    %v6573 = vadd.f32 %v6571, %v6572
    %v6574 = vrot.slane %v6573, 2
    %v6575 = vadd.f32 %v6573, %v6574
    %v6576 = vrot.slane %v6575, 1
    %v6577 = vadd.f32 %v6575, %v6576
    %6578 = vst [vmem:[#allocation2] sm:$0x1] %v6577
    // Predicated region
    $region22: #{tpu_custom_call.1} parent=1 // pred_check
      _
    $region23: #{tpu_custom_call.1} parent=1 // pred_check_branch
      %6580 = sbr.rel (0) target = $region25
    $region24: #{tpu_custom_call.1} parent=1 // pred_region
      %s6582 = ssub.s32 16, 16
      %6583 = vsyncadd [#allocation3], %s6582
      %s6585 = sshll.u32 [#allocation2], 4
      %s6586 = int_to_ptr.vmem [resolvable:$true] %s6585
      %6588 = dma.vmem_to_hbm [thread:$0]  %s6586, 16, %s5, [#allocation3]
    $region25: #{tpu_custom_call.1} parent=1 // pred_fallthru
      _
    // Predicated region
    $region26: #{tpu_custom_call.1} parent=1 // pred_check
      _
    $region27: #{tpu_custom_call.1} parent=1 // pred_check_branch
      %6590 = sbr.rel (0) target = $region29
    $region28: #{tpu_custom_call.1} parent=1 // pred_region
      %6591 = dma.done [#allocation3], 16
    $region29: #{tpu_custom_call.1} parent=1 // pred_fallthru
      _
    %6592 = vsyncpa [#allocation3], 1

</llo_original>
